<compile_context>
chip_gen: v7x
topology: tpu7x:2x2x1
jax: 0.10.0
libtpu: 0.0.40
codegen_flags: <defaults>
</compile_context>

<pallas_src>
import math
from functools import partial

import jax
import jax.numpy as jnp
from jax.experimental import pallas as pl
from jax.experimental.pallas import tpu as pltpu

NEG_INF = -1e30   # stand-in for float('-inf') in attention masks / padded logit lanes
LANES = 128       # lane width used for both parameter slabs and the output


# ---------------------------------------------------------------------------
# Fused kernel: full transformer forward for `bb` batch elements per grid step.
#   refs = (src, tgt, pad_bias, w_slab(bf16), v_slab(f32), out)
# ---------------------------------------------------------------------------
def _model_kernel(src_ref, tgt_ref, padb_ref, w_ref, v_ref, out_ref, *,
                  w_index, v_index, num_heads, num_enc, num_dec,
                  bb, s_len, t_len):
    e = src_ref.shape[1]
    hd = e // num_heads
    scale = 1.0 / math.sqrt(hd)

    # --- static slab accessors (weights bf16, vectors f32) ------------------
    def W(name):
        off, r, c = w_index[name]
        return w_ref[off:off + r, :c]           # (r, c) bf16

    def V(name):
        off, c = v_index[name]
        return v_ref[off:off + 1, :c]           # (1, c) f32

    def mm(x, w_bf16):
        # MXU: bf16 operands, f32 accumulation.  Weights are already bf16.
        return jnp.dot(x.astype(jnp.bfloat16), w_bf16,
                       preferred_element_type=jnp.float32)

    def ln(x, g, b):
        mu = jnp.mean(x, axis=-1, keepdims=True)
        xc = x - mu
        var = jnp.mean(xc * xc, axis=-1, keepdims=True)
        return xc * jax.lax.rsqrt(var + 1e-5) * g + b

    def mha(q2, kv2, prefix, bias, lq, lk, cross):
        """q2: (bb*lq, E); kv2: (bb*lk, E); bias: (bb|1, lq|1, lk) additive or None."""
        w_in, w_out = W(prefix + ".w_in"), W(prefix + ".w_out")
        b_in, b_out = V(prefix + ".b_in"), V(prefix + ".b_out")
        if not cross:                           # self-attention: fused QKV matmul
            qkv = mm(q2, w_in) + b_in
            q, k, v = qkv[:, :e], qkv[:, e:2 * e], qkv[:, 2 * e:]
        else:                                   # cross-attention: q from tgt, kv from memory
            q = mm(q2, w_in[:, :e]) + b_in[:, :e]
            kv = mm(kv2, w_in[:, e:]) + b_in[:, e:]
            k, v = kv[:, :e], kv[:, e:]

        q3 = q.reshape(bb, lq, e)
        k3 = k.reshape(bb, lk, e)
        v3 = v.reshape(bb, lk, e)

        heads = []
        for h in range(num_heads):              # unrolled; static lane slices
            sl = slice(h * hd, (h + 1) * hd)
            qh = q3[:, :, sl].astype(jnp.bfloat16)
            kh = k3[:, :, sl].astype(jnp.bfloat16)
            vh = v3[:, :, sl].astype(jnp.bfloat16)
            sc = jnp.einsum('bqd,bkd->bqk', qh, kh,
                            preferred_element_type=jnp.float32) * scale
            if bias is not None:
                sc = sc + bias
            m = jnp.max(sc, axis=-1, keepdims=True)
            p = jnp.exp(sc - m)
            denom = jnp.sum(p, axis=-1, keepdims=True)
            o = jnp.einsum('bqk,bkd->bqd', p.astype(jnp.bfloat16), vh,
                           preferred_element_type=jnp.float32)
            heads.append(o * pl.reciprocal(denom, approx=True))
        # Single fused output projection for all heads (one MXU push).
        o_all = jnp.concatenate(heads, axis=-1).reshape(bb * lq, e)
        return mm(o_all, w_out) + b_out

    x_src = src_ref[...]                        # (bb*S, E) f32
    x_tgt = tgt_ref[...]                        # (bb*T, E) f32
    pad_bias = padb_ref[...]                    # (bb, 1, S) additive key-padding bias

    # Causal mask built in-kernel (no HBM bias tensor).
    rows = jax.lax.broadcasted_iota(jnp.int32, (t_len, t_len), 0)
    cols = jax.lax.broadcasted_iota(jnp.int32, (t_len, t_len), 1)
    causal = jnp.where(cols > rows, NEG_INF, 0.0).astype(jnp.float32)[None]  # (1,T,T)

    # ------------------------------ encoder --------------------------------
    mem = x_src
    for l in range(num_enc):
        p = f"enc{l}"
        a = mha(mem, mem, p + ".attn", pad_bias, s_len, s_len, cross=False)
        mem = ln(mem + a, V(p + ".n1_g"), V(p + ".n1_b"))
        h1 = jnp.maximum(mm(mem, W(p + ".l1_w")) + V(p + ".l1_b"), 0.0)
        ff = mm(h1, W(p + ".l2_w")) + V(p + ".l2_b")
        mem = ln(mem + ff, V(p + ".n2_g"), V(p + ".n2_b"))
    mem = ln(mem, V("enc_norm_g"), V("enc_norm_b"))

    # ------------------------------ decoder --------------------------------
    y = x_tgt
    for l in range(num_dec):
        p = f"dec{l}"
        a = mha(y, y, p + ".self", causal, t_len, t_len, cross=False)
        y = ln(y + a, V(p + ".n1_g"), V(p + ".n1_b"))
        # nn.Transformer training path: memory_key_padding_mask defaults to None.
        c = mha(y, mem, p + ".cross", None, t_len, s_len, cross=True)
        y = ln(y + c, V(p + ".n2_g"), V(p + ".n2_b"))
        h1 = jnp.maximum(mm(y, W(p + ".l1_w")) + V(p + ".l1_b"), 0.0)
        ff = mm(h1, W(p + ".l2_w")) + V(p + ".l2_b")
        y = ln(y + ff, V(p + ".n3_g"), V(p + ".n3_b"))
    y = ln(y, V("dec_norm_g"), V("dec_norm_b"))

    # ------------- generator + log_softmax, lane-dense 128-wide -------------
    # Padded logit lanes get bias NEG_INF, so they contribute 0 to the LSE.
    logits = mm(y, W("gen_w")) + V("gen_b")     # (bb*T, 128) f32
    m = jnp.max(logits, axis=-1, keepdims=True)
    sft = logits - m
    lse = jnp.log(jnp.sum(jnp.exp(sft), axis=-1, keepdims=True))
    out_ref[...] = sft - lse                    # one full-width (128-lane) store


# ---------------------------------------------------------------------------
# Host-side glue (embedding gather, positional encoding, teacher forcing)
# ---------------------------------------------------------------------------
def positional_encoding_table(max_len, d_model):
    position = jnp.arange(max_len, dtype=jnp.float32)[:, None]
    div_term = jnp.exp(jnp.arange(0, d_model, 2, dtype=jnp.float32)
                       * (-math.log(10000.0) / d_model))
    pe = jnp.zeros((max_len, d_model), dtype=jnp.float32)
    pe = pe.at[:, 0::2].set(jnp.sin(position * div_term))
    pe = pe.at[:, 1::2].set(jnp.cos(position * div_term))
    return pe                                   # (max_len, E)


class Config:
    src_vocab_size = 11
    tgt_vocab_size = 13
    embedding_size = 32
    en_hidden_size = 32
    num_heads = 4
    tfm_en_num_layers = 2
    tfm_de_num_layers = 2
    ffnn_dim = 64
    pos_encoder_drop_rate = 0.0
    en_drop_rate = 0.0
    PAD_IDX = 0
    BOS_IDX = 1


def init_params(key, cfg):
    """Build embeddings plus two packed parameter slabs:
       w_slab (Rw,128) bf16 : all matmul weights, pre-transposed (Din,Dout), lane-padded
       v_slab (Rv,128) f32  : all biases / LN params, one row each, lane-padded
    Static offset dicts (w_index/v_index) describe where each parameter lives."""
    e, f, v = cfg.en_hidden_size, cfg.ffnn_dim, cfg.tgt_vocab_size
    keys = iter(jax.random.split(key, 256))

    def nrm(shape, scale=0.02):
        return (scale * jax.random.normal(next(keys), shape)).astype(jnp.float32)

    w_items, v_items = [], []                   # (name, array) in packing order

    def add_mha(prefix):
        w_items.append((prefix + ".w_in",  nrm((e, 3 * e))))
        w_items.append((prefix + ".w_out", nrm((e, e))))
        v_items.append((prefix + ".b_in",  jnp.zeros((3 * e,), jnp.float32)))
        v_items.append((prefix + ".b_out", jnp.zeros((e,), jnp.float32)))

    def add_ffn_norms(prefix, n_norms):
        w_items.append((prefix + ".l1_w", nrm((e, f))))
        w_items.append((prefix + ".l2_w", nrm((f, e))))
        v_items.append((prefix + ".l1_b", jnp.zeros((f,), jnp.float32)))
        v_items.append((prefix + ".l2_b", jnp.zeros((e,), jnp.float32)))
        for i in range(1, n_norms + 1):
            v_items.append((f"{prefix}.n{i}_g", jnp.ones((e,), jnp.float32)))
            v_items.append((f"{prefix}.n{i}_b", jnp.zeros((e,), jnp.float32)))

    for l in range(cfg.tfm_en_num_layers):
        add_mha(f"enc{l}.attn")
        add_ffn_norms(f"enc{l}", 2)
    for l in range(cfg.tfm_de_num_layers):
        add_mha(f"dec{l}.self")
        add_mha(f"dec{l}.cross")
        add_ffn_norms(f"dec{l}", 3)
    v_items.append(("enc_norm_g", jnp.ones((e,), jnp.float32)))
    v_items.append(("enc_norm_b", jnp.zeros((e,), jnp.float32)))
    v_items.append(("dec_norm_g", jnp.ones((e,), jnp.float32)))
    v_items.append(("dec_norm_b", jnp.zeros((e,), jnp.float32)))

    # Generator padded to 128 output lanes (lane-dense store); padded bias lanes
    # are NEG_INF so they vanish in the in-kernel log-sum-exp.
    gen_w = jnp.zeros((e, LANES), jnp.float32).at[:, :v].set(nrm((e, v)))
    gen_b = jnp.full((LANES,), NEG_INF, jnp.float32).at[:v].set(0.0)
    w_items.append(("gen_w", gen_w))
    v_items.append(("gen_b", gen_b))

    # --- pack weight slab (bf16) --------------------------------------------
    w_index, w_rows, off = {}, [], 0
    for name, arr in w_items:
        r, c = arr.shape
        w_index[name] = (off, r, c)
        w_rows.append(jnp.zeros((r, LANES), jnp.float32).at[:, :c].set(arr))
        off += r
    w_slab = jnp.concatenate(w_rows, axis=0).astype(jnp.bfloat16)

    # --- pack vector slab (f32), one row per parameter ----------------------
    v_index, v_rows = {}, []
    for i, (name, arr) in enumerate(v_items):
        c = arr.shape[0]
        v_index[name] = (i, c)
        v_rows.append(jnp.zeros((LANES,), jnp.float32).at[:c].set(arr))
    pad_rows = (-len(v_rows)) % 8
    v_rows += [jnp.zeros((LANES,), jnp.float32)] * pad_rows
    v_slab = jnp.stack(v_rows, axis=0)

    return dict(
        src_emb=nrm((cfg.src_vocab_size, cfg.embedding_size), 1.0),
        tgt_emb=nrm((cfg.tgt_vocab_size, cfg.embedding_size), 1.0),
        w_slab=w_slab, v_slab=v_slab, w_index=w_index, v_index=v_index)


def model_forward(params, cfg, xs, x_lens, ys, *, batch_block=None):
    """Training-branch forward of ModelGraph. xs: (B, S) int32, ys: (B, T) int32.
    Returns log-probs of shape (B, T, tgt_vocab_size). Requires S, T multiples of 8.
    batch_block: batch elements per grid step.  Default = B (single step; best on
    v5e/v6e single-TensorCore chips).  On v7x use batch_block = B // 2."""
    del x_lens  # unused by the reference training forward as well
    b, s = xs.shape
    t = ys.shape[1]
    e = cfg.embedding_size
    v = cfg.tgt_vocab_size
    bb = b if batch_block is None else batch_block
    assert b % bb == 0

    pe = positional_encoding_table(max(s, t), e)

    # Embedding gathers + scale + positional encoding (glue, plain JAX).
    src = jnp.take(params["src_emb"], xs, axis=0) * math.sqrt(e) + pe[None, :s, :]
    bos = jnp.full((b, 1), cfg.BOS_IDX, dtype=ys.dtype)
    ys_in = jnp.concatenate([bos, ys], axis=1)[:, :-1]              # teacher forcing
    tgt = jnp.take(params["tgt_emb"], ys_in, axis=0) * math.sqrt(e) + pe[None, :t, :]

    src2 = src.reshape(b * s, e).astype(jnp.float32)                # (B*S, E)
    tgt2 = tgt.reshape(b * t, e).astype(jnp.float32)                # (B*T, E)
    pad_bias = jnp.where(xs == cfg.PAD_IDX, NEG_INF, 0.0).astype(jnp.float32)[:, None, :]

    kernel = partial(_model_kernel,
                     w_index=params["w_index"], v_index=params["v_index"],
                     num_heads=cfg.num_heads,
                     num_enc=cfg.tfm_en_num_layers, num_dec=cfg.tfm_de_num_layers,
                     bb=bb, s_len=s, t_len=t)

    w_shape = params["w_slab"].shape
    v_shape = params["v_slab"].shape
    in_specs = [
        pl.BlockSpec((bb * s, e), lambda i: (i, 0)),                # src rows per step
        pl.BlockSpec((bb * t, e), lambda i: (i, 0)),                # tgt rows per step
        pl.BlockSpec((bb, 1, s), lambda i: (i, 0, 0)),              # key-pad bias
        pl.BlockSpec(w_shape, lambda i: (0, 0)),                    # weight slab (resident)
        pl.BlockSpec(v_shape, lambda i: (0, 0)),                    # bias/LN slab (resident)
    ]

    out = pl.pallas_call(
        kernel,
        grid=(b // bb,),
        in_specs=in_specs,
        out_specs=pl.BlockSpec((bb * t, LANES), lambda i: (i, 0)),
        out_shape=jax.ShapeDtypeStruct((b * t, LANES), jnp.float32),
        compiler_params=pltpu.CompilerParams(dimension_semantics=("parallel",)),
    )(src2, tgt2, pad_bias, params["w_slab"], params["v_slab"])

    return out[:, :v].reshape(b, t, v)                              # (B, T, V)


# ---------------------------------------------------------------------------
if __name__ == "__main__":
    cfg = Config()
    key = jax.random.PRNGKey(0)
    k_param, k_xs, k_ys = jax.random.split(key, 3)

    params = init_params(k_param, cfg)

    B, S, T = 2, 8, 8
    xs = jax.random.randint(k_xs, (B, S), 2, cfg.src_vocab_size, dtype=jnp.int32)
    xs = xs.at[1, 6:].set(cfg.PAD_IDX)                              # one sequence padded
    ys = jax.random.randint(k_ys, (B, T), 2, cfg.tgt_vocab_size, dtype=jnp.int32)
    x_lens = jnp.array([S, 6], dtype=jnp.int32)

    fwd = jax.jit(partial(model_forward, params, cfg))
    out = jax.block_until_ready(fwd(xs, x_lens, ys))

    assert out.shape == (B, T, cfg.tgt_vocab_size)
    assert bool(jnp.all(jnp.isfinite(out)))
    # log-softmax rows should (approximately) exponentiate-sum to 1
    assert bool(jnp.allclose(jnp.sum(jnp.exp(out), axis=-1), 1.0, atol=1e-4))
    print("KERNEL_OK")
</pallas_src>

<mosaic_0001>
module attributes {stable_mosaic.version = 11 : i64} {
  func.func @_model_kernel(%arg0: i32, %arg1: memref<16x32xf32, #tpu.memory_space<vmem>>, %arg2: memref<16x32xf32, #tpu.memory_space<vmem>>, %arg3: memref<2x1x8xf32, #tpu.memory_space<vmem>>, %arg4: memref<800x128xbf16, #tpu.memory_space<vmem>>, %arg5: memref<48x128xf32, #tpu.memory_space<vmem>>, %arg6: memref<16x128xf32, #tpu.memory_space<vmem>>) attributes {dimension_semantics = [#tpu.dimension_semantics<parallel>], iteration_bounds = array<i64: 1>, scalar_prefetch = 0 : i64, scratch_operands = 0 : i64, tpu.core_type = #tpu.core_type<tc>, window_params = [{transform_indices = @transform_0, window_bounds = array<i64: 16, 32>}, {transform_indices = @transform_1, window_bounds = array<i64: 16, 32>}, {transform_indices = @transform_2, window_bounds = array<i64: 2, 1, 8>}, {pipeline_mode = #tpu.pipeline_mode<synchronous>, transform_indices = @transform_3, window_bounds = array<i64: 800, 128>}, {pipeline_mode = #tpu.pipeline_mode<synchronous>, transform_indices = @transform_4, window_bounds = array<i64: 48, 128>}, {transform_indices = @transform_5, window_bounds = array<i64: 16, 128>}]} {
    %c0 = arith.constant 0 : index
    %c0_0 = arith.constant 0 : index
    %0 = vector.load %arg1[%c0, %c0_0] : memref<16x32xf32, #tpu.memory_space<vmem>>, vector<16x32xf32>
    %c0_1 = arith.constant 0 : index
    %c0_2 = arith.constant 0 : index
    %1 = vector.load %arg2[%c0_1, %c0_2] : memref<16x32xf32, #tpu.memory_space<vmem>>, vector<16x32xf32>
    %c0_3 = arith.constant 0 : index
    %c0_4 = arith.constant 0 : index
    %c0_5 = arith.constant 0 : index
    %2 = vector.load %arg3[%c0_3, %c0_4, %c0_5] : memref<2x1x8xf32, #tpu.memory_space<vmem>>, vector<2x1x8xf32>
    %3 = tpu.iota {dimensions = array<i32: 0>} : vector<8x8xi32>
    %4 = tpu.iota {dimensions = array<i32: 1>} : vector<8x8xi32>
    %5 = arith.cmpi sgt, %4, %3 : vector<8x8xi32>
    %cst = arith.constant -1.000000e+30 : f32
    %cst_6 = arith.constant 0.000000e+00 : f32
    %6 = vector.broadcast %cst : f32 to vector<8x8xf32>
    %7 = vector.broadcast %cst_6 : f32 to vector<8x8xf32>
    %8 = arith.select %5, %6, %7 : vector<8x8xi1>, vector<8x8xf32>
    %9 = vector.shape_cast %8 : vector<8x8xf32> to vector<1x8x8xf32>
    %c0_7 = arith.constant 0 : index
    %c0_8 = arith.constant 0 : index
    %10 = vector.load %arg4[%c0_7, %c0_8] : memref<800x128xbf16, #tpu.memory_space<vmem>>, vector<32x96xbf16>
    %c32 = arith.constant 32 : index
    %c0_9 = arith.constant 0 : index
    %11 = vector.load %arg4[%c32, %c0_9] : memref<800x128xbf16, #tpu.memory_space<vmem>>, vector<32x32xbf16>
    %c0_10 = arith.constant 0 : index
    %c0_11 = arith.constant 0 : index
    %12 = vector.load %arg5[%c0_10, %c0_11] : memref<48x128xf32, #tpu.memory_space<vmem>>, vector<1x96xf32>
    %c1 = arith.constant 1 : index
    %c0_12 = arith.constant 0 : index
    %13 = vector.load %arg5[%c1, %c0_12] : memref<48x128xf32, #tpu.memory_space<vmem>>, vector<1x32xf32>
    %14 = arith.truncf %0 : vector<16x32xf32> to vector<16x32xbf16>
    %cst_13 = arith.constant dense<0.000000e+00> : vector<16x96xf32>
    %15 = tpu.matmul %14, %10, %cst_13 {dimension_numbers = #tpu.dot_dimension_numbers<[1], [0], [0], [1], [0, 0, 1, 1], [], []>} : vector<16x32xbf16>, vector<32x96xbf16>, vector<16x96xf32> -> vector<16x96xf32>
    %16 = vector.broadcast %12 : vector<1x96xf32> to vector<16x96xf32>
    %17 = arith.addf %15, %16 : vector<16x96xf32>
    %18 = vector.extract_strided_slice %17 {offsets = [0, 0], sizes = [16, 32], strides = [1, 1]} : vector<16x96xf32> to vector<16x32xf32>
    %19 = vector.extract_strided_slice %17 {offsets = [0, 32], sizes = [16, 32], strides = [1, 1]} : vector<16x96xf32> to vector<16x32xf32>
    %20 = vector.extract_strided_slice %17 {offsets = [0, 64], sizes = [16, 32], strides = [1, 1]} : vector<16x96xf32> to vector<16x32xf32>
    %21 = vector.shape_cast %18 : vector<16x32xf32> to vector<2x8x32xf32>
    %22 = vector.shape_cast %19 : vector<16x32xf32> to vector<2x8x32xf32>
    %23 = vector.shape_cast %20 : vector<16x32xf32> to vector<2x8x32xf32>
    %24 = vector.extract_strided_slice %21 {offsets = [0, 0, 0], sizes = [2, 8, 8], strides = [1, 1, 1]} : vector<2x8x32xf32> to vector<2x8x8xf32>
    %25 = arith.truncf %24 : vector<2x8x8xf32> to vector<2x8x8xbf16>
    %26 = vector.extract_strided_slice %22 {offsets = [0, 0, 0], sizes = [2, 8, 8], strides = [1, 1, 1]} : vector<2x8x32xf32> to vector<2x8x8xf32>
    %27 = arith.truncf %26 : vector<2x8x8xf32> to vector<2x8x8xbf16>
    %28 = vector.extract_strided_slice %23 {offsets = [0, 0, 0], sizes = [2, 8, 8], strides = [1, 1, 1]} : vector<2x8x32xf32> to vector<2x8x8xf32>
    %29 = arith.truncf %28 : vector<2x8x8xf32> to vector<2x8x8xbf16>
    "tpu.trace_start"() <{level = 10 : i32, message = "bqd,bkd->bqk"}> : () -> ()
    %cst_14 = arith.constant dense<0.000000e+00> : vector<2x8x8xf32>
    %30 = tpu.matmul %25, %27, %cst_14 {dimension_numbers = #tpu.dot_dimension_numbers<[2], [2], [1], [1], [0, 0, 0, 1, 1, 1], [0], [0]>} : vector<2x8x8xbf16>, vector<2x8x8xbf16>, vector<2x8x8xf32> -> vector<2x8x8xf32>
    "tpu.trace_stop"() : () -> ()
    %cst_15 = arith.constant 0.353553385 : f32
    %31 = vector.broadcast %cst_15 : f32 to vector<2x8x8xf32>
    %32 = arith.mulf %30, %31 : vector<2x8x8xf32>
    %33 = vector.broadcast %2 : vector<2x1x8xf32> to vector<2x8x8xf32>
    %34 = arith.addf %32, %33 : vector<2x8x8xf32>
    %cst_16 = arith.constant dense<0xFF800000> : vector<2x8xf32>
    %35 = vector.multi_reduction <maximumf>, %34, %cst_16 [2] : vector<2x8x8xf32> to vector<2x8xf32>
    %36 = vector.shape_cast %35 : vector<2x8xf32> to vector<2x8x1xf32>
    %37 = vector.broadcast %36 : vector<2x8x1xf32> to vector<2x8x8xf32>
    %38 = arith.subf %34, %37 : vector<2x8x8xf32>
    %39 = math.exp %38 : vector<2x8x8xf32>
    %cst_17 = arith.constant dense<0.000000e+00> : vector<2x8xf32>
    %40 = vector.multi_reduction <add>, %39, %cst_17 [2] : vector<2x8x8xf32> to vector<2x8xf32>
    %41 = vector.shape_cast %40 : vector<2x8xf32> to vector<2x8x1xf32>
    %42 = arith.truncf %39 : vector<2x8x8xf32> to vector<2x8x8xbf16>
    "tpu.trace_start"() <{level = 10 : i32, message = "bqk,bkd->bqd"}> : () -> ()
    %cst_18 = arith.constant dense<0.000000e+00> : vector<2x8x8xf32>
    %43 = tpu.matmul %42, %29, %cst_18 {dimension_numbers = #tpu.dot_dimension_numbers<[2], [1], [1], [2], [0, 0, 0, 1, 1, 2], [0], [0]>} : vector<2x8x8xbf16>, vector<2x8x8xbf16>, vector<2x8x8xf32> -> vector<2x8x8xf32>
    "tpu.trace_stop"() : () -> ()
    %44 = tpu.reciprocal %41 {approx = true} : vector<2x8x1xf32> -> vector<2x8x1xf32>
    %45 = vector.broadcast %44 : vector<2x8x1xf32> to vector<2x8x8xf32>
    %46 = arith.mulf %43, %45 : vector<2x8x8xf32>
    %47 = vector.extract_strided_slice %21 {offsets = [0, 0, 8], sizes = [2, 8, 8], strides = [1, 1, 1]} : vector<2x8x32xf32> to vector<2x8x8xf32>
    %48 = arith.truncf %47 : vector<2x8x8xf32> to vector<2x8x8xbf16>
    %49 = vector.extract_strided_slice %22 {offsets = [0, 0, 8], sizes = [2, 8, 8], strides = [1, 1, 1]} : vector<2x8x32xf32> to vector<2x8x8xf32>
    %50 = arith.truncf %49 : vector<2x8x8xf32> to vector<2x8x8xbf16>
    %51 = vector.extract_strided_slice %23 {offsets = [0, 0, 8], sizes = [2, 8, 8], strides = [1, 1, 1]} : vector<2x8x32xf32> to vector<2x8x8xf32>
    %52 = arith.truncf %51 : vector<2x8x8xf32> to vector<2x8x8xbf16>
    "tpu.trace_start"() <{level = 10 : i32, message = "bqd,bkd->bqk"}> : () -> ()
    %cst_19 = arith.constant dense<0.000000e+00> : vector<2x8x8xf32>
    %53 = tpu.matmul %48, %50, %cst_19 {dimension_numbers = #tpu.dot_dimension_numbers<[2], [2], [1], [1], [0, 0, 0, 1, 1, 1], [0], [0]>} : vector<2x8x8xbf16>, vector<2x8x8xbf16>, vector<2x8x8xf32> -> vector<2x8x8xf32>
    "tpu.trace_stop"() : () -> ()
    %cst_20 = arith.constant 0.353553385 : f32
    %54 = vector.broadcast %cst_20 : f32 to vector<2x8x8xf32>
    %55 = arith.mulf %53, %54 : vector<2x8x8xf32>
    %56 = vector.broadcast %2 : vector<2x1x8xf32> to vector<2x8x8xf32>
    %57 = arith.addf %55, %56 : vector<2x8x8xf32>
    %cst_21 = arith.constant dense<0xFF800000> : vector<2x8xf32>
    %58 = vector.multi_reduction <maximumf>, %57, %cst_21 [2] : vector<2x8x8xf32> to vector<2x8xf32>
    %59 = vector.shape_cast %58 : vector<2x8xf32> to vector<2x8x1xf32>
    %60 = vector.broadcast %59 : vector<2x8x1xf32> to vector<2x8x8xf32>
    %61 = arith.subf %57, %60 : vector<2x8x8xf32>
    %62 = math.exp %61 : vector<2x8x8xf32>
    %cst_22 = arith.constant dense<0.000000e+00> : vector<2x8xf32>
    %63 = vector.multi_reduction <add>, %62, %cst_22 [2] : vector<2x8x8xf32> to vector<2x8xf32>
    %64 = vector.shape_cast %63 : vector<2x8xf32> to vector<2x8x1xf32>
    %65 = arith.truncf %62 : vector<2x8x8xf32> to vector<2x8x8xbf16>
    "tpu.trace_start"() <{level = 10 : i32, message = "bqk,bkd->bqd"}> : () -> ()
    %cst_23 = arith.constant dense<0.000000e+00> : vector<2x8x8xf32>
    %66 = tpu.matmul %65, %52, %cst_23 {dimension_numbers = #tpu.dot_dimension_numbers<[2], [1], [1], [2], [0, 0, 0, 1, 1, 2], [0], [0]>} : vector<2x8x8xbf16>, vector<2x8x8xbf16>, vector<2x8x8xf32> -> vector<2x8x8xf32>
    "tpu.trace_stop"() : () -> ()
    %67 = tpu.reciprocal %64 {approx = true} : vector<2x8x1xf32> -> vector<2x8x1xf32>
    %68 = vector.broadcast %67 : vector<2x8x1xf32> to vector<2x8x8xf32>
    %69 = arith.mulf %66, %68 : vector<2x8x8xf32>
    %70 = vector.extract_strided_slice %21 {offsets = [0, 0, 16], sizes = [2, 8, 8], strides = [1, 1, 1]} : vector<2x8x32xf32> to vector<2x8x8xf32>
    %71 = arith.truncf %70 : vector<2x8x8xf32> to vector<2x8x8xbf16>
    %72 = vector.extract_strided_slice %22 {offsets = [0, 0, 16], sizes = [2, 8, 8], strides = [1, 1, 1]} : vector<2x8x32xf32> to vector<2x8x8xf32>
    %73 = arith.truncf %72 : vector<2x8x8xf32> to vector<2x8x8xbf16>
    %74 = vector.extract_strided_slice %23 {offsets = [0, 0, 16], sizes = [2, 8, 8], strides = [1, 1, 1]} : vector<2x8x32xf32> to vector<2x8x8xf32>
    %75 = arith.truncf %74 : vector<2x8x8xf32> to vector<2x8x8xbf16>
    "tpu.trace_start"() <{level = 10 : i32, message = "bqd,bkd->bqk"}> : () -> ()
    %cst_24 = arith.constant dense<0.000000e+00> : vector<2x8x8xf32>
    %76 = tpu.matmul %71, %73, %cst_24 {dimension_numbers = #tpu.dot_dimension_numbers<[2], [2], [1], [1], [0, 0, 0, 1, 1, 1], [0], [0]>} : vector<2x8x8xbf16>, vector<2x8x8xbf16>, vector<2x8x8xf32> -> vector<2x8x8xf32>
    "tpu.trace_stop"() : () -> ()
    %cst_25 = arith.constant 0.353553385 : f32
    %77 = vector.broadcast %cst_25 : f32 to vector<2x8x8xf32>
    %78 = arith.mulf %76, %77 : vector<2x8x8xf32>
    %79 = vector.broadcast %2 : vector<2x1x8xf32> to vector<2x8x8xf32>
    %80 = arith.addf %78, %79 : vector<2x8x8xf32>
    %cst_26 = arith.constant dense<0xFF800000> : vector<2x8xf32>
    %81 = vector.multi_reduction <maximumf>, %80, %cst_26 [2] : vector<2x8x8xf32> to vector<2x8xf32>
    %82 = vector.shape_cast %81 : vector<2x8xf32> to vector<2x8x1xf32>
    %83 = vector.broadcast %82 : vector<2x8x1xf32> to vector<2x8x8xf32>
    %84 = arith.subf %80, %83 : vector<2x8x8xf32>
    %85 = math.exp %84 : vector<2x8x8xf32>
    %cst_27 = arith.constant dense<0.000000e+00> : vector<2x8xf32>
    %86 = vector.multi_reduction <add>, %85, %cst_27 [2] : vector<2x8x8xf32> to vector<2x8xf32>
    %87 = vector.shape_cast %86 : vector<2x8xf32> to vector<2x8x1xf32>
    %88 = arith.truncf %85 : vector<2x8x8xf32> to vector<2x8x8xbf16>
    "tpu.trace_start"() <{level = 10 : i32, message = "bqk,bkd->bqd"}> : () -> ()
    %cst_28 = arith.constant dense<0.000000e+00> : vector<2x8x8xf32>
    %89 = tpu.matmul %88, %75, %cst_28 {dimension_numbers = #tpu.dot_dimension_numbers<[2], [1], [1], [2], [0, 0, 0, 1, 1, 2], [0], [0]>} : vector<2x8x8xbf16>, vector<2x8x8xbf16>, vector<2x8x8xf32> -> vector<2x8x8xf32>
    "tpu.trace_stop"() : () -> ()
    %90 = tpu.reciprocal %87 {approx = true} : vector<2x8x1xf32> -> vector<2x8x1xf32>
    %91 = vector.broadcast %90 : vector<2x8x1xf32> to vector<2x8x8xf32>
    %92 = arith.mulf %89, %91 : vector<2x8x8xf32>
    %93 = vector.extract_strided_slice %21 {offsets = [0, 0, 24], sizes = [2, 8, 8], strides = [1, 1, 1]} : vector<2x8x32xf32> to vector<2x8x8xf32>
    %94 = arith.truncf %93 : vector<2x8x8xf32> to vector<2x8x8xbf16>
    %95 = vector.extract_strided_slice %22 {offsets = [0, 0, 24], sizes = [2, 8, 8], strides = [1, 1, 1]} : vector<2x8x32xf32> to vector<2x8x8xf32>
    %96 = arith.truncf %95 : vector<2x8x8xf32> to vector<2x8x8xbf16>
    %97 = vector.extract_strided_slice %23 {offsets = [0, 0, 24], sizes = [2, 8, 8], strides = [1, 1, 1]} : vector<2x8x32xf32> to vector<2x8x8xf32>
    %98 = arith.truncf %97 : vector<2x8x8xf32> to vector<2x8x8xbf16>
    "tpu.trace_start"() <{level = 10 : i32, message = "bqd,bkd->bqk"}> : () -> ()
    %cst_29 = arith.constant dense<0.000000e+00> : vector<2x8x8xf32>
    %99 = tpu.matmul %94, %96, %cst_29 {dimension_numbers = #tpu.dot_dimension_numbers<[2], [2], [1], [1], [0, 0, 0, 1, 1, 1], [0], [0]>} : vector<2x8x8xbf16>, vector<2x8x8xbf16>, vector<2x8x8xf32> -> vector<2x8x8xf32>
    "tpu.trace_stop"() : () -> ()
    %cst_30 = arith.constant 0.353553385 : f32
    %100 = vector.broadcast %cst_30 : f32 to vector<2x8x8xf32>
    %101 = arith.mulf %99, %100 : vector<2x8x8xf32>
    %102 = vector.broadcast %2 : vector<2x1x8xf32> to vector<2x8x8xf32>
    %103 = arith.addf %101, %102 : vector<2x8x8xf32>
    %cst_31 = arith.constant dense<0xFF800000> : vector<2x8xf32>
    %104 = vector.multi_reduction <maximumf>, %103, %cst_31 [2] : vector<2x8x8xf32> to vector<2x8xf32>
    %105 = vector.shape_cast %104 : vector<2x8xf32> to vector<2x8x1xf32>
    %106 = vector.broadcast %105 : vector<2x8x1xf32> to vector<2x8x8xf32>
    %107 = arith.subf %103, %106 : vector<2x8x8xf32>
    %108 = math.exp %107 : vector<2x8x8xf32>
    %cst_32 = arith.constant dense<0.000000e+00> : vector<2x8xf32>
    %109 = vector.multi_reduction <add>, %108, %cst_32 [2] : vector<2x8x8xf32> to vector<2x8xf32>
    %110 = vector.shape_cast %109 : vector<2x8xf32> to vector<2x8x1xf32>
    %111 = arith.truncf %108 : vector<2x8x8xf32> to vector<2x8x8xbf16>
    "tpu.trace_start"() <{level = 10 : i32, message = "bqk,bkd->bqd"}> : () -> ()
    %cst_33 = arith.constant dense<0.000000e+00> : vector<2x8x8xf32>
    %112 = tpu.matmul %111, %98, %cst_33 {dimension_numbers = #tpu.dot_dimension_numbers<[2], [1], [1], [2], [0, 0, 0, 1, 1, 2], [0], [0]>} : vector<2x8x8xbf16>, vector<2x8x8xbf16>, vector<2x8x8xf32> -> vector<2x8x8xf32>
    "tpu.trace_stop"() : () -> ()
    %113 = tpu.reciprocal %110 {approx = true} : vector<2x8x1xf32> -> vector<2x8x1xf32>
    %114 = vector.broadcast %113 : vector<2x8x1xf32> to vector<2x8x8xf32>
    %115 = arith.mulf %112, %114 : vector<2x8x8xf32>
    %116 = tpu.concatenate %46, %69, %92, %115 in 2 : vector<2x8x8xf32>, vector<2x8x8xf32>, vector<2x8x8xf32>, vector<2x8x8xf32> -> vector<2x8x32xf32>
    %117 = vector.shape_cast %116 : vector<2x8x32xf32> to vector<16x32xf32>
    %118 = arith.truncf %117 : vector<16x32xf32> to vector<16x32xbf16>
    %cst_34 = arith.constant dense<0.000000e+00> : vector<16x32xf32>
    %119 = tpu.matmul %118, %11, %cst_34 {dimension_numbers = #tpu.dot_dimension_numbers<[1], [0], [0], [1], [0, 0, 1, 1], [], []>} : vector<16x32xbf16>, vector<32x32xbf16>, vector<16x32xf32> -> vector<16x32xf32>
    %120 = vector.broadcast %13 : vector<1x32xf32> to vector<16x32xf32>
    %121 = arith.addf %119, %120 : vector<16x32xf32>
    %122 = arith.addf %0, %121 : vector<16x32xf32>
    %c4 = arith.constant 4 : index
    %c0_35 = arith.constant 0 : index
    %123 = vector.load %arg5[%c4, %c0_35] : memref<48x128xf32, #tpu.memory_space<vmem>>, vector<1x32xf32>
    %c5 = arith.constant 5 : index
    %c0_36 = arith.constant 0 : index
    %124 = vector.load %arg5[%c5, %c0_36] : memref<48x128xf32, #tpu.memory_space<vmem>>, vector<1x32xf32>
    %cst_37 = arith.constant dense<0.000000e+00> : vector<16xf32>
    %125 = vector.multi_reduction <add>, %122, %cst_37 [1] : vector<16x32xf32> to vector<16xf32>
    %126 = vector.shape_cast %125 : vector<16xf32> to vector<16x1xf32>
    %cst_38 = arith.constant 3.200000e+01 : f32
    %127 = vector.broadcast %cst_38 : f32 to vector<16x1xf32>
    %128 = arith.divf %126, %127 : vector<16x1xf32>
    %129 = vector.broadcast %128 : vector<16x1xf32> to vector<16x32xf32>
    %130 = arith.subf %122, %129 : vector<16x32xf32>
    %131 = arith.mulf %130, %130 : vector<16x32xf32>
    %cst_39 = arith.constant dense<0.000000e+00> : vector<16xf32>
    %132 = vector.multi_reduction <add>, %131, %cst_39 [1] : vector<16x32xf32> to vector<16xf32>
    %133 = vector.shape_cast %132 : vector<16xf32> to vector<16x1xf32>
    %cst_40 = arith.constant 3.200000e+01 : f32
    %134 = vector.broadcast %cst_40 : f32 to vector<16x1xf32>
    %135 = arith.divf %133, %134 : vector<16x1xf32>
    %cst_41 = arith.constant 9.99999974E-6 : f32
    %136 = vector.broadcast %cst_41 : f32 to vector<16x1xf32>
    %137 = arith.addf %135, %136 : vector<16x1xf32>
    %138 = math.rsqrt %137 : vector<16x1xf32>
    %139 = vector.broadcast %138 : vector<16x1xf32> to vector<16x32xf32>
    %140 = arith.mulf %130, %139 : vector<16x32xf32>
    %141 = vector.broadcast %123 : vector<1x32xf32> to vector<16x32xf32>
    %142 = arith.mulf %140, %141 : vector<16x32xf32>
    %143 = vector.broadcast %124 : vector<1x32xf32> to vector<16x32xf32>
    %144 = arith.addf %142, %143 : vector<16x32xf32>
    %c64 = arith.constant 64 : index
    %c0_42 = arith.constant 0 : index
    %145 = vector.load %arg4[%c64, %c0_42] : memref<800x128xbf16, #tpu.memory_space<vmem>>, vector<32x64xbf16>
    %146 = arith.truncf %144 : vector<16x32xf32> to vector<16x32xbf16>
    %cst_43 = arith.constant dense<0.000000e+00> : vector<16x64xf32>
    %147 = tpu.matmul %146, %145, %cst_43 {dimension_numbers = #tpu.dot_dimension_numbers<[1], [0], [0], [1], [0, 0, 1, 1], [], []>} : vector<16x32xbf16>, vector<32x64xbf16>, vector<16x64xf32> -> vector<16x64xf32>
    %c2 = arith.constant 2 : index
    %c0_44 = arith.constant 0 : index
    %148 = vector.load %arg5[%c2, %c0_44] : memref<48x128xf32, #tpu.memory_space<vmem>>, vector<1x64xf32>
    %149 = vector.broadcast %148 : vector<1x64xf32> to vector<16x64xf32>
    %150 = arith.addf %147, %149 : vector<16x64xf32>
    %cst_45 = arith.constant 0.000000e+00 : f32
    %151 = vector.broadcast %cst_45 : f32 to vector<16x64xf32>
    %152 = arith.maximumf %150, %151 : vector<16x64xf32>
    %c96 = arith.constant 96 : index
    %c0_46 = arith.constant 0 : index
    %153 = vector.load %arg4[%c96, %c0_46] : memref<800x128xbf16, #tpu.memory_space<vmem>>, vector<64x32xbf16>
    %154 = arith.truncf %152 : vector<16x64xf32> to vector<16x64xbf16>
    %cst_47 = arith.constant dense<0.000000e+00> : vector<16x32xf32>
    %155 = tpu.matmul %154, %153, %cst_47 {dimension_numbers = #tpu.dot_dimension_numbers<[1], [0], [0], [1], [0, 0, 1, 1], [], []>} : vector<16x64xbf16>, vector<64x32xbf16>, vector<16x32xf32> -> vector<16x32xf32>
    %c3 = arith.constant 3 : index
    %c0_48 = arith.constant 0 : index
    %156 = vector.load %arg5[%c3, %c0_48] : memref<48x128xf32, #tpu.memory_space<vmem>>, vector<1x32xf32>
    %157 = vector.broadcast %156 : vector<1x32xf32> to vector<16x32xf32>
    %158 = arith.addf %155, %157 : vector<16x32xf32>
    %159 = arith.addf %144, %158 : vector<16x32xf32>
    %c6 = arith.constant 6 : index
    %c0_49 = arith.constant 0 : index
    %160 = vector.load %arg5[%c6, %c0_49] : memref<48x128xf32, #tpu.memory_space<vmem>>, vector<1x32xf32>
    %c7 = arith.constant 7 : index
    %c0_50 = arith.constant 0 : index
    %161 = vector.load %arg5[%c7, %c0_50] : memref<48x128xf32, #tpu.memory_space<vmem>>, vector<1x32xf32>
    %cst_51 = arith.constant dense<0.000000e+00> : vector<16xf32>
    %162 = vector.multi_reduction <add>, %159, %cst_51 [1] : vector<16x32xf32> to vector<16xf32>
    %163 = vector.shape_cast %162 : vector<16xf32> to vector<16x1xf32>
    %cst_52 = arith.constant 3.200000e+01 : f32
    %164 = vector.broadcast %cst_52 : f32 to vector<16x1xf32>
    %165 = arith.divf %163, %164 : vector<16x1xf32>
    %166 = vector.broadcast %165 : vector<16x1xf32> to vector<16x32xf32>
    %167 = arith.subf %159, %166 : vector<16x32xf32>
    %168 = arith.mulf %167, %167 : vector<16x32xf32>
    %cst_53 = arith.constant dense<0.000000e+00> : vector<16xf32>
    %169 = vector.multi_reduction <add>, %168, %cst_53 [1] : vector<16x32xf32> to vector<16xf32>
    %170 = vector.shape_cast %169 : vector<16xf32> to vector<16x1xf32>
    %cst_54 = arith.constant 3.200000e+01 : f32
    %171 = vector.broadcast %cst_54 : f32 to vector<16x1xf32>
    %172 = arith.divf %170, %171 : vector<16x1xf32>
    %cst_55 = arith.constant 9.99999974E-6 : f32
    %173 = vector.broadcast %cst_55 : f32 to vector<16x1xf32>
    %174 = arith.addf %172, %173 : vector<16x1xf32>
    %175 = math.rsqrt %174 : vector<16x1xf32>
    %176 = vector.broadcast %175 : vector<16x1xf32> to vector<16x32xf32>
    %177 = arith.mulf %167, %176 : vector<16x32xf32>
    %178 = vector.broadcast %160 : vector<1x32xf32> to vector<16x32xf32>
    %179 = arith.mulf %177, %178 : vector<16x32xf32>
    %180 = vector.broadcast %161 : vector<1x32xf32> to vector<16x32xf32>
    %181 = arith.addf %179, %180 : vector<16x32xf32>
    %c160 = arith.constant 160 : index
    %c0_56 = arith.constant 0 : index
    %182 = vector.load %arg4[%c160, %c0_56] : memref<800x128xbf16, #tpu.memory_space<vmem>>, vector<32x96xbf16>
    %c192 = arith.constant 192 : index
    %c0_57 = arith.constant 0 : index
    %183 = vector.load %arg4[%c192, %c0_57] : memref<800x128xbf16, #tpu.memory_space<vmem>>, vector<32x32xbf16>
    %c8 = arith.constant 8 : index
    %c0_58 = arith.constant 0 : index
    %184 = vector.load %arg5[%c8, %c0_58] : memref<48x128xf32, #tpu.memory_space<vmem>>, vector<1x96xf32>
    %c9 = arith.constant 9 : index
    %c0_59 = arith.constant 0 : index
    %185 = vector.load %arg5[%c9, %c0_59] : memref<48x128xf32, #tpu.memory_space<vmem>>, vector<1x32xf32>
    %186 = arith.truncf %181 : vector<16x32xf32> to vector<16x32xbf16>
    %cst_60 = arith.constant dense<0.000000e+00> : vector<16x96xf32>
    %187 = tpu.matmul %186, %182, %cst_60 {dimension_numbers = #tpu.dot_dimension_numbers<[1], [0], [0], [1], [0, 0, 1, 1], [], []>} : vector<16x32xbf16>, vector<32x96xbf16>, vector<16x96xf32> -> vector<16x96xf32>
    %188 = vector.broadcast %184 : vector<1x96xf32> to vector<16x96xf32>
    %189 = arith.addf %187, %188 : vector<16x96xf32>
    %190 = vector.extract_strided_slice %189 {offsets = [0, 0], sizes = [16, 32], strides = [1, 1]} : vector<16x96xf32> to vector<16x32xf32>
    %191 = vector.extract_strided_slice %189 {offsets = [0, 32], sizes = [16, 32], strides = [1, 1]} : vector<16x96xf32> to vector<16x32xf32>
    %192 = vector.extract_strided_slice %189 {offsets = [0, 64], sizes = [16, 32], strides = [1, 1]} : vector<16x96xf32> to vector<16x32xf32>
    %193 = vector.shape_cast %190 : vector<16x32xf32> to vector<2x8x32xf32>
    %194 = vector.shape_cast %191 : vector<16x32xf32> to vector<2x8x32xf32>
    %195 = vector.shape_cast %192 : vector<16x32xf32> to vector<2x8x32xf32>
    %196 = vector.extract_strided_slice %193 {offsets = [0, 0, 0], sizes = [2, 8, 8], strides = [1, 1, 1]} : vector<2x8x32xf32> to vector<2x8x8xf32>
    %197 = arith.truncf %196 : vector<2x8x8xf32> to vector<2x8x8xbf16>
    %198 = vector.extract_strided_slice %194 {offsets = [0, 0, 0], sizes = [2, 8, 8], strides = [1, 1, 1]} : vector<2x8x32xf32> to vector<2x8x8xf32>
    %199 = arith.truncf %198 : vector<2x8x8xf32> to vector<2x8x8xbf16>
    %200 = vector.extract_strided_slice %195 {offsets = [0, 0, 0], sizes = [2, 8, 8], strides = [1, 1, 1]} : vector<2x8x32xf32> to vector<2x8x8xf32>
    %201 = arith.truncf %200 : vector<2x8x8xf32> to vector<2x8x8xbf16>
    "tpu.trace_start"() <{level = 10 : i32, message = "bqd,bkd->bqk"}> : () -> ()
    %cst_61 = arith.constant dense<0.000000e+00> : vector<2x8x8xf32>
    %202 = tpu.matmul %197, %199, %cst_61 {dimension_numbers = #tpu.dot_dimension_numbers<[2], [2], [1], [1], [0, 0, 0, 1, 1, 1], [0], [0]>} : vector<2x8x8xbf16>, vector<2x8x8xbf16>, vector<2x8x8xf32> -> vector<2x8x8xf32>
    "tpu.trace_stop"() : () -> ()
    %cst_62 = arith.constant 0.353553385 : f32
    %203 = vector.broadcast %cst_62 : f32 to vector<2x8x8xf32>
    %204 = arith.mulf %202, %203 : vector<2x8x8xf32>
    %205 = vector.broadcast %2 : vector<2x1x8xf32> to vector<2x8x8xf32>
    %206 = arith.addf %204, %205 : vector<2x8x8xf32>
    %cst_63 = arith.constant dense<0xFF800000> : vector<2x8xf32>
    %207 = vector.multi_reduction <maximumf>, %206, %cst_63 [2] : vector<2x8x8xf32> to vector<2x8xf32>
    %208 = vector.shape_cast %207 : vector<2x8xf32> to vector<2x8x1xf32>
    %209 = vector.broadcast %208 : vector<2x8x1xf32> to vector<2x8x8xf32>
    %210 = arith.subf %206, %209 : vector<2x8x8xf32>
    %211 = math.exp %210 : vector<2x8x8xf32>
    %cst_64 = arith.constant dense<0.000000e+00> : vector<2x8xf32>
    %212 = vector.multi_reduction <add>, %211, %cst_64 [2] : vector<2x8x8xf32> to vector<2x8xf32>
    %213 = vector.shape_cast %212 : vector<2x8xf32> to vector<2x8x1xf32>
    %214 = arith.truncf %211 : vector<2x8x8xf32> to vector<2x8x8xbf16>
    "tpu.trace_start"() <{level = 10 : i32, message = "bqk,bkd->bqd"}> : () -> ()
    %cst_65 = arith.constant dense<0.000000e+00> : vector<2x8x8xf32>
    %215 = tpu.matmul %214, %201, %cst_65 {dimension_numbers = #tpu.dot_dimension_numbers<[2], [1], [1], [2], [0, 0, 0, 1, 1, 2], [0], [0]>} : vector<2x8x8xbf16>, vector<2x8x8xbf16>, vector<2x8x8xf32> -> vector<2x8x8xf32>
    "tpu.trace_stop"() : () -> ()
    %216 = tpu.reciprocal %213 {approx = true} : vector<2x8x1xf32> -> vector<2x8x1xf32>
    %217 = vector.broadcast %216 : vector<2x8x1xf32> to vector<2x8x8xf32>
    %218 = arith.mulf %215, %217 : vector<2x8x8xf32>
    %219 = vector.extract_strided_slice %193 {offsets = [0, 0, 8], sizes = [2, 8, 8], strides = [1, 1, 1]} : vector<2x8x32xf32> to vector<2x8x8xf32>
    %220 = arith.truncf %219 : vector<2x8x8xf32> to vector<2x8x8xbf16>
    %221 = vector.extract_strided_slice %194 {offsets = [0, 0, 8], sizes = [2, 8, 8], strides = [1, 1, 1]} : vector<2x8x32xf32> to vector<2x8x8xf32>
    %222 = arith.truncf %221 : vector<2x8x8xf32> to vector<2x8x8xbf16>
    %223 = vector.extract_strided_slice %195 {offsets = [0, 0, 8], sizes = [2, 8, 8], strides = [1, 1, 1]} : vector<2x8x32xf32> to vector<2x8x8xf32>
    %224 = arith.truncf %223 : vector<2x8x8xf32> to vector<2x8x8xbf16>
    "tpu.trace_start"() <{level = 10 : i32, message = "bqd,bkd->bqk"}> : () -> ()
    %cst_66 = arith.constant dense<0.000000e+00> : vector<2x8x8xf32>
    %225 = tpu.matmul %220, %222, %cst_66 {dimension_numbers = #tpu.dot_dimension_numbers<[2], [2], [1], [1], [0, 0, 0, 1, 1, 1], [0], [0]>} : vector<2x8x8xbf16>, vector<2x8x8xbf16>, vector<2x8x8xf32> -> vector<2x8x8xf32>
    "tpu.trace_stop"() : () -> ()
    %cst_67 = arith.constant 0.353553385 : f32
    %226 = vector.broadcast %cst_67 : f32 to vector<2x8x8xf32>
    %227 = arith.mulf %225, %226 : vector<2x8x8xf32>
    %228 = vector.broadcast %2 : vector<2x1x8xf32> to vector<2x8x8xf32>
    %229 = arith.addf %227, %228 : vector<2x8x8xf32>
    %cst_68 = arith.constant dense<0xFF800000> : vector<2x8xf32>
    %230 = vector.multi_reduction <maximumf>, %229, %cst_68 [2] : vector<2x8x8xf32> to vector<2x8xf32>
    %231 = vector.shape_cast %230 : vector<2x8xf32> to vector<2x8x1xf32>
    %232 = vector.broadcast %231 : vector<2x8x1xf32> to vector<2x8x8xf32>
    %233 = arith.subf %229, %232 : vector<2x8x8xf32>
    %234 = math.exp %233 : vector<2x8x8xf32>
    %cst_69 = arith.constant dense<0.000000e+00> : vector<2x8xf32>
    %235 = vector.multi_reduction <add>, %234, %cst_69 [2] : vector<2x8x8xf32> to vector<2x8xf32>
    %236 = vector.shape_cast %235 : vector<2x8xf32> to vector<2x8x1xf32>
    %237 = arith.truncf %234 : vector<2x8x8xf32> to vector<2x8x8xbf16>
    "tpu.trace_start"() <{level = 10 : i32, message = "bqk,bkd->bqd"}> : () -> ()
    %cst_70 = arith.constant dense<0.000000e+00> : vector<2x8x8xf32>
    %238 = tpu.matmul %237, %224, %cst_70 {dimension_numbers = #tpu.dot_dimension_numbers<[2], [1], [1], [2], [0, 0, 0, 1, 1, 2], [0], [0]>} : vector<2x8x8xbf16>, vector<2x8x8xbf16>, vector<2x8x8xf32> -> vector<2x8x8xf32>
    "tpu.trace_stop"() : () -> ()
    %239 = tpu.reciprocal %236 {approx = true} : vector<2x8x1xf32> -> vector<2x8x1xf32>
    %240 = vector.broadcast %239 : vector<2x8x1xf32> to vector<2x8x8xf32>
    %241 = arith.mulf %238, %240 : vector<2x8x8xf32>
    %242 = vector.extract_strided_slice %193 {offsets = [0, 0, 16], sizes = [2, 8, 8], strides = [1, 1, 1]} : vector<2x8x32xf32> to vector<2x8x8xf32>
    %243 = arith.truncf %242 : vector<2x8x8xf32> to vector<2x8x8xbf16>
    %244 = vector.extract_strided_slice %194 {offsets = [0, 0, 16], sizes = [2, 8, 8], strides = [1, 1, 1]} : vector<2x8x32xf32> to vector<2x8x8xf32>
    %245 = arith.truncf %244 : vector<2x8x8xf32> to vector<2x8x8xbf16>
    %246 = vector.extract_strided_slice %195 {offsets = [0, 0, 16], sizes = [2, 8, 8], strides = [1, 1, 1]} : vector<2x8x32xf32> to vector<2x8x8xf32>
    %247 = arith.truncf %246 : vector<2x8x8xf32> to vector<2x8x8xbf16>
    "tpu.trace_start"() <{level = 10 : i32, message = "bqd,bkd->bqk"}> : () -> ()
    %cst_71 = arith.constant dense<0.000000e+00> : vector<2x8x8xf32>
    %248 = tpu.matmul %243, %245, %cst_71 {dimension_numbers = #tpu.dot_dimension_numbers<[2], [2], [1], [1], [0, 0, 0, 1, 1, 1], [0], [0]>} : vector<2x8x8xbf16>, vector<2x8x8xbf16>, vector<2x8x8xf32> -> vector<2x8x8xf32>
    "tpu.trace_stop"() : () -> ()
    %cst_72 = arith.constant 0.353553385 : f32
    %249 = vector.broadcast %cst_72 : f32 to vector<2x8x8xf32>
    %250 = arith.mulf %248, %249 : vector<2x8x8xf32>
    %251 = vector.broadcast %2 : vector<2x1x8xf32> to vector<2x8x8xf32>
    %252 = arith.addf %250, %251 : vector<2x8x8xf32>
    %cst_73 = arith.constant dense<0xFF800000> : vector<2x8xf32>
    %253 = vector.multi_reduction <maximumf>, %252, %cst_73 [2] : vector<2x8x8xf32> to vector<2x8xf32>
    %254 = vector.shape_cast %253 : vector<2x8xf32> to vector<2x8x1xf32>
    %255 = vector.broadcast %254 : vector<2x8x1xf32> to vector<2x8x8xf32>
    %256 = arith.subf %252, %255 : vector<2x8x8xf32>
    %257 = math.exp %256 : vector<2x8x8xf32>
    %cst_74 = arith.constant dense<0.000000e+00> : vector<2x8xf32>
    %258 = vector.multi_reduction <add>, %257, %cst_74 [2] : vector<2x8x8xf32> to vector<2x8xf32>
    %259 = vector.shape_cast %258 : vector<2x8xf32> to vector<2x8x1xf32>
    %260 = arith.truncf %257 : vector<2x8x8xf32> to vector<2x8x8xbf16>
    "tpu.trace_start"() <{level = 10 : i32, message = "bqk,bkd->bqd"}> : () -> ()
    %cst_75 = arith.constant dense<0.000000e+00> : vector<2x8x8xf32>
    %261 = tpu.matmul %260, %247, %cst_75 {dimension_numbers = #tpu.dot_dimension_numbers<[2], [1], [1], [2], [0, 0, 0, 1, 1, 2], [0], [0]>} : vector<2x8x8xbf16>, vector<2x8x8xbf16>, vector<2x8x8xf32> -> vector<2x8x8xf32>
    "tpu.trace_stop"() : () -> ()
    %262 = tpu.reciprocal %259 {approx = true} : vector<2x8x1xf32> -> vector<2x8x1xf32>
    %263 = vector.broadcast %262 : vector<2x8x1xf32> to vector<2x8x8xf32>
    %264 = arith.mulf %261, %263 : vector<2x8x8xf32>
    %265 = vector.extract_strided_slice %193 {offsets = [0, 0, 24], sizes = [2, 8, 8], strides = [1, 1, 1]} : vector<2x8x32xf32> to vector<2x8x8xf32>
    %266 = arith.truncf %265 : vector<2x8x8xf32> to vector<2x8x8xbf16>
    %267 = vector.extract_strided_slice %194 {offsets = [0, 0, 24], sizes = [2, 8, 8], strides = [1, 1, 1]} : vector<2x8x32xf32> to vector<2x8x8xf32>
    %268 = arith.truncf %267 : vector<2x8x8xf32> to vector<2x8x8xbf16>
    %269 = vector.extract_strided_slice %195 {offsets = [0, 0, 24], sizes = [2, 8, 8], strides = [1, 1, 1]} : vector<2x8x32xf32> to vector<2x8x8xf32>
    %270 = arith.truncf %269 : vector<2x8x8xf32> to vector<2x8x8xbf16>
    "tpu.trace_start"() <{level = 10 : i32, message = "bqd,bkd->bqk"}> : () -> ()
    %cst_76 = arith.constant dense<0.000000e+00> : vector<2x8x8xf32>
    %271 = tpu.matmul %266, %268, %cst_76 {dimension_numbers = #tpu.dot_dimension_numbers<[2], [2], [1], [1], [0, 0, 0, 1, 1, 1], [0], [0]>} : vector<2x8x8xbf16>, vector<2x8x8xbf16>, vector<2x8x8xf32> -> vector<2x8x8xf32>
    "tpu.trace_stop"() : () -> ()
    %cst_77 = arith.constant 0.353553385 : f32
    %272 = vector.broadcast %cst_77 : f32 to vector<2x8x8xf32>
    %273 = arith.mulf %271, %272 : vector<2x8x8xf32>
    %274 = vector.broadcast %2 : vector<2x1x8xf32> to vector<2x8x8xf32>
    %275 = arith.addf %273, %274 : vector<2x8x8xf32>
    %cst_78 = arith.constant dense<0xFF800000> : vector<2x8xf32>
    %276 = vector.multi_reduction <maximumf>, %275, %cst_78 [2] : vector<2x8x8xf32> to vector<2x8xf32>
    %277 = vector.shape_cast %276 : vector<2x8xf32> to vector<2x8x1xf32>
    %278 = vector.broadcast %277 : vector<2x8x1xf32> to vector<2x8x8xf32>
    %279 = arith.subf %275, %278 : vector<2x8x8xf32>
    %280 = math.exp %279 : vector<2x8x8xf32>
    %cst_79 = arith.constant dense<0.000000e+00> : vector<2x8xf32>
    %281 = vector.multi_reduction <add>, %280, %cst_79 [2] : vector<2x8x8xf32> to vector<2x8xf32>
    %282 = vector.shape_cast %281 : vector<2x8xf32> to vector<2x8x1xf32>
    %283 = arith.truncf %280 : vector<2x8x8xf32> to vector<2x8x8xbf16>
    "tpu.trace_start"() <{level = 10 : i32, message = "bqk,bkd->bqd"}> : () -> ()
    %cst_80 = arith.constant dense<0.000000e+00> : vector<2x8x8xf32>
    %284 = tpu.matmul %283, %270, %cst_80 {dimension_numbers = #tpu.dot_dimension_numbers<[2], [1], [1], [2], [0, 0, 0, 1, 1, 2], [0], [0]>} : vector<2x8x8xbf16>, vector<2x8x8xbf16>, vector<2x8x8xf32> -> vector<2x8x8xf32>
    "tpu.trace_stop"() : () -> ()
    %285 = tpu.reciprocal %282 {approx = true} : vector<2x8x1xf32> -> vector<2x8x1xf32>
    %286 = vector.broadcast %285 : vector<2x8x1xf32> to vector<2x8x8xf32>
    %287 = arith.mulf %284, %286 : vector<2x8x8xf32>
    %288 = tpu.concatenate %218, %241, %264, %287 in 2 : vector<2x8x8xf32>, vector<2x8x8xf32>, vector<2x8x8xf32>, vector<2x8x8xf32> -> vector<2x8x32xf32>
    %289 = vector.shape_cast %288 : vector<2x8x32xf32> to vector<16x32xf32>
    %290 = arith.truncf %289 : vector<16x32xf32> to vector<16x32xbf16>
    %cst_81 = arith.constant dense<0.000000e+00> : vector<16x32xf32>
    %291 = tpu.matmul %290, %183, %cst_81 {dimension_numbers = #tpu.dot_dimension_numbers<[1], [0], [0], [1], [0, 0, 1, 1], [], []>} : vector<16x32xbf16>, vector<32x32xbf16>, vector<16x32xf32> -> vector<16x32xf32>
    %292 = vector.broadcast %185 : vector<1x32xf32> to vector<16x32xf32>
    %293 = arith.addf %291, %292 : vector<16x32xf32>
    %294 = arith.addf %181, %293 : vector<16x32xf32>
    %c12 = arith.constant 12 : index
    %c0_82 = arith.constant 0 : index
    %295 = vector.load %arg5[%c12, %c0_82] : memref<48x128xf32, #tpu.memory_space<vmem>>, vector<1x32xf32>
    %c13 = arith.constant 13 : index
    %c0_83 = arith.constant 0 : index
    %296 = vector.load %arg5[%c13, %c0_83] : memref<48x128xf32, #tpu.memory_space<vmem>>, vector<1x32xf32>
    %cst_84 = arith.constant dense<0.000000e+00> : vector<16xf32>
    %297 = vector.multi_reduction <add>, %294, %cst_84 [1] : vector<16x32xf32> to vector<16xf32>
    %298 = vector.shape_cast %297 : vector<16xf32> to vector<16x1xf32>
    %cst_85 = arith.constant 3.200000e+01 : f32
    %299 = vector.broadcast %cst_85 : f32 to vector<16x1xf32>
    %300 = arith.divf %298, %299 : vector<16x1xf32>
    %301 = vector.broadcast %300 : vector<16x1xf32> to vector<16x32xf32>
    %302 = arith.subf %294, %301 : vector<16x32xf32>
    %303 = arith.mulf %302, %302 : vector<16x32xf32>
    %cst_86 = arith.constant dense<0.000000e+00> : vector<16xf32>
    %304 = vector.multi_reduction <add>, %303, %cst_86 [1] : vector<16x32xf32> to vector<16xf32>
    %305 = vector.shape_cast %304 : vector<16xf32> to vector<16x1xf32>
    %cst_87 = arith.constant 3.200000e+01 : f32
    %306 = vector.broadcast %cst_87 : f32 to vector<16x1xf32>
    %307 = arith.divf %305, %306 : vector<16x1xf32>
    %cst_88 = arith.constant 9.99999974E-6 : f32
    %308 = vector.broadcast %cst_88 : f32 to vector<16x1xf32>
    %309 = arith.addf %307, %308 : vector<16x1xf32>
    %310 = math.rsqrt %309 : vector<16x1xf32>
    %311 = vector.broadcast %310 : vector<16x1xf32> to vector<16x32xf32>
    %312 = arith.mulf %302, %311 : vector<16x32xf32>
    %313 = vector.broadcast %295 : vector<1x32xf32> to vector<16x32xf32>
    %314 = arith.mulf %312, %313 : vector<16x32xf32>
    %315 = vector.broadcast %296 : vector<1x32xf32> to vector<16x32xf32>
    %316 = arith.addf %314, %315 : vector<16x32xf32>
    %c224 = arith.constant 224 : index
    %c0_89 = arith.constant 0 : index
    %317 = vector.load %arg4[%c224, %c0_89] : memref<800x128xbf16, #tpu.memory_space<vmem>>, vector<32x64xbf16>
    %318 = arith.truncf %316 : vector<16x32xf32> to vector<16x32xbf16>
    %cst_90 = arith.constant dense<0.000000e+00> : vector<16x64xf32>
    %319 = tpu.matmul %318, %317, %cst_90 {dimension_numbers = #tpu.dot_dimension_numbers<[1], [0], [0], [1], [0, 0, 1, 1], [], []>} : vector<16x32xbf16>, vector<32x64xbf16>, vector<16x64xf32> -> vector<16x64xf32>
    %c10 = arith.constant 10 : index
    %c0_91 = arith.constant 0 : index
    %320 = vector.load %arg5[%c10, %c0_91] : memref<48x128xf32, #tpu.memory_space<vmem>>, vector<1x64xf32>
    %321 = vector.broadcast %320 : vector<1x64xf32> to vector<16x64xf32>
    %322 = arith.addf %319, %321 : vector<16x64xf32>
    %cst_92 = arith.constant 0.000000e+00 : f32
    %323 = vector.broadcast %cst_92 : f32 to vector<16x64xf32>
    %324 = arith.maximumf %322, %323 : vector<16x64xf32>
    %c256 = arith.constant 256 : index
    %c0_93 = arith.constant 0 : index
    %325 = vector.load %arg4[%c256, %c0_93] : memref<800x128xbf16, #tpu.memory_space<vmem>>, vector<64x32xbf16>
    %326 = arith.truncf %324 : vector<16x64xf32> to vector<16x64xbf16>
    %cst_94 = arith.constant dense<0.000000e+00> : vector<16x32xf32>
    %327 = tpu.matmul %326, %325, %cst_94 {dimension_numbers = #tpu.dot_dimension_numbers<[1], [0], [0], [1], [0, 0, 1, 1], [], []>} : vector<16x64xbf16>, vector<64x32xbf16>, vector<16x32xf32> -> vector<16x32xf32>
    %c11 = arith.constant 11 : index
    %c0_95 = arith.constant 0 : index
    %328 = vector.load %arg5[%c11, %c0_95] : memref<48x128xf32, #tpu.memory_space<vmem>>, vector<1x32xf32>
    %329 = vector.broadcast %328 : vector<1x32xf32> to vector<16x32xf32>
    %330 = arith.addf %327, %329 : vector<16x32xf32>
    %331 = arith.addf %316, %330 : vector<16x32xf32>
    %c14 = arith.constant 14 : index
    %c0_96 = arith.constant 0 : index
    %332 = vector.load %arg5[%c14, %c0_96] : memref<48x128xf32, #tpu.memory_space<vmem>>, vector<1x32xf32>
    %c15 = arith.constant 15 : index
    %c0_97 = arith.constant 0 : index
    %333 = vector.load %arg5[%c15, %c0_97] : memref<48x128xf32, #tpu.memory_space<vmem>>, vector<1x32xf32>
    %cst_98 = arith.constant dense<0.000000e+00> : vector<16xf32>
    %334 = vector.multi_reduction <add>, %331, %cst_98 [1] : vector<16x32xf32> to vector<16xf32>
    %335 = vector.shape_cast %334 : vector<16xf32> to vector<16x1xf32>
    %cst_99 = arith.constant 3.200000e+01 : f32
    %336 = vector.broadcast %cst_99 : f32 to vector<16x1xf32>
    %337 = arith.divf %335, %336 : vector<16x1xf32>
    %338 = vector.broadcast %337 : vector<16x1xf32> to vector<16x32xf32>
    %339 = arith.subf %331, %338 : vector<16x32xf32>
    %340 = arith.mulf %339, %339 : vector<16x32xf32>
    %cst_100 = arith.constant dense<0.000000e+00> : vector<16xf32>
    %341 = vector.multi_reduction <add>, %340, %cst_100 [1] : vector<16x32xf32> to vector<16xf32>
    %342 = vector.shape_cast %341 : vector<16xf32> to vector<16x1xf32>
    %cst_101 = arith.constant 3.200000e+01 : f32
    %343 = vector.broadcast %cst_101 : f32 to vector<16x1xf32>
    %344 = arith.divf %342, %343 : vector<16x1xf32>
    %cst_102 = arith.constant 9.99999974E-6 : f32
    %345 = vector.broadcast %cst_102 : f32 to vector<16x1xf32>
    %346 = arith.addf %344, %345 : vector<16x1xf32>
    %347 = math.rsqrt %346 : vector<16x1xf32>
    %348 = vector.broadcast %347 : vector<16x1xf32> to vector<16x32xf32>
    %349 = arith.mulf %339, %348 : vector<16x32xf32>
    %350 = vector.broadcast %332 : vector<1x32xf32> to vector<16x32xf32>
    %351 = arith.mulf %349, %350 : vector<16x32xf32>
    %352 = vector.broadcast %333 : vector<1x32xf32> to vector<16x32xf32>
    %353 = arith.addf %351, %352 : vector<16x32xf32>
    %c40 = arith.constant 40 : index
    %c0_103 = arith.constant 0 : index
    %354 = vector.load %arg5[%c40, %c0_103] : memref<48x128xf32, #tpu.memory_space<vmem>>, vector<1x32xf32>
    %c41 = arith.constant 41 : index
    %c0_104 = arith.constant 0 : index
    %355 = vector.load %arg5[%c41, %c0_104] : memref<48x128xf32, #tpu.memory_space<vmem>>, vector<1x32xf32>
    %cst_105 = arith.constant dense<0.000000e+00> : vector<16xf32>
    %356 = vector.multi_reduction <add>, %353, %cst_105 [1] : vector<16x32xf32> to vector<16xf32>
    %357 = vector.shape_cast %356 : vector<16xf32> to vector<16x1xf32>
    %cst_106 = arith.constant 3.200000e+01 : f32
    %358 = vector.broadcast %cst_106 : f32 to vector<16x1xf32>
    %359 = arith.divf %357, %358 : vector<16x1xf32>
    %360 = vector.broadcast %359 : vector<16x1xf32> to vector<16x32xf32>
    %361 = arith.subf %353, %360 : vector<16x32xf32>
    %362 = arith.mulf %361, %361 : vector<16x32xf32>
    %cst_107 = arith.constant dense<0.000000e+00> : vector<16xf32>
    %363 = vector.multi_reduction <add>, %362, %cst_107 [1] : vector<16x32xf32> to vector<16xf32>
    %364 = vector.shape_cast %363 : vector<16xf32> to vector<16x1xf32>
    %cst_108 = arith.constant 3.200000e+01 : f32
    %365 = vector.broadcast %cst_108 : f32 to vector<16x1xf32>
    %366 = arith.divf %364, %365 : vector<16x1xf32>
    %cst_109 = arith.constant 9.99999974E-6 : f32
    %367 = vector.broadcast %cst_109 : f32 to vector<16x1xf32>
    %368 = arith.addf %366, %367 : vector<16x1xf32>
    %369 = math.rsqrt %368 : vector<16x1xf32>
    %370 = vector.broadcast %369 : vector<16x1xf32> to vector<16x32xf32>
    %371 = arith.mulf %361, %370 : vector<16x32xf32>
    %372 = vector.broadcast %354 : vector<1x32xf32> to vector<16x32xf32>
    %373 = arith.mulf %371, %372 : vector<16x32xf32>
    %374 = vector.broadcast %355 : vector<1x32xf32> to vector<16x32xf32>
    %375 = arith.addf %373, %374 : vector<16x32xf32>
    %c320 = arith.constant 320 : index
    %c0_110 = arith.constant 0 : index
    %376 = vector.load %arg4[%c320, %c0_110] : memref<800x128xbf16, #tpu.memory_space<vmem>>, vector<32x96xbf16>
    %c352 = arith.constant 352 : index
    %c0_111 = arith.constant 0 : index
    %377 = vector.load %arg4[%c352, %c0_111] : memref<800x128xbf16, #tpu.memory_space<vmem>>, vector<32x32xbf16>
    %c16 = arith.constant 16 : index
    %c0_112 = arith.constant 0 : index
    %378 = vector.load %arg5[%c16, %c0_112] : memref<48x128xf32, #tpu.memory_space<vmem>>, vector<1x96xf32>
    %c17 = arith.constant 17 : index
    %c0_113 = arith.constant 0 : index
    %379 = vector.load %arg5[%c17, %c0_113] : memref<48x128xf32, #tpu.memory_space<vmem>>, vector<1x32xf32>
    %380 = arith.truncf %1 : vector<16x32xf32> to vector<16x32xbf16>
    %cst_114 = arith.constant dense<0.000000e+00> : vector<16x96xf32>
    %381 = tpu.matmul %380, %376, %cst_114 {dimension_numbers = #tpu.dot_dimension_numbers<[1], [0], [0], [1], [0, 0, 1, 1], [], []>} : vector<16x32xbf16>, vector<32x96xbf16>, vector<16x96xf32> -> vector<16x96xf32>
    %382 = vector.broadcast %378 : vector<1x96xf32> to vector<16x96xf32>
    %383 = arith.addf %381, %382 : vector<16x96xf32>
    %384 = vector.extract_strided_slice %383 {offsets = [0, 0], sizes = [16, 32], strides = [1, 1]} : vector<16x96xf32> to vector<16x32xf32>
    %385 = vector.extract_strided_slice %383 {offsets = [0, 32], sizes = [16, 32], strides = [1, 1]} : vector<16x96xf32> to vector<16x32xf32>
    %386 = vector.extract_strided_slice %383 {offsets = [0, 64], sizes = [16, 32], strides = [1, 1]} : vector<16x96xf32> to vector<16x32xf32>
    %387 = vector.shape_cast %384 : vector<16x32xf32> to vector<2x8x32xf32>
    %388 = vector.shape_cast %385 : vector<16x32xf32> to vector<2x8x32xf32>
    %389 = vector.shape_cast %386 : vector<16x32xf32> to vector<2x8x32xf32>
    %390 = vector.extract_strided_slice %387 {offsets = [0, 0, 0], sizes = [2, 8, 8], strides = [1, 1, 1]} : vector<2x8x32xf32> to vector<2x8x8xf32>
    %391 = arith.truncf %390 : vector<2x8x8xf32> to vector<2x8x8xbf16>
    %392 = vector.extract_strided_slice %388 {offsets = [0, 0, 0], sizes = [2, 8, 8], strides = [1, 1, 1]} : vector<2x8x32xf32> to vector<2x8x8xf32>
    %393 = arith.truncf %392 : vector<2x8x8xf32> to vector<2x8x8xbf16>
    %394 = vector.extract_strided_slice %389 {offsets = [0, 0, 0], sizes = [2, 8, 8], strides = [1, 1, 1]} : vector<2x8x32xf32> to vector<2x8x8xf32>
    %395 = arith.truncf %394 : vector<2x8x8xf32> to vector<2x8x8xbf16>
    "tpu.trace_start"() <{level = 10 : i32, message = "bqd,bkd->bqk"}> : () -> ()
    %cst_115 = arith.constant dense<0.000000e+00> : vector<2x8x8xf32>
    %396 = tpu.matmul %391, %393, %cst_115 {dimension_numbers = #tpu.dot_dimension_numbers<[2], [2], [1], [1], [0, 0, 0, 1, 1, 1], [0], [0]>} : vector<2x8x8xbf16>, vector<2x8x8xbf16>, vector<2x8x8xf32> -> vector<2x8x8xf32>
    "tpu.trace_stop"() : () -> ()
    %cst_116 = arith.constant 0.353553385 : f32
    %397 = vector.broadcast %cst_116 : f32 to vector<2x8x8xf32>
    %398 = arith.mulf %396, %397 : vector<2x8x8xf32>
    %399 = vector.broadcast %9 : vector<1x8x8xf32> to vector<2x8x8xf32>
    %400 = arith.addf %398, %399 : vector<2x8x8xf32>
    %cst_117 = arith.constant dense<0xFF800000> : vector<2x8xf32>
    %401 = vector.multi_reduction <maximumf>, %400, %cst_117 [2] : vector<2x8x8xf32> to vector<2x8xf32>
    %402 = vector.shape_cast %401 : vector<2x8xf32> to vector<2x8x1xf32>
    %403 = vector.broadcast %402 : vector<2x8x1xf32> to vector<2x8x8xf32>
    %404 = arith.subf %400, %403 : vector<2x8x8xf32>
    %405 = math.exp %404 : vector<2x8x8xf32>
    %cst_118 = arith.constant dense<0.000000e+00> : vector<2x8xf32>
    %406 = vector.multi_reduction <add>, %405, %cst_118 [2] : vector<2x8x8xf32> to vector<2x8xf32>
    %407 = vector.shape_cast %406 : vector<2x8xf32> to vector<2x8x1xf32>
    %408 = arith.truncf %405 : vector<2x8x8xf32> to vector<2x8x8xbf16>
    "tpu.trace_start"() <{level = 10 : i32, message = "bqk,bkd->bqd"}> : () -> ()
    %cst_119 = arith.constant dense<0.000000e+00> : vector<2x8x8xf32>
    %409 = tpu.matmul %408, %395, %cst_119 {dimension_numbers = #tpu.dot_dimension_numbers<[2], [1], [1], [2], [0, 0, 0, 1, 1, 2], [0], [0]>} : vector<2x8x8xbf16>, vector<2x8x8xbf16>, vector<2x8x8xf32> -> vector<2x8x8xf32>
    "tpu.trace_stop"() : () -> ()
    %410 = tpu.reciprocal %407 {approx = true} : vector<2x8x1xf32> -> vector<2x8x1xf32>
    %411 = vector.broadcast %410 : vector<2x8x1xf32> to vector<2x8x8xf32>
    %412 = arith.mulf %409, %411 : vector<2x8x8xf32>
    %413 = vector.extract_strided_slice %387 {offsets = [0, 0, 8], sizes = [2, 8, 8], strides = [1, 1, 1]} : vector<2x8x32xf32> to vector<2x8x8xf32>
    %414 = arith.truncf %413 : vector<2x8x8xf32> to vector<2x8x8xbf16>
    %415 = vector.extract_strided_slice %388 {offsets = [0, 0, 8], sizes = [2, 8, 8], strides = [1, 1, 1]} : vector<2x8x32xf32> to vector<2x8x8xf32>
    %416 = arith.truncf %415 : vector<2x8x8xf32> to vector<2x8x8xbf16>
    %417 = vector.extract_strided_slice %389 {offsets = [0, 0, 8], sizes = [2, 8, 8], strides = [1, 1, 1]} : vector<2x8x32xf32> to vector<2x8x8xf32>
    %418 = arith.truncf %417 : vector<2x8x8xf32> to vector<2x8x8xbf16>
    "tpu.trace_start"() <{level = 10 : i32, message = "bqd,bkd->bqk"}> : () -> ()
    %cst_120 = arith.constant dense<0.000000e+00> : vector<2x8x8xf32>
    %419 = tpu.matmul %414, %416, %cst_120 {dimension_numbers = #tpu.dot_dimension_numbers<[2], [2], [1], [1], [0, 0, 0, 1, 1, 1], [0], [0]>} : vector<2x8x8xbf16>, vector<2x8x8xbf16>, vector<2x8x8xf32> -> vector<2x8x8xf32>
    "tpu.trace_stop"() : () -> ()
    %cst_121 = arith.constant 0.353553385 : f32
    %420 = vector.broadcast %cst_121 : f32 to vector<2x8x8xf32>
    %421 = arith.mulf %419, %420 : vector<2x8x8xf32>
    %422 = vector.broadcast %9 : vector<1x8x8xf32> to vector<2x8x8xf32>
    %423 = arith.addf %421, %422 : vector<2x8x8xf32>
    %cst_122 = arith.constant dense<0xFF800000> : vector<2x8xf32>
    %424 = vector.multi_reduction <maximumf>, %423, %cst_122 [2] : vector<2x8x8xf32> to vector<2x8xf32>
    %425 = vector.shape_cast %424 : vector<2x8xf32> to vector<2x8x1xf32>
    %426 = vector.broadcast %425 : vector<2x8x1xf32> to vector<2x8x8xf32>
    %427 = arith.subf %423, %426 : vector<2x8x8xf32>
    %428 = math.exp %427 : vector<2x8x8xf32>
    %cst_123 = arith.constant dense<0.000000e+00> : vector<2x8xf32>
    %429 = vector.multi_reduction <add>, %428, %cst_123 [2] : vector<2x8x8xf32> to vector<2x8xf32>
    %430 = vector.shape_cast %429 : vector<2x8xf32> to vector<2x8x1xf32>
    %431 = arith.truncf %428 : vector<2x8x8xf32> to vector<2x8x8xbf16>
    "tpu.trace_start"() <{level = 10 : i32, message = "bqk,bkd->bqd"}> : () -> ()
    %cst_124 = arith.constant dense<0.000000e+00> : vector<2x8x8xf32>
    %432 = tpu.matmul %431, %418, %cst_124 {dimension_numbers = #tpu.dot_dimension_numbers<[2], [1], [1], [2], [0, 0, 0, 1, 1, 2], [0], [0]>} : vector<2x8x8xbf16>, vector<2x8x8xbf16>, vector<2x8x8xf32> -> vector<2x8x8xf32>
    "tpu.trace_stop"() : () -> ()
    %433 = tpu.reciprocal %430 {approx = true} : vector<2x8x1xf32> -> vector<2x8x1xf32>
    %434 = vector.broadcast %433 : vector<2x8x1xf32> to vector<2x8x8xf32>
    %435 = arith.mulf %432, %434 : vector<2x8x8xf32>
    %436 = vector.extract_strided_slice %387 {offsets = [0, 0, 16], sizes = [2, 8, 8], strides = [1, 1, 1]} : vector<2x8x32xf32> to vector<2x8x8xf32>
    %437 = arith.truncf %436 : vector<2x8x8xf32> to vector<2x8x8xbf16>
    %438 = vector.extract_strided_slice %388 {offsets = [0, 0, 16], sizes = [2, 8, 8], strides = [1, 1, 1]} : vector<2x8x32xf32> to vector<2x8x8xf32>
    %439 = arith.truncf %438 : vector<2x8x8xf32> to vector<2x8x8xbf16>
    %440 = vector.extract_strided_slice %389 {offsets = [0, 0, 16], sizes = [2, 8, 8], strides = [1, 1, 1]} : vector<2x8x32xf32> to vector<2x8x8xf32>
    %441 = arith.truncf %440 : vector<2x8x8xf32> to vector<2x8x8xbf16>
    "tpu.trace_start"() <{level = 10 : i32, message = "bqd,bkd->bqk"}> : () -> ()
    %cst_125 = arith.constant dense<0.000000e+00> : vector<2x8x8xf32>
    %442 = tpu.matmul %437, %439, %cst_125 {dimension_numbers = #tpu.dot_dimension_numbers<[2], [2], [1], [1], [0, 0, 0, 1, 1, 1], [0], [0]>} : vector<2x8x8xbf16>, vector<2x8x8xbf16>, vector<2x8x8xf32> -> vector<2x8x8xf32>
    "tpu.trace_stop"() : () -> ()
    %cst_126 = arith.constant 0.353553385 : f32
    %443 = vector.broadcast %cst_126 : f32 to vector<2x8x8xf32>
    %444 = arith.mulf %442, %443 : vector<2x8x8xf32>
    %445 = vector.broadcast %9 : vector<1x8x8xf32> to vector<2x8x8xf32>
    %446 = arith.addf %444, %445 : vector<2x8x8xf32>
    %cst_127 = arith.constant dense<0xFF800000> : vector<2x8xf32>
    %447 = vector.multi_reduction <maximumf>, %446, %cst_127 [2] : vector<2x8x8xf32> to vector<2x8xf32>
    %448 = vector.shape_cast %447 : vector<2x8xf32> to vector<2x8x1xf32>
    %449 = vector.broadcast %448 : vector<2x8x1xf32> to vector<2x8x8xf32>
    %450 = arith.subf %446, %449 : vector<2x8x8xf32>
    %451 = math.exp %450 : vector<2x8x8xf32>
    %cst_128 = arith.constant dense<0.000000e+00> : vector<2x8xf32>
    %452 = vector.multi_reduction <add>, %451, %cst_128 [2] : vector<2x8x8xf32> to vector<2x8xf32>
    %453 = vector.shape_cast %452 : vector<2x8xf32> to vector<2x8x1xf32>
    %454 = arith.truncf %451 : vector<2x8x8xf32> to vector<2x8x8xbf16>
    "tpu.trace_start"() <{level = 10 : i32, message = "bqk,bkd->bqd"}> : () -> ()
    %cst_129 = arith.constant dense<0.000000e+00> : vector<2x8x8xf32>
    %455 = tpu.matmul %454, %441, %cst_129 {dimension_numbers = #tpu.dot_dimension_numbers<[2], [1], [1], [2], [0, 0, 0, 1, 1, 2], [0], [0]>} : vector<2x8x8xbf16>, vector<2x8x8xbf16>, vector<2x8x8xf32> -> vector<2x8x8xf32>
    "tpu.trace_stop"() : () -> ()
    %456 = tpu.reciprocal %453 {approx = true} : vector<2x8x1xf32> -> vector<2x8x1xf32>
    %457 = vector.broadcast %456 : vector<2x8x1xf32> to vector<2x8x8xf32>
    %458 = arith.mulf %455, %457 : vector<2x8x8xf32>
    %459 = vector.extract_strided_slice %387 {offsets = [0, 0, 24], sizes = [2, 8, 8], strides = [1, 1, 1]} : vector<2x8x32xf32> to vector<2x8x8xf32>
    %460 = arith.truncf %459 : vector<2x8x8xf32> to vector<2x8x8xbf16>
    %461 = vector.extract_strided_slice %388 {offsets = [0, 0, 24], sizes = [2, 8, 8], strides = [1, 1, 1]} : vector<2x8x32xf32> to vector<2x8x8xf32>
    %462 = arith.truncf %461 : vector<2x8x8xf32> to vector<2x8x8xbf16>
    %463 = vector.extract_strided_slice %389 {offsets = [0, 0, 24], sizes = [2, 8, 8], strides = [1, 1, 1]} : vector<2x8x32xf32> to vector<2x8x8xf32>
    %464 = arith.truncf %463 : vector<2x8x8xf32> to vector<2x8x8xbf16>
    "tpu.trace_start"() <{level = 10 : i32, message = "bqd,bkd->bqk"}> : () -> ()
    %cst_130 = arith.constant dense<0.000000e+00> : vector<2x8x8xf32>
    %465 = tpu.matmul %460, %462, %cst_130 {dimension_numbers = #tpu.dot_dimension_numbers<[2], [2], [1], [1], [0, 0, 0, 1, 1, 1], [0], [0]>} : vector<2x8x8xbf16>, vector<2x8x8xbf16>, vector<2x8x8xf32> -> vector<2x8x8xf32>
    "tpu.trace_stop"() : () -> ()
    %cst_131 = arith.constant 0.353553385 : f32
    %466 = vector.broadcast %cst_131 : f32 to vector<2x8x8xf32>
    %467 = arith.mulf %465, %466 : vector<2x8x8xf32>
    %468 = vector.broadcast %9 : vector<1x8x8xf32> to vector<2x8x8xf32>
    %469 = arith.addf %467, %468 : vector<2x8x8xf32>
    %cst_132 = arith.constant dense<0xFF800000> : vector<2x8xf32>
    %470 = vector.multi_reduction <maximumf>, %469, %cst_132 [2] : vector<2x8x8xf32> to vector<2x8xf32>
    %471 = vector.shape_cast %470 : vector<2x8xf32> to vector<2x8x1xf32>
    %472 = vector.broadcast %471 : vector<2x8x1xf32> to vector<2x8x8xf32>
    %473 = arith.subf %469, %472 : vector<2x8x8xf32>
    %474 = math.exp %473 : vector<2x8x8xf32>
    %cst_133 = arith.constant dense<0.000000e+00> : vector<2x8xf32>
    %475 = vector.multi_reduction <add>, %474, %cst_133 [2] : vector<2x8x8xf32> to vector<2x8xf32>
    %476 = vector.shape_cast %475 : vector<2x8xf32> to vector<2x8x1xf32>
    %477 = arith.truncf %474 : vector<2x8x8xf32> to vector<2x8x8xbf16>
    "tpu.trace_start"() <{level = 10 : i32, message = "bqk,bkd->bqd"}> : () -> ()
    %cst_134 = arith.constant dense<0.000000e+00> : vector<2x8x8xf32>
    %478 = tpu.matmul %477, %464, %cst_134 {dimension_numbers = #tpu.dot_dimension_numbers<[2], [1], [1], [2], [0, 0, 0, 1, 1, 2], [0], [0]>} : vector<2x8x8xbf16>, vector<2x8x8xbf16>, vector<2x8x8xf32> -> vector<2x8x8xf32>
    "tpu.trace_stop"() : () -> ()
    %479 = tpu.reciprocal %476 {approx = true} : vector<2x8x1xf32> -> vector<2x8x1xf32>
    %480 = vector.broadcast %479 : vector<2x8x1xf32> to vector<2x8x8xf32>
    %481 = arith.mulf %478, %480 : vector<2x8x8xf32>
    %482 = tpu.concatenate %412, %435, %458, %481 in 2 : vector<2x8x8xf32>, vector<2x8x8xf32>, vector<2x8x8xf32>, vector<2x8x8xf32> -> vector<2x8x32xf32>
    %483 = vector.shape_cast %482 : vector<2x8x32xf32> to vector<16x32xf32>
    %484 = arith.truncf %483 : vector<16x32xf32> to vector<16x32xbf16>
    %cst_135 = arith.constant dense<0.000000e+00> : vector<16x32xf32>
    %485 = tpu.matmul %484, %377, %cst_135 {dimension_numbers = #tpu.dot_dimension_numbers<[1], [0], [0], [1], [0, 0, 1, 1], [], []>} : vector<16x32xbf16>, vector<32x32xbf16>, vector<16x32xf32> -> vector<16x32xf32>
    %486 = vector.broadcast %379 : vector<1x32xf32> to vector<16x32xf32>
    %487 = arith.addf %485, %486 : vector<16x32xf32>
    %488 = arith.addf %1, %487 : vector<16x32xf32>
    %c22 = arith.constant 22 : index
    %c0_136 = arith.constant 0 : index
    %489 = vector.load %arg5[%c22, %c0_136] : memref<48x128xf32, #tpu.memory_space<vmem>>, vector<1x32xf32>
    %c23 = arith.constant 23 : index
    %c0_137 = arith.constant 0 : index
    %490 = vector.load %arg5[%c23, %c0_137] : memref<48x128xf32, #tpu.memory_space<vmem>>, vector<1x32xf32>
    %cst_138 = arith.constant dense<0.000000e+00> : vector<16xf32>
    %491 = vector.multi_reduction <add>, %488, %cst_138 [1] : vector<16x32xf32> to vector<16xf32>
    %492 = vector.shape_cast %491 : vector<16xf32> to vector<16x1xf32>
    %cst_139 = arith.constant 3.200000e+01 : f32
    %493 = vector.broadcast %cst_139 : f32 to vector<16x1xf32>
    %494 = arith.divf %492, %493 : vector<16x1xf32>
    %495 = vector.broadcast %494 : vector<16x1xf32> to vector<16x32xf32>
    %496 = arith.subf %488, %495 : vector<16x32xf32>
    %497 = arith.mulf %496, %496 : vector<16x32xf32>
    %cst_140 = arith.constant dense<0.000000e+00> : vector<16xf32>
    %498 = vector.multi_reduction <add>, %497, %cst_140 [1] : vector<16x32xf32> to vector<16xf32>
    %499 = vector.shape_cast %498 : vector<16xf32> to vector<16x1xf32>
    %cst_141 = arith.constant 3.200000e+01 : f32
    %500 = vector.broadcast %cst_141 : f32 to vector<16x1xf32>
    %501 = arith.divf %499, %500 : vector<16x1xf32>
    %cst_142 = arith.constant 9.99999974E-6 : f32
    %502 = vector.broadcast %cst_142 : f32 to vector<16x1xf32>
    %503 = arith.addf %501, %502 : vector<16x1xf32>
    %504 = math.rsqrt %503 : vector<16x1xf32>
    %505 = vector.broadcast %504 : vector<16x1xf32> to vector<16x32xf32>
    %506 = arith.mulf %496, %505 : vector<16x32xf32>
    %507 = vector.broadcast %489 : vector<1x32xf32> to vector<16x32xf32>
    %508 = arith.mulf %506, %507 : vector<16x32xf32>
    %509 = vector.broadcast %490 : vector<1x32xf32> to vector<16x32xf32>
    %510 = arith.addf %508, %509 : vector<16x32xf32>
    %c384 = arith.constant 384 : index
    %c0_143 = arith.constant 0 : index
    %511 = vector.load %arg4[%c384, %c0_143] : memref<800x128xbf16, #tpu.memory_space<vmem>>, vector<32x96xbf16>
    %c416 = arith.constant 416 : index
    %c0_144 = arith.constant 0 : index
    %512 = vector.load %arg4[%c416, %c0_144] : memref<800x128xbf16, #tpu.memory_space<vmem>>, vector<32x32xbf16>
    %c18 = arith.constant 18 : index
    %c0_145 = arith.constant 0 : index
    %513 = vector.load %arg5[%c18, %c0_145] : memref<48x128xf32, #tpu.memory_space<vmem>>, vector<1x96xf32>
    %c19 = arith.constant 19 : index
    %c0_146 = arith.constant 0 : index
    %514 = vector.load %arg5[%c19, %c0_146] : memref<48x128xf32, #tpu.memory_space<vmem>>, vector<1x32xf32>
    %515 = vector.extract_strided_slice %511 {offsets = [0, 0], sizes = [32, 32], strides = [1, 1]} : vector<32x96xbf16> to vector<32x32xbf16>
    %516 = arith.truncf %510 : vector<16x32xf32> to vector<16x32xbf16>
    %cst_147 = arith.constant dense<0.000000e+00> : vector<16x32xf32>
    %517 = tpu.matmul %516, %515, %cst_147 {dimension_numbers = #tpu.dot_dimension_numbers<[1], [0], [0], [1], [0, 0, 1, 1], [], []>} : vector<16x32xbf16>, vector<32x32xbf16>, vector<16x32xf32> -> vector<16x32xf32>
    %518 = vector.extract_strided_slice %513 {offsets = [0, 0], sizes = [1, 32], strides = [1, 1]} : vector<1x96xf32> to vector<1x32xf32>
    %519 = vector.broadcast %518 : vector<1x32xf32> to vector<16x32xf32>
    %520 = arith.addf %517, %519 : vector<16x32xf32>
    %521 = vector.extract_strided_slice %511 {offsets = [0, 32], sizes = [32, 64], strides = [1, 1]} : vector<32x96xbf16> to vector<32x64xbf16>
    %522 = arith.truncf %375 : vector<16x32xf32> to vector<16x32xbf16>
    %cst_148 = arith.constant dense<0.000000e+00> : vector<16x64xf32>
    %523 = tpu.matmul %522, %521, %cst_148 {dimension_numbers = #tpu.dot_dimension_numbers<[1], [0], [0], [1], [0, 0, 1, 1], [], []>} : vector<16x32xbf16>, vector<32x64xbf16>, vector<16x64xf32> -> vector<16x64xf32>
    %524 = vector.extract_strided_slice %513 {offsets = [0, 32], sizes = [1, 64], strides = [1, 1]} : vector<1x96xf32> to vector<1x64xf32>
    %525 = vector.broadcast %524 : vector<1x64xf32> to vector<16x64xf32>
    %526 = arith.addf %523, %525 : vector<16x64xf32>
    %527 = vector.extract_strided_slice %526 {offsets = [0, 0], sizes = [16, 32], strides = [1, 1]} : vector<16x64xf32> to vector<16x32xf32>
    %528 = vector.extract_strided_slice %526 {offsets = [0, 32], sizes = [16, 32], strides = [1, 1]} : vector<16x64xf32> to vector<16x32xf32>
    %529 = vector.shape_cast %520 : vector<16x32xf32> to vector<2x8x32xf32>
    %530 = vector.shape_cast %527 : vector<16x32xf32> to vector<2x8x32xf32>
    %531 = vector.shape_cast %528 : vector<16x32xf32> to vector<2x8x32xf32>
    %532 = vector.extract_strided_slice %529 {offsets = [0, 0, 0], sizes = [2, 8, 8], strides = [1, 1, 1]} : vector<2x8x32xf32> to vector<2x8x8xf32>
    %533 = arith.truncf %532 : vector<2x8x8xf32> to vector<2x8x8xbf16>
    %534 = vector.extract_strided_slice %530 {offsets = [0, 0, 0], sizes = [2, 8, 8], strides = [1, 1, 1]} : vector<2x8x32xf32> to vector<2x8x8xf32>
    %535 = arith.truncf %534 : vector<2x8x8xf32> to vector<2x8x8xbf16>
    %536 = vector.extract_strided_slice %531 {offsets = [0, 0, 0], sizes = [2, 8, 8], strides = [1, 1, 1]} : vector<2x8x32xf32> to vector<2x8x8xf32>
    %537 = arith.truncf %536 : vector<2x8x8xf32> to vector<2x8x8xbf16>
    "tpu.trace_start"() <{level = 10 : i32, message = "bqd,bkd->bqk"}> : () -> ()
    %cst_149 = arith.constant dense<0.000000e+00> : vector<2x8x8xf32>
    %538 = tpu.matmul %533, %535, %cst_149 {dimension_numbers = #tpu.dot_dimension_numbers<[2], [2], [1], [1], [0, 0, 0, 1, 1, 1], [0], [0]>} : vector<2x8x8xbf16>, vector<2x8x8xbf16>, vector<2x8x8xf32> -> vector<2x8x8xf32>
    "tpu.trace_stop"() : () -> ()
    %cst_150 = arith.constant 0.353553385 : f32
    %539 = vector.broadcast %cst_150 : f32 to vector<2x8x8xf32>
    %540 = arith.mulf %538, %539 : vector<2x8x8xf32>
    %cst_151 = arith.constant dense<0xFF800000> : vector<2x8xf32>
    %541 = vector.multi_reduction <maximumf>, %540, %cst_151 [2] : vector<2x8x8xf32> to vector<2x8xf32>
    %542 = vector.shape_cast %541 : vector<2x8xf32> to vector<2x8x1xf32>
    %543 = vector.broadcast %542 : vector<2x8x1xf32> to vector<2x8x8xf32>
    %544 = arith.subf %540, %543 : vector<2x8x8xf32>
    %545 = math.exp %544 : vector<2x8x8xf32>
    %cst_152 = arith.constant dense<0.000000e+00> : vector<2x8xf32>
    %546 = vector.multi_reduction <add>, %545, %cst_152 [2] : vector<2x8x8xf32> to vector<2x8xf32>
    %547 = vector.shape_cast %546 : vector<2x8xf32> to vector<2x8x1xf32>
    %548 = arith.truncf %545 : vector<2x8x8xf32> to vector<2x8x8xbf16>
    "tpu.trace_start"() <{level = 10 : i32, message = "bqk,bkd->bqd"}> : () -> ()
    %cst_153 = arith.constant dense<0.000000e+00> : vector<2x8x8xf32>
    %549 = tpu.matmul %548, %537, %cst_153 {dimension_numbers = #tpu.dot_dimension_numbers<[2], [1], [1], [2], [0, 0, 0, 1, 1, 2], [0], [0]>} : vector<2x8x8xbf16>, vector<2x8x8xbf16>, vector<2x8x8xf32> -> vector<2x8x8xf32>
    "tpu.trace_stop"() : () -> ()
    %550 = tpu.reciprocal %547 {approx = true} : vector<2x8x1xf32> -> vector<2x8x1xf32>
    %551 = vector.broadcast %550 : vector<2x8x1xf32> to vector<2x8x8xf32>
    %552 = arith.mulf %549, %551 : vector<2x8x8xf32>
    %553 = vector.extract_strided_slice %529 {offsets = [0, 0, 8], sizes = [2, 8, 8], strides = [1, 1, 1]} : vector<2x8x32xf32> to vector<2x8x8xf32>
    %554 = arith.truncf %553 : vector<2x8x8xf32> to vector<2x8x8xbf16>
    %555 = vector.extract_strided_slice %530 {offsets = [0, 0, 8], sizes = [2, 8, 8], strides = [1, 1, 1]} : vector<2x8x32xf32> to vector<2x8x8xf32>
    %556 = arith.truncf %555 : vector<2x8x8xf32> to vector<2x8x8xbf16>
    %557 = vector.extract_strided_slice %531 {offsets = [0, 0, 8], sizes = [2, 8, 8], strides = [1, 1, 1]} : vector<2x8x32xf32> to vector<2x8x8xf32>
    %558 = arith.truncf %557 : vector<2x8x8xf32> to vector<2x8x8xbf16>
    "tpu.trace_start"() <{level = 10 : i32, message = "bqd,bkd->bqk"}> : () -> ()
    %cst_154 = arith.constant dense<0.000000e+00> : vector<2x8x8xf32>
    %559 = tpu.matmul %554, %556, %cst_154 {dimension_numbers = #tpu.dot_dimension_numbers<[2], [2], [1], [1], [0, 0, 0, 1, 1, 1], [0], [0]>} : vector<2x8x8xbf16>, vector<2x8x8xbf16>, vector<2x8x8xf32> -> vector<2x8x8xf32>
    "tpu.trace_stop"() : () -> ()
    %cst_155 = arith.constant 0.353553385 : f32
    %560 = vector.broadcast %cst_155 : f32 to vector<2x8x8xf32>
    %561 = arith.mulf %559, %560 : vector<2x8x8xf32>
    %cst_156 = arith.constant dense<0xFF800000> : vector<2x8xf32>
    %562 = vector.multi_reduction <maximumf>, %561, %cst_156 [2] : vector<2x8x8xf32> to vector<2x8xf32>
    %563 = vector.shape_cast %562 : vector<2x8xf32> to vector<2x8x1xf32>
    %564 = vector.broadcast %563 : vector<2x8x1xf32> to vector<2x8x8xf32>
    %565 = arith.subf %561, %564 : vector<2x8x8xf32>
    %566 = math.exp %565 : vector<2x8x8xf32>
    %cst_157 = arith.constant dense<0.000000e+00> : vector<2x8xf32>
    %567 = vector.multi_reduction <add>, %566, %cst_157 [2] : vector<2x8x8xf32> to vector<2x8xf32>
    %568 = vector.shape_cast %567 : vector<2x8xf32> to vector<2x8x1xf32>
    %569 = arith.truncf %566 : vector<2x8x8xf32> to vector<2x8x8xbf16>
    "tpu.trace_start"() <{level = 10 : i32, message = "bqk,bkd->bqd"}> : () -> ()
    %cst_158 = arith.constant dense<0.000000e+00> : vector<2x8x8xf32>
    %570 = tpu.matmul %569, %558, %cst_158 {dimension_numbers = #tpu.dot_dimension_numbers<[2], [1], [1], [2], [0, 0, 0, 1, 1, 2], [0], [0]>} : vector<2x8x8xbf16>, vector<2x8x8xbf16>, vector<2x8x8xf32> -> vector<2x8x8xf32>
    "tpu.trace_stop"() : () -> ()
    %571 = tpu.reciprocal %568 {approx = true} : vector<2x8x1xf32> -> vector<2x8x1xf32>
    %572 = vector.broadcast %571 : vector<2x8x1xf32> to vector<2x8x8xf32>
    %573 = arith.mulf %570, %572 : vector<2x8x8xf32>
    %574 = vector.extract_strided_slice %529 {offsets = [0, 0, 16], sizes = [2, 8, 8], strides = [1, 1, 1]} : vector<2x8x32xf32> to vector<2x8x8xf32>
    %575 = arith.truncf %574 : vector<2x8x8xf32> to vector<2x8x8xbf16>
    %576 = vector.extract_strided_slice %530 {offsets = [0, 0, 16], sizes = [2, 8, 8], strides = [1, 1, 1]} : vector<2x8x32xf32> to vector<2x8x8xf32>
    %577 = arith.truncf %576 : vector<2x8x8xf32> to vector<2x8x8xbf16>
    %578 = vector.extract_strided_slice %531 {offsets = [0, 0, 16], sizes = [2, 8, 8], strides = [1, 1, 1]} : vector<2x8x32xf32> to vector<2x8x8xf32>
    %579 = arith.truncf %578 : vector<2x8x8xf32> to vector<2x8x8xbf16>
    "tpu.trace_start"() <{level = 10 : i32, message = "bqd,bkd->bqk"}> : () -> ()
    %cst_159 = arith.constant dense<0.000000e+00> : vector<2x8x8xf32>
    %580 = tpu.matmul %575, %577, %cst_159 {dimension_numbers = #tpu.dot_dimension_numbers<[2], [2], [1], [1], [0, 0, 0, 1, 1, 1], [0], [0]>} : vector<2x8x8xbf16>, vector<2x8x8xbf16>, vector<2x8x8xf32> -> vector<2x8x8xf32>
    "tpu.trace_stop"() : () -> ()
    %cst_160 = arith.constant 0.353553385 : f32
    %581 = vector.broadcast %cst_160 : f32 to vector<2x8x8xf32>
    %582 = arith.mulf %580, %581 : vector<2x8x8xf32>
    %cst_161 = arith.constant dense<0xFF800000> : vector<2x8xf32>
    %583 = vector.multi_reduction <maximumf>, %582, %cst_161 [2] : vector<2x8x8xf32> to vector<2x8xf32>
    %584 = vector.shape_cast %583 : vector<2x8xf32> to vector<2x8x1xf32>
    %585 = vector.broadcast %584 : vector<2x8x1xf32> to vector<2x8x8xf32>
    %586 = arith.subf %582, %585 : vector<2x8x8xf32>
    %587 = math.exp %586 : vector<2x8x8xf32>
    %cst_162 = arith.constant dense<0.000000e+00> : vector<2x8xf32>
    %588 = vector.multi_reduction <add>, %587, %cst_162 [2] : vector<2x8x8xf32> to vector<2x8xf32>
    %589 = vector.shape_cast %588 : vector<2x8xf32> to vector<2x8x1xf32>
    %590 = arith.truncf %587 : vector<2x8x8xf32> to vector<2x8x8xbf16>
    "tpu.trace_start"() <{level = 10 : i32, message = "bqk,bkd->bqd"}> : () -> ()
    %cst_163 = arith.constant dense<0.000000e+00> : vector<2x8x8xf32>
    %591 = tpu.matmul %590, %579, %cst_163 {dimension_numbers = #tpu.dot_dimension_numbers<[2], [1], [1], [2], [0, 0, 0, 1, 1, 2], [0], [0]>} : vector<2x8x8xbf16>, vector<2x8x8xbf16>, vector<2x8x8xf32> -> vector<2x8x8xf32>
    "tpu.trace_stop"() : () -> ()
    %592 = tpu.reciprocal %589 {approx = true} : vector<2x8x1xf32> -> vector<2x8x1xf32>
    %593 = vector.broadcast %592 : vector<2x8x1xf32> to vector<2x8x8xf32>
    %594 = arith.mulf %591, %593 : vector<2x8x8xf32>
    %595 = vector.extract_strided_slice %529 {offsets = [0, 0, 24], sizes = [2, 8, 8], strides = [1, 1, 1]} : vector<2x8x32xf32> to vector<2x8x8xf32>
    %596 = arith.truncf %595 : vector<2x8x8xf32> to vector<2x8x8xbf16>
    %597 = vector.extract_strided_slice %530 {offsets = [0, 0, 24], sizes = [2, 8, 8], strides = [1, 1, 1]} : vector<2x8x32xf32> to vector<2x8x8xf32>
    %598 = arith.truncf %597 : vector<2x8x8xf32> to vector<2x8x8xbf16>
    %599 = vector.extract_strided_slice %531 {offsets = [0, 0, 24], sizes = [2, 8, 8], strides = [1, 1, 1]} : vector<2x8x32xf32> to vector<2x8x8xf32>
    %600 = arith.truncf %599 : vector<2x8x8xf32> to vector<2x8x8xbf16>
    "tpu.trace_start"() <{level = 10 : i32, message = "bqd,bkd->bqk"}> : () -> ()
    %cst_164 = arith.constant dense<0.000000e+00> : vector<2x8x8xf32>
    %601 = tpu.matmul %596, %598, %cst_164 {dimension_numbers = #tpu.dot_dimension_numbers<[2], [2], [1], [1], [0, 0, 0, 1, 1, 1], [0], [0]>} : vector<2x8x8xbf16>, vector<2x8x8xbf16>, vector<2x8x8xf32> -> vector<2x8x8xf32>
    "tpu.trace_stop"() : () -> ()
    %cst_165 = arith.constant 0.353553385 : f32
    %602 = vector.broadcast %cst_165 : f32 to vector<2x8x8xf32>
    %603 = arith.mulf %601, %602 : vector<2x8x8xf32>
    %cst_166 = arith.constant dense<0xFF800000> : vector<2x8xf32>
    %604 = vector.multi_reduction <maximumf>, %603, %cst_166 [2] : vector<2x8x8xf32> to vector<2x8xf32>
    %605 = vector.shape_cast %604 : vector<2x8xf32> to vector<2x8x1xf32>
    %606 = vector.broadcast %605 : vector<2x8x1xf32> to vector<2x8x8xf32>
    %607 = arith.subf %603, %606 : vector<2x8x8xf32>
    %608 = math.exp %607 : vector<2x8x8xf32>
    %cst_167 = arith.constant dense<0.000000e+00> : vector<2x8xf32>
    %609 = vector.multi_reduction <add>, %608, %cst_167 [2] : vector<2x8x8xf32> to vector<2x8xf32>
    %610 = vector.shape_cast %609 : vector<2x8xf32> to vector<2x8x1xf32>
    %611 = arith.truncf %608 : vector<2x8x8xf32> to vector<2x8x8xbf16>
    "tpu.trace_start"() <{level = 10 : i32, message = "bqk,bkd->bqd"}> : () -> ()
    %cst_168 = arith.constant dense<0.000000e+00> : vector<2x8x8xf32>
    %612 = tpu.matmul %611, %600, %cst_168 {dimension_numbers = #tpu.dot_dimension_numbers<[2], [1], [1], [2], [0, 0, 0, 1, 1, 2], [0], [0]>} : vector<2x8x8xbf16>, vector<2x8x8xbf16>, vector<2x8x8xf32> -> vector<2x8x8xf32>
    "tpu.trace_stop"() : () -> ()
    %613 = tpu.reciprocal %610 {approx = true} : vector<2x8x1xf32> -> vector<2x8x1xf32>
    %614 = vector.broadcast %613 : vector<2x8x1xf32> to vector<2x8x8xf32>
    %615 = arith.mulf %612, %614 : vector<2x8x8xf32>
    %616 = tpu.concatenate %552, %573, %594, %615 in 2 : vector<2x8x8xf32>, vector<2x8x8xf32>, vector<2x8x8xf32>, vector<2x8x8xf32> -> vector<2x8x32xf32>
    %617 = vector.shape_cast %616 : vector<2x8x32xf32> to vector<16x32xf32>
    %618 = arith.truncf %617 : vector<16x32xf32> to vector<16x32xbf16>
    %cst_169 = arith.constant dense<0.000000e+00> : vector<16x32xf32>
    %619 = tpu.matmul %618, %512, %cst_169 {dimension_numbers = #tpu.dot_dimension_numbers<[1], [0], [0], [1], [0, 0, 1, 1], [], []>} : vector<16x32xbf16>, vector<32x32xbf16>, vector<16x32xf32> -> vector<16x32xf32>
    %620 = vector.broadcast %514 : vector<1x32xf32> to vector<16x32xf32>
    %621 = arith.addf %619, %620 : vector<16x32xf32>
    %622 = arith.addf %510, %621 : vector<16x32xf32>
    %c24 = arith.constant 24 : index
    %c0_170 = arith.constant 0 : index
    %623 = vector.load %arg5[%c24, %c0_170] : memref<48x128xf32, #tpu.memory_space<vmem>>, vector<1x32xf32>
    %c25 = arith.constant 25 : index
    %c0_171 = arith.constant 0 : index
    %624 = vector.load %arg5[%c25, %c0_171] : memref<48x128xf32, #tpu.memory_space<vmem>>, vector<1x32xf32>
    %cst_172 = arith.constant dense<0.000000e+00> : vector<16xf32>
    %625 = vector.multi_reduction <add>, %622, %cst_172 [1] : vector<16x32xf32> to vector<16xf32>
    %626 = vector.shape_cast %625 : vector<16xf32> to vector<16x1xf32>
    %cst_173 = arith.constant 3.200000e+01 : f32
    %627 = vector.broadcast %cst_173 : f32 to vector<16x1xf32>
    %628 = arith.divf %626, %627 : vector<16x1xf32>
    %629 = vector.broadcast %628 : vector<16x1xf32> to vector<16x32xf32>
    %630 = arith.subf %622, %629 : vector<16x32xf32>
    %631 = arith.mulf %630, %630 : vector<16x32xf32>
    %cst_174 = arith.constant dense<0.000000e+00> : vector<16xf32>
    %632 = vector.multi_reduction <add>, %631, %cst_174 [1] : vector<16x32xf32> to vector<16xf32>
    %633 = vector.shape_cast %632 : vector<16xf32> to vector<16x1xf32>
    %cst_175 = arith.constant 3.200000e+01 : f32
    %634 = vector.broadcast %cst_175 : f32 to vector<16x1xf32>
    %635 = arith.divf %633, %634 : vector<16x1xf32>
    %cst_176 = arith.constant 9.99999974E-6 : f32
    %636 = vector.broadcast %cst_176 : f32 to vector<16x1xf32>
    %637 = arith.addf %635, %636 : vector<16x1xf32>
    %638 = math.rsqrt %637 : vector<16x1xf32>
    %639 = vector.broadcast %638 : vector<16x1xf32> to vector<16x32xf32>
    %640 = arith.mulf %630, %639 : vector<16x32xf32>
    %641 = vector.broadcast %623 : vector<1x32xf32> to vector<16x32xf32>
    %642 = arith.mulf %640, %641 : vector<16x32xf32>
    %643 = vector.broadcast %624 : vector<1x32xf32> to vector<16x32xf32>
    %644 = arith.addf %642, %643 : vector<16x32xf32>
    %c448 = arith.constant 448 : index
    %c0_177 = arith.constant 0 : index
    %645 = vector.load %arg4[%c448, %c0_177] : memref<800x128xbf16, #tpu.memory_space<vmem>>, vector<32x64xbf16>
    %646 = arith.truncf %644 : vector<16x32xf32> to vector<16x32xbf16>
    %cst_178 = arith.constant dense<0.000000e+00> : vector<16x64xf32>
    %647 = tpu.matmul %646, %645, %cst_178 {dimension_numbers = #tpu.dot_dimension_numbers<[1], [0], [0], [1], [0, 0, 1, 1], [], []>} : vector<16x32xbf16>, vector<32x64xbf16>, vector<16x64xf32> -> vector<16x64xf32>
    %c20 = arith.constant 20 : index
    %c0_179 = arith.constant 0 : index
    %648 = vector.load %arg5[%c20, %c0_179] : memref<48x128xf32, #tpu.memory_space<vmem>>, vector<1x64xf32>
    %649 = vector.broadcast %648 : vector<1x64xf32> to vector<16x64xf32>
    %650 = arith.addf %647, %649 : vector<16x64xf32>
    %cst_180 = arith.constant 0.000000e+00 : f32
    %651 = vector.broadcast %cst_180 : f32 to vector<16x64xf32>
    %652 = arith.maximumf %650, %651 : vector<16x64xf32>
    %c480 = arith.constant 480 : index
    %c0_181 = arith.constant 0 : index
    %653 = vector.load %arg4[%c480, %c0_181] : memref<800x128xbf16, #tpu.memory_space<vmem>>, vector<64x32xbf16>
    %654 = arith.truncf %652 : vector<16x64xf32> to vector<16x64xbf16>
    %cst_182 = arith.constant dense<0.000000e+00> : vector<16x32xf32>
    %655 = tpu.matmul %654, %653, %cst_182 {dimension_numbers = #tpu.dot_dimension_numbers<[1], [0], [0], [1], [0, 0, 1, 1], [], []>} : vector<16x64xbf16>, vector<64x32xbf16>, vector<16x32xf32> -> vector<16x32xf32>
    %c21 = arith.constant 21 : index
    %c0_183 = arith.constant 0 : index
    %656 = vector.load %arg5[%c21, %c0_183] : memref<48x128xf32, #tpu.memory_space<vmem>>, vector<1x32xf32>
    %657 = vector.broadcast %656 : vector<1x32xf32> to vector<16x32xf32>
    %658 = arith.addf %655, %657 : vector<16x32xf32>
    %659 = arith.addf %644, %658 : vector<16x32xf32>
    %c26 = arith.constant 26 : index
    %c0_184 = arith.constant 0 : index
    %660 = vector.load %arg5[%c26, %c0_184] : memref<48x128xf32, #tpu.memory_space<vmem>>, vector<1x32xf32>
    %c27 = arith.constant 27 : index
    %c0_185 = arith.constant 0 : index
    %661 = vector.load %arg5[%c27, %c0_185] : memref<48x128xf32, #tpu.memory_space<vmem>>, vector<1x32xf32>
    %cst_186 = arith.constant dense<0.000000e+00> : vector<16xf32>
    %662 = vector.multi_reduction <add>, %659, %cst_186 [1] : vector<16x32xf32> to vector<16xf32>
    %663 = vector.shape_cast %662 : vector<16xf32> to vector<16x1xf32>
    %cst_187 = arith.constant 3.200000e+01 : f32
    %664 = vector.broadcast %cst_187 : f32 to vector<16x1xf32>
    %665 = arith.divf %663, %664 : vector<16x1xf32>
    %666 = vector.broadcast %665 : vector<16x1xf32> to vector<16x32xf32>
    %667 = arith.subf %659, %666 : vector<16x32xf32>
    %668 = arith.mulf %667, %667 : vector<16x32xf32>
    %cst_188 = arith.constant dense<0.000000e+00> : vector<16xf32>
    %669 = vector.multi_reduction <add>, %668, %cst_188 [1] : vector<16x32xf32> to vector<16xf32>
    %670 = vector.shape_cast %669 : vector<16xf32> to vector<16x1xf32>
    %cst_189 = arith.constant 3.200000e+01 : f32
    %671 = vector.broadcast %cst_189 : f32 to vector<16x1xf32>
    %672 = arith.divf %670, %671 : vector<16x1xf32>
    %cst_190 = arith.constant 9.99999974E-6 : f32
    %673 = vector.broadcast %cst_190 : f32 to vector<16x1xf32>
    %674 = arith.addf %672, %673 : vector<16x1xf32>
    %675 = math.rsqrt %674 : vector<16x1xf32>
    %676 = vector.broadcast %675 : vector<16x1xf32> to vector<16x32xf32>
    %677 = arith.mulf %667, %676 : vector<16x32xf32>
    %678 = vector.broadcast %660 : vector<1x32xf32> to vector<16x32xf32>
    %679 = arith.mulf %677, %678 : vector<16x32xf32>
    %680 = vector.broadcast %661 : vector<1x32xf32> to vector<16x32xf32>
    %681 = arith.addf %679, %680 : vector<16x32xf32>
    %c544 = arith.constant 544 : index
    %c0_191 = arith.constant 0 : index
    %682 = vector.load %arg4[%c544, %c0_191] : memref<800x128xbf16, #tpu.memory_space<vmem>>, vector<32x96xbf16>
    %c576 = arith.constant 576 : index
    %c0_192 = arith.constant 0 : index
    %683 = vector.load %arg4[%c576, %c0_192] : memref<800x128xbf16, #tpu.memory_space<vmem>>, vector<32x32xbf16>
    %c28 = arith.constant 28 : index
    %c0_193 = arith.constant 0 : index
    %684 = vector.load %arg5[%c28, %c0_193] : memref<48x128xf32, #tpu.memory_space<vmem>>, vector<1x96xf32>
    %c29 = arith.constant 29 : index
    %c0_194 = arith.constant 0 : index
    %685 = vector.load %arg5[%c29, %c0_194] : memref<48x128xf32, #tpu.memory_space<vmem>>, vector<1x32xf32>
    %686 = arith.truncf %681 : vector<16x32xf32> to vector<16x32xbf16>
    %cst_195 = arith.constant dense<0.000000e+00> : vector<16x96xf32>
    %687 = tpu.matmul %686, %682, %cst_195 {dimension_numbers = #tpu.dot_dimension_numbers<[1], [0], [0], [1], [0, 0, 1, 1], [], []>} : vector<16x32xbf16>, vector<32x96xbf16>, vector<16x96xf32> -> vector<16x96xf32>
    %688 = vector.broadcast %684 : vector<1x96xf32> to vector<16x96xf32>
    %689 = arith.addf %687, %688 : vector<16x96xf32>
    %690 = vector.extract_strided_slice %689 {offsets = [0, 0], sizes = [16, 32], strides = [1, 1]} : vector<16x96xf32> to vector<16x32xf32>
    %691 = vector.extract_strided_slice %689 {offsets = [0, 32], sizes = [16, 32], strides = [1, 1]} : vector<16x96xf32> to vector<16x32xf32>
    %692 = vector.extract_strided_slice %689 {offsets = [0, 64], sizes = [16, 32], strides = [1, 1]} : vector<16x96xf32> to vector<16x32xf32>
    %693 = vector.shape_cast %690 : vector<16x32xf32> to vector<2x8x32xf32>
    %694 = vector.shape_cast %691 : vector<16x32xf32> to vector<2x8x32xf32>
    %695 = vector.shape_cast %692 : vector<16x32xf32> to vector<2x8x32xf32>
    %696 = vector.extract_strided_slice %693 {offsets = [0, 0, 0], sizes = [2, 8, 8], strides = [1, 1, 1]} : vector<2x8x32xf32> to vector<2x8x8xf32>
    %697 = arith.truncf %696 : vector<2x8x8xf32> to vector<2x8x8xbf16>
    %698 = vector.extract_strided_slice %694 {offsets = [0, 0, 0], sizes = [2, 8, 8], strides = [1, 1, 1]} : vector<2x8x32xf32> to vector<2x8x8xf32>
    %699 = arith.truncf %698 : vector<2x8x8xf32> to vector<2x8x8xbf16>
    %700 = vector.extract_strided_slice %695 {offsets = [0, 0, 0], sizes = [2, 8, 8], strides = [1, 1, 1]} : vector<2x8x32xf32> to vector<2x8x8xf32>
    %701 = arith.truncf %700 : vector<2x8x8xf32> to vector<2x8x8xbf16>
    "tpu.trace_start"() <{level = 10 : i32, message = "bqd,bkd->bqk"}> : () -> ()
    %cst_196 = arith.constant dense<0.000000e+00> : vector<2x8x8xf32>
    %702 = tpu.matmul %697, %699, %cst_196 {dimension_numbers = #tpu.dot_dimension_numbers<[2], [2], [1], [1], [0, 0, 0, 1, 1, 1], [0], [0]>} : vector<2x8x8xbf16>, vector<2x8x8xbf16>, vector<2x8x8xf32> -> vector<2x8x8xf32>
    "tpu.trace_stop"() : () -> ()
    %cst_197 = arith.constant 0.353553385 : f32
    %703 = vector.broadcast %cst_197 : f32 to vector<2x8x8xf32>
    %704 = arith.mulf %702, %703 : vector<2x8x8xf32>
    %705 = vector.broadcast %9 : vector<1x8x8xf32> to vector<2x8x8xf32>
    %706 = arith.addf %704, %705 : vector<2x8x8xf32>
    %cst_198 = arith.constant dense<0xFF800000> : vector<2x8xf32>
    %707 = vector.multi_reduction <maximumf>, %706, %cst_198 [2] : vector<2x8x8xf32> to vector<2x8xf32>
    %708 = vector.shape_cast %707 : vector<2x8xf32> to vector<2x8x1xf32>
    %709 = vector.broadcast %708 : vector<2x8x1xf32> to vector<2x8x8xf32>
    %710 = arith.subf %706, %709 : vector<2x8x8xf32>
    %711 = math.exp %710 : vector<2x8x8xf32>
    %cst_199 = arith.constant dense<0.000000e+00> : vector<2x8xf32>
    %712 = vector.multi_reduction <add>, %711, %cst_199 [2] : vector<2x8x8xf32> to vector<2x8xf32>
    %713 = vector.shape_cast %712 : vector<2x8xf32> to vector<2x8x1xf32>
    %714 = arith.truncf %711 : vector<2x8x8xf32> to vector<2x8x8xbf16>
    "tpu.trace_start"() <{level = 10 : i32, message = "bqk,bkd->bqd"}> : () -> ()
    %cst_200 = arith.constant dense<0.000000e+00> : vector<2x8x8xf32>
    %715 = tpu.matmul %714, %701, %cst_200 {dimension_numbers = #tpu.dot_dimension_numbers<[2], [1], [1], [2], [0, 0, 0, 1, 1, 2], [0], [0]>} : vector<2x8x8xbf16>, vector<2x8x8xbf16>, vector<2x8x8xf32> -> vector<2x8x8xf32>
    "tpu.trace_stop"() : () -> ()
    %716 = tpu.reciprocal %713 {approx = true} : vector<2x8x1xf32> -> vector<2x8x1xf32>
    %717 = vector.broadcast %716 : vector<2x8x1xf32> to vector<2x8x8xf32>
    %718 = arith.mulf %715, %717 : vector<2x8x8xf32>
    %719 = vector.extract_strided_slice %693 {offsets = [0, 0, 8], sizes = [2, 8, 8], strides = [1, 1, 1]} : vector<2x8x32xf32> to vector<2x8x8xf32>
    %720 = arith.truncf %719 : vector<2x8x8xf32> to vector<2x8x8xbf16>
    %721 = vector.extract_strided_slice %694 {offsets = [0, 0, 8], sizes = [2, 8, 8], strides = [1, 1, 1]} : vector<2x8x32xf32> to vector<2x8x8xf32>
    %722 = arith.truncf %721 : vector<2x8x8xf32> to vector<2x8x8xbf16>
    %723 = vector.extract_strided_slice %695 {offsets = [0, 0, 8], sizes = [2, 8, 8], strides = [1, 1, 1]} : vector<2x8x32xf32> to vector<2x8x8xf32>
    %724 = arith.truncf %723 : vector<2x8x8xf32> to vector<2x8x8xbf16>
    "tpu.trace_start"() <{level = 10 : i32, message = "bqd,bkd->bqk"}> : () -> ()
    %cst_201 = arith.constant dense<0.000000e+00> : vector<2x8x8xf32>
    %725 = tpu.matmul %720, %722, %cst_201 {dimension_numbers = #tpu.dot_dimension_numbers<[2], [2], [1], [1], [0, 0, 0, 1, 1, 1], [0], [0]>} : vector<2x8x8xbf16>, vector<2x8x8xbf16>, vector<2x8x8xf32> -> vector<2x8x8xf32>
    "tpu.trace_stop"() : () -> ()
    %cst_202 = arith.constant 0.353553385 : f32
    %726 = vector.broadcast %cst_202 : f32 to vector<2x8x8xf32>
    %727 = arith.mulf %725, %726 : vector<2x8x8xf32>
    %728 = vector.broadcast %9 : vector<1x8x8xf32> to vector<2x8x8xf32>
    %729 = arith.addf %727, %728 : vector<2x8x8xf32>
    %cst_203 = arith.constant dense<0xFF800000> : vector<2x8xf32>
    %730 = vector.multi_reduction <maximumf>, %729, %cst_203 [2] : vector<2x8x8xf32> to vector<2x8xf32>
    %731 = vector.shape_cast %730 : vector<2x8xf32> to vector<2x8x1xf32>
    %732 = vector.broadcast %731 : vector<2x8x1xf32> to vector<2x8x8xf32>
    %733 = arith.subf %729, %732 : vector<2x8x8xf32>
    %734 = math.exp %733 : vector<2x8x8xf32>
    %cst_204 = arith.constant dense<0.000000e+00> : vector<2x8xf32>
    %735 = vector.multi_reduction <add>, %734, %cst_204 [2] : vector<2x8x8xf32> to vector<2x8xf32>
    %736 = vector.shape_cast %735 : vector<2x8xf32> to vector<2x8x1xf32>
    %737 = arith.truncf %734 : vector<2x8x8xf32> to vector<2x8x8xbf16>
    "tpu.trace_start"() <{level = 10 : i32, message = "bqk,bkd->bqd"}> : () -> ()
    %cst_205 = arith.constant dense<0.000000e+00> : vector<2x8x8xf32>
    %738 = tpu.matmul %737, %724, %cst_205 {dimension_numbers = #tpu.dot_dimension_numbers<[2], [1], [1], [2], [0, 0, 0, 1, 1, 2], [0], [0]>} : vector<2x8x8xbf16>, vector<2x8x8xbf16>, vector<2x8x8xf32> -> vector<2x8x8xf32>
    "tpu.trace_stop"() : () -> ()
    %739 = tpu.reciprocal %736 {approx = true} : vector<2x8x1xf32> -> vector<2x8x1xf32>
    %740 = vector.broadcast %739 : vector<2x8x1xf32> to vector<2x8x8xf32>
    %741 = arith.mulf %738, %740 : vector<2x8x8xf32>
    %742 = vector.extract_strided_slice %693 {offsets = [0, 0, 16], sizes = [2, 8, 8], strides = [1, 1, 1]} : vector<2x8x32xf32> to vector<2x8x8xf32>
    %743 = arith.truncf %742 : vector<2x8x8xf32> to vector<2x8x8xbf16>
    %744 = vector.extract_strided_slice %694 {offsets = [0, 0, 16], sizes = [2, 8, 8], strides = [1, 1, 1]} : vector<2x8x32xf32> to vector<2x8x8xf32>
    %745 = arith.truncf %744 : vector<2x8x8xf32> to vector<2x8x8xbf16>
    %746 = vector.extract_strided_slice %695 {offsets = [0, 0, 16], sizes = [2, 8, 8], strides = [1, 1, 1]} : vector<2x8x32xf32> to vector<2x8x8xf32>
    %747 = arith.truncf %746 : vector<2x8x8xf32> to vector<2x8x8xbf16>
    "tpu.trace_start"() <{level = 10 : i32, message = "bqd,bkd->bqk"}> : () -> ()
    %cst_206 = arith.constant dense<0.000000e+00> : vector<2x8x8xf32>
    %748 = tpu.matmul %743, %745, %cst_206 {dimension_numbers = #tpu.dot_dimension_numbers<[2], [2], [1], [1], [0, 0, 0, 1, 1, 1], [0], [0]>} : vector<2x8x8xbf16>, vector<2x8x8xbf16>, vector<2x8x8xf32> -> vector<2x8x8xf32>
    "tpu.trace_stop"() : () -> ()
    %cst_207 = arith.constant 0.353553385 : f32
    %749 = vector.broadcast %cst_207 : f32 to vector<2x8x8xf32>
    %750 = arith.mulf %748, %749 : vector<2x8x8xf32>
    %751 = vector.broadcast %9 : vector<1x8x8xf32> to vector<2x8x8xf32>
    %752 = arith.addf %750, %751 : vector<2x8x8xf32>
    %cst_208 = arith.constant dense<0xFF800000> : vector<2x8xf32>
    %753 = vector.multi_reduction <maximumf>, %752, %cst_208 [2] : vector<2x8x8xf32> to vector<2x8xf32>
    %754 = vector.shape_cast %753 : vector<2x8xf32> to vector<2x8x1xf32>
    %755 = vector.broadcast %754 : vector<2x8x1xf32> to vector<2x8x8xf32>
    %756 = arith.subf %752, %755 : vector<2x8x8xf32>
    %757 = math.exp %756 : vector<2x8x8xf32>
    %cst_209 = arith.constant dense<0.000000e+00> : vector<2x8xf32>
    %758 = vector.multi_reduction <add>, %757, %cst_209 [2] : vector<2x8x8xf32> to vector<2x8xf32>
    %759 = vector.shape_cast %758 : vector<2x8xf32> to vector<2x8x1xf32>
    %760 = arith.truncf %757 : vector<2x8x8xf32> to vector<2x8x8xbf16>
    "tpu.trace_start"() <{level = 10 : i32, message = "bqk,bkd->bqd"}> : () -> ()
    %cst_210 = arith.constant dense<0.000000e+00> : vector<2x8x8xf32>
    %761 = tpu.matmul %760, %747, %cst_210 {dimension_numbers = #tpu.dot_dimension_numbers<[2], [1], [1], [2], [0, 0, 0, 1, 1, 2], [0], [0]>} : vector<2x8x8xbf16>, vector<2x8x8xbf16>, vector<2x8x8xf32> -> vector<2x8x8xf32>
    "tpu.trace_stop"() : () -> ()
    %762 = tpu.reciprocal %759 {approx = true} : vector<2x8x1xf32> -> vector<2x8x1xf32>
    %763 = vector.broadcast %762 : vector<2x8x1xf32> to vector<2x8x8xf32>
    %764 = arith.mulf %761, %763 : vector<2x8x8xf32>
    %765 = vector.extract_strided_slice %693 {offsets = [0, 0, 24], sizes = [2, 8, 8], strides = [1, 1, 1]} : vector<2x8x32xf32> to vector<2x8x8xf32>
    %766 = arith.truncf %765 : vector<2x8x8xf32> to vector<2x8x8xbf16>
    %767 = vector.extract_strided_slice %694 {offsets = [0, 0, 24], sizes = [2, 8, 8], strides = [1, 1, 1]} : vector<2x8x32xf32> to vector<2x8x8xf32>
    %768 = arith.truncf %767 : vector<2x8x8xf32> to vector<2x8x8xbf16>
    %769 = vector.extract_strided_slice %695 {offsets = [0, 0, 24], sizes = [2, 8, 8], strides = [1, 1, 1]} : vector<2x8x32xf32> to vector<2x8x8xf32>
    %770 = arith.truncf %769 : vector<2x8x8xf32> to vector<2x8x8xbf16>
    "tpu.trace_start"() <{level = 10 : i32, message = "bqd,bkd->bqk"}> : () -> ()
    %cst_211 = arith.constant dense<0.000000e+00> : vector<2x8x8xf32>
    %771 = tpu.matmul %766, %768, %cst_211 {dimension_numbers = #tpu.dot_dimension_numbers<[2], [2], [1], [1], [0, 0, 0, 1, 1, 1], [0], [0]>} : vector<2x8x8xbf16>, vector<2x8x8xbf16>, vector<2x8x8xf32> -> vector<2x8x8xf32>
    "tpu.trace_stop"() : () -> ()
    %cst_212 = arith.constant 0.353553385 : f32
    %772 = vector.broadcast %cst_212 : f32 to vector<2x8x8xf32>
    %773 = arith.mulf %771, %772 : vector<2x8x8xf32>
    %774 = vector.broadcast %9 : vector<1x8x8xf32> to vector<2x8x8xf32>
    %775 = arith.addf %773, %774 : vector<2x8x8xf32>
    %cst_213 = arith.constant dense<0xFF800000> : vector<2x8xf32>
    %776 = vector.multi_reduction <maximumf>, %775, %cst_213 [2] : vector<2x8x8xf32> to vector<2x8xf32>
    %777 = vector.shape_cast %776 : vector<2x8xf32> to vector<2x8x1xf32>
    %778 = vector.broadcast %777 : vector<2x8x1xf32> to vector<2x8x8xf32>
    %779 = arith.subf %775, %778 : vector<2x8x8xf32>
    %780 = math.exp %779 : vector<2x8x8xf32>
    %cst_214 = arith.constant dense<0.000000e+00> : vector<2x8xf32>
    %781 = vector.multi_reduction <add>, %780, %cst_214 [2] : vector<2x8x8xf32> to vector<2x8xf32>
    %782 = vector.shape_cast %781 : vector<2x8xf32> to vector<2x8x1xf32>
    %783 = arith.truncf %780 : vector<2x8x8xf32> to vector<2x8x8xbf16>
    "tpu.trace_start"() <{level = 10 : i32, message = "bqk,bkd->bqd"}> : () -> ()
    %cst_215 = arith.constant dense<0.000000e+00> : vector<2x8x8xf32>
    %784 = tpu.matmul %783, %770, %cst_215 {dimension_numbers = #tpu.dot_dimension_numbers<[2], [1], [1], [2], [0, 0, 0, 1, 1, 2], [0], [0]>} : vector<2x8x8xbf16>, vector<2x8x8xbf16>, vector<2x8x8xf32> -> vector<2x8x8xf32>
    "tpu.trace_stop"() : () -> ()
    %785 = tpu.reciprocal %782 {approx = true} : vector<2x8x1xf32> -> vector<2x8x1xf32>
    %786 = vector.broadcast %785 : vector<2x8x1xf32> to vector<2x8x8xf32>
    %787 = arith.mulf %784, %786 : vector<2x8x8xf32>
    %788 = tpu.concatenate %718, %741, %764, %787 in 2 : vector<2x8x8xf32>, vector<2x8x8xf32>, vector<2x8x8xf32>, vector<2x8x8xf32> -> vector<2x8x32xf32>
    %789 = vector.shape_cast %788 : vector<2x8x32xf32> to vector<16x32xf32>
    %790 = arith.truncf %789 : vector<16x32xf32> to vector<16x32xbf16>
    %cst_216 = arith.constant dense<0.000000e+00> : vector<16x32xf32>
    %791 = tpu.matmul %790, %683, %cst_216 {dimension_numbers = #tpu.dot_dimension_numbers<[1], [0], [0], [1], [0, 0, 1, 1], [], []>} : vector<16x32xbf16>, vector<32x32xbf16>, vector<16x32xf32> -> vector<16x32xf32>
    %792 = vector.broadcast %685 : vector<1x32xf32> to vector<16x32xf32>
    %793 = arith.addf %791, %792 : vector<16x32xf32>
    %794 = arith.addf %681, %793 : vector<16x32xf32>
    %c34 = arith.constant 34 : index
    %c0_217 = arith.constant 0 : index
    %795 = vector.load %arg5[%c34, %c0_217] : memref<48x128xf32, #tpu.memory_space<vmem>>, vector<1x32xf32>
    %c35 = arith.constant 35 : index
    %c0_218 = arith.constant 0 : index
    %796 = vector.load %arg5[%c35, %c0_218] : memref<48x128xf32, #tpu.memory_space<vmem>>, vector<1x32xf32>
    %cst_219 = arith.constant dense<0.000000e+00> : vector<16xf32>
    %797 = vector.multi_reduction <add>, %794, %cst_219 [1] : vector<16x32xf32> to vector<16xf32>
    %798 = vector.shape_cast %797 : vector<16xf32> to vector<16x1xf32>
    %cst_220 = arith.constant 3.200000e+01 : f32
    %799 = vector.broadcast %cst_220 : f32 to vector<16x1xf32>
    %800 = arith.divf %798, %799 : vector<16x1xf32>
    %801 = vector.broadcast %800 : vector<16x1xf32> to vector<16x32xf32>
    %802 = arith.subf %794, %801 : vector<16x32xf32>
    %803 = arith.mulf %802, %802 : vector<16x32xf32>
    %cst_221 = arith.constant dense<0.000000e+00> : vector<16xf32>
    %804 = vector.multi_reduction <add>, %803, %cst_221 [1] : vector<16x32xf32> to vector<16xf32>
    %805 = vector.shape_cast %804 : vector<16xf32> to vector<16x1xf32>
    %cst_222 = arith.constant 3.200000e+01 : f32
    %806 = vector.broadcast %cst_222 : f32 to vector<16x1xf32>
    %807 = arith.divf %805, %806 : vector<16x1xf32>
    %cst_223 = arith.constant 9.99999974E-6 : f32
    %808 = vector.broadcast %cst_223 : f32 to vector<16x1xf32>
    %809 = arith.addf %807, %808 : vector<16x1xf32>
    %810 = math.rsqrt %809 : vector<16x1xf32>
    %811 = vector.broadcast %810 : vector<16x1xf32> to vector<16x32xf32>
    %812 = arith.mulf %802, %811 : vector<16x32xf32>
    %813 = vector.broadcast %795 : vector<1x32xf32> to vector<16x32xf32>
    %814 = arith.mulf %812, %813 : vector<16x32xf32>
    %815 = vector.broadcast %796 : vector<1x32xf32> to vector<16x32xf32>
    %816 = arith.addf %814, %815 : vector<16x32xf32>
    %c608 = arith.constant 608 : index
    %c0_224 = arith.constant 0 : index
    %817 = vector.load %arg4[%c608, %c0_224] : memref<800x128xbf16, #tpu.memory_space<vmem>>, vector<32x96xbf16>
    %c640 = arith.constant 640 : index
    %c0_225 = arith.constant 0 : index
    %818 = vector.load %arg4[%c640, %c0_225] : memref<800x128xbf16, #tpu.memory_space<vmem>>, vector<32x32xbf16>
    %c30 = arith.constant 30 : index
    %c0_226 = arith.constant 0 : index
    %819 = vector.load %arg5[%c30, %c0_226] : memref<48x128xf32, #tpu.memory_space<vmem>>, vector<1x96xf32>
    %c31 = arith.constant 31 : index
    %c0_227 = arith.constant 0 : index
    %820 = vector.load %arg5[%c31, %c0_227] : memref<48x128xf32, #tpu.memory_space<vmem>>, vector<1x32xf32>
    %821 = vector.extract_strided_slice %817 {offsets = [0, 0], sizes = [32, 32], strides = [1, 1]} : vector<32x96xbf16> to vector<32x32xbf16>
    %822 = arith.truncf %816 : vector<16x32xf32> to vector<16x32xbf16>
    %cst_228 = arith.constant dense<0.000000e+00> : vector<16x32xf32>
    %823 = tpu.matmul %822, %821, %cst_228 {dimension_numbers = #tpu.dot_dimension_numbers<[1], [0], [0], [1], [0, 0, 1, 1], [], []>} : vector<16x32xbf16>, vector<32x32xbf16>, vector<16x32xf32> -> vector<16x32xf32>
    %824 = vector.extract_strided_slice %819 {offsets = [0, 0], sizes = [1, 32], strides = [1, 1]} : vector<1x96xf32> to vector<1x32xf32>
    %825 = vector.broadcast %824 : vector<1x32xf32> to vector<16x32xf32>
    %826 = arith.addf %823, %825 : vector<16x32xf32>
    %827 = vector.extract_strided_slice %817 {offsets = [0, 32], sizes = [32, 64], strides = [1, 1]} : vector<32x96xbf16> to vector<32x64xbf16>
    %828 = arith.truncf %375 : vector<16x32xf32> to vector<16x32xbf16>
    %cst_229 = arith.constant dense<0.000000e+00> : vector<16x64xf32>
    %829 = tpu.matmul %828, %827, %cst_229 {dimension_numbers = #tpu.dot_dimension_numbers<[1], [0], [0], [1], [0, 0, 1, 1], [], []>} : vector<16x32xbf16>, vector<32x64xbf16>, vector<16x64xf32> -> vector<16x64xf32>
    %830 = vector.extract_strided_slice %819 {offsets = [0, 32], sizes = [1, 64], strides = [1, 1]} : vector<1x96xf32> to vector<1x64xf32>
    %831 = vector.broadcast %830 : vector<1x64xf32> to vector<16x64xf32>
    %832 = arith.addf %829, %831 : vector<16x64xf32>
    %833 = vector.extract_strided_slice %832 {offsets = [0, 0], sizes = [16, 32], strides = [1, 1]} : vector<16x64xf32> to vector<16x32xf32>
    %834 = vector.extract_strided_slice %832 {offsets = [0, 32], sizes = [16, 32], strides = [1, 1]} : vector<16x64xf32> to vector<16x32xf32>
    %835 = vector.shape_cast %826 : vector<16x32xf32> to vector<2x8x32xf32>
    %836 = vector.shape_cast %833 : vector<16x32xf32> to vector<2x8x32xf32>
    %837 = vector.shape_cast %834 : vector<16x32xf32> to vector<2x8x32xf32>
    %838 = vector.extract_strided_slice %835 {offsets = [0, 0, 0], sizes = [2, 8, 8], strides = [1, 1, 1]} : vector<2x8x32xf32> to vector<2x8x8xf32>
    %839 = arith.truncf %838 : vector<2x8x8xf32> to vector<2x8x8xbf16>
    %840 = vector.extract_strided_slice %836 {offsets = [0, 0, 0], sizes = [2, 8, 8], strides = [1, 1, 1]} : vector<2x8x32xf32> to vector<2x8x8xf32>
    %841 = arith.truncf %840 : vector<2x8x8xf32> to vector<2x8x8xbf16>
    %842 = vector.extract_strided_slice %837 {offsets = [0, 0, 0], sizes = [2, 8, 8], strides = [1, 1, 1]} : vector<2x8x32xf32> to vector<2x8x8xf32>
    %843 = arith.truncf %842 : vector<2x8x8xf32> to vector<2x8x8xbf16>
    "tpu.trace_start"() <{level = 10 : i32, message = "bqd,bkd->bqk"}> : () -> ()
    %cst_230 = arith.constant dense<0.000000e+00> : vector<2x8x8xf32>
    %844 = tpu.matmul %839, %841, %cst_230 {dimension_numbers = #tpu.dot_dimension_numbers<[2], [2], [1], [1], [0, 0, 0, 1, 1, 1], [0], [0]>} : vector<2x8x8xbf16>, vector<2x8x8xbf16>, vector<2x8x8xf32> -> vector<2x8x8xf32>
    "tpu.trace_stop"() : () -> ()
    %cst_231 = arith.constant 0.353553385 : f32
    %845 = vector.broadcast %cst_231 : f32 to vector<2x8x8xf32>
    %846 = arith.mulf %844, %845 : vector<2x8x8xf32>
    %cst_232 = arith.constant dense<0xFF800000> : vector<2x8xf32>
    %847 = vector.multi_reduction <maximumf>, %846, %cst_232 [2] : vector<2x8x8xf32> to vector<2x8xf32>
    %848 = vector.shape_cast %847 : vector<2x8xf32> to vector<2x8x1xf32>
    %849 = vector.broadcast %848 : vector<2x8x1xf32> to vector<2x8x8xf32>
    %850 = arith.subf %846, %849 : vector<2x8x8xf32>
    %851 = math.exp %850 : vector<2x8x8xf32>
    %cst_233 = arith.constant dense<0.000000e+00> : vector<2x8xf32>
    %852 = vector.multi_reduction <add>, %851, %cst_233 [2] : vector<2x8x8xf32> to vector<2x8xf32>
    %853 = vector.shape_cast %852 : vector<2x8xf32> to vector<2x8x1xf32>
    %854 = arith.truncf %851 : vector<2x8x8xf32> to vector<2x8x8xbf16>
    "tpu.trace_start"() <{level = 10 : i32, message = "bqk,bkd->bqd"}> : () -> ()
    %cst_234 = arith.constant dense<0.000000e+00> : vector<2x8x8xf32>
    %855 = tpu.matmul %854, %843, %cst_234 {dimension_numbers = #tpu.dot_dimension_numbers<[2], [1], [1], [2], [0, 0, 0, 1, 1, 2], [0], [0]>} : vector<2x8x8xbf16>, vector<2x8x8xbf16>, vector<2x8x8xf32> -> vector<2x8x8xf32>
    "tpu.trace_stop"() : () -> ()
    %856 = tpu.reciprocal %853 {approx = true} : vector<2x8x1xf32> -> vector<2x8x1xf32>
    %857 = vector.broadcast %856 : vector<2x8x1xf32> to vector<2x8x8xf32>
    %858 = arith.mulf %855, %857 : vector<2x8x8xf32>
    %859 = vector.extract_strided_slice %835 {offsets = [0, 0, 8], sizes = [2, 8, 8], strides = [1, 1, 1]} : vector<2x8x32xf32> to vector<2x8x8xf32>
    %860 = arith.truncf %859 : vector<2x8x8xf32> to vector<2x8x8xbf16>
    %861 = vector.extract_strided_slice %836 {offsets = [0, 0, 8], sizes = [2, 8, 8], strides = [1, 1, 1]} : vector<2x8x32xf32> to vector<2x8x8xf32>
    %862 = arith.truncf %861 : vector<2x8x8xf32> to vector<2x8x8xbf16>
    %863 = vector.extract_strided_slice %837 {offsets = [0, 0, 8], sizes = [2, 8, 8], strides = [1, 1, 1]} : vector<2x8x32xf32> to vector<2x8x8xf32>
    %864 = arith.truncf %863 : vector<2x8x8xf32> to vector<2x8x8xbf16>
    "tpu.trace_start"() <{level = 10 : i32, message = "bqd,bkd->bqk"}> : () -> ()
    %cst_235 = arith.constant dense<0.000000e+00> : vector<2x8x8xf32>
    %865 = tpu.matmul %860, %862, %cst_235 {dimension_numbers = #tpu.dot_dimension_numbers<[2], [2], [1], [1], [0, 0, 0, 1, 1, 1], [0], [0]>} : vector<2x8x8xbf16>, vector<2x8x8xbf16>, vector<2x8x8xf32> -> vector<2x8x8xf32>
    "tpu.trace_stop"() : () -> ()
    %cst_236 = arith.constant 0.353553385 : f32
    %866 = vector.broadcast %cst_236 : f32 to vector<2x8x8xf32>
    %867 = arith.mulf %865, %866 : vector<2x8x8xf32>
    %cst_237 = arith.constant dense<0xFF800000> : vector<2x8xf32>
    %868 = vector.multi_reduction <maximumf>, %867, %cst_237 [2] : vector<2x8x8xf32> to vector<2x8xf32>
    %869 = vector.shape_cast %868 : vector<2x8xf32> to vector<2x8x1xf32>
    %870 = vector.broadcast %869 : vector<2x8x1xf32> to vector<2x8x8xf32>
    %871 = arith.subf %867, %870 : vector<2x8x8xf32>
    %872 = math.exp %871 : vector<2x8x8xf32>
    %cst_238 = arith.constant dense<0.000000e+00> : vector<2x8xf32>
    %873 = vector.multi_reduction <add>, %872, %cst_238 [2] : vector<2x8x8xf32> to vector<2x8xf32>
    %874 = vector.shape_cast %873 : vector<2x8xf32> to vector<2x8x1xf32>
    %875 = arith.truncf %872 : vector<2x8x8xf32> to vector<2x8x8xbf16>
    "tpu.trace_start"() <{level = 10 : i32, message = "bqk,bkd->bqd"}> : () -> ()
    %cst_239 = arith.constant dense<0.000000e+00> : vector<2x8x8xf32>
    %876 = tpu.matmul %875, %864, %cst_239 {dimension_numbers = #tpu.dot_dimension_numbers<[2], [1], [1], [2], [0, 0, 0, 1, 1, 2], [0], [0]>} : vector<2x8x8xbf16>, vector<2x8x8xbf16>, vector<2x8x8xf32> -> vector<2x8x8xf32>
    "tpu.trace_stop"() : () -> ()
    %877 = tpu.reciprocal %874 {approx = true} : vector<2x8x1xf32> -> vector<2x8x1xf32>
    %878 = vector.broadcast %877 : vector<2x8x1xf32> to vector<2x8x8xf32>
    %879 = arith.mulf %876, %878 : vector<2x8x8xf32>
    %880 = vector.extract_strided_slice %835 {offsets = [0, 0, 16], sizes = [2, 8, 8], strides = [1, 1, 1]} : vector<2x8x32xf32> to vector<2x8x8xf32>
    %881 = arith.truncf %880 : vector<2x8x8xf32> to vector<2x8x8xbf16>
    %882 = vector.extract_strided_slice %836 {offsets = [0, 0, 16], sizes = [2, 8, 8], strides = [1, 1, 1]} : vector<2x8x32xf32> to vector<2x8x8xf32>
    %883 = arith.truncf %882 : vector<2x8x8xf32> to vector<2x8x8xbf16>
    %884 = vector.extract_strided_slice %837 {offsets = [0, 0, 16], sizes = [2, 8, 8], strides = [1, 1, 1]} : vector<2x8x32xf32> to vector<2x8x8xf32>
    %885 = arith.truncf %884 : vector<2x8x8xf32> to vector<2x8x8xbf16>
    "tpu.trace_start"() <{level = 10 : i32, message = "bqd,bkd->bqk"}> : () -> ()
    %cst_240 = arith.constant dense<0.000000e+00> : vector<2x8x8xf32>
    %886 = tpu.matmul %881, %883, %cst_240 {dimension_numbers = #tpu.dot_dimension_numbers<[2], [2], [1], [1], [0, 0, 0, 1, 1, 1], [0], [0]>} : vector<2x8x8xbf16>, vector<2x8x8xbf16>, vector<2x8x8xf32> -> vector<2x8x8xf32>
    "tpu.trace_stop"() : () -> ()
    %cst_241 = arith.constant 0.353553385 : f32
    %887 = vector.broadcast %cst_241 : f32 to vector<2x8x8xf32>
    %888 = arith.mulf %886, %887 : vector<2x8x8xf32>
    %cst_242 = arith.constant dense<0xFF800000> : vector<2x8xf32>
    %889 = vector.multi_reduction <maximumf>, %888, %cst_242 [2] : vector<2x8x8xf32> to vector<2x8xf32>
    %890 = vector.shape_cast %889 : vector<2x8xf32> to vector<2x8x1xf32>
    %891 = vector.broadcast %890 : vector<2x8x1xf32> to vector<2x8x8xf32>
    %892 = arith.subf %888, %891 : vector<2x8x8xf32>
    %893 = math.exp %892 : vector<2x8x8xf32>
    %cst_243 = arith.constant dense<0.000000e+00> : vector<2x8xf32>
    %894 = vector.multi_reduction <add>, %893, %cst_243 [2] : vector<2x8x8xf32> to vector<2x8xf32>
    %895 = vector.shape_cast %894 : vector<2x8xf32> to vector<2x8x1xf32>
    %896 = arith.truncf %893 : vector<2x8x8xf32> to vector<2x8x8xbf16>
    "tpu.trace_start"() <{level = 10 : i32, message = "bqk,bkd->bqd"}> : () -> ()
    %cst_244 = arith.constant dense<0.000000e+00> : vector<2x8x8xf32>
    %897 = tpu.matmul %896, %885, %cst_244 {dimension_numbers = #tpu.dot_dimension_numbers<[2], [1], [1], [2], [0, 0, 0, 1, 1, 2], [0], [0]>} : vector<2x8x8xbf16>, vector<2x8x8xbf16>, vector<2x8x8xf32> -> vector<2x8x8xf32>
    "tpu.trace_stop"() : () -> ()
    %898 = tpu.reciprocal %895 {approx = true} : vector<2x8x1xf32> -> vector<2x8x1xf32>
    %899 = vector.broadcast %898 : vector<2x8x1xf32> to vector<2x8x8xf32>
    %900 = arith.mulf %897, %899 : vector<2x8x8xf32>
    %901 = vector.extract_strided_slice %835 {offsets = [0, 0, 24], sizes = [2, 8, 8], strides = [1, 1, 1]} : vector<2x8x32xf32> to vector<2x8x8xf32>
    %902 = arith.truncf %901 : vector<2x8x8xf32> to vector<2x8x8xbf16>
    %903 = vector.extract_strided_slice %836 {offsets = [0, 0, 24], sizes = [2, 8, 8], strides = [1, 1, 1]} : vector<2x8x32xf32> to vector<2x8x8xf32>
    %904 = arith.truncf %903 : vector<2x8x8xf32> to vector<2x8x8xbf16>
    %905 = vector.extract_strided_slice %837 {offsets = [0, 0, 24], sizes = [2, 8, 8], strides = [1, 1, 1]} : vector<2x8x32xf32> to vector<2x8x8xf32>
    %906 = arith.truncf %905 : vector<2x8x8xf32> to vector<2x8x8xbf16>
    "tpu.trace_start"() <{level = 10 : i32, message = "bqd,bkd->bqk"}> : () -> ()
    %cst_245 = arith.constant dense<0.000000e+00> : vector<2x8x8xf32>
    %907 = tpu.matmul %902, %904, %cst_245 {dimension_numbers = #tpu.dot_dimension_numbers<[2], [2], [1], [1], [0, 0, 0, 1, 1, 1], [0], [0]>} : vector<2x8x8xbf16>, vector<2x8x8xbf16>, vector<2x8x8xf32> -> vector<2x8x8xf32>
    "tpu.trace_stop"() : () -> ()
    %cst_246 = arith.constant 0.353553385 : f32
    %908 = vector.broadcast %cst_246 : f32 to vector<2x8x8xf32>
    %909 = arith.mulf %907, %908 : vector<2x8x8xf32>
    %cst_247 = arith.constant dense<0xFF800000> : vector<2x8xf32>
    %910 = vector.multi_reduction <maximumf>, %909, %cst_247 [2] : vector<2x8x8xf32> to vector<2x8xf32>
    %911 = vector.shape_cast %910 : vector<2x8xf32> to vector<2x8x1xf32>
    %912 = vector.broadcast %911 : vector<2x8x1xf32> to vector<2x8x8xf32>
    %913 = arith.subf %909, %912 : vector<2x8x8xf32>
    %914 = math.exp %913 : vector<2x8x8xf32>
    %cst_248 = arith.constant dense<0.000000e+00> : vector<2x8xf32>
    %915 = vector.multi_reduction <add>, %914, %cst_248 [2] : vector<2x8x8xf32> to vector<2x8xf32>
    %916 = vector.shape_cast %915 : vector<2x8xf32> to vector<2x8x1xf32>
    %917 = arith.truncf %914 : vector<2x8x8xf32> to vector<2x8x8xbf16>
    "tpu.trace_start"() <{level = 10 : i32, message = "bqk,bkd->bqd"}> : () -> ()
    %cst_249 = arith.constant dense<0.000000e+00> : vector<2x8x8xf32>
    %918 = tpu.matmul %917, %906, %cst_249 {dimension_numbers = #tpu.dot_dimension_numbers<[2], [1], [1], [2], [0, 0, 0, 1, 1, 2], [0], [0]>} : vector<2x8x8xbf16>, vector<2x8x8xbf16>, vector<2x8x8xf32> -> vector<2x8x8xf32>
    "tpu.trace_stop"() : () -> ()
    %919 = tpu.reciprocal %916 {approx = true} : vector<2x8x1xf32> -> vector<2x8x1xf32>
    %920 = vector.broadcast %919 : vector<2x8x1xf32> to vector<2x8x8xf32>
    %921 = arith.mulf %918, %920 : vector<2x8x8xf32>
    %922 = tpu.concatenate %858, %879, %900, %921 in 2 : vector<2x8x8xf32>, vector<2x8x8xf32>, vector<2x8x8xf32>, vector<2x8x8xf32> -> vector<2x8x32xf32>
    %923 = vector.shape_cast %922 : vector<2x8x32xf32> to vector<16x32xf32>
    %924 = arith.truncf %923 : vector<16x32xf32> to vector<16x32xbf16>
    %cst_250 = arith.constant dense<0.000000e+00> : vector<16x32xf32>
    %925 = tpu.matmul %924, %818, %cst_250 {dimension_numbers = #tpu.dot_dimension_numbers<[1], [0], [0], [1], [0, 0, 1, 1], [], []>} : vector<16x32xbf16>, vector<32x32xbf16>, vector<16x32xf32> -> vector<16x32xf32>
    %926 = vector.broadcast %820 : vector<1x32xf32> to vector<16x32xf32>
    %927 = arith.addf %925, %926 : vector<16x32xf32>
    %928 = arith.addf %816, %927 : vector<16x32xf32>
    %c36 = arith.constant 36 : index
    %c0_251 = arith.constant 0 : index
    %929 = vector.load %arg5[%c36, %c0_251] : memref<48x128xf32, #tpu.memory_space<vmem>>, vector<1x32xf32>
    %c37 = arith.constant 37 : index
    %c0_252 = arith.constant 0 : index
    %930 = vector.load %arg5[%c37, %c0_252] : memref<48x128xf32, #tpu.memory_space<vmem>>, vector<1x32xf32>
    %cst_253 = arith.constant dense<0.000000e+00> : vector<16xf32>
    %931 = vector.multi_reduction <add>, %928, %cst_253 [1] : vector<16x32xf32> to vector<16xf32>
    %932 = vector.shape_cast %931 : vector<16xf32> to vector<16x1xf32>
    %cst_254 = arith.constant 3.200000e+01 : f32
    %933 = vector.broadcast %cst_254 : f32 to vector<16x1xf32>
    %934 = arith.divf %932, %933 : vector<16x1xf32>
    %935 = vector.broadcast %934 : vector<16x1xf32> to vector<16x32xf32>
    %936 = arith.subf %928, %935 : vector<16x32xf32>
    %937 = arith.mulf %936, %936 : vector<16x32xf32>
    %cst_255 = arith.constant dense<0.000000e+00> : vector<16xf32>
    %938 = vector.multi_reduction <add>, %937, %cst_255 [1] : vector<16x32xf32> to vector<16xf32>
    %939 = vector.shape_cast %938 : vector<16xf32> to vector<16x1xf32>
    %cst_256 = arith.constant 3.200000e+01 : f32
    %940 = vector.broadcast %cst_256 : f32 to vector<16x1xf32>
    %941 = arith.divf %939, %940 : vector<16x1xf32>
    %cst_257 = arith.constant 9.99999974E-6 : f32
    %942 = vector.broadcast %cst_257 : f32 to vector<16x1xf32>
    %943 = arith.addf %941, %942 : vector<16x1xf32>
    %944 = math.rsqrt %943 : vector<16x1xf32>
    %945 = vector.broadcast %944 : vector<16x1xf32> to vector<16x32xf32>
    %946 = arith.mulf %936, %945 : vector<16x32xf32>
    %947 = vector.broadcast %929 : vector<1x32xf32> to vector<16x32xf32>
    %948 = arith.mulf %946, %947 : vector<16x32xf32>
    %949 = vector.broadcast %930 : vector<1x32xf32> to vector<16x32xf32>
    %950 = arith.addf %948, %949 : vector<16x32xf32>
    %c672 = arith.constant 672 : index
    %c0_258 = arith.constant 0 : index
    %951 = vector.load %arg4[%c672, %c0_258] : memref<800x128xbf16, #tpu.memory_space<vmem>>, vector<32x64xbf16>
    %952 = arith.truncf %950 : vector<16x32xf32> to vector<16x32xbf16>
    %cst_259 = arith.constant dense<0.000000e+00> : vector<16x64xf32>
    %953 = tpu.matmul %952, %951, %cst_259 {dimension_numbers = #tpu.dot_dimension_numbers<[1], [0], [0], [1], [0, 0, 1, 1], [], []>} : vector<16x32xbf16>, vector<32x64xbf16>, vector<16x64xf32> -> vector<16x64xf32>
    %c32_260 = arith.constant 32 : index
    %c0_261 = arith.constant 0 : index
    %954 = vector.load %arg5[%c32_260, %c0_261] : memref<48x128xf32, #tpu.memory_space<vmem>>, vector<1x64xf32>
    %955 = vector.broadcast %954 : vector<1x64xf32> to vector<16x64xf32>
    %956 = arith.addf %953, %955 : vector<16x64xf32>
    %cst_262 = arith.constant 0.000000e+00 : f32
    %957 = vector.broadcast %cst_262 : f32 to vector<16x64xf32>
    %958 = arith.maximumf %956, %957 : vector<16x64xf32>
    %c704 = arith.constant 704 : index
    %c0_263 = arith.constant 0 : index
    %959 = vector.load %arg4[%c704, %c0_263] : memref<800x128xbf16, #tpu.memory_space<vmem>>, vector<64x32xbf16>
    %960 = arith.truncf %958 : vector<16x64xf32> to vector<16x64xbf16>
    %cst_264 = arith.constant dense<0.000000e+00> : vector<16x32xf32>
    %961 = tpu.matmul %960, %959, %cst_264 {dimension_numbers = #tpu.dot_dimension_numbers<[1], [0], [0], [1], [0, 0, 1, 1], [], []>} : vector<16x64xbf16>, vector<64x32xbf16>, vector<16x32xf32> -> vector<16x32xf32>
    %c33 = arith.constant 33 : index
    %c0_265 = arith.constant 0 : index
    %962 = vector.load %arg5[%c33, %c0_265] : memref<48x128xf32, #tpu.memory_space<vmem>>, vector<1x32xf32>
    %963 = vector.broadcast %962 : vector<1x32xf32> to vector<16x32xf32>
    %964 = arith.addf %961, %963 : vector<16x32xf32>
    %965 = arith.addf %950, %964 : vector<16x32xf32>
    %c38 = arith.constant 38 : index
    %c0_266 = arith.constant 0 : index
    %966 = vector.load %arg5[%c38, %c0_266] : memref<48x128xf32, #tpu.memory_space<vmem>>, vector<1x32xf32>
    %c39 = arith.constant 39 : index
    %c0_267 = arith.constant 0 : index
    %967 = vector.load %arg5[%c39, %c0_267] : memref<48x128xf32, #tpu.memory_space<vmem>>, vector<1x32xf32>
    %cst_268 = arith.constant dense<0.000000e+00> : vector<16xf32>
    %968 = vector.multi_reduction <add>, %965, %cst_268 [1] : vector<16x32xf32> to vector<16xf32>
    %969 = vector.shape_cast %968 : vector<16xf32> to vector<16x1xf32>
    %cst_269 = arith.constant 3.200000e+01 : f32
    %970 = vector.broadcast %cst_269 : f32 to vector<16x1xf32>
    %971 = arith.divf %969, %970 : vector<16x1xf32>
    %972 = vector.broadcast %971 : vector<16x1xf32> to vector<16x32xf32>
    %973 = arith.subf %965, %972 : vector<16x32xf32>
    %974 = arith.mulf %973, %973 : vector<16x32xf32>
    %cst_270 = arith.constant dense<0.000000e+00> : vector<16xf32>
    %975 = vector.multi_reduction <add>, %974, %cst_270 [1] : vector<16x32xf32> to vector<16xf32>
    %976 = vector.shape_cast %975 : vector<16xf32> to vector<16x1xf32>
    %cst_271 = arith.constant 3.200000e+01 : f32
    %977 = vector.broadcast %cst_271 : f32 to vector<16x1xf32>
    %978 = arith.divf %976, %977 : vector<16x1xf32>
    %cst_272 = arith.constant 9.99999974E-6 : f32
    %979 = vector.broadcast %cst_272 : f32 to vector<16x1xf32>
    %980 = arith.addf %978, %979 : vector<16x1xf32>
    %981 = math.rsqrt %980 : vector<16x1xf32>
    %982 = vector.broadcast %981 : vector<16x1xf32> to vector<16x32xf32>
    %983 = arith.mulf %973, %982 : vector<16x32xf32>
    %984 = vector.broadcast %966 : vector<1x32xf32> to vector<16x32xf32>
    %985 = arith.mulf %983, %984 : vector<16x32xf32>
    %986 = vector.broadcast %967 : vector<1x32xf32> to vector<16x32xf32>
    %987 = arith.addf %985, %986 : vector<16x32xf32>
    %c42 = arith.constant 42 : index
    %c0_273 = arith.constant 0 : index
    %988 = vector.load %arg5[%c42, %c0_273] : memref<48x128xf32, #tpu.memory_space<vmem>>, vector<1x32xf32>
    %c43 = arith.constant 43 : index
    %c0_274 = arith.constant 0 : index
    %989 = vector.load %arg5[%c43, %c0_274] : memref<48x128xf32, #tpu.memory_space<vmem>>, vector<1x32xf32>
    %cst_275 = arith.constant dense<0.000000e+00> : vector<16xf32>
    %990 = vector.multi_reduction <add>, %987, %cst_275 [1] : vector<16x32xf32> to vector<16xf32>
    %991 = vector.shape_cast %990 : vector<16xf32> to vector<16x1xf32>
    %cst_276 = arith.constant 3.200000e+01 : f32
    %992 = vector.broadcast %cst_276 : f32 to vector<16x1xf32>
    %993 = arith.divf %991, %992 : vector<16x1xf32>
    %994 = vector.broadcast %993 : vector<16x1xf32> to vector<16x32xf32>
    %995 = arith.subf %987, %994 : vector<16x32xf32>
    %996 = arith.mulf %995, %995 : vector<16x32xf32>
    %cst_277 = arith.constant dense<0.000000e+00> : vector<16xf32>
    %997 = vector.multi_reduction <add>, %996, %cst_277 [1] : vector<16x32xf32> to vector<16xf32>
    %998 = vector.shape_cast %997 : vector<16xf32> to vector<16x1xf32>
    %cst_278 = arith.constant 3.200000e+01 : f32
    %999 = vector.broadcast %cst_278 : f32 to vector<16x1xf32>
    %1000 = arith.divf %998, %999 : vector<16x1xf32>
    %cst_279 = arith.constant 9.99999974E-6 : f32
    %1001 = vector.broadcast %cst_279 : f32 to vector<16x1xf32>
    %1002 = arith.addf %1000, %1001 : vector<16x1xf32>
    %1003 = math.rsqrt %1002 : vector<16x1xf32>
    %1004 = vector.broadcast %1003 : vector<16x1xf32> to vector<16x32xf32>
    %1005 = arith.mulf %995, %1004 : vector<16x32xf32>
    %1006 = vector.broadcast %988 : vector<1x32xf32> to vector<16x32xf32>
    %1007 = arith.mulf %1005, %1006 : vector<16x32xf32>
    %1008 = vector.broadcast %989 : vector<1x32xf32> to vector<16x32xf32>
    %1009 = arith.addf %1007, %1008 : vector<16x32xf32>
    %c768 = arith.constant 768 : index
    %c0_280 = arith.constant 0 : index
    %1010 = vector.load %arg4[%c768, %c0_280] : memref<800x128xbf16, #tpu.memory_space<vmem>>, vector<32x128xbf16>
    %1011 = arith.truncf %1009 : vector<16x32xf32> to vector<16x32xbf16>
    %cst_281 = arith.constant dense<0.000000e+00> : vector<16x128xf32>
    %1012 = tpu.matmul %1011, %1010, %cst_281 {dimension_numbers = #tpu.dot_dimension_numbers<[1], [0], [0], [1], [0, 0, 1, 1], [], []>} : vector<16x32xbf16>, vector<32x128xbf16>, vector<16x128xf32> -> vector<16x128xf32>
    %c44 = arith.constant 44 : index
    %c0_282 = arith.constant 0 : index
    %1013 = vector.load %arg5[%c44, %c0_282] : memref<48x128xf32, #tpu.memory_space<vmem>>, vector<1x128xf32>
    %1014 = vector.broadcast %1013 : vector<1x128xf32> to vector<16x128xf32>
    %1015 = arith.addf %1012, %1014 : vector<16x128xf32>
    %cst_283 = arith.constant dense<0xFF800000> : vector<16xf32>
    %1016 = vector.multi_reduction <maximumf>, %1015, %cst_283 [1] : vector<16x128xf32> to vector<16xf32>
    %1017 = vector.shape_cast %1016 : vector<16xf32> to vector<16x1xf32>
    %1018 = vector.broadcast %1017 : vector<16x1xf32> to vector<16x128xf32>
    %1019 = arith.subf %1015, %1018 : vector<16x128xf32>
    %1020 = math.exp %1019 : vector<16x128xf32>
    %cst_284 = arith.constant dense<0.000000e+00> : vector<16xf32>
    %1021 = vector.multi_reduction <add>, %1020, %cst_284 [1] : vector<16x128xf32> to vector<16xf32>
    %1022 = vector.shape_cast %1021 : vector<16xf32> to vector<16x1xf32>
    %1023 = math.log %1022 : vector<16x1xf32>
    %1024 = vector.broadcast %1023 : vector<16x1xf32> to vector<16x128xf32>
    %1025 = arith.subf %1019, %1024 : vector<16x128xf32>
    %c0_285 = arith.constant 0 : index
    %c0_286 = arith.constant 0 : index
    %1026 = vector.load %arg6[%c0_285, %c0_286] : memref<16x128xf32, #tpu.memory_space<vmem>>, vector<16x128xf32>
    tpu.vector_store %arg6[%c0_285, %c0_286], %1025 {strides = array<i32>} : memref<16x128xf32, #tpu.memory_space<vmem>>, vector<16x128xf32>,
    return
  }
  func.func @transform_0(%arg0: i32) -> (i32, i32) {
    %c0_i32 = arith.constant 0 : i32
    %c0_i32_0 = arith.constant 0 : i32
    return %arg0, %c0_i32 : i32, i32
  }
  func.func @transform_1(%arg0: i32) -> (i32, i32) {
    %c0_i32 = arith.constant 0 : i32
    %c0_i32_0 = arith.constant 0 : i32
    return %arg0, %c0_i32 : i32, i32
  }
  func.func @transform_2(%arg0: i32) -> (i32, i32, i32) {
    %c0_i32 = arith.constant 0 : i32
    %c0_i32_0 = arith.constant 0 : i32
    %c0_i32_1 = arith.constant 0 : i32
    return %arg0, %c0_i32, %c0_i32_0 : i32, i32, i32
  }
  func.func @transform_3(%arg0: i32) -> (i32, i32) {
    %c0_i32 = arith.constant 0 : i32
    %c0_i32_0 = arith.constant 0 : i32
    %c0_i32_1 = arith.constant 0 : i32
    return %c0_i32, %c0_i32_0 : i32, i32
  }
  func.func @transform_4(%arg0: i32) -> (i32, i32) {
    %c0_i32 = arith.constant 0 : i32
    %c0_i32_0 = arith.constant 0 : i32
    %c0_i32_1 = arith.constant 0 : i32
    return %c0_i32, %c0_i32_0 : i32, i32
  }
  func.func @transform_5(%arg0: i32) -> (i32, i32) {
    %c0_i32 = arith.constant 0 : i32
    %c0_i32_0 = arith.constant 0 : i32
    return %arg0, %c0_i32 : i32, i32
  }
}

</mosaic_0001>

<llo_original>
// kernel: model_forward.1
$region0: #{model_forward.1}
  #allocation0 [shape = 'u32[]', space=smem, size = 0x4, offset = 0x4, fixed_abs, tag = 'smem constant byte address 0x4 - core index']
  #allocation1 [shape = 'u32[144,128]{1,0:T(1,128)}', space=vmem, size = 0x12000, scoped, tag = 'internal scratch']
  %s0 = inlined_call_operand.vmem [shape: f32[16,32], index: 0, kind: input, shape index: {}]
  %s1 = inlined_call_operand.vmem [shape: f32[16,32], index: 1, kind: input, shape index: {}]
  %s2 = inlined_call_operand.vmem [shape: f32[2,1,8], index: 2, kind: input, shape index: {}]
  %s3 = inlined_call_operand.hbm [shape: bf16[800,128], index: 3, kind: input, shape index: {}]
  %s4 = inlined_call_operand.vmem [shape: f32[48,128], index: 4, kind: input, shape index: {}]
  %s5 = inlined_call_operand.vmem [shape: f32[16,128], index: 5, kind: output, shape index: {}]
  %s6 = sld [smem:[#allocation0]]
  $region34: #{model_forward.1} parent=0
    _
  %s8 = ssub.s32 1, %s6
  %s9 = scalar_select 0, %s8, %s6
  $region1: #{model_forward.1} parent=0
    #allocation2 [shape = 'u8[204800]{0}', space=vmem, size = 0x32000, scoped, tag = 'input window, operand 3, single buffered']
    #allocation3 [shape = 's32[1]{0}', space=sflag, size = 0x4, scoped, tag = 'scoped memory for model_forward.1']
    %10 = vsyncpa [#allocation3], 0
    // Predicated region
    $region2: #{model_forward.1} parent=1 // pred_check
      _
    $region3: #{model_forward.1} parent=1 // pred_check_branch
      %12 = sbr.rel (0) target = $region5
    $region4: #{model_forward.1} parent=1 // pred_region
      _
    $region5: #{model_forward.1} parent=1 // pred_fallthru
      _
    // Predicated region
    $region6: #{model_forward.1} parent=1 // pred_check
      _
    $region7: #{model_forward.1} parent=1 // pred_check_branch
      %14 = sbr.rel (0) target = $region9
    $region8: #{model_forward.1} parent=1 // pred_region
      _
    $region9: #{model_forward.1} parent=1 // pred_fallthru
      _
    // Predicated region
    $region10: #{model_forward.1} parent=1 // pred_check
      _
    $region11: #{model_forward.1} parent=1 // pred_check_branch
      %16 = sbr.rel (0) target = $region13
    $region12: #{model_forward.1} parent=1 // pred_region
      _
    $region13: #{model_forward.1} parent=1 // pred_fallthru
      _
    // Predicated region
    $region14: #{model_forward.1} parent=1 // pred_check
      _
    $region15: #{model_forward.1} parent=1 // pred_check_branch
      %18 = sbr.rel (0) target = $region17
    $region16: #{model_forward.1} parent=1 // pred_region
      %s20 = ssub.s32 6400, 6400
      %21 = vsyncadd [#allocation3], %s20
      %s22 = sshll.u32 [#allocation2], 4
      %s23 = int_to_ptr.vmem [resolvable:$true] %s22
      %28 = dma.hbm_to_vmem [thread:$0]  %s3, 6400, %s23, [#allocation3], 64, 64, 4
    $region17: #{model_forward.1} parent=1 // pred_fallthru
      _
    // Predicated region
    $region18: #{model_forward.1} parent=1 // pred_check
      _
    $region19: #{model_forward.1} parent=1 // pred_check_branch
      %30 = sbr.rel (0) target = $region21
    $region20: #{model_forward.1} parent=1 // pred_region
      _
    $region21: #{model_forward.1} parent=1 // pred_fallthru
      _
    // Predicated region
    $region22: #{model_forward.1} parent=1 // pred_check
      _
    $region23: #{model_forward.1} parent=1 // pred_check_branch
      %32 = sbr.rel (0) target = $region25
    $region24: #{model_forward.1} parent=1 // pred_region
      %33 = dma.done [#allocation3], 6400
    $region25: #{model_forward.1} parent=1 // pred_fallthru
      _
    %v35 = vld [vmem:[%s0] sm:$0xff]
    %v36 = vld [vmem:[%s0 + $0x8] sm:$0xff]
    %v37 = vld [vmem:[%s1] sm:$0xff]
    %v38 = vld [vmem:[%s1 + $0x8] sm:$0xff]
    %v39 = vld [vmem:[%s2] sm:$0x1]
    %v40 = vld [vmem:[%s2 + $0x1] sm:$0x1]
    %v41 = vlaneseq
    %v42 = vshrl.u32 %v41, 7
    %v43 = vlaneseq
    %v44 = vand.u32 %v43, 127
    %vm45 = vcmp.gt.s32.totalorder %v44, %v42
    %v46 = vsel %vm45, -1e+30, 0.0
    %v47 = vld [vmem:[#allocation2] sm:$0xf]
    %v48 = vld [vmem:[#allocation2 + $0x4] sm:$0xf]
    %v49 = vld [vmem:[#allocation2 + $0x8] sm:$0xf]
    %v50 = vld [vmem:[#allocation2 + $0xc] sm:$0xf]
    %v51 = vld [vmem:[#allocation2 + $0x10] sm:$0xf]
    %v52 = vld [vmem:[#allocation2 + $0x14] sm:$0xf]
    %v53 = vld [vmem:[#allocation2 + $0x18] sm:$0xf]
    %v54 = vld [vmem:[#allocation2 + $0x1c] sm:$0xf]
    %v55 = vld [vmem:[%s4] sm:$0x1]
    %v56 = vld [vmem:[%s4 + $0x1] sm:$0x1]
    %v57 = vpack.c.bf16 %v36, %v35
    %v58 = vlaneseq
    %v59 = vshrl.u32 %v58, 7
    %v60 = vsub.s32 0, %v59
    %v61 = vrot.slane %v55, %v60
    %v66 = vunpack.c.l.b16 %v47
    %v67 = vunpack.c.l.b16 %v48
    %v68 = vunpack.c.l.b16 %v49
    %v69 = vunpack.c.l.b16 %v50
    %v70 = vpack.c.b16 %v67, %v66
    %v71 = vpack.c.b16 %v69, %v68
    %vm74 = vcmask 261120
    %v76 = vsel %vm74, %v57, 0
    %78 = vmatprep.subr.bf16.mxu0 0
    %79 = vmatpush1.bf16.msra.mxu0 %v70
    %80 = vmatprep.subr.bf16.mxu0 0
    %81 = vmatpush1.bf16.msra.mxu0 %v71
    %82 = vmatprep.subr.bf16.mxu0 0
    %83 = vmatpush1.bf16.msra.mxu0 0
    %84 = vmatprep.subr.bf16.mxu0 0
    %85 = vmatpush1.bf16.msra.mxu0 0
    %86 = vmatprep.subr.bf16.mxu0 0
    %87 = vmatpush1.bf16.msra.mxu0 0
    %88 = vmatprep.subr.bf16.mxu0 0
    %89 = vmatpush1.bf16.msra.mxu0 0
    %90 = vmatprep.subr.bf16.mxu0 0
    %91 = vmatpush1.bf16.msra.mxu0 0
    %92 = vmatprep.subr.bf16.mxu0 0
    %93 = vmatpush1.bf16.msra.mxu0 0
    %94 = vmatprep.subr.bf16.mxu0 0
    %95 = vmatpush1.bf16.msra.mxu0 0
    %96 = vmatprep.subr.bf16.mxu0 0
    %97 = vmatpush1.bf16.msra.mxu0 0
    %98 = vmatprep.subr.bf16.mxu0 0
    %99 = vmatpush1.bf16.msra.mxu0 0
    %100 = vmatprep.subr.bf16.mxu0 0
    %101 = vmatpush1.bf16.msra.mxu0 0
    %102 = vmatprep.subr.bf16.mxu0 0
    %103 = vmatpush1.bf16.msra.mxu0 0
    %104 = vmatprep.subr.bf16.mxu0 0
    %105 = vmatpush1.bf16.msra.mxu0 0
    %106 = vmatprep.subr.bf16.mxu0 0
    %107 = vmatpush1.bf16.msra.mxu0 0
    %108 = vmatprep.subr.bf16.mxu0 0
    %109 = vmatpush1.bf16.msra.mxu0 0
    %110 = vmatprep.mubr.bf16.mxu0 0
    %111 = vmatmul.mubr.bf16.gmra.mrb[0].mxu0 %v76
    %v112 = vpop.f32.mrb[0].mxu0
    %v113 = vadd.f32 %v61, %v112
    %v114 = vpop.f32.mrb[0].mxu0
    %v115 = vpop.f32.mrb[0].mxu0
    %v116 = vadd.f32 %v61, %v115
    %v117 = vpop.f32.mrb[0].mxu0
    %118 = vdwg.mxu0
    %v119 = vpack.c.bf16 %v113, %v113
    %v120 = vpack.c.bf16 %v116, %v116
    %122 = vrot.lane.b32.xlu0 %v119, 96
    %v123 = vpop.permute.xlu0 %122
    %vm124 = vcmask 64512
    %v126 = vsel %vm124, %v119, 0
    %v129 = vsel %vm124, %v123, 0
    %131 = vmatprep.subr.bf16.mxu0 0
    %132 = vmatpush1.bf16.xpose.msra.mxu0 %v129
    %133 = vmatprep.subr.bf16.mxu0 0
    %134 = vmatpush1.bf16.xpose.msra.mxu0 0
    %135 = vmatprep.subr.bf16.mxu0 0
    %136 = vmatpush1.bf16.xpose.msra.mxu0 0
    %137 = vmatprep.subr.bf16.mxu0 0
    %138 = vmatpush1.bf16.xpose.msra.mxu0 0
    %139 = vmatprep.subr.bf16.mxu0 0
    %140 = vmatpush1.bf16.xpose.msra.mxu0 0
    %141 = vmatprep.subr.bf16.mxu0 0
    %142 = vmatpush1.bf16.xpose.msra.mxu0 0
    %143 = vmatprep.subr.bf16.mxu0 0
    %144 = vmatpush1.bf16.xpose.msra.mxu0 0
    %145 = vmatprep.subr.bf16.mxu0 0
    %146 = vmatpush1.bf16.xpose.msra.mxu0 0
    %147 = vmatprep.subr.bf16.mxu0 0
    %148 = vmatpush1.bf16.xpose.msra.mxu0 0
    %149 = vmatprep.subr.bf16.mxu0 0
    %150 = vmatpush1.bf16.xpose.msra.mxu0 0
    %151 = vmatprep.subr.bf16.mxu0 0
    %152 = vmatpush1.bf16.xpose.msra.mxu0 0
    %153 = vmatprep.subr.bf16.mxu0 0
    %154 = vmatpush1.bf16.xpose.msra.mxu0 0
    %155 = vmatprep.subr.bf16.mxu0 0
    %156 = vmatpush1.bf16.xpose.msra.mxu0 0
    %157 = vmatprep.subr.bf16.mxu0 0
    %158 = vmatpush1.bf16.xpose.msra.mxu0 0
    %159 = vmatprep.subr.bf16.mxu0 0
    %160 = vmatpush1.bf16.xpose.msra.mxu0 0
    %161 = vmatprep.subr.bf16.mxu0 0
    %162 = vmatpush1.bf16.xpose.msra.mxu0 0
    %163 = vmatprep.mubr.bf16.mxu0 0
    %164 = vmatmul.mubr.bf16.gmra.mrb[0].mxu0 %v126
    %v165 = vpop.f32.mrb[0].mxu0
    %v166 = vadd.f32 0.0, %v165
    %v167 = vpop.f32.mrb[0].mxu0
    %v168 = vpop.f32.mrb[0].mxu0
    %v169 = vpop.f32.mrb[0].mxu0
    %170 = vdwg.mxu0
    %172 = vrot.lane.b32.xlu0 %v120, 96
    %v173 = vpop.permute.xlu0 %172
    %v175 = vsel %vm124, %v120, 0
    %v178 = vsel %vm124, %v173, 0
    %180 = vmatprep.subr.bf16.mxu0 0
    %181 = vmatpush1.bf16.xpose.msra.mxu0 %v178
    %182 = vmatprep.subr.bf16.mxu0 0
    %183 = vmatpush1.bf16.xpose.msra.mxu0 0
    %184 = vmatprep.subr.bf16.mxu0 0
    %185 = vmatpush1.bf16.xpose.msra.mxu0 0
    %186 = vmatprep.subr.bf16.mxu0 0
    %187 = vmatpush1.bf16.xpose.msra.mxu0 0
    %188 = vmatprep.subr.bf16.mxu0 0
    %189 = vmatpush1.bf16.xpose.msra.mxu0 0
    %190 = vmatprep.subr.bf16.mxu0 0
    %191 = vmatpush1.bf16.xpose.msra.mxu0 0
    %192 = vmatprep.subr.bf16.mxu0 0
    %193 = vmatpush1.bf16.xpose.msra.mxu0 0
    %194 = vmatprep.subr.bf16.mxu0 0
    %195 = vmatpush1.bf16.xpose.msra.mxu0 0
    %196 = vmatprep.subr.bf16.mxu0 0
    %197 = vmatpush1.bf16.xpose.msra.mxu0 0
    %198 = vmatprep.subr.bf16.mxu0 0
    %199 = vmatpush1.bf16.xpose.msra.mxu0 0
    %200 = vmatprep.subr.bf16.mxu0 0
    %201 = vmatpush1.bf16.xpose.msra.mxu0 0
    %202 = vmatprep.subr.bf16.mxu0 0
    %203 = vmatpush1.bf16.xpose.msra.mxu0 0
    %204 = vmatprep.subr.bf16.mxu0 0
    %205 = vmatpush1.bf16.xpose.msra.mxu0 0
    %206 = vmatprep.subr.bf16.mxu0 0
    %207 = vmatpush1.bf16.xpose.msra.mxu0 0
    %208 = vmatprep.subr.bf16.mxu0 0
    %209 = vmatpush1.bf16.xpose.msra.mxu0 0
    %210 = vmatprep.subr.bf16.mxu0 0
    %211 = vmatpush1.bf16.xpose.msra.mxu0 0
    %212 = vmatprep.mubr.bf16.mxu0 0
    %213 = vmatmul.mubr.bf16.gmra.mrb[0].mxu0 %v175
    %v214 = vpop.f32.mrb[0].mxu0
    %v215 = vadd.f32 0.0, %v214
    %v216 = vpop.f32.mrb[0].mxu0
    %v217 = vpop.f32.mrb[0].mxu0
    %v218 = vpop.f32.mrb[0].mxu0
    %219 = vdwg.mxu0
    %v220 = vmul.f32 %v166, 0.35355338
    %v221 = vmul.f32 %v215, 0.35355338
    %v224 = vlaneseq
    %v225 = vshrl.u32 %v224, 7
    %v226 = vsub.s32 0, %v225
    %v227 = vrot.slane %v39, %v226
    %v228 = vlaneseq
    %v229 = vshrl.u32 %v228, 7
    %v230 = vsub.s32 0, %v229
    %v231 = vrot.slane %v40, %v230
    %v234 = vadd.f32 %v220, %v227
    %v235 = vadd.f32 %v221, %v231
    %v236 = vsel %vm124, %v234, -inf
    %237 = vmax.xlane.f32.xlu0 %v236
    %v238 = vpop.xlane.xlu0 %237
    %v239 = vsel %vm124, %v235, -inf
    %240 = vmax.xlane.f32.xlu0 %v239
    %v241 = vpop.xlane.xlu0 %240
    %v242 = vsub.f32 %v234, %v238
    %v243 = vsub.f32 %v235, %v241
    %v244 = vmul.f32 %v242, 1.442695
    %v245 = vpow.pop %v244
    %v246 = vmul.f32 %v243, 1.442695
    %v247 = vpow.pop %v246
    %v248 = vsel %vm124, %v245, 0.0
    %249 = vadd.xlane.f32.xlu0 %v248
    %v250 = vpop.xlane.xlu0 %249
    %v251 = vsel %vm124, %v247, 0.0
    %252 = vadd.xlane.f32.xlu0 %v251
    %v253 = vpop.xlane.xlu0 %252
    %v254 = vpack.c.bf16 %v245, %v245
    %v255 = vpack.c.bf16 %v247, %v247
    %256 = vrot.lane.b32.xlu0 %v119, 64
    %v257 = vpop.permute.xlu0 %256
    %v259 = vsel %vm124, %v254, 0
    %vm261 = vcmask 1043456
    %v263 = vsel %vm261, %v257, 0
    %265 = vmatprep.subr.bf16.mxu0 0
    %266 = vmatpush1.bf16.msra.mxu0 %v263
    %267 = vmatprep.subr.bf16.mxu0 0
    %268 = vmatpush1.bf16.msra.mxu0 0
    %269 = vmatprep.subr.bf16.mxu0 0
    %270 = vmatpush1.bf16.msra.mxu0 0
    %271 = vmatprep.subr.bf16.mxu0 0
    %272 = vmatpush1.bf16.msra.mxu0 0
    %273 = vmatprep.subr.bf16.mxu0 0
    %274 = vmatpush1.bf16.msra.mxu0 0
    %275 = vmatprep.subr.bf16.mxu0 0
    %276 = vmatpush1.bf16.msra.mxu0 0
    %277 = vmatprep.subr.bf16.mxu0 0
    %278 = vmatpush1.bf16.msra.mxu0 0
    %279 = vmatprep.subr.bf16.mxu0 0
    %280 = vmatpush1.bf16.msra.mxu0 0
    %281 = vmatprep.subr.bf16.mxu0 0
    %282 = vmatpush1.bf16.msra.mxu0 0
    %283 = vmatprep.subr.bf16.mxu0 0
    %284 = vmatpush1.bf16.msra.mxu0 0
    %285 = vmatprep.subr.bf16.mxu0 0
    %286 = vmatpush1.bf16.msra.mxu0 0
    %287 = vmatprep.subr.bf16.mxu0 0
    %288 = vmatpush1.bf16.msra.mxu0 0
    %289 = vmatprep.subr.bf16.mxu0 0
    %290 = vmatpush1.bf16.msra.mxu0 0
    %291 = vmatprep.subr.bf16.mxu0 0
    %292 = vmatpush1.bf16.msra.mxu0 0
    %293 = vmatprep.subr.bf16.mxu0 0
    %294 = vmatpush1.bf16.msra.mxu0 0
    %295 = vmatprep.subr.bf16.mxu0 0
    %296 = vmatpush1.bf16.msra.mxu0 0
    %297 = vmatprep.mubr.bf16.mxu0 0
    %298 = vmatmul.mubr.bf16.gmra.mrb[0].mxu0 %v259
    %v299 = vpop.f32.mrb[0].mxu0
    %v300 = vadd.f32 0.0, %v299
    %v301 = vpop.f32.mrb[0].mxu0
    %v302 = vpop.f32.mrb[0].mxu0
    %v303 = vpop.f32.mrb[0].mxu0
    %304 = vdwg.mxu0
    %305 = vrot.lane.b32.xlu0 %v120, 64
    %v306 = vpop.permute.xlu0 %305
    %v308 = vsel %vm124, %v255, 0
    %v311 = vsel %vm261, %v306, 0
    %313 = vmatprep.subr.bf16.mxu0 0
    %314 = vmatpush1.bf16.msra.mxu0 %v311
    %315 = vmatprep.subr.bf16.mxu0 0
    %316 = vmatpush1.bf16.msra.mxu0 0
    %317 = vmatprep.subr.bf16.mxu0 0
    %318 = vmatpush1.bf16.msra.mxu0 0
    %319 = vmatprep.subr.bf16.mxu0 0
    %320 = vmatpush1.bf16.msra.mxu0 0
    %321 = vmatprep.subr.bf16.mxu0 0
    %322 = vmatpush1.bf16.msra.mxu0 0
    %323 = vmatprep.subr.bf16.mxu0 0
    %324 = vmatpush1.bf16.msra.mxu0 0
    %325 = vmatprep.subr.bf16.mxu0 0
    %326 = vmatpush1.bf16.msra.mxu0 0
    %327 = vmatprep.subr.bf16.mxu0 0
    %328 = vmatpush1.bf16.msra.mxu0 0
    %329 = vmatprep.subr.bf16.mxu0 0
    %330 = vmatpush1.bf16.msra.mxu0 0
    %331 = vmatprep.subr.bf16.mxu0 0
    %332 = vmatpush1.bf16.msra.mxu0 0
    %333 = vmatprep.subr.bf16.mxu0 0
    %334 = vmatpush1.bf16.msra.mxu0 0
    %335 = vmatprep.subr.bf16.mxu0 0
    %336 = vmatpush1.bf16.msra.mxu0 0
    %337 = vmatprep.subr.bf16.mxu0 0
    %338 = vmatpush1.bf16.msra.mxu0 0
    %339 = vmatprep.subr.bf16.mxu0 0
    %340 = vmatpush1.bf16.msra.mxu0 0
    %341 = vmatprep.subr.bf16.mxu0 0
    %342 = vmatpush1.bf16.msra.mxu0 0
    %343 = vmatprep.subr.bf16.mxu0 0
    %344 = vmatpush1.bf16.msra.mxu0 0
    %345 = vmatprep.mubr.bf16.mxu0 0
    %346 = vmatmul.mubr.bf16.gmra.mrb[0].mxu0 %v308
    %v347 = vpop.f32.mrb[0].mxu0
    %v348 = vadd.f32 0.0, %v347
    %v349 = vpop.f32.mrb[0].mxu0
    %v350 = vpop.f32.mrb[0].mxu0
    %v351 = vpop.f32.mrb[0].mxu0
    %352 = vdwg.mxu0
    %v353 = vrcp.pop %v250
    %v354 = vrcp.pop %v253
    %v355 = vmul.f32 %v300, %v353
    %v356 = vmul.f32 %v348, %v354
    %357 = vrot.lane.b32.xlu0 %v119, 120
    %v358 = vpop.permute.xlu0 %357
    %359 = vrot.lane.b32.xlu0 %v119, 88
    %v360 = vpop.permute.xlu0 %359
    %v362 = vsel %vm124, %v358, 0
    %v365 = vsel %vm124, %v360, 0
    %367 = vmatprep.subr.bf16.mxu0 0
    %368 = vmatpush1.bf16.xpose.msra.mxu0 %v365
    %369 = vmatprep.subr.bf16.mxu0 0
    %370 = vmatpush1.bf16.xpose.msra.mxu0 0
    %371 = vmatprep.subr.bf16.mxu0 0
    %372 = vmatpush1.bf16.xpose.msra.mxu0 0
    %373 = vmatprep.subr.bf16.mxu0 0
    %374 = vmatpush1.bf16.xpose.msra.mxu0 0
    %375 = vmatprep.subr.bf16.mxu0 0
    %376 = vmatpush1.bf16.xpose.msra.mxu0 0
    %377 = vmatprep.subr.bf16.mxu0 0
    %378 = vmatpush1.bf16.xpose.msra.mxu0 0
    %379 = vmatprep.subr.bf16.mxu0 0
    %380 = vmatpush1.bf16.xpose.msra.mxu0 0
    %381 = vmatprep.subr.bf16.mxu0 0
    %382 = vmatpush1.bf16.xpose.msra.mxu0 0
    %383 = vmatprep.subr.bf16.mxu0 0
    %384 = vmatpush1.bf16.xpose.msra.mxu0 0
    %385 = vmatprep.subr.bf16.mxu0 0
    %386 = vmatpush1.bf16.xpose.msra.mxu0 0
    %387 = vmatprep.subr.bf16.mxu0 0
    %388 = vmatpush1.bf16.xpose.msra.mxu0 0
    %389 = vmatprep.subr.bf16.mxu0 0
    %390 = vmatpush1.bf16.xpose.msra.mxu0 0
    %391 = vmatprep.subr.bf16.mxu0 0
    %392 = vmatpush1.bf16.xpose.msra.mxu0 0
    %393 = vmatprep.subr.bf16.mxu0 0
    %394 = vmatpush1.bf16.xpose.msra.mxu0 0
    %395 = vmatprep.subr.bf16.mxu0 0
    %396 = vmatpush1.bf16.xpose.msra.mxu0 0
    %397 = vmatprep.subr.bf16.mxu0 0
    %398 = vmatpush1.bf16.xpose.msra.mxu0 0
    %399 = vmatprep.mubr.bf16.mxu0 0
    %400 = vmatmul.mubr.bf16.gmra.mrb[0].mxu0 %v362
    %v401 = vpop.f32.mrb[0].mxu0
    %v402 = vadd.f32 0.0, %v401
    %v403 = vpop.f32.mrb[0].mxu0
    %v404 = vpop.f32.mrb[0].mxu0
    %v405 = vpop.f32.mrb[0].mxu0
    %406 = vdwg.mxu0
    %407 = vrot.lane.b32.xlu0 %v120, 120
    %v408 = vpop.permute.xlu0 %407
    %409 = vrot.lane.b32.xlu0 %v120, 88
    %v410 = vpop.permute.xlu0 %409
    %v412 = vsel %vm124, %v408, 0
    %v415 = vsel %vm124, %v410, 0
    %417 = vmatprep.subr.bf16.mxu0 0
    %418 = vmatpush1.bf16.xpose.msra.mxu0 %v415
    %419 = vmatprep.subr.bf16.mxu0 0
    %420 = vmatpush1.bf16.xpose.msra.mxu0 0
    %421 = vmatprep.subr.bf16.mxu0 0
    %422 = vmatpush1.bf16.xpose.msra.mxu0 0
    %423 = vmatprep.subr.bf16.mxu0 0
    %424 = vmatpush1.bf16.xpose.msra.mxu0 0
    %425 = vmatprep.subr.bf16.mxu0 0
    %426 = vmatpush1.bf16.xpose.msra.mxu0 0
    %427 = vmatprep.subr.bf16.mxu0 0
    %428 = vmatpush1.bf16.xpose.msra.mxu0 0
    %429 = vmatprep.subr.bf16.mxu0 0
    %430 = vmatpush1.bf16.xpose.msra.mxu0 0
    %431 = vmatprep.subr.bf16.mxu0 0
    %432 = vmatpush1.bf16.xpose.msra.mxu0 0
    %433 = vmatprep.subr.bf16.mxu0 0
    %434 = vmatpush1.bf16.xpose.msra.mxu0 0
    %435 = vmatprep.subr.bf16.mxu0 0
    %436 = vmatpush1.bf16.xpose.msra.mxu0 0
    %437 = vmatprep.subr.bf16.mxu0 0
    %438 = vmatpush1.bf16.xpose.msra.mxu0 0
    %439 = vmatprep.subr.bf16.mxu0 0
    %440 = vmatpush1.bf16.xpose.msra.mxu0 0
    %441 = vmatprep.subr.bf16.mxu0 0
    %442 = vmatpush1.bf16.xpose.msra.mxu0 0
    %443 = vmatprep.subr.bf16.mxu0 0
    %444 = vmatpush1.bf16.xpose.msra.mxu0 0
    %445 = vmatprep.subr.bf16.mxu0 0
    %446 = vmatpush1.bf16.xpose.msra.mxu0 0
    %447 = vmatprep.subr.bf16.mxu0 0
    %448 = vmatpush1.bf16.xpose.msra.mxu0 0
    %449 = vmatprep.mubr.bf16.mxu0 0
    %450 = vmatmul.mubr.bf16.gmra.mrb[0].mxu0 %v412
    %v451 = vpop.f32.mrb[0].mxu0
    %v452 = vadd.f32 0.0, %v451
    %v453 = vpop.f32.mrb[0].mxu0
    %v454 = vpop.f32.mrb[0].mxu0
    %v455 = vpop.f32.mrb[0].mxu0
    %456 = vdwg.mxu0
    %v457 = vmul.f32 %v402, 0.35355338
    %v458 = vmul.f32 %v452, 0.35355338
    %v459 = vadd.f32 %v457, %v227
    %v460 = vadd.f32 %v458, %v231
    %v461 = vsel %vm124, %v459, -inf
    %462 = vmax.xlane.f32.xlu0 %v461
    %v463 = vpop.xlane.xlu0 %462
    %v464 = vsel %vm124, %v460, -inf
    %465 = vmax.xlane.f32.xlu0 %v464
    %v466 = vpop.xlane.xlu0 %465
    %v467 = vsub.f32 %v459, %v463
    %v468 = vsub.f32 %v460, %v466
    %v469 = vmul.f32 %v467, 1.442695
    %v470 = vpow.pop %v469
    %v471 = vmul.f32 %v468, 1.442695
    %v472 = vpow.pop %v471
    %v473 = vsel %vm124, %v470, 0.0
    %474 = vadd.xlane.f32.xlu0 %v473
    %v475 = vpop.xlane.xlu0 %474
    %v476 = vsel %vm124, %v472, 0.0
    %477 = vadd.xlane.f32.xlu0 %v476
    %v478 = vpop.xlane.xlu0 %477
    %v479 = vpack.c.bf16 %v470, %v470
    %v480 = vpack.c.bf16 %v472, %v472
    %481 = vrot.lane.b32.xlu0 %v119, 56
    %v482 = vpop.permute.xlu0 %481
    %v484 = vsel %vm124, %v479, 0
    %v487 = vsel %vm261, %v482, 0
    %489 = vmatprep.subr.bf16.mxu0 0
    %490 = vmatpush1.bf16.msra.mxu0 %v487
    %491 = vmatprep.subr.bf16.mxu0 0
    %492 = vmatpush1.bf16.msra.mxu0 0
    %493 = vmatprep.subr.bf16.mxu0 0
    %494 = vmatpush1.bf16.msra.mxu0 0
    %495 = vmatprep.subr.bf16.mxu0 0
    %496 = vmatpush1.bf16.msra.mxu0 0
    %497 = vmatprep.subr.bf16.mxu0 0
    %498 = vmatpush1.bf16.msra.mxu0 0
    %499 = vmatprep.subr.bf16.mxu0 0
    %500 = vmatpush1.bf16.msra.mxu0 0
    %501 = vmatprep.subr.bf16.mxu0 0
    %502 = vmatpush1.bf16.msra.mxu0 0
    %503 = vmatprep.subr.bf16.mxu0 0
    %504 = vmatpush1.bf16.msra.mxu0 0
    %505 = vmatprep.subr.bf16.mxu0 0
    %506 = vmatpush1.bf16.msra.mxu0 0
    %507 = vmatprep.subr.bf16.mxu0 0
    %508 = vmatpush1.bf16.msra.mxu0 0
    %509 = vmatprep.subr.bf16.mxu0 0
    %510 = vmatpush1.bf16.msra.mxu0 0
    %511 = vmatprep.subr.bf16.mxu0 0
    %512 = vmatpush1.bf16.msra.mxu0 0
    %513 = vmatprep.subr.bf16.mxu0 0
    %514 = vmatpush1.bf16.msra.mxu0 0
    %515 = vmatprep.subr.bf16.mxu0 0
    %516 = vmatpush1.bf16.msra.mxu0 0
    %517 = vmatprep.subr.bf16.mxu0 0
    %518 = vmatpush1.bf16.msra.mxu0 0
    %519 = vmatprep.subr.bf16.mxu0 0
    %520 = vmatpush1.bf16.msra.mxu0 0
    %521 = vmatprep.mubr.bf16.mxu0 0
    %522 = vmatmul.mubr.bf16.gmra.mrb[0].mxu0 %v484
    %v523 = vpop.f32.mrb[0].mxu0
    %v524 = vadd.f32 0.0, %v523
    %v525 = vpop.f32.mrb[0].mxu0
    %v526 = vpop.f32.mrb[0].mxu0
    %v527 = vpop.f32.mrb[0].mxu0
    %528 = vdwg.mxu0
    %529 = vrot.lane.b32.xlu0 %v120, 56
    %v530 = vpop.permute.xlu0 %529
    %v532 = vsel %vm124, %v480, 0
    %v535 = vsel %vm261, %v530, 0
    %537 = vmatprep.subr.bf16.mxu0 0
    %538 = vmatpush1.bf16.msra.mxu0 %v535
    %539 = vmatprep.subr.bf16.mxu0 0
    %540 = vmatpush1.bf16.msra.mxu0 0
    %541 = vmatprep.subr.bf16.mxu0 0
    %542 = vmatpush1.bf16.msra.mxu0 0
    %543 = vmatprep.subr.bf16.mxu0 0
    %544 = vmatpush1.bf16.msra.mxu0 0
    %545 = vmatprep.subr.bf16.mxu0 0
    %546 = vmatpush1.bf16.msra.mxu0 0
    %547 = vmatprep.subr.bf16.mxu0 0
    %548 = vmatpush1.bf16.msra.mxu0 0
    %549 = vmatprep.subr.bf16.mxu0 0
    %550 = vmatpush1.bf16.msra.mxu0 0
    %551 = vmatprep.subr.bf16.mxu0 0
    %552 = vmatpush1.bf16.msra.mxu0 0
    %553 = vmatprep.subr.bf16.mxu0 0
    %554 = vmatpush1.bf16.msra.mxu0 0
    %555 = vmatprep.subr.bf16.mxu0 0
    %556 = vmatpush1.bf16.msra.mxu0 0
    %557 = vmatprep.subr.bf16.mxu0 0
    %558 = vmatpush1.bf16.msra.mxu0 0
    %559 = vmatprep.subr.bf16.mxu0 0
    %560 = vmatpush1.bf16.msra.mxu0 0
    %561 = vmatprep.subr.bf16.mxu0 0
    %562 = vmatpush1.bf16.msra.mxu0 0
    %563 = vmatprep.subr.bf16.mxu0 0
    %564 = vmatpush1.bf16.msra.mxu0 0
    %565 = vmatprep.subr.bf16.mxu0 0
    %566 = vmatpush1.bf16.msra.mxu0 0
    %567 = vmatprep.subr.bf16.mxu0 0
    %568 = vmatpush1.bf16.msra.mxu0 0
    %569 = vmatprep.mubr.bf16.mxu0 0
    %570 = vmatmul.mubr.bf16.gmra.mrb[0].mxu0 %v532
    %v571 = vpop.f32.mrb[0].mxu0
    %v572 = vadd.f32 0.0, %v571
    %v573 = vpop.f32.mrb[0].mxu0
    %v574 = vpop.f32.mrb[0].mxu0
    %v575 = vpop.f32.mrb[0].mxu0
    %576 = vdwg.mxu0
    %v577 = vrcp.pop %v475
    %v578 = vrcp.pop %v478
    %v579 = vmul.f32 %v524, %v577
    %v580 = vmul.f32 %v572, %v578
    %581 = vrot.lane.b32.xlu0 %v119, 112
    %v582 = vpop.permute.xlu0 %581
    %583 = vrot.lane.b32.xlu0 %v119, 80
    %v584 = vpop.permute.xlu0 %583
    %v586 = vsel %vm124, %v582, 0
    %v589 = vsel %vm124, %v584, 0
    %591 = vmatprep.subr.bf16.mxu0 0
    %592 = vmatpush1.bf16.xpose.msra.mxu0 %v589
    %593 = vmatprep.subr.bf16.mxu0 0
    %594 = vmatpush1.bf16.xpose.msra.mxu0 0
    %595 = vmatprep.subr.bf16.mxu0 0
    %596 = vmatpush1.bf16.xpose.msra.mxu0 0
    %597 = vmatprep.subr.bf16.mxu0 0
    %598 = vmatpush1.bf16.xpose.msra.mxu0 0
    %599 = vmatprep.subr.bf16.mxu0 0
    %600 = vmatpush1.bf16.xpose.msra.mxu0 0
    %601 = vmatprep.subr.bf16.mxu0 0
    %602 = vmatpush1.bf16.xpose.msra.mxu0 0
    %603 = vmatprep.subr.bf16.mxu0 0
    %604 = vmatpush1.bf16.xpose.msra.mxu0 0
    %605 = vmatprep.subr.bf16.mxu0 0
    %606 = vmatpush1.bf16.xpose.msra.mxu0 0
    %607 = vmatprep.subr.bf16.mxu0 0
    %608 = vmatpush1.bf16.xpose.msra.mxu0 0
    %609 = vmatprep.subr.bf16.mxu0 0
    %610 = vmatpush1.bf16.xpose.msra.mxu0 0
    %611 = vmatprep.subr.bf16.mxu0 0
    %612 = vmatpush1.bf16.xpose.msra.mxu0 0
    %613 = vmatprep.subr.bf16.mxu0 0
    %614 = vmatpush1.bf16.xpose.msra.mxu0 0
    %615 = vmatprep.subr.bf16.mxu0 0
    %616 = vmatpush1.bf16.xpose.msra.mxu0 0
    %617 = vmatprep.subr.bf16.mxu0 0
    %618 = vmatpush1.bf16.xpose.msra.mxu0 0
    %619 = vmatprep.subr.bf16.mxu0 0
    %620 = vmatpush1.bf16.xpose.msra.mxu0 0
    %621 = vmatprep.subr.bf16.mxu0 0
    %622 = vmatpush1.bf16.xpose.msra.mxu0 0
    %623 = vmatprep.mubr.bf16.mxu0 0
    %624 = vmatmul.mubr.bf16.gmra.mrb[0].mxu0 %v586
    %v625 = vpop.f32.mrb[0].mxu0
    %v626 = vadd.f32 0.0, %v625
    %v627 = vpop.f32.mrb[0].mxu0
    %v628 = vpop.f32.mrb[0].mxu0
    %v629 = vpop.f32.mrb[0].mxu0
    %630 = vdwg.mxu0
    %631 = vrot.lane.b32.xlu0 %v120, 112
    %v632 = vpop.permute.xlu0 %631
    %633 = vrot.lane.b32.xlu0 %v120, 80
    %v634 = vpop.permute.xlu0 %633
    %v636 = vsel %vm124, %v632, 0
    %v639 = vsel %vm124, %v634, 0
    %641 = vmatprep.subr.bf16.mxu0 0
    %642 = vmatpush1.bf16.xpose.msra.mxu0 %v639
    %643 = vmatprep.subr.bf16.mxu0 0
    %644 = vmatpush1.bf16.xpose.msra.mxu0 0
    %645 = vmatprep.subr.bf16.mxu0 0
    %646 = vmatpush1.bf16.xpose.msra.mxu0 0
    %647 = vmatprep.subr.bf16.mxu0 0
    %648 = vmatpush1.bf16.xpose.msra.mxu0 0
    %649 = vmatprep.subr.bf16.mxu0 0
    %650 = vmatpush1.bf16.xpose.msra.mxu0 0
    %651 = vmatprep.subr.bf16.mxu0 0
    %652 = vmatpush1.bf16.xpose.msra.mxu0 0
    %653 = vmatprep.subr.bf16.mxu0 0
    %654 = vmatpush1.bf16.xpose.msra.mxu0 0
    %655 = vmatprep.subr.bf16.mxu0 0
    %656 = vmatpush1.bf16.xpose.msra.mxu0 0
    %657 = vmatprep.subr.bf16.mxu0 0
    %658 = vmatpush1.bf16.xpose.msra.mxu0 0
    %659 = vmatprep.subr.bf16.mxu0 0
    %660 = vmatpush1.bf16.xpose.msra.mxu0 0
    %661 = vmatprep.subr.bf16.mxu0 0
    %662 = vmatpush1.bf16.xpose.msra.mxu0 0
    %663 = vmatprep.subr.bf16.mxu0 0
    %664 = vmatpush1.bf16.xpose.msra.mxu0 0
    %665 = vmatprep.subr.bf16.mxu0 0
    %666 = vmatpush1.bf16.xpose.msra.mxu0 0
    %667 = vmatprep.subr.bf16.mxu0 0
    %668 = vmatpush1.bf16.xpose.msra.mxu0 0
    %669 = vmatprep.subr.bf16.mxu0 0
    %670 = vmatpush1.bf16.xpose.msra.mxu0 0
    %671 = vmatprep.subr.bf16.mxu0 0
    %672 = vmatpush1.bf16.xpose.msra.mxu0 0
    %673 = vmatprep.mubr.bf16.mxu0 0
    %674 = vmatmul.mubr.bf16.gmra.mrb[0].mxu0 %v636
    %v675 = vpop.f32.mrb[0].mxu0
    %v676 = vadd.f32 0.0, %v675
    %v677 = vpop.f32.mrb[0].mxu0
    %v678 = vpop.f32.mrb[0].mxu0
    %v679 = vpop.f32.mrb[0].mxu0
    %680 = vdwg.mxu0
    %v681 = vmul.f32 %v626, 0.35355338
    %v682 = vmul.f32 %v676, 0.35355338
    %v683 = vadd.f32 %v681, %v227
    %v684 = vadd.f32 %v682, %v231
    %v685 = vsel %vm124, %v683, -inf
    %686 = vmax.xlane.f32.xlu0 %v685
    %v687 = vpop.xlane.xlu0 %686
    %v688 = vsel %vm124, %v684, -inf
    %689 = vmax.xlane.f32.xlu0 %v688
    %v690 = vpop.xlane.xlu0 %689
    %v691 = vsub.f32 %v683, %v687
    %v692 = vsub.f32 %v684, %v690
    %v693 = vmul.f32 %v691, 1.442695
    %v694 = vpow.pop %v693
    %v695 = vmul.f32 %v692, 1.442695
    %v696 = vpow.pop %v695
    %v697 = vsel %vm124, %v694, 0.0
    %698 = vadd.xlane.f32.xlu0 %v697
    %v699 = vpop.xlane.xlu0 %698
    %v700 = vsel %vm124, %v696, 0.0
    %701 = vadd.xlane.f32.xlu0 %v700
    %v702 = vpop.xlane.xlu0 %701
    %v703 = vpack.c.bf16 %v694, %v694
    %v704 = vpack.c.bf16 %v696, %v696
    %705 = vrot.lane.b32.xlu0 %v119, 48
    %v706 = vpop.permute.xlu0 %705
    %v708 = vsel %vm124, %v703, 0
    %v711 = vsel %vm261, %v706, 0
    %713 = vmatprep.subr.bf16.mxu0 0
    %714 = vmatpush1.bf16.msra.mxu0 %v711
    %715 = vmatprep.subr.bf16.mxu0 0
    %716 = vmatpush1.bf16.msra.mxu0 0
    %717 = vmatprep.subr.bf16.mxu0 0
    %718 = vmatpush1.bf16.msra.mxu0 0
    %719 = vmatprep.subr.bf16.mxu0 0
    %720 = vmatpush1.bf16.msra.mxu0 0
    %721 = vmatprep.subr.bf16.mxu0 0
    %722 = vmatpush1.bf16.msra.mxu0 0
    %723 = vmatprep.subr.bf16.mxu0 0
    %724 = vmatpush1.bf16.msra.mxu0 0
    %725 = vmatprep.subr.bf16.mxu0 0
    %726 = vmatpush1.bf16.msra.mxu0 0
    %727 = vmatprep.subr.bf16.mxu0 0
    %728 = vmatpush1.bf16.msra.mxu0 0
    %729 = vmatprep.subr.bf16.mxu0 0
    %730 = vmatpush1.bf16.msra.mxu0 0
    %731 = vmatprep.subr.bf16.mxu0 0
    %732 = vmatpush1.bf16.msra.mxu0 0
    %733 = vmatprep.subr.bf16.mxu0 0
    %734 = vmatpush1.bf16.msra.mxu0 0
    %735 = vmatprep.subr.bf16.mxu0 0
    %736 = vmatpush1.bf16.msra.mxu0 0
    %737 = vmatprep.subr.bf16.mxu0 0
    %738 = vmatpush1.bf16.msra.mxu0 0
    %739 = vmatprep.subr.bf16.mxu0 0
    %740 = vmatpush1.bf16.msra.mxu0 0
    %741 = vmatprep.subr.bf16.mxu0 0
    %742 = vmatpush1.bf16.msra.mxu0 0
    %743 = vmatprep.subr.bf16.mxu0 0
    %744 = vmatpush1.bf16.msra.mxu0 0
    %745 = vmatprep.mubr.bf16.mxu0 0
    %746 = vmatmul.mubr.bf16.gmra.mrb[0].mxu0 %v708
    %v747 = vpop.f32.mrb[0].mxu0
    %v748 = vadd.f32 0.0, %v747
    %v749 = vpop.f32.mrb[0].mxu0
    %v750 = vpop.f32.mrb[0].mxu0
    %v751 = vpop.f32.mrb[0].mxu0
    %752 = vdwg.mxu0
    %753 = vrot.lane.b32.xlu0 %v120, 48
    %v754 = vpop.permute.xlu0 %753
    %v756 = vsel %vm124, %v704, 0
    %v759 = vsel %vm261, %v754, 0
    %761 = vmatprep.subr.bf16.mxu0 0
    %762 = vmatpush1.bf16.msra.mxu0 %v759
    %763 = vmatprep.subr.bf16.mxu0 0
    %764 = vmatpush1.bf16.msra.mxu0 0
    %765 = vmatprep.subr.bf16.mxu0 0
    %766 = vmatpush1.bf16.msra.mxu0 0
    %767 = vmatprep.subr.bf16.mxu0 0
    %768 = vmatpush1.bf16.msra.mxu0 0
    %769 = vmatprep.subr.bf16.mxu0 0
    %770 = vmatpush1.bf16.msra.mxu0 0
    %771 = vmatprep.subr.bf16.mxu0 0
    %772 = vmatpush1.bf16.msra.mxu0 0
    %773 = vmatprep.subr.bf16.mxu0 0
    %774 = vmatpush1.bf16.msra.mxu0 0
    %775 = vmatprep.subr.bf16.mxu0 0
    %776 = vmatpush1.bf16.msra.mxu0 0
    %777 = vmatprep.subr.bf16.mxu0 0
    %778 = vmatpush1.bf16.msra.mxu0 0
    %779 = vmatprep.subr.bf16.mxu0 0
    %780 = vmatpush1.bf16.msra.mxu0 0
    %781 = vmatprep.subr.bf16.mxu0 0
    %782 = vmatpush1.bf16.msra.mxu0 0
    %783 = vmatprep.subr.bf16.mxu0 0
    %784 = vmatpush1.bf16.msra.mxu0 0
    %785 = vmatprep.subr.bf16.mxu0 0
    %786 = vmatpush1.bf16.msra.mxu0 0
    %787 = vmatprep.subr.bf16.mxu0 0
    %788 = vmatpush1.bf16.msra.mxu0 0
    %789 = vmatprep.subr.bf16.mxu0 0
    %790 = vmatpush1.bf16.msra.mxu0 0
    %791 = vmatprep.subr.bf16.mxu0 0
    %792 = vmatpush1.bf16.msra.mxu0 0
    %793 = vmatprep.mubr.bf16.mxu0 0
    %794 = vmatmul.mubr.bf16.gmra.mrb[0].mxu0 %v756
    %v795 = vpop.f32.mrb[0].mxu0
    %v796 = vadd.f32 0.0, %v795
    %v797 = vpop.f32.mrb[0].mxu0
    %v798 = vpop.f32.mrb[0].mxu0
    %v799 = vpop.f32.mrb[0].mxu0
    %800 = vdwg.mxu0
    %v801 = vrcp.pop %v699
    %v802 = vrcp.pop %v702
    %v803 = vmul.f32 %v748, %v801
    %v804 = vmul.f32 %v796, %v802
    %805 = vrot.lane.b32.xlu0 %v119, 104
    %v806 = vpop.permute.xlu0 %805
    %807 = vrot.lane.b32.xlu0 %v119, 72
    %v808 = vpop.permute.xlu0 %807
    %v810 = vsel %vm124, %v806, 0
    %v813 = vsel %vm124, %v808, 0
    %815 = vmatprep.subr.bf16.mxu0 0
    %816 = vmatpush1.bf16.xpose.msra.mxu0 %v813
    %817 = vmatprep.subr.bf16.mxu0 0
    %818 = vmatpush1.bf16.xpose.msra.mxu0 0
    %819 = vmatprep.subr.bf16.mxu0 0
    %820 = vmatpush1.bf16.xpose.msra.mxu0 0
    %821 = vmatprep.subr.bf16.mxu0 0
    %822 = vmatpush1.bf16.xpose.msra.mxu0 0
    %823 = vmatprep.subr.bf16.mxu0 0
    %824 = vmatpush1.bf16.xpose.msra.mxu0 0
    %825 = vmatprep.subr.bf16.mxu0 0
    %826 = vmatpush1.bf16.xpose.msra.mxu0 0
    %827 = vmatprep.subr.bf16.mxu0 0
    %828 = vmatpush1.bf16.xpose.msra.mxu0 0
    %829 = vmatprep.subr.bf16.mxu0 0
    %830 = vmatpush1.bf16.xpose.msra.mxu0 0
    %831 = vmatprep.subr.bf16.mxu0 0
    %832 = vmatpush1.bf16.xpose.msra.mxu0 0
    %833 = vmatprep.subr.bf16.mxu0 0
    %834 = vmatpush1.bf16.xpose.msra.mxu0 0
    %835 = vmatprep.subr.bf16.mxu0 0
    %836 = vmatpush1.bf16.xpose.msra.mxu0 0
    %837 = vmatprep.subr.bf16.mxu0 0
    %838 = vmatpush1.bf16.xpose.msra.mxu0 0
    %839 = vmatprep.subr.bf16.mxu0 0
    %840 = vmatpush1.bf16.xpose.msra.mxu0 0
    %841 = vmatprep.subr.bf16.mxu0 0
    %842 = vmatpush1.bf16.xpose.msra.mxu0 0
    %843 = vmatprep.subr.bf16.mxu0 0
    %844 = vmatpush1.bf16.xpose.msra.mxu0 0
    %845 = vmatprep.subr.bf16.mxu0 0
    %846 = vmatpush1.bf16.xpose.msra.mxu0 0
    %847 = vmatprep.mubr.bf16.mxu0 0
    %848 = vmatmul.mubr.bf16.gmra.mrb[0].mxu0 %v810
    %v849 = vpop.f32.mrb[0].mxu0
    %v850 = vadd.f32 0.0, %v849
    %v851 = vpop.f32.mrb[0].mxu0
    %v852 = vpop.f32.mrb[0].mxu0
    %v853 = vpop.f32.mrb[0].mxu0
    %854 = vdwg.mxu0
    %855 = vrot.lane.b32.xlu0 %v120, 104
    %v856 = vpop.permute.xlu0 %855
    %857 = vrot.lane.b32.xlu0 %v120, 72
    %v858 = vpop.permute.xlu0 %857
    %v860 = vsel %vm124, %v856, 0
    %v863 = vsel %vm124, %v858, 0
    %865 = vmatprep.subr.bf16.mxu0 0
    %866 = vmatpush1.bf16.xpose.msra.mxu0 %v863
    %867 = vmatprep.subr.bf16.mxu0 0
    %868 = vmatpush1.bf16.xpose.msra.mxu0 0
    %869 = vmatprep.subr.bf16.mxu0 0
    %870 = vmatpush1.bf16.xpose.msra.mxu0 0
    %871 = vmatprep.subr.bf16.mxu0 0
    %872 = vmatpush1.bf16.xpose.msra.mxu0 0
    %873 = vmatprep.subr.bf16.mxu0 0
    %874 = vmatpush1.bf16.xpose.msra.mxu0 0
    %875 = vmatprep.subr.bf16.mxu0 0
    %876 = vmatpush1.bf16.xpose.msra.mxu0 0
    %877 = vmatprep.subr.bf16.mxu0 0
    %878 = vmatpush1.bf16.xpose.msra.mxu0 0
    %879 = vmatprep.subr.bf16.mxu0 0
    %880 = vmatpush1.bf16.xpose.msra.mxu0 0
    %881 = vmatprep.subr.bf16.mxu0 0
    %882 = vmatpush1.bf16.xpose.msra.mxu0 0
    %883 = vmatprep.subr.bf16.mxu0 0
    %884 = vmatpush1.bf16.xpose.msra.mxu0 0
    %885 = vmatprep.subr.bf16.mxu0 0
    %886 = vmatpush1.bf16.xpose.msra.mxu0 0
    %887 = vmatprep.subr.bf16.mxu0 0
    %888 = vmatpush1.bf16.xpose.msra.mxu0 0
    %889 = vmatprep.subr.bf16.mxu0 0
    %890 = vmatpush1.bf16.xpose.msra.mxu0 0
    %891 = vmatprep.subr.bf16.mxu0 0
    %892 = vmatpush1.bf16.xpose.msra.mxu0 0
    %893 = vmatprep.subr.bf16.mxu0 0
    %894 = vmatpush1.bf16.xpose.msra.mxu0 0
    %895 = vmatprep.subr.bf16.mxu0 0
    %896 = vmatpush1.bf16.xpose.msra.mxu0 0
    %897 = vmatprep.mubr.bf16.mxu0 0
    %898 = vmatmul.mubr.bf16.gmra.mrb[0].mxu0 %v860
    %v899 = vpop.f32.mrb[0].mxu0
    %v900 = vadd.f32 0.0, %v899
    %v901 = vpop.f32.mrb[0].mxu0
    %v902 = vpop.f32.mrb[0].mxu0
    %v903 = vpop.f32.mrb[0].mxu0
    %904 = vdwg.mxu0
    %v905 = vmul.f32 %v850, 0.35355338
    %v906 = vmul.f32 %v900, 0.35355338
    %v907 = vadd.f32 %v905, %v227
    %v908 = vadd.f32 %v906, %v231
    %v909 = vsel %vm124, %v907, -inf
    %910 = vmax.xlane.f32.xlu0 %v909
    %v911 = vpop.xlane.xlu0 %910
    %v912 = vsel %vm124, %v908, -inf
    %913 = vmax.xlane.f32.xlu0 %v912
    %v914 = vpop.xlane.xlu0 %913
    %v915 = vsub.f32 %v907, %v911
    %v916 = vsub.f32 %v908, %v914
    %v917 = vmul.f32 %v915, 1.442695
    %v918 = vpow.pop %v917
    %v919 = vmul.f32 %v916, 1.442695
    %v920 = vpow.pop %v919
    %v921 = vsel %vm124, %v918, 0.0
    %922 = vadd.xlane.f32.xlu0 %v921
    %v923 = vpop.xlane.xlu0 %922
    %v924 = vsel %vm124, %v920, 0.0
    %925 = vadd.xlane.f32.xlu0 %v924
    %v926 = vpop.xlane.xlu0 %925
    %v927 = vpack.c.bf16 %v918, %v918
    %v928 = vpack.c.bf16 %v920, %v920
    %929 = vrot.lane.b32.xlu0 %v119, 40
    %v930 = vpop.permute.xlu0 %929
    %v932 = vsel %vm124, %v927, 0
    %v935 = vsel %vm261, %v930, 0
    %937 = vmatprep.subr.bf16.mxu0 0
    %938 = vmatpush1.bf16.msra.mxu0 %v935
    %939 = vmatprep.subr.bf16.mxu0 0
    %940 = vmatpush1.bf16.msra.mxu0 0
    %941 = vmatprep.subr.bf16.mxu0 0
    %942 = vmatpush1.bf16.msra.mxu0 0
    %943 = vmatprep.subr.bf16.mxu0 0
    %944 = vmatpush1.bf16.msra.mxu0 0
    %945 = vmatprep.subr.bf16.mxu0 0
    %946 = vmatpush1.bf16.msra.mxu0 0
    %947 = vmatprep.subr.bf16.mxu0 0
    %948 = vmatpush1.bf16.msra.mxu0 0
    %949 = vmatprep.subr.bf16.mxu0 0
    %950 = vmatpush1.bf16.msra.mxu0 0
    %951 = vmatprep.subr.bf16.mxu0 0
    %952 = vmatpush1.bf16.msra.mxu0 0
    %953 = vmatprep.subr.bf16.mxu0 0
    %954 = vmatpush1.bf16.msra.mxu0 0
    %955 = vmatprep.subr.bf16.mxu0 0
    %956 = vmatpush1.bf16.msra.mxu0 0
    %957 = vmatprep.subr.bf16.mxu0 0
    %958 = vmatpush1.bf16.msra.mxu0 0
    %959 = vmatprep.subr.bf16.mxu0 0
    %960 = vmatpush1.bf16.msra.mxu0 0
    %961 = vmatprep.subr.bf16.mxu0 0
    %962 = vmatpush1.bf16.msra.mxu0 0
    %963 = vmatprep.subr.bf16.mxu0 0
    %964 = vmatpush1.bf16.msra.mxu0 0
    %965 = vmatprep.subr.bf16.mxu0 0
    %966 = vmatpush1.bf16.msra.mxu0 0
    %967 = vmatprep.subr.bf16.mxu0 0
    %968 = vmatpush1.bf16.msra.mxu0 0
    %969 = vmatprep.mubr.bf16.mxu0 0
    %970 = vmatmul.mubr.bf16.gmra.mrb[0].mxu0 %v932
    %v971 = vpop.f32.mrb[0].mxu0
    %v972 = vadd.f32 0.0, %v971
    %v973 = vpop.f32.mrb[0].mxu0
    %v974 = vpop.f32.mrb[0].mxu0
    %v975 = vpop.f32.mrb[0].mxu0
    %976 = vdwg.mxu0
    %977 = vrot.lane.b32.xlu0 %v120, 40
    %v978 = vpop.permute.xlu0 %977
    %v980 = vsel %vm124, %v928, 0
    %v983 = vsel %vm261, %v978, 0
    %985 = vmatprep.subr.bf16.mxu0 0
    %986 = vmatpush1.bf16.msra.mxu0 %v983
    %987 = vmatprep.subr.bf16.mxu0 0
    %988 = vmatpush1.bf16.msra.mxu0 0
    %989 = vmatprep.subr.bf16.mxu0 0
    %990 = vmatpush1.bf16.msra.mxu0 0
    %991 = vmatprep.subr.bf16.mxu0 0
    %992 = vmatpush1.bf16.msra.mxu0 0
    %993 = vmatprep.subr.bf16.mxu0 0
    %994 = vmatpush1.bf16.msra.mxu0 0
    %995 = vmatprep.subr.bf16.mxu0 0
    %996 = vmatpush1.bf16.msra.mxu0 0
    %997 = vmatprep.subr.bf16.mxu0 0
    %998 = vmatpush1.bf16.msra.mxu0 0
    %999 = vmatprep.subr.bf16.mxu0 0
    %1000 = vmatpush1.bf16.msra.mxu0 0
    %1001 = vmatprep.subr.bf16.mxu0 0
    %1002 = vmatpush1.bf16.msra.mxu0 0
    %1003 = vmatprep.subr.bf16.mxu0 0
    %1004 = vmatpush1.bf16.msra.mxu0 0
    %1005 = vmatprep.subr.bf16.mxu0 0
    %1006 = vmatpush1.bf16.msra.mxu0 0
    %1007 = vmatprep.subr.bf16.mxu0 0
    %1008 = vmatpush1.bf16.msra.mxu0 0
    %1009 = vmatprep.subr.bf16.mxu0 0
    %1010 = vmatpush1.bf16.msra.mxu0 0
    %1011 = vmatprep.subr.bf16.mxu0 0
    %1012 = vmatpush1.bf16.msra.mxu0 0
    %1013 = vmatprep.subr.bf16.mxu0 0
    %1014 = vmatpush1.bf16.msra.mxu0 0
    %1015 = vmatprep.subr.bf16.mxu0 0
    %1016 = vmatpush1.bf16.msra.mxu0 0
    %1017 = vmatprep.mubr.bf16.mxu0 0
    %1018 = vmatmul.mubr.bf16.gmra.mrb[0].mxu0 %v980
    %v1019 = vpop.f32.mrb[0].mxu0
    %v1020 = vadd.f32 0.0, %v1019
    %v1021 = vpop.f32.mrb[0].mxu0
    %v1022 = vpop.f32.mrb[0].mxu0
    %v1023 = vpop.f32.mrb[0].mxu0
    %1024 = vdwg.mxu0
    %v1025 = vrcp.pop %v923
    %v1026 = vrcp.pop %v926
    %v1027 = vmul.f32 %v972, %v1025
    %v1028 = vmul.f32 %v1020, %v1026
    %1031 = vrot.lane.b32.xlu0 %v579, 8
    %v1032 = vpop.permute.xlu0 %1031
    %1033 = vrot.lane.b32.xlu0 %v580, 8
    %v1034 = vpop.permute.xlu0 %1033
    %1039 = vrot.lane.b32.xlu0 %v803, 16
    %v1040 = vpop.permute.xlu0 %1039
    %1041 = vrot.lane.b32.xlu0 %v804, 16
    %v1042 = vpop.permute.xlu0 %1041
    %1047 = vrot.lane.b32.xlu0 %v1027, 24
    %v1048 = vpop.permute.xlu0 %1047
    %1049 = vrot.lane.b32.xlu0 %v1028, 24
    %v1050 = vpop.permute.xlu0 %1049
    %v1053 = vsel %vm124, %v355, %v1032
    %v1054 = vsel %vm124, %v356, %v1034
    %vm1055 = vcmask 130048
    %v1056 = vsel %vm1055, %v1053, %v1040
    %v1057 = vsel %vm1055, %v1054, %v1042
    %vm1058 = vcmask 195584
    %v1059 = vsel %vm1058, %v1056, %v1048
    %v1060 = vsel %vm1058, %v1057, %v1050
    %v1061 = vpack.c.bf16 %v1060, %v1059
    %v1062 = vlaneseq
    %v1063 = vshrl.u32 %v1062, 7
    %v1064 = vsub.s32 0, %v1063
    %v1065 = vrot.slane %v56, %v1064
    %v1070 = vunpack.c.l.b16 %v51
    %v1071 = vunpack.c.l.b16 %v52
    %v1072 = vunpack.c.l.b16 %v53
    %v1073 = vunpack.c.l.b16 %v54
    %v1074 = vpack.c.b16 %v1071, %v1070
    %v1075 = vpack.c.b16 %v1073, %v1072
    %v1079 = vsel %vm74, %v1061, 0
    %1081 = vmatprep.subr.bf16.mxu0 0
    %1082 = vmatpush1.bf16.msra.mxu0 %v1074
    %1083 = vmatprep.subr.bf16.mxu0 0
    %1084 = vmatpush1.bf16.msra.mxu0 %v1075
    %1085 = vmatprep.subr.bf16.mxu0 0
    %1086 = vmatpush1.bf16.msra.mxu0 0
    %1087 = vmatprep.subr.bf16.mxu0 0
    %1088 = vmatpush1.bf16.msra.mxu0 0
    %1089 = vmatprep.subr.bf16.mxu0 0
    %1090 = vmatpush1.bf16.msra.mxu0 0
    %1091 = vmatprep.subr.bf16.mxu0 0
    %1092 = vmatpush1.bf16.msra.mxu0 0
    %1093 = vmatprep.subr.bf16.mxu0 0
    %1094 = vmatpush1.bf16.msra.mxu0 0
    %1095 = vmatprep.subr.bf16.mxu0 0
    %1096 = vmatpush1.bf16.msra.mxu0 0
    %1097 = vmatprep.subr.bf16.mxu0 0
    %1098 = vmatpush1.bf16.msra.mxu0 0
    %1099 = vmatprep.subr.bf16.mxu0 0
    %1100 = vmatpush1.bf16.msra.mxu0 0
    %1101 = vmatprep.subr.bf16.mxu0 0
    %1102 = vmatpush1.bf16.msra.mxu0 0
    %1103 = vmatprep.subr.bf16.mxu0 0
    %1104 = vmatpush1.bf16.msra.mxu0 0
    %1105 = vmatprep.subr.bf16.mxu0 0
    %1106 = vmatpush1.bf16.msra.mxu0 0
    %1107 = vmatprep.subr.bf16.mxu0 0
    %1108 = vmatpush1.bf16.msra.mxu0 0
    %1109 = vmatprep.subr.bf16.mxu0 0
    %1110 = vmatpush1.bf16.msra.mxu0 0
    %1111 = vmatprep.subr.bf16.mxu0 0
    %1112 = vmatpush1.bf16.msra.mxu0 0
    %1113 = vmatprep.mubr.bf16.mxu0 0
    %1114 = vmatmul.mubr.bf16.gmra.mrb[0].mxu0 %v1079
    %v1115 = vpop.f32.mrb[0].mxu0
    %v1116 = vadd.f32 %v1065, %v1115
    %v1117 = vpop.f32.mrb[0].mxu0
    %v1118 = vpop.f32.mrb[0].mxu0
    %v1119 = vadd.f32 %v1065, %v1118
    %v1120 = vpop.f32.mrb[0].mxu0
    %1121 = vdwg.mxu0
    %v1122 = vadd.f32 %v35, %v1116
    %v1123 = vadd.f32 %v36, %v1119
    %v1124 = vld [vmem:[%s4 + $0x4] sm:$0x1]
    %v1125 = vld [vmem:[%s4 + $0x5] sm:$0x1]
    %v1126 = vsel %vm74, %v1122, 0.0
    %1127 = vadd.xlane.f32.xlu0 %v1126
    %v1128 = vpop.xlane.xlu0 %1127
    %v1129 = vsel %vm74, %v1123, 0.0
    %1130 = vadd.xlane.f32.xlu0 %v1129
    %v1131 = vpop.xlane.xlu0 %1130
    %v1132 = vrcp.pop 32.0
    %v1133 = vmul.f32 %v1128, %v1132
    %v1134 = vmul.f32 %v1131, %v1132
    %v1135 = vsub.f32 %v1122, %v1133
    %v1136 = vsub.f32 %v1123, %v1134
    %v1137 = vmul.f32 %v1135, %v1135
    %v1138 = vmul.f32 %v1136, %v1136
    %v1139 = vsel %vm74, %v1137, 0.0
    %1140 = vadd.xlane.f32.xlu0 %v1139
    %v1141 = vpop.xlane.xlu0 %1140
    %v1142 = vsel %vm74, %v1138, 0.0
    %1143 = vadd.xlane.f32.xlu0 %v1142
    %v1144 = vpop.xlane.xlu0 %1143
    %v1145 = vmul.f32 %v1141, %v1132
    %v1146 = vmul.f32 %v1144, %v1132
    %v1147 = vadd.f32 %v1145, 1e-05
    %v1148 = vadd.f32 %v1146, 1e-05
    %v1149 = vrsqrt.pop %v1147
    %v1150 = vrsqrt.pop %v1148
    %v1151 = vmul.f32 %v1135, %v1149
    %v1152 = vmul.f32 %v1136, %v1150
    %v1153 = vlaneseq
    %v1154 = vshrl.u32 %v1153, 7
    %v1155 = vsub.s32 0, %v1154
    %v1156 = vrot.slane %v1124, %v1155
    %v1157 = vmul.f32 %v1151, %v1156
    %v1158 = vmul.f32 %v1152, %v1156
    %v1159 = vlaneseq
    %v1160 = vshrl.u32 %v1159, 7
    %v1161 = vsub.s32 0, %v1160
    %v1162 = vrot.slane %v1125, %v1161
    %v1163 = vadd.f32 %v1157, %v1162
    %v1164 = vadd.f32 %v1158, %v1162
    %v1165 = vld [vmem:[#allocation2 + $0x20] sm:$0xf]
    %v1166 = vld [vmem:[#allocation2 + $0x24] sm:$0xf]
    %v1167 = vld [vmem:[#allocation2 + $0x28] sm:$0xf]
    %v1168 = vld [vmem:[#allocation2 + $0x2c] sm:$0xf]
    %v1169 = vpack.c.bf16 %v1164, %v1163
    %v1170 = vld [vmem:[%s4 + $0x2] sm:$0x1]
    %v1171 = vlaneseq
    %v1172 = vshrl.u32 %v1171, 7
    %v1173 = vsub.s32 0, %v1172
    %v1174 = vrot.slane %v1170, %v1173
    %v1179 = vunpack.c.l.b16 %v1165
    %v1180 = vunpack.c.l.b16 %v1166
    %v1181 = vunpack.c.l.b16 %v1167
    %v1182 = vunpack.c.l.b16 %v1168
    %v1183 = vpack.c.b16 %v1180, %v1179
    %v1184 = vpack.c.b16 %v1182, %v1181
    %v1188 = vsel %vm74, %v1169, 0
    %1190 = vmatprep.subr.bf16.mxu0 0
    %1191 = vmatpush1.bf16.msra.mxu0 %v1183
    %1192 = vmatprep.subr.bf16.mxu0 0
    %1193 = vmatpush1.bf16.msra.mxu0 %v1184
    %1194 = vmatprep.subr.bf16.mxu0 0
    %1195 = vmatpush1.bf16.msra.mxu0 0
    %1196 = vmatprep.subr.bf16.mxu0 0
    %1197 = vmatpush1.bf16.msra.mxu0 0
    %1198 = vmatprep.subr.bf16.mxu0 0
    %1199 = vmatpush1.bf16.msra.mxu0 0
    %1200 = vmatprep.subr.bf16.mxu0 0
    %1201 = vmatpush1.bf16.msra.mxu0 0
    %1202 = vmatprep.subr.bf16.mxu0 0
    %1203 = vmatpush1.bf16.msra.mxu0 0
    %1204 = vmatprep.subr.bf16.mxu0 0
    %1205 = vmatpush1.bf16.msra.mxu0 0
    %1206 = vmatprep.subr.bf16.mxu0 0
    %1207 = vmatpush1.bf16.msra.mxu0 0
    %1208 = vmatprep.subr.bf16.mxu0 0
    %1209 = vmatpush1.bf16.msra.mxu0 0
    %1210 = vmatprep.subr.bf16.mxu0 0
    %1211 = vmatpush1.bf16.msra.mxu0 0
    %1212 = vmatprep.subr.bf16.mxu0 0
    %1213 = vmatpush1.bf16.msra.mxu0 0
    %1214 = vmatprep.subr.bf16.mxu0 0
    %1215 = vmatpush1.bf16.msra.mxu0 0
    %1216 = vmatprep.subr.bf16.mxu0 0
    %1217 = vmatpush1.bf16.msra.mxu0 0
    %1218 = vmatprep.subr.bf16.mxu0 0
    %1219 = vmatpush1.bf16.msra.mxu0 0
    %1220 = vmatprep.subr.bf16.mxu0 0
    %1221 = vmatpush1.bf16.msra.mxu0 0
    %1222 = vmatprep.mubr.bf16.mxu0 0
    %1223 = vmatmul.mubr.bf16.gmra.mrb[0].mxu0 %v1188
    %v1224 = vpop.f32.mrb[0].mxu0
    %v1225 = vadd.f32 %v1174, %v1224
    %v1226 = vpop.f32.mrb[0].mxu0
    %v1227 = vpop.f32.mrb[0].mxu0
    %v1228 = vadd.f32 %v1174, %v1227
    %v1229 = vpop.f32.mrb[0].mxu0
    %1230 = vdwg.mxu0
    %v1231 = vmax.f32 %v1225, 0.0
    %v1232 = vmax.f32 %v1228, 0.0
    %v1233 = vld [vmem:[#allocation2 + $0x30] sm:$0xf]
    %v1234 = vld [vmem:[#allocation2 + $0x34] sm:$0xf]
    %v1235 = vld [vmem:[#allocation2 + $0x38] sm:$0xf]
    %v1236 = vld [vmem:[#allocation2 + $0x3c] sm:$0xf]
    %v1237 = vld [vmem:[#allocation2 + $0x40] sm:$0xf]
    %v1238 = vld [vmem:[#allocation2 + $0x44] sm:$0xf]
    %v1239 = vld [vmem:[#allocation2 + $0x48] sm:$0xf]
    %v1240 = vld [vmem:[#allocation2 + $0x4c] sm:$0xf]
    %v1241 = vpack.c.bf16 %v1232, %v1231
    %v1242 = vld [vmem:[%s4 + $0x3] sm:$0x1]
    %v1243 = vlaneseq
    %v1244 = vshrl.u32 %v1243, 7
    %v1245 = vsub.s32 0, %v1244
    %v1246 = vrot.slane %v1242, %v1245
    %v1255 = vunpack.c.l.b16 %v1233
    %v1256 = vunpack.c.l.b16 %v1234
    %v1257 = vunpack.c.l.b16 %v1235
    %v1258 = vunpack.c.l.b16 %v1236
    %v1259 = vunpack.c.l.b16 %v1237
    %v1260 = vunpack.c.l.b16 %v1238
    %v1261 = vunpack.c.l.b16 %v1239
    %v1262 = vunpack.c.l.b16 %v1240
    %v1263 = vpack.c.b16 %v1256, %v1255
    %v1264 = vpack.c.b16 %v1258, %v1257
    %v1265 = vpack.c.b16 %v1260, %v1259
    %v1266 = vpack.c.b16 %v1262, %v1261
    %vm1271 = vcmask 523264
    %v1273 = vsel %vm1271, %v1241, 0
    %1275 = vmatprep.subr.bf16.mxu0 0
    %1276 = vmatpush1.bf16.msra.mxu0 %v1263
    %1277 = vmatprep.subr.bf16.mxu0 0
    %1278 = vmatpush1.bf16.msra.mxu0 %v1264
    %1279 = vmatprep.subr.bf16.mxu0 0
    %1280 = vmatpush1.bf16.msra.mxu0 %v1265
    %1281 = vmatprep.subr.bf16.mxu0 0
    %1282 = vmatpush1.bf16.msra.mxu0 %v1266
    %1283 = vmatprep.subr.bf16.mxu0 0
    %1284 = vmatpush1.bf16.msra.mxu0 0
    %1285 = vmatprep.subr.bf16.mxu0 0
    %1286 = vmatpush1.bf16.msra.mxu0 0
    %1287 = vmatprep.subr.bf16.mxu0 0
    %1288 = vmatpush1.bf16.msra.mxu0 0
    %1289 = vmatprep.subr.bf16.mxu0 0
    %1290 = vmatpush1.bf16.msra.mxu0 0
    %1291 = vmatprep.subr.bf16.mxu0 0
    %1292 = vmatpush1.bf16.msra.mxu0 0
    %1293 = vmatprep.subr.bf16.mxu0 0
    %1294 = vmatpush1.bf16.msra.mxu0 0
    %1295 = vmatprep.subr.bf16.mxu0 0
    %1296 = vmatpush1.bf16.msra.mxu0 0
    %1297 = vmatprep.subr.bf16.mxu0 0
    %1298 = vmatpush1.bf16.msra.mxu0 0
    %1299 = vmatprep.subr.bf16.mxu0 0
    %1300 = vmatpush1.bf16.msra.mxu0 0
    %1301 = vmatprep.subr.bf16.mxu0 0
    %1302 = vmatpush1.bf16.msra.mxu0 0
    %1303 = vmatprep.subr.bf16.mxu0 0
    %1304 = vmatpush1.bf16.msra.mxu0 0
    %1305 = vmatprep.subr.bf16.mxu0 0
    %1306 = vmatpush1.bf16.msra.mxu0 0
    %1307 = vmatprep.mubr.bf16.mxu0 0
    %1308 = vmatmul.mubr.bf16.gmra.mrb[0].mxu0 %v1273
    %v1309 = vpop.f32.mrb[0].mxu0
    %v1310 = vadd.f32 %v1246, %v1309
    %v1311 = vpop.f32.mrb[0].mxu0
    %v1312 = vpop.f32.mrb[0].mxu0
    %v1313 = vadd.f32 %v1246, %v1312
    %v1314 = vpop.f32.mrb[0].mxu0
    %1315 = vdwg.mxu0
    %v1316 = vadd.f32 %v1163, %v1310
    %v1317 = vadd.f32 %v1164, %v1313
    %v1318 = vld [vmem:[%s4 + $0x6] sm:$0x1]
    %v1319 = vld [vmem:[%s4 + $0x7] sm:$0x1]
    %v1320 = vsel %vm74, %v1316, 0.0
    %1321 = vadd.xlane.f32.xlu0 %v1320
    %v1322 = vpop.xlane.xlu0 %1321
    %v1323 = vsel %vm74, %v1317, 0.0
    %1324 = vadd.xlane.f32.xlu0 %v1323
    %v1325 = vpop.xlane.xlu0 %1324
    %v1326 = vmul.f32 %v1322, %v1132
    %v1327 = vmul.f32 %v1325, %v1132
    %v1328 = vsub.f32 %v1316, %v1326
    %v1329 = vsub.f32 %v1317, %v1327
    %v1330 = vmul.f32 %v1328, %v1328
    %v1331 = vmul.f32 %v1329, %v1329
    %v1332 = vsel %vm74, %v1330, 0.0
    %1333 = vadd.xlane.f32.xlu0 %v1332
    %v1334 = vpop.xlane.xlu0 %1333
    %v1335 = vsel %vm74, %v1331, 0.0
    %1336 = vadd.xlane.f32.xlu0 %v1335
    %v1337 = vpop.xlane.xlu0 %1336
    %v1338 = vmul.f32 %v1334, %v1132
    %v1339 = vmul.f32 %v1337, %v1132
    %v1340 = vadd.f32 %v1338, 1e-05
    %v1341 = vadd.f32 %v1339, 1e-05
    %v1342 = vrsqrt.pop %v1340
    %v1343 = vrsqrt.pop %v1341
    %v1344 = vmul.f32 %v1328, %v1342
    %v1345 = vmul.f32 %v1329, %v1343
    %v1346 = vlaneseq
    %v1347 = vshrl.u32 %v1346, 7
    %v1348 = vsub.s32 0, %v1347
    %v1349 = vrot.slane %v1318, %v1348
    %v1350 = vmul.f32 %v1344, %v1349
    %v1351 = vmul.f32 %v1345, %v1349
    %v1352 = vlaneseq
    %v1353 = vshrl.u32 %v1352, 7
    %v1354 = vsub.s32 0, %v1353
    %v1355 = vrot.slane %v1319, %v1354
    %v1356 = vadd.f32 %v1350, %v1355
    %v1357 = vadd.f32 %v1351, %v1355
    %v1358 = vld [vmem:[#allocation2 + $0x50] sm:$0xf]
    %v1359 = vld [vmem:[#allocation2 + $0x54] sm:$0xf]
    %v1360 = vld [vmem:[#allocation2 + $0x58] sm:$0xf]
    %v1361 = vld [vmem:[#allocation2 + $0x5c] sm:$0xf]
    %v1362 = vld [vmem:[#allocation2 + $0x60] sm:$0xf]
    %v1363 = vld [vmem:[#allocation2 + $0x64] sm:$0xf]
    %v1364 = vld [vmem:[#allocation2 + $0x68] sm:$0xf]
    %v1365 = vld [vmem:[#allocation2 + $0x6c] sm:$0xf]
    %v1366 = vld [vmem:[%s4 + $0x8] sm:$0x1]
    %v1367 = vld [vmem:[%s4 + $0x9] sm:$0x1]
    %v1368 = vpack.c.bf16 %v1357, %v1356
    %v1369 = vlaneseq
    %v1370 = vshrl.u32 %v1369, 7
    %v1371 = vsub.s32 0, %v1370
    %v1372 = vrot.slane %v1366, %v1371
    %v1377 = vunpack.c.l.b16 %v1358
    %v1378 = vunpack.c.l.b16 %v1359
    %v1379 = vunpack.c.l.b16 %v1360
    %v1380 = vunpack.c.l.b16 %v1361
    %v1381 = vpack.c.b16 %v1378, %v1377
    %v1382 = vpack.c.b16 %v1380, %v1379
    %v1386 = vsel %vm74, %v1368, 0
    %1388 = vmatprep.subr.bf16.mxu0 0
    %1389 = vmatpush1.bf16.msra.mxu0 %v1381
    %1390 = vmatprep.subr.bf16.mxu0 0
    %1391 = vmatpush1.bf16.msra.mxu0 %v1382
    %1392 = vmatprep.subr.bf16.mxu0 0
    %1393 = vmatpush1.bf16.msra.mxu0 0
    %1394 = vmatprep.subr.bf16.mxu0 0
    %1395 = vmatpush1.bf16.msra.mxu0 0
    %1396 = vmatprep.subr.bf16.mxu0 0
    %1397 = vmatpush1.bf16.msra.mxu0 0
    %1398 = vmatprep.subr.bf16.mxu0 0
    %1399 = vmatpush1.bf16.msra.mxu0 0
    %1400 = vmatprep.subr.bf16.mxu0 0
    %1401 = vmatpush1.bf16.msra.mxu0 0
    %1402 = vmatprep.subr.bf16.mxu0 0
    %1403 = vmatpush1.bf16.msra.mxu0 0
    %1404 = vmatprep.subr.bf16.mxu0 0
    %1405 = vmatpush1.bf16.msra.mxu0 0
    %1406 = vmatprep.subr.bf16.mxu0 0
    %1407 = vmatpush1.bf16.msra.mxu0 0
    %1408 = vmatprep.subr.bf16.mxu0 0
    %1409 = vmatpush1.bf16.msra.mxu0 0
    %1410 = vmatprep.subr.bf16.mxu0 0
    %1411 = vmatpush1.bf16.msra.mxu0 0
    %1412 = vmatprep.subr.bf16.mxu0 0
    %1413 = vmatpush1.bf16.msra.mxu0 0
    %1414 = vmatprep.subr.bf16.mxu0 0
    %1415 = vmatpush1.bf16.msra.mxu0 0
    %1416 = vmatprep.subr.bf16.mxu0 0
    %1417 = vmatpush1.bf16.msra.mxu0 0
    %1418 = vmatprep.subr.bf16.mxu0 0
    %1419 = vmatpush1.bf16.msra.mxu0 0
    %1420 = vmatprep.mubr.bf16.mxu0 0
    %1421 = vmatmul.mubr.bf16.gmra.mrb[0].mxu0 %v1386
    %v1422 = vpop.f32.mrb[0].mxu0
    %v1423 = vadd.f32 %v1372, %v1422
    %v1424 = vpop.f32.mrb[0].mxu0
    %v1425 = vpop.f32.mrb[0].mxu0
    %v1426 = vadd.f32 %v1372, %v1425
    %v1427 = vpop.f32.mrb[0].mxu0
    %1428 = vdwg.mxu0
    %v1429 = vpack.c.bf16 %v1423, %v1423
    %v1430 = vpack.c.bf16 %v1426, %v1426
    %1432 = vrot.lane.b32.xlu0 %v1429, 96
    %v1433 = vpop.permute.xlu0 %1432
    %v1435 = vsel %vm124, %v1429, 0
    %v1438 = vsel %vm124, %v1433, 0
    %1440 = vmatprep.subr.bf16.mxu0 0
    %1441 = vmatpush1.bf16.xpose.msra.mxu0 %v1438
    %1442 = vmatprep.subr.bf16.mxu0 0
    %1443 = vmatpush1.bf16.xpose.msra.mxu0 0
    %1444 = vmatprep.subr.bf16.mxu0 0
    %1445 = vmatpush1.bf16.xpose.msra.mxu0 0
    %1446 = vmatprep.subr.bf16.mxu0 0
    %1447 = vmatpush1.bf16.xpose.msra.mxu0 0
    %1448 = vmatprep.subr.bf16.mxu0 0
    %1449 = vmatpush1.bf16.xpose.msra.mxu0 0
    %1450 = vmatprep.subr.bf16.mxu0 0
    %1451 = vmatpush1.bf16.xpose.msra.mxu0 0
    %1452 = vmatprep.subr.bf16.mxu0 0
    %1453 = vmatpush1.bf16.xpose.msra.mxu0 0
    %1454 = vmatprep.subr.bf16.mxu0 0
    %1455 = vmatpush1.bf16.xpose.msra.mxu0 0
    %1456 = vmatprep.subr.bf16.mxu0 0
    %1457 = vmatpush1.bf16.xpose.msra.mxu0 0
    %1458 = vmatprep.subr.bf16.mxu0 0
    %1459 = vmatpush1.bf16.xpose.msra.mxu0 0
    %1460 = vmatprep.subr.bf16.mxu0 0
    %1461 = vmatpush1.bf16.xpose.msra.mxu0 0
    %1462 = vmatprep.subr.bf16.mxu0 0
    %1463 = vmatpush1.bf16.xpose.msra.mxu0 0
    %1464 = vmatprep.subr.bf16.mxu0 0
    %1465 = vmatpush1.bf16.xpose.msra.mxu0 0
    %1466 = vmatprep.subr.bf16.mxu0 0
    %1467 = vmatpush1.bf16.xpose.msra.mxu0 0
    %1468 = vmatprep.subr.bf16.mxu0 0
    %1469 = vmatpush1.bf16.xpose.msra.mxu0 0
    %1470 = vmatprep.subr.bf16.mxu0 0
    %1471 = vmatpush1.bf16.xpose.msra.mxu0 0
    %1472 = vmatprep.mubr.bf16.mxu0 0
    %1473 = vmatmul.mubr.bf16.gmra.mrb[0].mxu0 %v1435
    %v1474 = vpop.f32.mrb[0].mxu0
    %v1475 = vadd.f32 0.0, %v1474
    %v1476 = vpop.f32.mrb[0].mxu0
    %v1477 = vpop.f32.mrb[0].mxu0
    %v1478 = vpop.f32.mrb[0].mxu0
    %1479 = vdwg.mxu0
    %1481 = vrot.lane.b32.xlu0 %v1430, 96
    %v1482 = vpop.permute.xlu0 %1481
    %v1484 = vsel %vm124, %v1430, 0
    %v1487 = vsel %vm124, %v1482, 0
    %1489 = vmatprep.subr.bf16.mxu0 0
    %1490 = vmatpush1.bf16.xpose.msra.mxu0 %v1487
    %1491 = vmatprep.subr.bf16.mxu0 0
    %1492 = vmatpush1.bf16.xpose.msra.mxu0 0
    %1493 = vmatprep.subr.bf16.mxu0 0
    %1494 = vmatpush1.bf16.xpose.msra.mxu0 0
    %1495 = vmatprep.subr.bf16.mxu0 0
    %1496 = vmatpush1.bf16.xpose.msra.mxu0 0
    %1497 = vmatprep.subr.bf16.mxu0 0
    %1498 = vmatpush1.bf16.xpose.msra.mxu0 0
    %1499 = vmatprep.subr.bf16.mxu0 0
    %1500 = vmatpush1.bf16.xpose.msra.mxu0 0
    %1501 = vmatprep.subr.bf16.mxu0 0
    %1502 = vmatpush1.bf16.xpose.msra.mxu0 0
    %1503 = vmatprep.subr.bf16.mxu0 0
    %1504 = vmatpush1.bf16.xpose.msra.mxu0 0
    %1505 = vmatprep.subr.bf16.mxu0 0
    %1506 = vmatpush1.bf16.xpose.msra.mxu0 0
    %1507 = vmatprep.subr.bf16.mxu0 0
    %1508 = vmatpush1.bf16.xpose.msra.mxu0 0
    %1509 = vmatprep.subr.bf16.mxu0 0
    %1510 = vmatpush1.bf16.xpose.msra.mxu0 0
    %1511 = vmatprep.subr.bf16.mxu0 0
    %1512 = vmatpush1.bf16.xpose.msra.mxu0 0
    %1513 = vmatprep.subr.bf16.mxu0 0
    %1514 = vmatpush1.bf16.xpose.msra.mxu0 0
    %1515 = vmatprep.subr.bf16.mxu0 0
    %1516 = vmatpush1.bf16.xpose.msra.mxu0 0
    %1517 = vmatprep.subr.bf16.mxu0 0
    %1518 = vmatpush1.bf16.xpose.msra.mxu0 0
    %1519 = vmatprep.subr.bf16.mxu0 0
    %1520 = vmatpush1.bf16.xpose.msra.mxu0 0
    %1521 = vmatprep.mubr.bf16.mxu0 0
    %1522 = vmatmul.mubr.bf16.gmra.mrb[0].mxu0 %v1484
    %v1523 = vpop.f32.mrb[0].mxu0
    %v1524 = vadd.f32 0.0, %v1523
    %v1525 = vpop.f32.mrb[0].mxu0
    %v1526 = vpop.f32.mrb[0].mxu0
    %v1527 = vpop.f32.mrb[0].mxu0
    %1528 = vdwg.mxu0
    %v1529 = vmul.f32 %v1475, 0.35355338
    %v1530 = vmul.f32 %v1524, 0.35355338
    %v1531 = vadd.f32 %v1529, %v227
    %v1532 = vadd.f32 %v1530, %v231
    %v1533 = vsel %vm124, %v1531, -inf
    %1534 = vmax.xlane.f32.xlu0 %v1533
    %v1535 = vpop.xlane.xlu0 %1534
    %v1536 = vsel %vm124, %v1532, -inf
    %1537 = vmax.xlane.f32.xlu0 %v1536
    %v1538 = vpop.xlane.xlu0 %1537
    %v1539 = vsub.f32 %v1531, %v1535
    %v1540 = vsub.f32 %v1532, %v1538
    %v1541 = vmul.f32 %v1539, 1.442695
    %v1542 = vpow.pop %v1541
    %v1543 = vmul.f32 %v1540, 1.442695
    %v1544 = vpow.pop %v1543
    %v1545 = vsel %vm124, %v1542, 0.0
    %1546 = vadd.xlane.f32.xlu0 %v1545
    %v1547 = vpop.xlane.xlu0 %1546
    %v1548 = vsel %vm124, %v1544, 0.0
    %1549 = vadd.xlane.f32.xlu0 %v1548
    %v1550 = vpop.xlane.xlu0 %1549
    %v1551 = vpack.c.bf16 %v1542, %v1542
    %v1552 = vpack.c.bf16 %v1544, %v1544
    %1553 = vrot.lane.b32.xlu0 %v1429, 64
    %v1554 = vpop.permute.xlu0 %1553
    %v1556 = vsel %vm124, %v1551, 0
    %v1559 = vsel %vm261, %v1554, 0
    %1561 = vmatprep.subr.bf16.mxu0 0
    %1562 = vmatpush1.bf16.msra.mxu0 %v1559
    %1563 = vmatprep.subr.bf16.mxu0 0
    %1564 = vmatpush1.bf16.msra.mxu0 0
    %1565 = vmatprep.subr.bf16.mxu0 0
    %1566 = vmatpush1.bf16.msra.mxu0 0
    %1567 = vmatprep.subr.bf16.mxu0 0
    %1568 = vmatpush1.bf16.msra.mxu0 0
    %1569 = vmatprep.subr.bf16.mxu0 0
    %1570 = vmatpush1.bf16.msra.mxu0 0
    %1571 = vmatprep.subr.bf16.mxu0 0
    %1572 = vmatpush1.bf16.msra.mxu0 0
    %1573 = vmatprep.subr.bf16.mxu0 0
    %1574 = vmatpush1.bf16.msra.mxu0 0
    %1575 = vmatprep.subr.bf16.mxu0 0
    %1576 = vmatpush1.bf16.msra.mxu0 0
    %1577 = vmatprep.subr.bf16.mxu0 0
    %1578 = vmatpush1.bf16.msra.mxu0 0
    %1579 = vmatprep.subr.bf16.mxu0 0
    %1580 = vmatpush1.bf16.msra.mxu0 0
    %1581 = vmatprep.subr.bf16.mxu0 0
    %1582 = vmatpush1.bf16.msra.mxu0 0
    %1583 = vmatprep.subr.bf16.mxu0 0
    %1584 = vmatpush1.bf16.msra.mxu0 0
    %1585 = vmatprep.subr.bf16.mxu0 0
    %1586 = vmatpush1.bf16.msra.mxu0 0
    %1587 = vmatprep.subr.bf16.mxu0 0
    %1588 = vmatpush1.bf16.msra.mxu0 0
    %1589 = vmatprep.subr.bf16.mxu0 0
    %1590 = vmatpush1.bf16.msra.mxu0 0
    %1591 = vmatprep.subr.bf16.mxu0 0
    %1592 = vmatpush1.bf16.msra.mxu0 0
    %1593 = vmatprep.mubr.bf16.mxu0 0
    %1594 = vmatmul.mubr.bf16.gmra.mrb[0].mxu0 %v1556
    %v1595 = vpop.f32.mrb[0].mxu0
    %v1596 = vadd.f32 0.0, %v1595
    %v1597 = vpop.f32.mrb[0].mxu0
    %v1598 = vpop.f32.mrb[0].mxu0
    %v1599 = vpop.f32.mrb[0].mxu0
    %1600 = vdwg.mxu0
    %1601 = vrot.lane.b32.xlu0 %v1430, 64
    %v1602 = vpop.permute.xlu0 %1601
    %v1604 = vsel %vm124, %v1552, 0
    %v1607 = vsel %vm261, %v1602, 0
    %1609 = vmatprep.subr.bf16.mxu0 0
    %1610 = vmatpush1.bf16.msra.mxu0 %v1607
    %1611 = vmatprep.subr.bf16.mxu0 0
    %1612 = vmatpush1.bf16.msra.mxu0 0
    %1613 = vmatprep.subr.bf16.mxu0 0
    %1614 = vmatpush1.bf16.msra.mxu0 0
    %1615 = vmatprep.subr.bf16.mxu0 0
    %1616 = vmatpush1.bf16.msra.mxu0 0
    %1617 = vmatprep.subr.bf16.mxu0 0
    %1618 = vmatpush1.bf16.msra.mxu0 0
    %1619 = vmatprep.subr.bf16.mxu0 0
    %1620 = vmatpush1.bf16.msra.mxu0 0
    %1621 = vmatprep.subr.bf16.mxu0 0
    %1622 = vmatpush1.bf16.msra.mxu0 0
    %1623 = vmatprep.subr.bf16.mxu0 0
    %1624 = vmatpush1.bf16.msra.mxu0 0
    %1625 = vmatprep.subr.bf16.mxu0 0
    %1626 = vmatpush1.bf16.msra.mxu0 0
    %1627 = vmatprep.subr.bf16.mxu0 0
    %1628 = vmatpush1.bf16.msra.mxu0 0
    %1629 = vmatprep.subr.bf16.mxu0 0
    %1630 = vmatpush1.bf16.msra.mxu0 0
    %1631 = vmatprep.subr.bf16.mxu0 0
    %1632 = vmatpush1.bf16.msra.mxu0 0
    %1633 = vmatprep.subr.bf16.mxu0 0
    %1634 = vmatpush1.bf16.msra.mxu0 0
    %1635 = vmatprep.subr.bf16.mxu0 0
    %1636 = vmatpush1.bf16.msra.mxu0 0
    %1637 = vmatprep.subr.bf16.mxu0 0
    %1638 = vmatpush1.bf16.msra.mxu0 0
    %1639 = vmatprep.subr.bf16.mxu0 0
    %1640 = vmatpush1.bf16.msra.mxu0 0
    %1641 = vmatprep.mubr.bf16.mxu0 0
    %1642 = vmatmul.mubr.bf16.gmra.mrb[0].mxu0 %v1604
    %v1643 = vpop.f32.mrb[0].mxu0
    %v1644 = vadd.f32 0.0, %v1643
    %v1645 = vpop.f32.mrb[0].mxu0
    %v1646 = vpop.f32.mrb[0].mxu0
    %v1647 = vpop.f32.mrb[0].mxu0
    %1648 = vdwg.mxu0
    %v1649 = vrcp.pop %v1547
    %v1650 = vrcp.pop %v1550
    %v1651 = vmul.f32 %v1596, %v1649
    %v1652 = vmul.f32 %v1644, %v1650
    %1653 = vrot.lane.b32.xlu0 %v1429, 120
    %v1654 = vpop.permute.xlu0 %1653
    %1655 = vrot.lane.b32.xlu0 %v1429, 88
    %v1656 = vpop.permute.xlu0 %1655
    %v1658 = vsel %vm124, %v1654, 0
    %v1661 = vsel %vm124, %v1656, 0
    %1663 = vmatprep.subr.bf16.mxu0 0
    %1664 = vmatpush1.bf16.xpose.msra.mxu0 %v1661
    %1665 = vmatprep.subr.bf16.mxu0 0
    %1666 = vmatpush1.bf16.xpose.msra.mxu0 0
    %1667 = vmatprep.subr.bf16.mxu0 0
    %1668 = vmatpush1.bf16.xpose.msra.mxu0 0
    %1669 = vmatprep.subr.bf16.mxu0 0
    %1670 = vmatpush1.bf16.xpose.msra.mxu0 0
    %1671 = vmatprep.subr.bf16.mxu0 0
    %1672 = vmatpush1.bf16.xpose.msra.mxu0 0
    %1673 = vmatprep.subr.bf16.mxu0 0
    %1674 = vmatpush1.bf16.xpose.msra.mxu0 0
    %1675 = vmatprep.subr.bf16.mxu0 0
    %1676 = vmatpush1.bf16.xpose.msra.mxu0 0
    %1677 = vmatprep.subr.bf16.mxu0 0
    %1678 = vmatpush1.bf16.xpose.msra.mxu0 0
    %1679 = vmatprep.subr.bf16.mxu0 0
    %1680 = vmatpush1.bf16.xpose.msra.mxu0 0
    %1681 = vmatprep.subr.bf16.mxu0 0
    %1682 = vmatpush1.bf16.xpose.msra.mxu0 0
    %1683 = vmatprep.subr.bf16.mxu0 0
    %1684 = vmatpush1.bf16.xpose.msra.mxu0 0
    %1685 = vmatprep.subr.bf16.mxu0 0
    %1686 = vmatpush1.bf16.xpose.msra.mxu0 0
    %1687 = vmatprep.subr.bf16.mxu0 0
    %1688 = vmatpush1.bf16.xpose.msra.mxu0 0
    %1689 = vmatprep.subr.bf16.mxu0 0
    %1690 = vmatpush1.bf16.xpose.msra.mxu0 0
    %1691 = vmatprep.subr.bf16.mxu0 0
    %1692 = vmatpush1.bf16.xpose.msra.mxu0 0
    %1693 = vmatprep.subr.bf16.mxu0 0
    %1694 = vmatpush1.bf16.xpose.msra.mxu0 0
    %1695 = vmatprep.mubr.bf16.mxu0 0
    %1696 = vmatmul.mubr.bf16.gmra.mrb[0].mxu0 %v1658
    %v1697 = vpop.f32.mrb[0].mxu0
    %v1698 = vadd.f32 0.0, %v1697
    %v1699 = vpop.f32.mrb[0].mxu0
    %v1700 = vpop.f32.mrb[0].mxu0
    %v1701 = vpop.f32.mrb[0].mxu0
    %1702 = vdwg.mxu0
    %1703 = vrot.lane.b32.xlu0 %v1430, 120
    %v1704 = vpop.permute.xlu0 %1703
    %1705 = vrot.lane.b32.xlu0 %v1430, 88
    %v1706 = vpop.permute.xlu0 %1705
    %v1708 = vsel %vm124, %v1704, 0
    %v1711 = vsel %vm124, %v1706, 0
    %1713 = vmatprep.subr.bf16.mxu0 0
    %1714 = vmatpush1.bf16.xpose.msra.mxu0 %v1711
    %1715 = vmatprep.subr.bf16.mxu0 0
    %1716 = vmatpush1.bf16.xpose.msra.mxu0 0
    %1717 = vmatprep.subr.bf16.mxu0 0
    %1718 = vmatpush1.bf16.xpose.msra.mxu0 0
    %1719 = vmatprep.subr.bf16.mxu0 0
    %1720 = vmatpush1.bf16.xpose.msra.mxu0 0
    %1721 = vmatprep.subr.bf16.mxu0 0
    %1722 = vmatpush1.bf16.xpose.msra.mxu0 0
    %1723 = vmatprep.subr.bf16.mxu0 0
    %1724 = vmatpush1.bf16.xpose.msra.mxu0 0
    %1725 = vmatprep.subr.bf16.mxu0 0
    %1726 = vmatpush1.bf16.xpose.msra.mxu0 0
    %1727 = vmatprep.subr.bf16.mxu0 0
    %1728 = vmatpush1.bf16.xpose.msra.mxu0 0
    %1729 = vmatprep.subr.bf16.mxu0 0
    %1730 = vmatpush1.bf16.xpose.msra.mxu0 0
    %1731 = vmatprep.subr.bf16.mxu0 0
    %1732 = vmatpush1.bf16.xpose.msra.mxu0 0
    %1733 = vmatprep.subr.bf16.mxu0 0
    %1734 = vmatpush1.bf16.xpose.msra.mxu0 0
    %1735 = vmatprep.subr.bf16.mxu0 0
    %1736 = vmatpush1.bf16.xpose.msra.mxu0 0
    %1737 = vmatprep.subr.bf16.mxu0 0
    %1738 = vmatpush1.bf16.xpose.msra.mxu0 0
    %1739 = vmatprep.subr.bf16.mxu0 0
    %1740 = vmatpush1.bf16.xpose.msra.mxu0 0
    %1741 = vmatprep.subr.bf16.mxu0 0
    %1742 = vmatpush1.bf16.xpose.msra.mxu0 0
    %1743 = vmatprep.subr.bf16.mxu0 0
    %1744 = vmatpush1.bf16.xpose.msra.mxu0 0
    %1745 = vmatprep.mubr.bf16.mxu0 0
    %1746 = vmatmul.mubr.bf16.gmra.mrb[0].mxu0 %v1708
    %v1747 = vpop.f32.mrb[0].mxu0
    %v1748 = vadd.f32 0.0, %v1747
    %v1749 = vpop.f32.mrb[0].mxu0
    %v1750 = vpop.f32.mrb[0].mxu0
    %v1751 = vpop.f32.mrb[0].mxu0
    %1752 = vdwg.mxu0
    %v1753 = vmul.f32 %v1698, 0.35355338
    %v1754 = vmul.f32 %v1748, 0.35355338
    %v1755 = vadd.f32 %v1753, %v227
    %v1756 = vadd.f32 %v1754, %v231
    %v1757 = vsel %vm124, %v1755, -inf
    %1758 = vmax.xlane.f32.xlu0 %v1757
    %v1759 = vpop.xlane.xlu0 %1758
    %v1760 = vsel %vm124, %v1756, -inf
    %1761 = vmax.xlane.f32.xlu0 %v1760
    %v1762 = vpop.xlane.xlu0 %1761
    %v1763 = vsub.f32 %v1755, %v1759
    %v1764 = vsub.f32 %v1756, %v1762
    %v1765 = vmul.f32 %v1763, 1.442695
    %v1766 = vpow.pop %v1765
    %v1767 = vmul.f32 %v1764, 1.442695
    %v1768 = vpow.pop %v1767
    %v1769 = vsel %vm124, %v1766, 0.0
    %1770 = vadd.xlane.f32.xlu0 %v1769
    %v1771 = vpop.xlane.xlu0 %1770
    %v1772 = vsel %vm124, %v1768, 0.0
    %1773 = vadd.xlane.f32.xlu0 %v1772
    %v1774 = vpop.xlane.xlu0 %1773
    %v1775 = vpack.c.bf16 %v1766, %v1766
    %v1776 = vpack.c.bf16 %v1768, %v1768
    %1777 = vrot.lane.b32.xlu0 %v1429, 56
    %v1778 = vpop.permute.xlu0 %1777
    %v1780 = vsel %vm124, %v1775, 0
    %v1783 = vsel %vm261, %v1778, 0
    %1785 = vmatprep.subr.bf16.mxu0 0
    %1786 = vmatpush1.bf16.msra.mxu0 %v1783
    %1787 = vmatprep.subr.bf16.mxu0 0
    %1788 = vmatpush1.bf16.msra.mxu0 0
    %1789 = vmatprep.subr.bf16.mxu0 0
    %1790 = vmatpush1.bf16.msra.mxu0 0
    %1791 = vmatprep.subr.bf16.mxu0 0
    %1792 = vmatpush1.bf16.msra.mxu0 0
    %1793 = vmatprep.subr.bf16.mxu0 0
    %1794 = vmatpush1.bf16.msra.mxu0 0
    %1795 = vmatprep.subr.bf16.mxu0 0
    %1796 = vmatpush1.bf16.msra.mxu0 0
    %1797 = vmatprep.subr.bf16.mxu0 0
    %1798 = vmatpush1.bf16.msra.mxu0 0
    %1799 = vmatprep.subr.bf16.mxu0 0
    %1800 = vmatpush1.bf16.msra.mxu0 0
    %1801 = vmatprep.subr.bf16.mxu0 0
    %1802 = vmatpush1.bf16.msra.mxu0 0
    %1803 = vmatprep.subr.bf16.mxu0 0
    %1804 = vmatpush1.bf16.msra.mxu0 0
    %1805 = vmatprep.subr.bf16.mxu0 0
    %1806 = vmatpush1.bf16.msra.mxu0 0
    %1807 = vmatprep.subr.bf16.mxu0 0
    %1808 = vmatpush1.bf16.msra.mxu0 0
    %1809 = vmatprep.subr.bf16.mxu0 0
    %1810 = vmatpush1.bf16.msra.mxu0 0
    %1811 = vmatprep.subr.bf16.mxu0 0
    %1812 = vmatpush1.bf16.msra.mxu0 0
    %1813 = vmatprep.subr.bf16.mxu0 0
    %1814 = vmatpush1.bf16.msra.mxu0 0
    %1815 = vmatprep.subr.bf16.mxu0 0
    %1816 = vmatpush1.bf16.msra.mxu0 0
    %1817 = vmatprep.mubr.bf16.mxu0 0
    %1818 = vmatmul.mubr.bf16.gmra.mrb[0].mxu0 %v1780
    %v1819 = vpop.f32.mrb[0].mxu0
    %v1820 = vadd.f32 0.0, %v1819
    %v1821 = vpop.f32.mrb[0].mxu0
    %v1822 = vpop.f32.mrb[0].mxu0
    %v1823 = vpop.f32.mrb[0].mxu0
    %1824 = vdwg.mxu0
    %1825 = vrot.lane.b32.xlu0 %v1430, 56
    %v1826 = vpop.permute.xlu0 %1825
    %v1828 = vsel %vm124, %v1776, 0
    %v1831 = vsel %vm261, %v1826, 0
    %1833 = vmatprep.subr.bf16.mxu0 0
    %1834 = vmatpush1.bf16.msra.mxu0 %v1831
    %1835 = vmatprep.subr.bf16.mxu0 0
    %1836 = vmatpush1.bf16.msra.mxu0 0
    %1837 = vmatprep.subr.bf16.mxu0 0
    %1838 = vmatpush1.bf16.msra.mxu0 0
    %1839 = vmatprep.subr.bf16.mxu0 0
    %1840 = vmatpush1.bf16.msra.mxu0 0
    %1841 = vmatprep.subr.bf16.mxu0 0
    %1842 = vmatpush1.bf16.msra.mxu0 0
    %1843 = vmatprep.subr.bf16.mxu0 0
    %1844 = vmatpush1.bf16.msra.mxu0 0
    %1845 = vmatprep.subr.bf16.mxu0 0
    %1846 = vmatpush1.bf16.msra.mxu0 0
    %1847 = vmatprep.subr.bf16.mxu0 0
    %1848 = vmatpush1.bf16.msra.mxu0 0
    %1849 = vmatprep.subr.bf16.mxu0 0
    %1850 = vmatpush1.bf16.msra.mxu0 0
    %1851 = vmatprep.subr.bf16.mxu0 0
    %1852 = vmatpush1.bf16.msra.mxu0 0
    %1853 = vmatprep.subr.bf16.mxu0 0
    %1854 = vmatpush1.bf16.msra.mxu0 0
    %1855 = vmatprep.subr.bf16.mxu0 0
    %1856 = vmatpush1.bf16.msra.mxu0 0
    %1857 = vmatprep.subr.bf16.mxu0 0
    %1858 = vmatpush1.bf16.msra.mxu0 0
    %1859 = vmatprep.subr.bf16.mxu0 0
    %1860 = vmatpush1.bf16.msra.mxu0 0
    %1861 = vmatprep.subr.bf16.mxu0 0
    %1862 = vmatpush1.bf16.msra.mxu0 0
    %1863 = vmatprep.subr.bf16.mxu0 0
    %1864 = vmatpush1.bf16.msra.mxu0 0
    %1865 = vmatprep.mubr.bf16.mxu0 0
    %1866 = vmatmul.mubr.bf16.gmra.mrb[0].mxu0 %v1828
    %v1867 = vpop.f32.mrb[0].mxu0
    %v1868 = vadd.f32 0.0, %v1867
    %v1869 = vpop.f32.mrb[0].mxu0
    %v1870 = vpop.f32.mrb[0].mxu0
    %v1871 = vpop.f32.mrb[0].mxu0
    %1872 = vdwg.mxu0
    %v1873 = vrcp.pop %v1771
    %v1874 = vrcp.pop %v1774
    %v1875 = vmul.f32 %v1820, %v1873
    %v1876 = vmul.f32 %v1868, %v1874
    %1877 = vrot.lane.b32.xlu0 %v1429, 112
    %v1878 = vpop.permute.xlu0 %1877
    %1879 = vrot.lane.b32.xlu0 %v1429, 80
    %v1880 = vpop.permute.xlu0 %1879
    %v1882 = vsel %vm124, %v1878, 0
    %v1885 = vsel %vm124, %v1880, 0
    %1887 = vmatprep.subr.bf16.mxu0 0
    %1888 = vmatpush1.bf16.xpose.msra.mxu0 %v1885
    %1889 = vmatprep.subr.bf16.mxu0 0
    %1890 = vmatpush1.bf16.xpose.msra.mxu0 0
    %1891 = vmatprep.subr.bf16.mxu0 0
    %1892 = vmatpush1.bf16.xpose.msra.mxu0 0
    %1893 = vmatprep.subr.bf16.mxu0 0
    %1894 = vmatpush1.bf16.xpose.msra.mxu0 0
    %1895 = vmatprep.subr.bf16.mxu0 0
    %1896 = vmatpush1.bf16.xpose.msra.mxu0 0
    %1897 = vmatprep.subr.bf16.mxu0 0
    %1898 = vmatpush1.bf16.xpose.msra.mxu0 0
    %1899 = vmatprep.subr.bf16.mxu0 0
    %1900 = vmatpush1.bf16.xpose.msra.mxu0 0
    %1901 = vmatprep.subr.bf16.mxu0 0
    %1902 = vmatpush1.bf16.xpose.msra.mxu0 0
    %1903 = vmatprep.subr.bf16.mxu0 0
    %1904 = vmatpush1.bf16.xpose.msra.mxu0 0
    %1905 = vmatprep.subr.bf16.mxu0 0
    %1906 = vmatpush1.bf16.xpose.msra.mxu0 0
    %1907 = vmatprep.subr.bf16.mxu0 0
    %1908 = vmatpush1.bf16.xpose.msra.mxu0 0
    %1909 = vmatprep.subr.bf16.mxu0 0
    %1910 = vmatpush1.bf16.xpose.msra.mxu0 0
    %1911 = vmatprep.subr.bf16.mxu0 0
    %1912 = vmatpush1.bf16.xpose.msra.mxu0 0
    %1913 = vmatprep.subr.bf16.mxu0 0
    %1914 = vmatpush1.bf16.xpose.msra.mxu0 0
    %1915 = vmatprep.subr.bf16.mxu0 0
    %1916 = vmatpush1.bf16.xpose.msra.mxu0 0
    %1917 = vmatprep.subr.bf16.mxu0 0
    %1918 = vmatpush1.bf16.xpose.msra.mxu0 0
    %1919 = vmatprep.mubr.bf16.mxu0 0
    %1920 = vmatmul.mubr.bf16.gmra.mrb[0].mxu0 %v1882
    %v1921 = vpop.f32.mrb[0].mxu0
    %v1922 = vadd.f32 0.0, %v1921
    %v1923 = vpop.f32.mrb[0].mxu0
    %v1924 = vpop.f32.mrb[0].mxu0
    %v1925 = vpop.f32.mrb[0].mxu0
    %1926 = vdwg.mxu0
    %1927 = vrot.lane.b32.xlu0 %v1430, 112
    %v1928 = vpop.permute.xlu0 %1927
    %1929 = vrot.lane.b32.xlu0 %v1430, 80
    %v1930 = vpop.permute.xlu0 %1929
    %v1932 = vsel %vm124, %v1928, 0
    %v1935 = vsel %vm124, %v1930, 0
    %1937 = vmatprep.subr.bf16.mxu0 0
    %1938 = vmatpush1.bf16.xpose.msra.mxu0 %v1935
    %1939 = vmatprep.subr.bf16.mxu0 0
    %1940 = vmatpush1.bf16.xpose.msra.mxu0 0
    %1941 = vmatprep.subr.bf16.mxu0 0
    %1942 = vmatpush1.bf16.xpose.msra.mxu0 0
    %1943 = vmatprep.subr.bf16.mxu0 0
    %1944 = vmatpush1.bf16.xpose.msra.mxu0 0
    %1945 = vmatprep.subr.bf16.mxu0 0
    %1946 = vmatpush1.bf16.xpose.msra.mxu0 0
    %1947 = vmatprep.subr.bf16.mxu0 0
    %1948 = vmatpush1.bf16.xpose.msra.mxu0 0
    %1949 = vmatprep.subr.bf16.mxu0 0
    %1950 = vmatpush1.bf16.xpose.msra.mxu0 0
    %1951 = vmatprep.subr.bf16.mxu0 0
    %1952 = vmatpush1.bf16.xpose.msra.mxu0 0
    %1953 = vmatprep.subr.bf16.mxu0 0
    %1954 = vmatpush1.bf16.xpose.msra.mxu0 0
    %1955 = vmatprep.subr.bf16.mxu0 0
    %1956 = vmatpush1.bf16.xpose.msra.mxu0 0
    %1957 = vmatprep.subr.bf16.mxu0 0
    %1958 = vmatpush1.bf16.xpose.msra.mxu0 0
    %1959 = vmatprep.subr.bf16.mxu0 0
    %1960 = vmatpush1.bf16.xpose.msra.mxu0 0
    %1961 = vmatprep.subr.bf16.mxu0 0
    %1962 = vmatpush1.bf16.xpose.msra.mxu0 0
    %1963 = vmatprep.subr.bf16.mxu0 0
    %1964 = vmatpush1.bf16.xpose.msra.mxu0 0
    %1965 = vmatprep.subr.bf16.mxu0 0
    %1966 = vmatpush1.bf16.xpose.msra.mxu0 0
    %1967 = vmatprep.subr.bf16.mxu0 0
    %1968 = vmatpush1.bf16.xpose.msra.mxu0 0
    %1969 = vmatprep.mubr.bf16.mxu0 0
    %1970 = vmatmul.mubr.bf16.gmra.mrb[0].mxu0 %v1932
    %v1971 = vpop.f32.mrb[0].mxu0
    %v1972 = vadd.f32 0.0, %v1971
    %v1973 = vpop.f32.mrb[0].mxu0
    %v1974 = vpop.f32.mrb[0].mxu0
    %v1975 = vpop.f32.mrb[0].mxu0
    %1976 = vdwg.mxu0
    %v1977 = vmul.f32 %v1922, 0.35355338
    %v1978 = vmul.f32 %v1972, 0.35355338
    %v1979 = vadd.f32 %v1977, %v227
    %v1980 = vadd.f32 %v1978, %v231
    %v1981 = vsel %vm124, %v1979, -inf
    %1982 = vmax.xlane.f32.xlu0 %v1981
    %v1983 = vpop.xlane.xlu0 %1982
    %v1984 = vsel %vm124, %v1980, -inf
    %1985 = vmax.xlane.f32.xlu0 %v1984
    %v1986 = vpop.xlane.xlu0 %1985
    %v1987 = vsub.f32 %v1979, %v1983
    %v1988 = vsub.f32 %v1980, %v1986
    %v1989 = vmul.f32 %v1987, 1.442695
    %v1990 = vpow.pop %v1989
    %v1991 = vmul.f32 %v1988, 1.442695
    %v1992 = vpow.pop %v1991
    %v1993 = vsel %vm124, %v1990, 0.0
    %1994 = vadd.xlane.f32.xlu0 %v1993
    %v1995 = vpop.xlane.xlu0 %1994
    %v1996 = vsel %vm124, %v1992, 0.0
    %1997 = vadd.xlane.f32.xlu0 %v1996
    %v1998 = vpop.xlane.xlu0 %1997
    %v1999 = vpack.c.bf16 %v1990, %v1990
    %v2000 = vpack.c.bf16 %v1992, %v1992
    %2001 = vrot.lane.b32.xlu0 %v1429, 48
    %v2002 = vpop.permute.xlu0 %2001
    %v2004 = vsel %vm124, %v1999, 0
    %v2007 = vsel %vm261, %v2002, 0
    %2009 = vmatprep.subr.bf16.mxu0 0
    %2010 = vmatpush1.bf16.msra.mxu0 %v2007
    %2011 = vmatprep.subr.bf16.mxu0 0
    %2012 = vmatpush1.bf16.msra.mxu0 0
    %2013 = vmatprep.subr.bf16.mxu0 0
    %2014 = vmatpush1.bf16.msra.mxu0 0
    %2015 = vmatprep.subr.bf16.mxu0 0
    %2016 = vmatpush1.bf16.msra.mxu0 0
    %2017 = vmatprep.subr.bf16.mxu0 0
    %2018 = vmatpush1.bf16.msra.mxu0 0
    %2019 = vmatprep.subr.bf16.mxu0 0
    %2020 = vmatpush1.bf16.msra.mxu0 0
    %2021 = vmatprep.subr.bf16.mxu0 0
    %2022 = vmatpush1.bf16.msra.mxu0 0
    %2023 = vmatprep.subr.bf16.mxu0 0
    %2024 = vmatpush1.bf16.msra.mxu0 0
    %2025 = vmatprep.subr.bf16.mxu0 0
    %2026 = vmatpush1.bf16.msra.mxu0 0
    %2027 = vmatprep.subr.bf16.mxu0 0
    %2028 = vmatpush1.bf16.msra.mxu0 0
    %2029 = vmatprep.subr.bf16.mxu0 0
    %2030 = vmatpush1.bf16.msra.mxu0 0
    %2031 = vmatprep.subr.bf16.mxu0 0
    %2032 = vmatpush1.bf16.msra.mxu0 0
    %2033 = vmatprep.subr.bf16.mxu0 0
    %2034 = vmatpush1.bf16.msra.mxu0 0
    %2035 = vmatprep.subr.bf16.mxu0 0
    %2036 = vmatpush1.bf16.msra.mxu0 0
    %2037 = vmatprep.subr.bf16.mxu0 0
    %2038 = vmatpush1.bf16.msra.mxu0 0
    %2039 = vmatprep.subr.bf16.mxu0 0
    %2040 = vmatpush1.bf16.msra.mxu0 0
    %2041 = vmatprep.mubr.bf16.mxu0 0
    %2042 = vmatmul.mubr.bf16.gmra.mrb[0].mxu0 %v2004
    %v2043 = vpop.f32.mrb[0].mxu0
    %v2044 = vadd.f32 0.0, %v2043
    %v2045 = vpop.f32.mrb[0].mxu0
    %v2046 = vpop.f32.mrb[0].mxu0
    %v2047 = vpop.f32.mrb[0].mxu0
    %2048 = vdwg.mxu0
    %2049 = vrot.lane.b32.xlu0 %v1430, 48
    %v2050 = vpop.permute.xlu0 %2049
    %v2052 = vsel %vm124, %v2000, 0
    %v2055 = vsel %vm261, %v2050, 0
    %2057 = vmatprep.subr.bf16.mxu0 0
    %2058 = vmatpush1.bf16.msra.mxu0 %v2055
    %2059 = vmatprep.subr.bf16.mxu0 0
    %2060 = vmatpush1.bf16.msra.mxu0 0
    %2061 = vmatprep.subr.bf16.mxu0 0
    %2062 = vmatpush1.bf16.msra.mxu0 0
    %2063 = vmatprep.subr.bf16.mxu0 0
    %2064 = vmatpush1.bf16.msra.mxu0 0
    %2065 = vmatprep.subr.bf16.mxu0 0
    %2066 = vmatpush1.bf16.msra.mxu0 0
    %2067 = vmatprep.subr.bf16.mxu0 0
    %2068 = vmatpush1.bf16.msra.mxu0 0
    %2069 = vmatprep.subr.bf16.mxu0 0
    %2070 = vmatpush1.bf16.msra.mxu0 0
    %2071 = vmatprep.subr.bf16.mxu0 0
    %2072 = vmatpush1.bf16.msra.mxu0 0
    %2073 = vmatprep.subr.bf16.mxu0 0
    %2074 = vmatpush1.bf16.msra.mxu0 0
    %2075 = vmatprep.subr.bf16.mxu0 0
    %2076 = vmatpush1.bf16.msra.mxu0 0
    %2077 = vmatprep.subr.bf16.mxu0 0
    %2078 = vmatpush1.bf16.msra.mxu0 0
    %2079 = vmatprep.subr.bf16.mxu0 0
    %2080 = vmatpush1.bf16.msra.mxu0 0
    %2081 = vmatprep.subr.bf16.mxu0 0
    %2082 = vmatpush1.bf16.msra.mxu0 0
    %2083 = vmatprep.subr.bf16.mxu0 0
    %2084 = vmatpush1.bf16.msra.mxu0 0
    %2085 = vmatprep.subr.bf16.mxu0 0
    %2086 = vmatpush1.bf16.msra.mxu0 0
    %2087 = vmatprep.subr.bf16.mxu0 0
    %2088 = vmatpush1.bf16.msra.mxu0 0
    %2089 = vmatprep.mubr.bf16.mxu0 0
    %2090 = vmatmul.mubr.bf16.gmra.mrb[0].mxu0 %v2052
    %v2091 = vpop.f32.mrb[0].mxu0
    %v2092 = vadd.f32 0.0, %v2091
    %v2093 = vpop.f32.mrb[0].mxu0
    %v2094 = vpop.f32.mrb[0].mxu0
    %v2095 = vpop.f32.mrb[0].mxu0
    %2096 = vdwg.mxu0
    %v2097 = vrcp.pop %v1995
    %v2098 = vrcp.pop %v1998
    %v2099 = vmul.f32 %v2044, %v2097
    %v2100 = vmul.f32 %v2092, %v2098
    %2101 = vrot.lane.b32.xlu0 %v1429, 104
    %v2102 = vpop.permute.xlu0 %2101
    %2103 = vrot.lane.b32.xlu0 %v1429, 72
    %v2104 = vpop.permute.xlu0 %2103
    %v2106 = vsel %vm124, %v2102, 0
    %v2109 = vsel %vm124, %v2104, 0
    %2111 = vmatprep.subr.bf16.mxu0 0
    %2112 = vmatpush1.bf16.xpose.msra.mxu0 %v2109
    %2113 = vmatprep.subr.bf16.mxu0 0
    %2114 = vmatpush1.bf16.xpose.msra.mxu0 0
    %2115 = vmatprep.subr.bf16.mxu0 0
    %2116 = vmatpush1.bf16.xpose.msra.mxu0 0
    %2117 = vmatprep.subr.bf16.mxu0 0
    %2118 = vmatpush1.bf16.xpose.msra.mxu0 0
    %2119 = vmatprep.subr.bf16.mxu0 0
    %2120 = vmatpush1.bf16.xpose.msra.mxu0 0
    %2121 = vmatprep.subr.bf16.mxu0 0
    %2122 = vmatpush1.bf16.xpose.msra.mxu0 0
    %2123 = vmatprep.subr.bf16.mxu0 0
    %2124 = vmatpush1.bf16.xpose.msra.mxu0 0
    %2125 = vmatprep.subr.bf16.mxu0 0
    %2126 = vmatpush1.bf16.xpose.msra.mxu0 0
    %2127 = vmatprep.subr.bf16.mxu0 0
    %2128 = vmatpush1.bf16.xpose.msra.mxu0 0
    %2129 = vmatprep.subr.bf16.mxu0 0
    %2130 = vmatpush1.bf16.xpose.msra.mxu0 0
    %2131 = vmatprep.subr.bf16.mxu0 0
    %2132 = vmatpush1.bf16.xpose.msra.mxu0 0
    %2133 = vmatprep.subr.bf16.mxu0 0
    %2134 = vmatpush1.bf16.xpose.msra.mxu0 0
    %2135 = vmatprep.subr.bf16.mxu0 0
    %2136 = vmatpush1.bf16.xpose.msra.mxu0 0
    %2137 = vmatprep.subr.bf16.mxu0 0
    %2138 = vmatpush1.bf16.xpose.msra.mxu0 0
    %2139 = vmatprep.subr.bf16.mxu0 0
    %2140 = vmatpush1.bf16.xpose.msra.mxu0 0
    %2141 = vmatprep.subr.bf16.mxu0 0
    %2142 = vmatpush1.bf16.xpose.msra.mxu0 0
    %2143 = vmatprep.mubr.bf16.mxu0 0
    %2144 = vmatmul.mubr.bf16.gmra.mrb[0].mxu0 %v2106
    %v2145 = vpop.f32.mrb[0].mxu0
    %v2146 = vadd.f32 0.0, %v2145
    %v2147 = vpop.f32.mrb[0].mxu0
    %v2148 = vpop.f32.mrb[0].mxu0
    %v2149 = vpop.f32.mrb[0].mxu0
    %2150 = vdwg.mxu0
    %2151 = vrot.lane.b32.xlu0 %v1430, 104
    %v2152 = vpop.permute.xlu0 %2151
    %2153 = vrot.lane.b32.xlu0 %v1430, 72
    %v2154 = vpop.permute.xlu0 %2153
    %v2156 = vsel %vm124, %v2152, 0
    %v2159 = vsel %vm124, %v2154, 0
    %2161 = vmatprep.subr.bf16.mxu0 0
    %2162 = vmatpush1.bf16.xpose.msra.mxu0 %v2159
    %2163 = vmatprep.subr.bf16.mxu0 0
    %2164 = vmatpush1.bf16.xpose.msra.mxu0 0
    %2165 = vmatprep.subr.bf16.mxu0 0
    %2166 = vmatpush1.bf16.xpose.msra.mxu0 0
    %2167 = vmatprep.subr.bf16.mxu0 0
    %2168 = vmatpush1.bf16.xpose.msra.mxu0 0
    %2169 = vmatprep.subr.bf16.mxu0 0
    %2170 = vmatpush1.bf16.xpose.msra.mxu0 0
    %2171 = vmatprep.subr.bf16.mxu0 0
    %2172 = vmatpush1.bf16.xpose.msra.mxu0 0
    %2173 = vmatprep.subr.bf16.mxu0 0
    %2174 = vmatpush1.bf16.xpose.msra.mxu0 0
    %2175 = vmatprep.subr.bf16.mxu0 0
    %2176 = vmatpush1.bf16.xpose.msra.mxu0 0
    %2177 = vmatprep.subr.bf16.mxu0 0
    %2178 = vmatpush1.bf16.xpose.msra.mxu0 0
    %2179 = vmatprep.subr.bf16.mxu0 0
    %2180 = vmatpush1.bf16.xpose.msra.mxu0 0
    %2181 = vmatprep.subr.bf16.mxu0 0
    %2182 = vmatpush1.bf16.xpose.msra.mxu0 0
    %2183 = vmatprep.subr.bf16.mxu0 0
    %2184 = vmatpush1.bf16.xpose.msra.mxu0 0
    %2185 = vmatprep.subr.bf16.mxu0 0
    %2186 = vmatpush1.bf16.xpose.msra.mxu0 0
    %2187 = vmatprep.subr.bf16.mxu0 0
    %2188 = vmatpush1.bf16.xpose.msra.mxu0 0
    %2189 = vmatprep.subr.bf16.mxu0 0
    %2190 = vmatpush1.bf16.xpose.msra.mxu0 0
    %2191 = vmatprep.subr.bf16.mxu0 0
    %2192 = vmatpush1.bf16.xpose.msra.mxu0 0
    %2193 = vmatprep.mubr.bf16.mxu0 0
    %2194 = vmatmul.mubr.bf16.gmra.mrb[0].mxu0 %v2156
    %v2195 = vpop.f32.mrb[0].mxu0
    %v2196 = vadd.f32 0.0, %v2195
    %v2197 = vpop.f32.mrb[0].mxu0
    %v2198 = vpop.f32.mrb[0].mxu0
    %v2199 = vpop.f32.mrb[0].mxu0
    %2200 = vdwg.mxu0
    %v2201 = vmul.f32 %v2146, 0.35355338
    %v2202 = vmul.f32 %v2196, 0.35355338
    %v2203 = vadd.f32 %v2201, %v227
    %v2204 = vadd.f32 %v2202, %v231
    %v2205 = vsel %vm124, %v2203, -inf
    %2206 = vmax.xlane.f32.xlu0 %v2205
    %v2207 = vpop.xlane.xlu0 %2206
    %v2208 = vsel %vm124, %v2204, -inf
    %2209 = vmax.xlane.f32.xlu0 %v2208
    %v2210 = vpop.xlane.xlu0 %2209
    %v2211 = vsub.f32 %v2203, %v2207
    %v2212 = vsub.f32 %v2204, %v2210
    %v2213 = vmul.f32 %v2211, 1.442695
    %v2214 = vpow.pop %v2213
    %v2215 = vmul.f32 %v2212, 1.442695
    %v2216 = vpow.pop %v2215
    %v2217 = vsel %vm124, %v2214, 0.0
    %2218 = vadd.xlane.f32.xlu0 %v2217
    %v2219 = vpop.xlane.xlu0 %2218
    %v2220 = vsel %vm124, %v2216, 0.0
    %2221 = vadd.xlane.f32.xlu0 %v2220
    %v2222 = vpop.xlane.xlu0 %2221
    %v2223 = vpack.c.bf16 %v2214, %v2214
    %v2224 = vpack.c.bf16 %v2216, %v2216
    %2225 = vrot.lane.b32.xlu0 %v1429, 40
    %v2226 = vpop.permute.xlu0 %2225
    %v2228 = vsel %vm124, %v2223, 0
    %v2231 = vsel %vm261, %v2226, 0
    %2233 = vmatprep.subr.bf16.mxu0 0
    %2234 = vmatpush1.bf16.msra.mxu0 %v2231
    %2235 = vmatprep.subr.bf16.mxu0 0
    %2236 = vmatpush1.bf16.msra.mxu0 0
    %2237 = vmatprep.subr.bf16.mxu0 0
    %2238 = vmatpush1.bf16.msra.mxu0 0
    %2239 = vmatprep.subr.bf16.mxu0 0
    %2240 = vmatpush1.bf16.msra.mxu0 0
    %2241 = vmatprep.subr.bf16.mxu0 0
    %2242 = vmatpush1.bf16.msra.mxu0 0
    %2243 = vmatprep.subr.bf16.mxu0 0
    %2244 = vmatpush1.bf16.msra.mxu0 0
    %2245 = vmatprep.subr.bf16.mxu0 0
    %2246 = vmatpush1.bf16.msra.mxu0 0
    %2247 = vmatprep.subr.bf16.mxu0 0
    %2248 = vmatpush1.bf16.msra.mxu0 0
    %2249 = vmatprep.subr.bf16.mxu0 0
    %2250 = vmatpush1.bf16.msra.mxu0 0
    %2251 = vmatprep.subr.bf16.mxu0 0
    %2252 = vmatpush1.bf16.msra.mxu0 0
    %2253 = vmatprep.subr.bf16.mxu0 0
    %2254 = vmatpush1.bf16.msra.mxu0 0
    %2255 = vmatprep.subr.bf16.mxu0 0
    %2256 = vmatpush1.bf16.msra.mxu0 0
    %2257 = vmatprep.subr.bf16.mxu0 0
    %2258 = vmatpush1.bf16.msra.mxu0 0
    %2259 = vmatprep.subr.bf16.mxu0 0
    %2260 = vmatpush1.bf16.msra.mxu0 0
    %2261 = vmatprep.subr.bf16.mxu0 0
    %2262 = vmatpush1.bf16.msra.mxu0 0
    %2263 = vmatprep.subr.bf16.mxu0 0
    %2264 = vmatpush1.bf16.msra.mxu0 0
    %2265 = vmatprep.mubr.bf16.mxu0 0
    %2266 = vmatmul.mubr.bf16.gmra.mrb[0].mxu0 %v2228
    %v2267 = vpop.f32.mrb[0].mxu0
    %v2268 = vadd.f32 0.0, %v2267
    %v2269 = vpop.f32.mrb[0].mxu0
    %v2270 = vpop.f32.mrb[0].mxu0
    %v2271 = vpop.f32.mrb[0].mxu0
    %2272 = vdwg.mxu0
    %2273 = vrot.lane.b32.xlu0 %v1430, 40
    %v2274 = vpop.permute.xlu0 %2273
    %v2276 = vsel %vm124, %v2224, 0
    %v2279 = vsel %vm261, %v2274, 0
    %2281 = vmatprep.subr.bf16.mxu0 0
    %2282 = vmatpush1.bf16.msra.mxu0 %v2279
    %2283 = vmatprep.subr.bf16.mxu0 0
    %2284 = vmatpush1.bf16.msra.mxu0 0
    %2285 = vmatprep.subr.bf16.mxu0 0
    %2286 = vmatpush1.bf16.msra.mxu0 0
    %2287 = vmatprep.subr.bf16.mxu0 0
    %2288 = vmatpush1.bf16.msra.mxu0 0
    %2289 = vmatprep.subr.bf16.mxu0 0
    %2290 = vmatpush1.bf16.msra.mxu0 0
    %2291 = vmatprep.subr.bf16.mxu0 0
    %2292 = vmatpush1.bf16.msra.mxu0 0
    %2293 = vmatprep.subr.bf16.mxu0 0
    %2294 = vmatpush1.bf16.msra.mxu0 0
    %2295 = vmatprep.subr.bf16.mxu0 0
    %2296 = vmatpush1.bf16.msra.mxu0 0
    %2297 = vmatprep.subr.bf16.mxu0 0
    %2298 = vmatpush1.bf16.msra.mxu0 0
    %2299 = vmatprep.subr.bf16.mxu0 0
    %2300 = vmatpush1.bf16.msra.mxu0 0
    %2301 = vmatprep.subr.bf16.mxu0 0
    %2302 = vmatpush1.bf16.msra.mxu0 0
    %2303 = vmatprep.subr.bf16.mxu0 0
    %2304 = vmatpush1.bf16.msra.mxu0 0
    %2305 = vmatprep.subr.bf16.mxu0 0
    %2306 = vmatpush1.bf16.msra.mxu0 0
    %2307 = vmatprep.subr.bf16.mxu0 0
    %2308 = vmatpush1.bf16.msra.mxu0 0
    %2309 = vmatprep.subr.bf16.mxu0 0
    %2310 = vmatpush1.bf16.msra.mxu0 0
    %2311 = vmatprep.subr.bf16.mxu0 0
    %2312 = vmatpush1.bf16.msra.mxu0 0
    %2313 = vmatprep.mubr.bf16.mxu0 0
    %2314 = vmatmul.mubr.bf16.gmra.mrb[0].mxu0 %v2276
    %v2315 = vpop.f32.mrb[0].mxu0
    %v2316 = vadd.f32 0.0, %v2315
    %v2317 = vpop.f32.mrb[0].mxu0
    %v2318 = vpop.f32.mrb[0].mxu0
    %v2319 = vpop.f32.mrb[0].mxu0
    %2320 = vdwg.mxu0
    %v2321 = vrcp.pop %v2219
    %v2322 = vrcp.pop %v2222
    %v2323 = vmul.f32 %v2268, %v2321
    %v2324 = vmul.f32 %v2316, %v2322
    %2327 = vrot.lane.b32.xlu0 %v1875, 8
    %v2328 = vpop.permute.xlu0 %2327
    %2329 = vrot.lane.b32.xlu0 %v1876, 8
    %v2330 = vpop.permute.xlu0 %2329
    %2335 = vrot.lane.b32.xlu0 %v2099, 16
    %v2336 = vpop.permute.xlu0 %2335
    %2337 = vrot.lane.b32.xlu0 %v2100, 16
    %v2338 = vpop.permute.xlu0 %2337
    %2343 = vrot.lane.b32.xlu0 %v2323, 24
    %v2344 = vpop.permute.xlu0 %2343
    %2345 = vrot.lane.b32.xlu0 %v2324, 24
    %v2346 = vpop.permute.xlu0 %2345
    %v2349 = vsel %vm124, %v1651, %v2328
    %v2350 = vsel %vm124, %v1652, %v2330
    %v2351 = vsel %vm1055, %v2349, %v2336
    %v2352 = vsel %vm1055, %v2350, %v2338
    %v2353 = vsel %vm1058, %v2351, %v2344
    %v2354 = vsel %vm1058, %v2352, %v2346
    %v2355 = vpack.c.bf16 %v2354, %v2353
    %v2356 = vlaneseq
    %v2357 = vshrl.u32 %v2356, 7
    %v2358 = vsub.s32 0, %v2357
    %v2359 = vrot.slane %v1367, %v2358
    %v2364 = vunpack.c.l.b16 %v1362
    %v2365 = vunpack.c.l.b16 %v1363
    %v2366 = vunpack.c.l.b16 %v1364
    %v2367 = vunpack.c.l.b16 %v1365
    %v2368 = vpack.c.b16 %v2365, %v2364
    %v2369 = vpack.c.b16 %v2367, %v2366
    %v2373 = vsel %vm74, %v2355, 0
    %2375 = vmatprep.subr.bf16.mxu0 0
    %2376 = vmatpush1.bf16.msra.mxu0 %v2368
    %2377 = vmatprep.subr.bf16.mxu0 0
    %2378 = vmatpush1.bf16.msra.mxu0 %v2369
    %2379 = vmatprep.subr.bf16.mxu0 0
    %2380 = vmatpush1.bf16.msra.mxu0 0
    %2381 = vmatprep.subr.bf16.mxu0 0
    %2382 = vmatpush1.bf16.msra.mxu0 0
    %2383 = vmatprep.subr.bf16.mxu0 0
    %2384 = vmatpush1.bf16.msra.mxu0 0
    %2385 = vmatprep.subr.bf16.mxu0 0
    %2386 = vmatpush1.bf16.msra.mxu0 0
    %2387 = vmatprep.subr.bf16.mxu0 0
    %2388 = vmatpush1.bf16.msra.mxu0 0
    %2389 = vmatprep.subr.bf16.mxu0 0
    %2390 = vmatpush1.bf16.msra.mxu0 0
    %2391 = vmatprep.subr.bf16.mxu0 0
    %2392 = vmatpush1.bf16.msra.mxu0 0
    %2393 = vmatprep.subr.bf16.mxu0 0
    %2394 = vmatpush1.bf16.msra.mxu0 0
    %2395 = vmatprep.subr.bf16.mxu0 0
    %2396 = vmatpush1.bf16.msra.mxu0 0
    %2397 = vmatprep.subr.bf16.mxu0 0
    %2398 = vmatpush1.bf16.msra.mxu0 0
    %2399 = vmatprep.subr.bf16.mxu0 0
    %2400 = vmatpush1.bf16.msra.mxu0 0
    %2401 = vmatprep.subr.bf16.mxu0 0
    %2402 = vmatpush1.bf16.msra.mxu0 0
    %2403 = vmatprep.subr.bf16.mxu0 0
    %2404 = vmatpush1.bf16.msra.mxu0 0
    %2405 = vmatprep.subr.bf16.mxu0 0
    %2406 = vmatpush1.bf16.msra.mxu0 0
    %2407 = vmatprep.mubr.bf16.mxu0 0
    %2408 = vmatmul.mubr.bf16.gmra.mrb[0].mxu0 %v2373
    %v2409 = vpop.f32.mrb[0].mxu0
    %v2410 = vadd.f32 %v2359, %v2409
    %v2411 = vpop.f32.mrb[0].mxu0
    %v2412 = vpop.f32.mrb[0].mxu0
    %v2413 = vadd.f32 %v2359, %v2412
    %v2414 = vpop.f32.mrb[0].mxu0
    %2415 = vdwg.mxu0
    %v2416 = vadd.f32 %v1356, %v2410
    %v2417 = vadd.f32 %v1357, %v2413
    %v2418 = vld [vmem:[%s4 + $0xc] sm:$0x1]
    %v2419 = vld [vmem:[%s4 + $0xd] sm:$0x1]
    %v2420 = vsel %vm74, %v2416, 0.0
    %2421 = vadd.xlane.f32.xlu0 %v2420
    %v2422 = vpop.xlane.xlu0 %2421
    %v2423 = vsel %vm74, %v2417, 0.0
    %2424 = vadd.xlane.f32.xlu0 %v2423
    %v2425 = vpop.xlane.xlu0 %2424
    %v2426 = vmul.f32 %v2422, %v1132
    %v2427 = vmul.f32 %v2425, %v1132
    %v2428 = vsub.f32 %v2416, %v2426
    %v2429 = vsub.f32 %v2417, %v2427
    %v2430 = vmul.f32 %v2428, %v2428
    %v2431 = vmul.f32 %v2429, %v2429
    %v2432 = vsel %vm74, %v2430, 0.0
    %2433 = vadd.xlane.f32.xlu0 %v2432
    %v2434 = vpop.xlane.xlu0 %2433
    %v2435 = vsel %vm74, %v2431, 0.0
    %2436 = vadd.xlane.f32.xlu0 %v2435
    %v2437 = vpop.xlane.xlu0 %2436
    %v2438 = vmul.f32 %v2434, %v1132
    %v2439 = vmul.f32 %v2437, %v1132
    %v2440 = vadd.f32 %v2438, 1e-05
    %v2441 = vadd.f32 %v2439, 1e-05
    %v2442 = vrsqrt.pop %v2440
    %v2443 = vrsqrt.pop %v2441
    %v2444 = vmul.f32 %v2428, %v2442
    %v2445 = vmul.f32 %v2429, %v2443
    %v2446 = vlaneseq
    %v2447 = vshrl.u32 %v2446, 7
    %v2448 = vsub.s32 0, %v2447
    %v2449 = vrot.slane %v2418, %v2448
    %v2450 = vmul.f32 %v2444, %v2449
    %v2451 = vmul.f32 %v2445, %v2449
    %v2452 = vlaneseq
    %v2453 = vshrl.u32 %v2452, 7
    %v2454 = vsub.s32 0, %v2453
    %v2455 = vrot.slane %v2419, %v2454
    %v2456 = vadd.f32 %v2450, %v2455
    %v2457 = vadd.f32 %v2451, %v2455
    %v2458 = vld [vmem:[#allocation2 + $0x70] sm:$0xf]
    %v2459 = vld [vmem:[#allocation2 + $0x74] sm:$0xf]
    %v2460 = vld [vmem:[#allocation2 + $0x78] sm:$0xf]
    %v2461 = vld [vmem:[#allocation2 + $0x7c] sm:$0xf]
    %v2462 = vpack.c.bf16 %v2457, %v2456
    %v2463 = vld [vmem:[%s4 + $0xa] sm:$0x1]
    %v2464 = vlaneseq
    %v2465 = vshrl.u32 %v2464, 7
    %v2466 = vsub.s32 0, %v2465
    %v2467 = vrot.slane %v2463, %v2466
    %v2472 = vunpack.c.l.b16 %v2458
    %v2473 = vunpack.c.l.b16 %v2459
    %v2474 = vunpack.c.l.b16 %v2460
    %v2475 = vunpack.c.l.b16 %v2461
    %v2476 = vpack.c.b16 %v2473, %v2472
    %v2477 = vpack.c.b16 %v2475, %v2474
    %v2481 = vsel %vm74, %v2462, 0
    %2483 = vmatprep.subr.bf16.mxu0 0
    %2484 = vmatpush1.bf16.msra.mxu0 %v2476
    %2485 = vmatprep.subr.bf16.mxu0 0
    %2486 = vmatpush1.bf16.msra.mxu0 %v2477
    %2487 = vmatprep.subr.bf16.mxu0 0
    %2488 = vmatpush1.bf16.msra.mxu0 0
    %2489 = vmatprep.subr.bf16.mxu0 0
    %2490 = vmatpush1.bf16.msra.mxu0 0
    %2491 = vmatprep.subr.bf16.mxu0 0
    %2492 = vmatpush1.bf16.msra.mxu0 0
    %2493 = vmatprep.subr.bf16.mxu0 0
    %2494 = vmatpush1.bf16.msra.mxu0 0
    %2495 = vmatprep.subr.bf16.mxu0 0
    %2496 = vmatpush1.bf16.msra.mxu0 0
    %2497 = vmatprep.subr.bf16.mxu0 0
    %2498 = vmatpush1.bf16.msra.mxu0 0
    %2499 = vmatprep.subr.bf16.mxu0 0
    %2500 = vmatpush1.bf16.msra.mxu0 0
    %2501 = vmatprep.subr.bf16.mxu0 0
    %2502 = vmatpush1.bf16.msra.mxu0 0
    %2503 = vmatprep.subr.bf16.mxu0 0
    %2504 = vmatpush1.bf16.msra.mxu0 0
    %2505 = vmatprep.subr.bf16.mxu0 0
    %2506 = vmatpush1.bf16.msra.mxu0 0
    %2507 = vmatprep.subr.bf16.mxu0 0
    %2508 = vmatpush1.bf16.msra.mxu0 0
    %2509 = vmatprep.subr.bf16.mxu0 0
    %2510 = vmatpush1.bf16.msra.mxu0 0
    %2511 = vmatprep.subr.bf16.mxu0 0
    %2512 = vmatpush1.bf16.msra.mxu0 0
    %2513 = vmatprep.subr.bf16.mxu0 0
    %2514 = vmatpush1.bf16.msra.mxu0 0
    %2515 = vmatprep.mubr.bf16.mxu0 0
    %2516 = vmatmul.mubr.bf16.gmra.mrb[0].mxu0 %v2481
    %v2517 = vpop.f32.mrb[0].mxu0
    %v2518 = vadd.f32 %v2467, %v2517
    %v2519 = vpop.f32.mrb[0].mxu0
    %v2520 = vpop.f32.mrb[0].mxu0
    %v2521 = vadd.f32 %v2467, %v2520
    %v2522 = vpop.f32.mrb[0].mxu0
    %2523 = vdwg.mxu0
    %v2524 = vmax.f32 %v2518, 0.0
    %v2525 = vmax.f32 %v2521, 0.0
    %v2526 = vld [vmem:[#allocation2 + $0x80] sm:$0xf]
    %v2527 = vld [vmem:[#allocation2 + $0x84] sm:$0xf]
    %v2528 = vld [vmem:[#allocation2 + $0x88] sm:$0xf]
    %v2529 = vld [vmem:[#allocation2 + $0x8c] sm:$0xf]
    %v2530 = vld [vmem:[#allocation2 + $0x90] sm:$0xf]
    %v2531 = vld [vmem:[#allocation2 + $0x94] sm:$0xf]
    %v2532 = vld [vmem:[#allocation2 + $0x98] sm:$0xf]
    %v2533 = vld [vmem:[#allocation2 + $0x9c] sm:$0xf]
    %v2534 = vpack.c.bf16 %v2525, %v2524
    %v2535 = vld [vmem:[%s4 + $0xb] sm:$0x1]
    %v2536 = vlaneseq
    %v2537 = vshrl.u32 %v2536, 7
    %v2538 = vsub.s32 0, %v2537
    %v2539 = vrot.slane %v2535, %v2538
    %v2548 = vunpack.c.l.b16 %v2526
    %v2549 = vunpack.c.l.b16 %v2527
    %v2550 = vunpack.c.l.b16 %v2528
    %v2551 = vunpack.c.l.b16 %v2529
    %v2552 = vunpack.c.l.b16 %v2530
    %v2553 = vunpack.c.l.b16 %v2531
    %v2554 = vunpack.c.l.b16 %v2532
    %v2555 = vunpack.c.l.b16 %v2533
    %v2556 = vpack.c.b16 %v2549, %v2548
    %v2557 = vpack.c.b16 %v2551, %v2550
    %v2558 = vpack.c.b16 %v2553, %v2552
    %v2559 = vpack.c.b16 %v2555, %v2554
    %v2565 = vsel %vm1271, %v2534, 0
    %2567 = vmatprep.subr.bf16.mxu0 0
    %2568 = vmatpush1.bf16.msra.mxu0 %v2556
    %2569 = vmatprep.subr.bf16.mxu0 0
    %2570 = vmatpush1.bf16.msra.mxu0 %v2557
    %2571 = vmatprep.subr.bf16.mxu0 0
    %2572 = vmatpush1.bf16.msra.mxu0 %v2558
    %2573 = vmatprep.subr.bf16.mxu0 0
    %2574 = vmatpush1.bf16.msra.mxu0 %v2559
    %2575 = vmatprep.subr.bf16.mxu0 0
    %2576 = vmatpush1.bf16.msra.mxu0 0
    %2577 = vmatprep.subr.bf16.mxu0 0
    %2578 = vmatpush1.bf16.msra.mxu0 0
    %2579 = vmatprep.subr.bf16.mxu0 0
    %2580 = vmatpush1.bf16.msra.mxu0 0
    %2581 = vmatprep.subr.bf16.mxu0 0
    %2582 = vmatpush1.bf16.msra.mxu0 0
    %2583 = vmatprep.subr.bf16.mxu0 0
    %2584 = vmatpush1.bf16.msra.mxu0 0
    %2585 = vmatprep.subr.bf16.mxu0 0
    %2586 = vmatpush1.bf16.msra.mxu0 0
    %2587 = vmatprep.subr.bf16.mxu0 0
    %2588 = vmatpush1.bf16.msra.mxu0 0
    %2589 = vmatprep.subr.bf16.mxu0 0
    %2590 = vmatpush1.bf16.msra.mxu0 0
    %2591 = vmatprep.subr.bf16.mxu0 0
    %2592 = vmatpush1.bf16.msra.mxu0 0
    %2593 = vmatprep.subr.bf16.mxu0 0
    %2594 = vmatpush1.bf16.msra.mxu0 0
    %2595 = vmatprep.subr.bf16.mxu0 0
    %2596 = vmatpush1.bf16.msra.mxu0 0
    %2597 = vmatprep.subr.bf16.mxu0 0
    %2598 = vmatpush1.bf16.msra.mxu0 0
    %2599 = vmatprep.mubr.bf16.mxu0 0
    %2600 = vmatmul.mubr.bf16.gmra.mrb[0].mxu0 %v2565
    %v2601 = vpop.f32.mrb[0].mxu0
    %v2602 = vadd.f32 %v2539, %v2601
    %v2603 = vpop.f32.mrb[0].mxu0
    %v2604 = vpop.f32.mrb[0].mxu0
    %v2605 = vadd.f32 %v2539, %v2604
    %v2606 = vpop.f32.mrb[0].mxu0
    %2607 = vdwg.mxu0
    %v2608 = vadd.f32 %v2456, %v2602
    %v2609 = vadd.f32 %v2457, %v2605
    %v2610 = vld [vmem:[%s4 + $0xe] sm:$0x1]
    %v2611 = vld [vmem:[%s4 + $0xf] sm:$0x1]
    %v2612 = vsel %vm74, %v2608, 0.0
    %2613 = vadd.xlane.f32.xlu0 %v2612
    %v2614 = vpop.xlane.xlu0 %2613
    %v2615 = vsel %vm74, %v2609, 0.0
    %2616 = vadd.xlane.f32.xlu0 %v2615
    %v2617 = vpop.xlane.xlu0 %2616
    %v2618 = vmul.f32 %v2614, %v1132
    %v2619 = vmul.f32 %v2617, %v1132
    %v2620 = vsub.f32 %v2608, %v2618
    %v2621 = vsub.f32 %v2609, %v2619
    %v2622 = vmul.f32 %v2620, %v2620
    %v2623 = vmul.f32 %v2621, %v2621
    %v2624 = vsel %vm74, %v2622, 0.0
    %2625 = vadd.xlane.f32.xlu0 %v2624
    %v2626 = vpop.xlane.xlu0 %2625
    %v2627 = vsel %vm74, %v2623, 0.0
    %2628 = vadd.xlane.f32.xlu0 %v2627
    %v2629 = vpop.xlane.xlu0 %2628
    %v2630 = vmul.f32 %v2626, %v1132
    %v2631 = vmul.f32 %v2629, %v1132
    %v2632 = vadd.f32 %v2630, 1e-05
    %v2633 = vadd.f32 %v2631, 1e-05
    %v2634 = vrsqrt.pop %v2632
    %v2635 = vrsqrt.pop %v2633
    %v2636 = vmul.f32 %v2620, %v2634
    %v2637 = vmul.f32 %v2621, %v2635
    %v2638 = vlaneseq
    %v2639 = vshrl.u32 %v2638, 7
    %v2640 = vsub.s32 0, %v2639
    %v2641 = vrot.slane %v2610, %v2640
    %v2642 = vmul.f32 %v2636, %v2641
    %v2643 = vmul.f32 %v2637, %v2641
    %v2644 = vlaneseq
    %v2645 = vshrl.u32 %v2644, 7
    %v2646 = vsub.s32 0, %v2645
    %v2647 = vrot.slane %v2611, %v2646
    %v2648 = vadd.f32 %v2642, %v2647
    %v2649 = vadd.f32 %v2643, %v2647
    %v2650 = vld [vmem:[%s4 + $0x28] sm:$0x1]
    %v2651 = vld [vmem:[%s4 + $0x29] sm:$0x1]
    %v2652 = vsel %vm74, %v2648, 0.0
    %2653 = vadd.xlane.f32.xlu0 %v2652
    %v2654 = vpop.xlane.xlu0 %2653
    %v2655 = vsel %vm74, %v2649, 0.0
    %2656 = vadd.xlane.f32.xlu0 %v2655
    %v2657 = vpop.xlane.xlu0 %2656
    %v2658 = vmul.f32 %v2654, %v1132
    %v2659 = vmul.f32 %v2657, %v1132
    %v2660 = vsub.f32 %v2648, %v2658
    %v2661 = vsub.f32 %v2649, %v2659
    %v2662 = vmul.f32 %v2660, %v2660
    %v2663 = vmul.f32 %v2661, %v2661
    %v2664 = vsel %vm74, %v2662, 0.0
    %2665 = vadd.xlane.f32.xlu0 %v2664
    %v2666 = vpop.xlane.xlu0 %2665
    %v2667 = vsel %vm74, %v2663, 0.0
    %2668 = vadd.xlane.f32.xlu0 %v2667
    %v2669 = vpop.xlane.xlu0 %2668
    %v2670 = vmul.f32 %v2666, %v1132
    %v2671 = vmul.f32 %v2669, %v1132
    %v2672 = vadd.f32 %v2670, 1e-05
    %v2673 = vadd.f32 %v2671, 1e-05
    %v2674 = vrsqrt.pop %v2672
    %v2675 = vrsqrt.pop %v2673
    %v2676 = vmul.f32 %v2660, %v2674
    %v2677 = vmul.f32 %v2661, %v2675
    %v2678 = vlaneseq
    %v2679 = vshrl.u32 %v2678, 7
    %v2680 = vsub.s32 0, %v2679
    %v2681 = vrot.slane %v2650, %v2680
    %v2682 = vmul.f32 %v2676, %v2681
    %v2683 = vmul.f32 %v2677, %v2681
    %v2684 = vlaneseq
    %v2685 = vshrl.u32 %v2684, 7
    %v2686 = vsub.s32 0, %v2685
    %v2687 = vrot.slane %v2651, %v2686
    %v2688 = vadd.f32 %v2682, %v2687
    %v2689 = vadd.f32 %v2683, %v2687
    %v2690 = vld [vmem:[#allocation2 + $0xa0] sm:$0xf]
    %v2691 = vld [vmem:[#allocation2 + $0xa4] sm:$0xf]
    %v2692 = vld [vmem:[#allocation2 + $0xa8] sm:$0xf]
    %v2693 = vld [vmem:[#allocation2 + $0xac] sm:$0xf]
    %v2694 = vld [vmem:[#allocation2 + $0xb0] sm:$0xf]
    %v2695 = vld [vmem:[#allocation2 + $0xb4] sm:$0xf]
    %v2696 = vld [vmem:[#allocation2 + $0xb8] sm:$0xf]
    %v2697 = vld [vmem:[#allocation2 + $0xbc] sm:$0xf]
    %v2698 = vld [vmem:[%s4 + $0x10] sm:$0x1]
    %v2699 = vld [vmem:[%s4 + $0x11] sm:$0x1]
    %v2700 = vpack.c.bf16 %v38, %v37
    %v2701 = vlaneseq
    %v2702 = vshrl.u32 %v2701, 7
    %v2703 = vsub.s32 0, %v2702
    %v2704 = vrot.slane %v2698, %v2703
    %v2709 = vunpack.c.l.b16 %v2690
    %v2710 = vunpack.c.l.b16 %v2691
    %v2711 = vunpack.c.l.b16 %v2692
    %v2712 = vunpack.c.l.b16 %v2693
    %v2713 = vpack.c.b16 %v2710, %v2709
    %v2714 = vpack.c.b16 %v2712, %v2711
    %v2718 = vsel %vm74, %v2700, 0
    %2720 = vmatprep.subr.bf16.mxu0 0
    %2721 = vmatpush1.bf16.msra.mxu0 %v2713
    %2722 = vmatprep.subr.bf16.mxu0 0
    %2723 = vmatpush1.bf16.msra.mxu0 %v2714
    %2724 = vmatprep.subr.bf16.mxu0 0
    %2725 = vmatpush1.bf16.msra.mxu0 0
    %2726 = vmatprep.subr.bf16.mxu0 0
    %2727 = vmatpush1.bf16.msra.mxu0 0
    %2728 = vmatprep.subr.bf16.mxu0 0
    %2729 = vmatpush1.bf16.msra.mxu0 0
    %2730 = vmatprep.subr.bf16.mxu0 0
    %2731 = vmatpush1.bf16.msra.mxu0 0
    %2732 = vmatprep.subr.bf16.mxu0 0
    %2733 = vmatpush1.bf16.msra.mxu0 0
    %2734 = vmatprep.subr.bf16.mxu0 0
    %2735 = vmatpush1.bf16.msra.mxu0 0
    %2736 = vmatprep.subr.bf16.mxu0 0
    %2737 = vmatpush1.bf16.msra.mxu0 0
    %2738 = vmatprep.subr.bf16.mxu0 0
    %2739 = vmatpush1.bf16.msra.mxu0 0
    %2740 = vmatprep.subr.bf16.mxu0 0
    %2741 = vmatpush1.bf16.msra.mxu0 0
    %2742 = vmatprep.subr.bf16.mxu0 0
    %2743 = vmatpush1.bf16.msra.mxu0 0
    %2744 = vmatprep.subr.bf16.mxu0 0
    %2745 = vmatpush1.bf16.msra.mxu0 0
    %2746 = vmatprep.subr.bf16.mxu0 0
    %2747 = vmatpush1.bf16.msra.mxu0 0
    %2748 = vmatprep.subr.bf16.mxu0 0
    %2749 = vmatpush1.bf16.msra.mxu0 0
    %2750 = vmatprep.subr.bf16.mxu0 0
    %2751 = vmatpush1.bf16.msra.mxu0 0
    %2752 = vmatprep.mubr.bf16.mxu0 0
    %2753 = vmatmul.mubr.bf16.gmra.mrb[0].mxu0 %v2718
    %v2754 = vpop.f32.mrb[0].mxu0
    %v2755 = vadd.f32 %v2704, %v2754
    %v2756 = vpop.f32.mrb[0].mxu0
    %v2757 = vpop.f32.mrb[0].mxu0
    %v2758 = vadd.f32 %v2704, %v2757
    %v2759 = vpop.f32.mrb[0].mxu0
    %2760 = vdwg.mxu0
    %v2761 = vpack.c.bf16 %v2755, %v2755
    %v2762 = vpack.c.bf16 %v2758, %v2758
    %2764 = vrot.lane.b32.xlu0 %v2761, 96
    %v2765 = vpop.permute.xlu0 %2764
    %v2767 = vsel %vm124, %v2761, 0
    %v2770 = vsel %vm124, %v2765, 0
    %2772 = vmatprep.subr.bf16.mxu0 0
    %2773 = vmatpush1.bf16.xpose.msra.mxu0 %v2770
    %2774 = vmatprep.subr.bf16.mxu0 0
    %2775 = vmatpush1.bf16.xpose.msra.mxu0 0
    %2776 = vmatprep.subr.bf16.mxu0 0
    %2777 = vmatpush1.bf16.xpose.msra.mxu0 0
    %2778 = vmatprep.subr.bf16.mxu0 0
    %2779 = vmatpush1.bf16.xpose.msra.mxu0 0
    %2780 = vmatprep.subr.bf16.mxu0 0
    %2781 = vmatpush1.bf16.xpose.msra.mxu0 0
    %2782 = vmatprep.subr.bf16.mxu0 0
    %2783 = vmatpush1.bf16.xpose.msra.mxu0 0
    %2784 = vmatprep.subr.bf16.mxu0 0
    %2785 = vmatpush1.bf16.xpose.msra.mxu0 0
    %2786 = vmatprep.subr.bf16.mxu0 0
    %2787 = vmatpush1.bf16.xpose.msra.mxu0 0
    %2788 = vmatprep.subr.bf16.mxu0 0
    %2789 = vmatpush1.bf16.xpose.msra.mxu0 0
    %2790 = vmatprep.subr.bf16.mxu0 0
    %2791 = vmatpush1.bf16.xpose.msra.mxu0 0
    %2792 = vmatprep.subr.bf16.mxu0 0
    %2793 = vmatpush1.bf16.xpose.msra.mxu0 0
    %2794 = vmatprep.subr.bf16.mxu0 0
    %2795 = vmatpush1.bf16.xpose.msra.mxu0 0
    %2796 = vmatprep.subr.bf16.mxu0 0
    %2797 = vmatpush1.bf16.xpose.msra.mxu0 0
    %2798 = vmatprep.subr.bf16.mxu0 0
    %2799 = vmatpush1.bf16.xpose.msra.mxu0 0
    %2800 = vmatprep.subr.bf16.mxu0 0
    %2801 = vmatpush1.bf16.xpose.msra.mxu0 0
    %2802 = vmatprep.subr.bf16.mxu0 0
    %2803 = vmatpush1.bf16.xpose.msra.mxu0 0
    %2804 = vmatprep.mubr.bf16.mxu0 0
    %2805 = vmatmul.mubr.bf16.gmra.mrb[0].mxu0 %v2767
    %v2806 = vpop.f32.mrb[0].mxu0
    %v2807 = vadd.f32 0.0, %v2806
    %v2808 = vpop.f32.mrb[0].mxu0
    %v2809 = vpop.f32.mrb[0].mxu0
    %v2810 = vpop.f32.mrb[0].mxu0
    %2811 = vdwg.mxu0
    %2813 = vrot.lane.b32.xlu0 %v2762, 96
    %v2814 = vpop.permute.xlu0 %2813
    %v2816 = vsel %vm124, %v2762, 0
    %v2819 = vsel %vm124, %v2814, 0
    %2821 = vmatprep.subr.bf16.mxu0 0
    %2822 = vmatpush1.bf16.xpose.msra.mxu0 %v2819
    %2823 = vmatprep.subr.bf16.mxu0 0
    %2824 = vmatpush1.bf16.xpose.msra.mxu0 0
    %2825 = vmatprep.subr.bf16.mxu0 0
    %2826 = vmatpush1.bf16.xpose.msra.mxu0 0
    %2827 = vmatprep.subr.bf16.mxu0 0
    %2828 = vmatpush1.bf16.xpose.msra.mxu0 0
    %2829 = vmatprep.subr.bf16.mxu0 0
    %2830 = vmatpush1.bf16.xpose.msra.mxu0 0
    %2831 = vmatprep.subr.bf16.mxu0 0
    %2832 = vmatpush1.bf16.xpose.msra.mxu0 0
    %2833 = vmatprep.subr.bf16.mxu0 0
    %2834 = vmatpush1.bf16.xpose.msra.mxu0 0
    %2835 = vmatprep.subr.bf16.mxu0 0
    %2836 = vmatpush1.bf16.xpose.msra.mxu0 0
    %2837 = vmatprep.subr.bf16.mxu0 0
    %2838 = vmatpush1.bf16.xpose.msra.mxu0 0
    %2839 = vmatprep.subr.bf16.mxu0 0
    %2840 = vmatpush1.bf16.xpose.msra.mxu0 0
    %2841 = vmatprep.subr.bf16.mxu0 0
    %2842 = vmatpush1.bf16.xpose.msra.mxu0 0
    %2843 = vmatprep.subr.bf16.mxu0 0
    %2844 = vmatpush1.bf16.xpose.msra.mxu0 0
    %2845 = vmatprep.subr.bf16.mxu0 0
    %2846 = vmatpush1.bf16.xpose.msra.mxu0 0
    %2847 = vmatprep.subr.bf16.mxu0 0
    %2848 = vmatpush1.bf16.xpose.msra.mxu0 0
    %2849 = vmatprep.subr.bf16.mxu0 0
    %2850 = vmatpush1.bf16.xpose.msra.mxu0 0
    %2851 = vmatprep.subr.bf16.mxu0 0
    %2852 = vmatpush1.bf16.xpose.msra.mxu0 0
    %2853 = vmatprep.mubr.bf16.mxu0 0
    %2854 = vmatmul.mubr.bf16.gmra.mrb[0].mxu0 %v2816
    %v2855 = vpop.f32.mrb[0].mxu0
    %v2856 = vadd.f32 0.0, %v2855
    %v2857 = vpop.f32.mrb[0].mxu0
    %v2858 = vpop.f32.mrb[0].mxu0
    %v2859 = vpop.f32.mrb[0].mxu0
    %2860 = vdwg.mxu0
    %v2861 = vmul.f32 %v2807, 0.35355338
    %v2862 = vmul.f32 %v2856, 0.35355338
    %v2863 = vadd.f32 %v2861, %v46
    %v2864 = vadd.f32 %v2862, %v46
    %v2865 = vsel %vm124, %v2863, -inf
    %2866 = vmax.xlane.f32.xlu0 %v2865
    %v2867 = vpop.xlane.xlu0 %2866
    %v2868 = vsel %vm124, %v2864, -inf
    %2869 = vmax.xlane.f32.xlu0 %v2868
    %v2870 = vpop.xlane.xlu0 %2869
    %v2871 = vsub.f32 %v2863, %v2867
    %v2872 = vsub.f32 %v2864, %v2870
    %v2873 = vmul.f32 %v2871, 1.442695
    %v2874 = vpow.pop %v2873
    %v2875 = vmul.f32 %v2872, 1.442695
    %v2876 = vpow.pop %v2875
    %v2877 = vsel %vm124, %v2874, 0.0
    %2878 = vadd.xlane.f32.xlu0 %v2877
    %v2879 = vpop.xlane.xlu0 %2878
    %v2880 = vsel %vm124, %v2876, 0.0
    %2881 = vadd.xlane.f32.xlu0 %v2880
    %v2882 = vpop.xlane.xlu0 %2881
    %v2883 = vpack.c.bf16 %v2874, %v2874
    %v2884 = vpack.c.bf16 %v2876, %v2876
    %2885 = vrot.lane.b32.xlu0 %v2761, 64
    %v2886 = vpop.permute.xlu0 %2885
    %v2888 = vsel %vm124, %v2883, 0
    %v2891 = vsel %vm261, %v2886, 0
    %2893 = vmatprep.subr.bf16.mxu0 0
    %2894 = vmatpush1.bf16.msra.mxu0 %v2891
    %2895 = vmatprep.subr.bf16.mxu0 0
    %2896 = vmatpush1.bf16.msra.mxu0 0
    %2897 = vmatprep.subr.bf16.mxu0 0
    %2898 = vmatpush1.bf16.msra.mxu0 0
    %2899 = vmatprep.subr.bf16.mxu0 0
    %2900 = vmatpush1.bf16.msra.mxu0 0
    %2901 = vmatprep.subr.bf16.mxu0 0
    %2902 = vmatpush1.bf16.msra.mxu0 0
    %2903 = vmatprep.subr.bf16.mxu0 0
    %2904 = vmatpush1.bf16.msra.mxu0 0
    %2905 = vmatprep.subr.bf16.mxu0 0
    %2906 = vmatpush1.bf16.msra.mxu0 0
    %2907 = vmatprep.subr.bf16.mxu0 0
    %2908 = vmatpush1.bf16.msra.mxu0 0
    %2909 = vmatprep.subr.bf16.mxu0 0
    %2910 = vmatpush1.bf16.msra.mxu0 0
    %2911 = vmatprep.subr.bf16.mxu0 0
    %2912 = vmatpush1.bf16.msra.mxu0 0
    %2913 = vmatprep.subr.bf16.mxu0 0
    %2914 = vmatpush1.bf16.msra.mxu0 0
    %2915 = vmatprep.subr.bf16.mxu0 0
    %2916 = vmatpush1.bf16.msra.mxu0 0
    %2917 = vmatprep.subr.bf16.mxu0 0
    %2918 = vmatpush1.bf16.msra.mxu0 0
    %2919 = vmatprep.subr.bf16.mxu0 0
    %2920 = vmatpush1.bf16.msra.mxu0 0
    %2921 = vmatprep.subr.bf16.mxu0 0
    %2922 = vmatpush1.bf16.msra.mxu0 0
    %2923 = vmatprep.subr.bf16.mxu0 0
    %2924 = vmatpush1.bf16.msra.mxu0 0
    %2925 = vmatprep.mubr.bf16.mxu0 0
    %2926 = vmatmul.mubr.bf16.gmra.mrb[0].mxu0 %v2888
    %v2927 = vpop.f32.mrb[0].mxu0
    %v2928 = vadd.f32 0.0, %v2927
    %v2929 = vpop.f32.mrb[0].mxu0
    %v2930 = vpop.f32.mrb[0].mxu0
    %v2931 = vpop.f32.mrb[0].mxu0
    %2932 = vdwg.mxu0
    %2933 = vrot.lane.b32.xlu0 %v2762, 64
    %v2934 = vpop.permute.xlu0 %2933
    %v2936 = vsel %vm124, %v2884, 0
    %v2939 = vsel %vm261, %v2934, 0
    %2941 = vmatprep.subr.bf16.mxu0 0
    %2942 = vmatpush1.bf16.msra.mxu0 %v2939
    %2943 = vmatprep.subr.bf16.mxu0 0
    %2944 = vmatpush1.bf16.msra.mxu0 0
    %2945 = vmatprep.subr.bf16.mxu0 0
    %2946 = vmatpush1.bf16.msra.mxu0 0
    %2947 = vmatprep.subr.bf16.mxu0 0
    %2948 = vmatpush1.bf16.msra.mxu0 0
    %2949 = vmatprep.subr.bf16.mxu0 0
    %2950 = vmatpush1.bf16.msra.mxu0 0
    %2951 = vmatprep.subr.bf16.mxu0 0
    %2952 = vmatpush1.bf16.msra.mxu0 0
    %2953 = vmatprep.subr.bf16.mxu0 0
    %2954 = vmatpush1.bf16.msra.mxu0 0
    %2955 = vmatprep.subr.bf16.mxu0 0
    %2956 = vmatpush1.bf16.msra.mxu0 0
    %2957 = vmatprep.subr.bf16.mxu0 0
    %2958 = vmatpush1.bf16.msra.mxu0 0
    %2959 = vmatprep.subr.bf16.mxu0 0
    %2960 = vmatpush1.bf16.msra.mxu0 0
    %2961 = vmatprep.subr.bf16.mxu0 0
    %2962 = vmatpush1.bf16.msra.mxu0 0
    %2963 = vmatprep.subr.bf16.mxu0 0
    %2964 = vmatpush1.bf16.msra.mxu0 0
    %2965 = vmatprep.subr.bf16.mxu0 0
    %2966 = vmatpush1.bf16.msra.mxu0 0
    %2967 = vmatprep.subr.bf16.mxu0 0
    %2968 = vmatpush1.bf16.msra.mxu0 0
    %2969 = vmatprep.subr.bf16.mxu0 0
    %2970 = vmatpush1.bf16.msra.mxu0 0
    %2971 = vmatprep.subr.bf16.mxu0 0
    %2972 = vmatpush1.bf16.msra.mxu0 0
    %2973 = vmatprep.mubr.bf16.mxu0 0
    %2974 = vmatmul.mubr.bf16.gmra.mrb[0].mxu0 %v2936
    %v2975 = vpop.f32.mrb[0].mxu0
    %v2976 = vadd.f32 0.0, %v2975
    %v2977 = vpop.f32.mrb[0].mxu0
    %v2978 = vpop.f32.mrb[0].mxu0
    %v2979 = vpop.f32.mrb[0].mxu0
    %2980 = vdwg.mxu0
    %v2981 = vrcp.pop %v2879
    %v2982 = vrcp.pop %v2882
    %v2983 = vmul.f32 %v2928, %v2981
    %v2984 = vmul.f32 %v2976, %v2982
    %2985 = vrot.lane.b32.xlu0 %v2761, 120
    %v2986 = vpop.permute.xlu0 %2985
    %2987 = vrot.lane.b32.xlu0 %v2761, 88
    %v2988 = vpop.permute.xlu0 %2987
    %v2990 = vsel %vm124, %v2986, 0
    %v2993 = vsel %vm124, %v2988, 0
    %2995 = vmatprep.subr.bf16.mxu0 0
    %2996 = vmatpush1.bf16.xpose.msra.mxu0 %v2993
    %2997 = vmatprep.subr.bf16.mxu0 0
    %2998 = vmatpush1.bf16.xpose.msra.mxu0 0
    %2999 = vmatprep.subr.bf16.mxu0 0
    %3000 = vmatpush1.bf16.xpose.msra.mxu0 0
    %3001 = vmatprep.subr.bf16.mxu0 0
    %3002 = vmatpush1.bf16.xpose.msra.mxu0 0
    %3003 = vmatprep.subr.bf16.mxu0 0
    %3004 = vmatpush1.bf16.xpose.msra.mxu0 0
    %3005 = vmatprep.subr.bf16.mxu0 0
    %3006 = vmatpush1.bf16.xpose.msra.mxu0 0
    %3007 = vmatprep.subr.bf16.mxu0 0
    %3008 = vmatpush1.bf16.xpose.msra.mxu0 0
    %3009 = vmatprep.subr.bf16.mxu0 0
    %3010 = vmatpush1.bf16.xpose.msra.mxu0 0
    %3011 = vmatprep.subr.bf16.mxu0 0
    %3012 = vmatpush1.bf16.xpose.msra.mxu0 0
    %3013 = vmatprep.subr.bf16.mxu0 0
    %3014 = vmatpush1.bf16.xpose.msra.mxu0 0
    %3015 = vmatprep.subr.bf16.mxu0 0
    %3016 = vmatpush1.bf16.xpose.msra.mxu0 0
    %3017 = vmatprep.subr.bf16.mxu0 0
    %3018 = vmatpush1.bf16.xpose.msra.mxu0 0
    %3019 = vmatprep.subr.bf16.mxu0 0
    %3020 = vmatpush1.bf16.xpose.msra.mxu0 0
    %3021 = vmatprep.subr.bf16.mxu0 0
    %3022 = vmatpush1.bf16.xpose.msra.mxu0 0
    %3023 = vmatprep.subr.bf16.mxu0 0
    %3024 = vmatpush1.bf16.xpose.msra.mxu0 0
    %3025 = vmatprep.subr.bf16.mxu0 0
    %3026 = vmatpush1.bf16.xpose.msra.mxu0 0
    %3027 = vmatprep.mubr.bf16.mxu0 0
    %3028 = vmatmul.mubr.bf16.gmra.mrb[0].mxu0 %v2990
    %v3029 = vpop.f32.mrb[0].mxu0
    %v3030 = vadd.f32 0.0, %v3029
    %v3031 = vpop.f32.mrb[0].mxu0
    %v3032 = vpop.f32.mrb[0].mxu0
    %v3033 = vpop.f32.mrb[0].mxu0
    %3034 = vdwg.mxu0
    %3035 = vrot.lane.b32.xlu0 %v2762, 120
    %v3036 = vpop.permute.xlu0 %3035
    %3037 = vrot.lane.b32.xlu0 %v2762, 88
    %v3038 = vpop.permute.xlu0 %3037
    %v3040 = vsel %vm124, %v3036, 0
    %v3043 = vsel %vm124, %v3038, 0
    %3045 = vmatprep.subr.bf16.mxu0 0
    %3046 = vmatpush1.bf16.xpose.msra.mxu0 %v3043
    %3047 = vmatprep.subr.bf16.mxu0 0
    %3048 = vmatpush1.bf16.xpose.msra.mxu0 0
    %3049 = vmatprep.subr.bf16.mxu0 0
    %3050 = vmatpush1.bf16.xpose.msra.mxu0 0
    %3051 = vmatprep.subr.bf16.mxu0 0
    %3052 = vmatpush1.bf16.xpose.msra.mxu0 0
    %3053 = vmatprep.subr.bf16.mxu0 0
    %3054 = vmatpush1.bf16.xpose.msra.mxu0 0
    %3055 = vmatprep.subr.bf16.mxu0 0
    %3056 = vmatpush1.bf16.xpose.msra.mxu0 0
    %3057 = vmatprep.subr.bf16.mxu0 0
    %3058 = vmatpush1.bf16.xpose.msra.mxu0 0
    %3059 = vmatprep.subr.bf16.mxu0 0
    %3060 = vmatpush1.bf16.xpose.msra.mxu0 0
    %3061 = vmatprep.subr.bf16.mxu0 0
    %3062 = vmatpush1.bf16.xpose.msra.mxu0 0
    %3063 = vmatprep.subr.bf16.mxu0 0
    %3064 = vmatpush1.bf16.xpose.msra.mxu0 0
    %3065 = vmatprep.subr.bf16.mxu0 0
    %3066 = vmatpush1.bf16.xpose.msra.mxu0 0
    %3067 = vmatprep.subr.bf16.mxu0 0
    %3068 = vmatpush1.bf16.xpose.msra.mxu0 0
    %3069 = vmatprep.subr.bf16.mxu0 0
    %3070 = vmatpush1.bf16.xpose.msra.mxu0 0
    %3071 = vmatprep.subr.bf16.mxu0 0
    %3072 = vmatpush1.bf16.xpose.msra.mxu0 0
    %3073 = vmatprep.subr.bf16.mxu0 0
    %3074 = vmatpush1.bf16.xpose.msra.mxu0 0
    %3075 = vmatprep.subr.bf16.mxu0 0
    %3076 = vmatpush1.bf16.xpose.msra.mxu0 0
    %3077 = vmatprep.mubr.bf16.mxu0 0
    %3078 = vmatmul.mubr.bf16.gmra.mrb[0].mxu0 %v3040
    %v3079 = vpop.f32.mrb[0].mxu0
    %v3080 = vadd.f32 0.0, %v3079
    %v3081 = vpop.f32.mrb[0].mxu0
    %v3082 = vpop.f32.mrb[0].mxu0
    %v3083 = vpop.f32.mrb[0].mxu0
    %3084 = vdwg.mxu0
    %v3085 = vmul.f32 %v3030, 0.35355338
    %v3086 = vmul.f32 %v3080, 0.35355338
    %v3087 = vadd.f32 %v3085, %v46
    %v3088 = vadd.f32 %v3086, %v46
    %v3089 = vsel %vm124, %v3087, -inf
    %3090 = vmax.xlane.f32.xlu0 %v3089
    %v3091 = vpop.xlane.xlu0 %3090
    %v3092 = vsel %vm124, %v3088, -inf
    %3093 = vmax.xlane.f32.xlu0 %v3092
    %v3094 = vpop.xlane.xlu0 %3093
    %v3095 = vsub.f32 %v3087, %v3091
    %v3096 = vsub.f32 %v3088, %v3094
    %v3097 = vmul.f32 %v3095, 1.442695
    %v3098 = vpow.pop %v3097
    %v3099 = vmul.f32 %v3096, 1.442695
    %v3100 = vpow.pop %v3099
    %v3101 = vsel %vm124, %v3098, 0.0
    %3102 = vadd.xlane.f32.xlu0 %v3101
    %v3103 = vpop.xlane.xlu0 %3102
    %v3104 = vsel %vm124, %v3100, 0.0
    %3105 = vadd.xlane.f32.xlu0 %v3104
    %v3106 = vpop.xlane.xlu0 %3105
    %v3107 = vpack.c.bf16 %v3098, %v3098
    %v3108 = vpack.c.bf16 %v3100, %v3100
    %3109 = vrot.lane.b32.xlu0 %v2761, 56
    %v3110 = vpop.permute.xlu0 %3109
    %v3112 = vsel %vm124, %v3107, 0
    %v3115 = vsel %vm261, %v3110, 0
    %3117 = vmatprep.subr.bf16.mxu0 0
    %3118 = vmatpush1.bf16.msra.mxu0 %v3115
    %3119 = vmatprep.subr.bf16.mxu0 0
    %3120 = vmatpush1.bf16.msra.mxu0 0
    %3121 = vmatprep.subr.bf16.mxu0 0
    %3122 = vmatpush1.bf16.msra.mxu0 0
    %3123 = vmatprep.subr.bf16.mxu0 0
    %3124 = vmatpush1.bf16.msra.mxu0 0
    %3125 = vmatprep.subr.bf16.mxu0 0
    %3126 = vmatpush1.bf16.msra.mxu0 0
    %3127 = vmatprep.subr.bf16.mxu0 0
    %3128 = vmatpush1.bf16.msra.mxu0 0
    %3129 = vmatprep.subr.bf16.mxu0 0
    %3130 = vmatpush1.bf16.msra.mxu0 0
    %3131 = vmatprep.subr.bf16.mxu0 0
    %3132 = vmatpush1.bf16.msra.mxu0 0
    %3133 = vmatprep.subr.bf16.mxu0 0
    %3134 = vmatpush1.bf16.msra.mxu0 0
    %3135 = vmatprep.subr.bf16.mxu0 0
    %3136 = vmatpush1.bf16.msra.mxu0 0
    %3137 = vmatprep.subr.bf16.mxu0 0
    %3138 = vmatpush1.bf16.msra.mxu0 0
    %3139 = vmatprep.subr.bf16.mxu0 0
    %3140 = vmatpush1.bf16.msra.mxu0 0
    %3141 = vmatprep.subr.bf16.mxu0 0
    %3142 = vmatpush1.bf16.msra.mxu0 0
    %3143 = vmatprep.subr.bf16.mxu0 0
    %3144 = vmatpush1.bf16.msra.mxu0 0
    %3145 = vmatprep.subr.bf16.mxu0 0
    %3146 = vmatpush1.bf16.msra.mxu0 0
    %3147 = vmatprep.subr.bf16.mxu0 0
    %3148 = vmatpush1.bf16.msra.mxu0 0
    %3149 = vmatprep.mubr.bf16.mxu0 0
    %3150 = vmatmul.mubr.bf16.gmra.mrb[0].mxu0 %v3112
    %v3151 = vpop.f32.mrb[0].mxu0
    %v3152 = vadd.f32 0.0, %v3151
    %v3153 = vpop.f32.mrb[0].mxu0
    %v3154 = vpop.f32.mrb[0].mxu0
    %v3155 = vpop.f32.mrb[0].mxu0
    %3156 = vdwg.mxu0
    %3157 = vrot.lane.b32.xlu0 %v2762, 56
    %v3158 = vpop.permute.xlu0 %3157
    %v3160 = vsel %vm124, %v3108, 0
    %v3163 = vsel %vm261, %v3158, 0
    %3165 = vmatprep.subr.bf16.mxu0 0
    %3166 = vmatpush1.bf16.msra.mxu0 %v3163
    %3167 = vmatprep.subr.bf16.mxu0 0
    %3168 = vmatpush1.bf16.msra.mxu0 0
    %3169 = vmatprep.subr.bf16.mxu0 0
    %3170 = vmatpush1.bf16.msra.mxu0 0
    %3171 = vmatprep.subr.bf16.mxu0 0
    %3172 = vmatpush1.bf16.msra.mxu0 0
    %3173 = vmatprep.subr.bf16.mxu0 0
    %3174 = vmatpush1.bf16.msra.mxu0 0
    %3175 = vmatprep.subr.bf16.mxu0 0
    %3176 = vmatpush1.bf16.msra.mxu0 0
    %3177 = vmatprep.subr.bf16.mxu0 0
    %3178 = vmatpush1.bf16.msra.mxu0 0
    %3179 = vmatprep.subr.bf16.mxu0 0
    %3180 = vmatpush1.bf16.msra.mxu0 0
    %3181 = vmatprep.subr.bf16.mxu0 0
    %3182 = vmatpush1.bf16.msra.mxu0 0
    %3183 = vmatprep.subr.bf16.mxu0 0
    %3184 = vmatpush1.bf16.msra.mxu0 0
    %3185 = vmatprep.subr.bf16.mxu0 0
    %3186 = vmatpush1.bf16.msra.mxu0 0
    %3187 = vmatprep.subr.bf16.mxu0 0
    %3188 = vmatpush1.bf16.msra.mxu0 0
    %3189 = vmatprep.subr.bf16.mxu0 0
    %3190 = vmatpush1.bf16.msra.mxu0 0
    %3191 = vmatprep.subr.bf16.mxu0 0
    %3192 = vmatpush1.bf16.msra.mxu0 0
    %3193 = vmatprep.subr.bf16.mxu0 0
    %3194 = vmatpush1.bf16.msra.mxu0 0
    %3195 = vmatprep.subr.bf16.mxu0 0
    %3196 = vmatpush1.bf16.msra.mxu0 0
    %3197 = vmatprep.mubr.bf16.mxu0 0
    %3198 = vmatmul.mubr.bf16.gmra.mrb[0].mxu0 %v3160
    %v3199 = vpop.f32.mrb[0].mxu0
    %v3200 = vadd.f32 0.0, %v3199
    %v3201 = vpop.f32.mrb[0].mxu0
    %v3202 = vpop.f32.mrb[0].mxu0
    %v3203 = vpop.f32.mrb[0].mxu0
    %3204 = vdwg.mxu0
    %v3205 = vrcp.pop %v3103
    %v3206 = vrcp.pop %v3106
    %v3207 = vmul.f32 %v3152, %v3205
    %v3208 = vmul.f32 %v3200, %v3206
    %3209 = vrot.lane.b32.xlu0 %v2761, 112
    %v3210 = vpop.permute.xlu0 %3209
    %3211 = vrot.lane.b32.xlu0 %v2761, 80
    %v3212 = vpop.permute.xlu0 %3211
    %v3214 = vsel %vm124, %v3210, 0
    %v3217 = vsel %vm124, %v3212, 0
    %3219 = vmatprep.subr.bf16.mxu0 0
    %3220 = vmatpush1.bf16.xpose.msra.mxu0 %v3217
    %3221 = vmatprep.subr.bf16.mxu0 0
    %3222 = vmatpush1.bf16.xpose.msra.mxu0 0
    %3223 = vmatprep.subr.bf16.mxu0 0
    %3224 = vmatpush1.bf16.xpose.msra.mxu0 0
    %3225 = vmatprep.subr.bf16.mxu0 0
    %3226 = vmatpush1.bf16.xpose.msra.mxu0 0
    %3227 = vmatprep.subr.bf16.mxu0 0
    %3228 = vmatpush1.bf16.xpose.msra.mxu0 0
    %3229 = vmatprep.subr.bf16.mxu0 0
    %3230 = vmatpush1.bf16.xpose.msra.mxu0 0
    %3231 = vmatprep.subr.bf16.mxu0 0
    %3232 = vmatpush1.bf16.xpose.msra.mxu0 0
    %3233 = vmatprep.subr.bf16.mxu0 0
    %3234 = vmatpush1.bf16.xpose.msra.mxu0 0
    %3235 = vmatprep.subr.bf16.mxu0 0
    %3236 = vmatpush1.bf16.xpose.msra.mxu0 0
    %3237 = vmatprep.subr.bf16.mxu0 0
    %3238 = vmatpush1.bf16.xpose.msra.mxu0 0
    %3239 = vmatprep.subr.bf16.mxu0 0
    %3240 = vmatpush1.bf16.xpose.msra.mxu0 0
    %3241 = vmatprep.subr.bf16.mxu0 0
    %3242 = vmatpush1.bf16.xpose.msra.mxu0 0
    %3243 = vmatprep.subr.bf16.mxu0 0
    %3244 = vmatpush1.bf16.xpose.msra.mxu0 0
    %3245 = vmatprep.subr.bf16.mxu0 0
    %3246 = vmatpush1.bf16.xpose.msra.mxu0 0
    %3247 = vmatprep.subr.bf16.mxu0 0
    %3248 = vmatpush1.bf16.xpose.msra.mxu0 0
    %3249 = vmatprep.subr.bf16.mxu0 0
    %3250 = vmatpush1.bf16.xpose.msra.mxu0 0
    %3251 = vmatprep.mubr.bf16.mxu0 0
    %3252 = vmatmul.mubr.bf16.gmra.mrb[0].mxu0 %v3214
    %v3253 = vpop.f32.mrb[0].mxu0
    %v3254 = vadd.f32 0.0, %v3253
    %v3255 = vpop.f32.mrb[0].mxu0
    %v3256 = vpop.f32.mrb[0].mxu0
    %v3257 = vpop.f32.mrb[0].mxu0
    %3258 = vdwg.mxu0
    %3259 = vrot.lane.b32.xlu0 %v2762, 112
    %v3260 = vpop.permute.xlu0 %3259
    %3261 = vrot.lane.b32.xlu0 %v2762, 80
    %v3262 = vpop.permute.xlu0 %3261
    %v3264 = vsel %vm124, %v3260, 0
    %v3267 = vsel %vm124, %v3262, 0
    %3269 = vmatprep.subr.bf16.mxu0 0
    %3270 = vmatpush1.bf16.xpose.msra.mxu0 %v3267
    %3271 = vmatprep.subr.bf16.mxu0 0
    %3272 = vmatpush1.bf16.xpose.msra.mxu0 0
    %3273 = vmatprep.subr.bf16.mxu0 0
    %3274 = vmatpush1.bf16.xpose.msra.mxu0 0
    %3275 = vmatprep.subr.bf16.mxu0 0
    %3276 = vmatpush1.bf16.xpose.msra.mxu0 0
    %3277 = vmatprep.subr.bf16.mxu0 0
    %3278 = vmatpush1.bf16.xpose.msra.mxu0 0
    %3279 = vmatprep.subr.bf16.mxu0 0
    %3280 = vmatpush1.bf16.xpose.msra.mxu0 0
    %3281 = vmatprep.subr.bf16.mxu0 0
    %3282 = vmatpush1.bf16.xpose.msra.mxu0 0
    %3283 = vmatprep.subr.bf16.mxu0 0
    %3284 = vmatpush1.bf16.xpose.msra.mxu0 0
    %3285 = vmatprep.subr.bf16.mxu0 0
    %3286 = vmatpush1.bf16.xpose.msra.mxu0 0
    %3287 = vmatprep.subr.bf16.mxu0 0
    %3288 = vmatpush1.bf16.xpose.msra.mxu0 0
    %3289 = vmatprep.subr.bf16.mxu0 0
    %3290 = vmatpush1.bf16.xpose.msra.mxu0 0
    %3291 = vmatprep.subr.bf16.mxu0 0
    %3292 = vmatpush1.bf16.xpose.msra.mxu0 0
    %3293 = vmatprep.subr.bf16.mxu0 0
    %3294 = vmatpush1.bf16.xpose.msra.mxu0 0
    %3295 = vmatprep.subr.bf16.mxu0 0
    %3296 = vmatpush1.bf16.xpose.msra.mxu0 0
    %3297 = vmatprep.subr.bf16.mxu0 0
    %3298 = vmatpush1.bf16.xpose.msra.mxu0 0
    %3299 = vmatprep.subr.bf16.mxu0 0
    %3300 = vmatpush1.bf16.xpose.msra.mxu0 0
    %3301 = vmatprep.mubr.bf16.mxu0 0
    %3302 = vmatmul.mubr.bf16.gmra.mrb[0].mxu0 %v3264
    %v3303 = vpop.f32.mrb[0].mxu0
    %v3304 = vadd.f32 0.0, %v3303
    %v3305 = vpop.f32.mrb[0].mxu0
    %v3306 = vpop.f32.mrb[0].mxu0
    %v3307 = vpop.f32.mrb[0].mxu0
    %3308 = vdwg.mxu0
    %v3309 = vmul.f32 %v3254, 0.35355338
    %v3310 = vmul.f32 %v3304, 0.35355338
    %v3311 = vadd.f32 %v3309, %v46
    %v3312 = vadd.f32 %v3310, %v46
    %v3313 = vsel %vm124, %v3311, -inf
    %3314 = vmax.xlane.f32.xlu0 %v3313
    %v3315 = vpop.xlane.xlu0 %3314
    %v3316 = vsel %vm124, %v3312, -inf
    %3317 = vmax.xlane.f32.xlu0 %v3316
    %v3318 = vpop.xlane.xlu0 %3317
    %v3319 = vsub.f32 %v3311, %v3315
    %v3320 = vsub.f32 %v3312, %v3318
    %v3321 = vmul.f32 %v3319, 1.442695
    %v3322 = vpow.pop %v3321
    %v3323 = vmul.f32 %v3320, 1.442695
    %v3324 = vpow.pop %v3323
    %v3325 = vsel %vm124, %v3322, 0.0
    %3326 = vadd.xlane.f32.xlu0 %v3325
    %v3327 = vpop.xlane.xlu0 %3326
    %v3328 = vsel %vm124, %v3324, 0.0
    %3329 = vadd.xlane.f32.xlu0 %v3328
    %v3330 = vpop.xlane.xlu0 %3329
    %v3331 = vpack.c.bf16 %v3322, %v3322
    %v3332 = vpack.c.bf16 %v3324, %v3324
    %3333 = vrot.lane.b32.xlu0 %v2761, 48
    %v3334 = vpop.permute.xlu0 %3333
    %v3336 = vsel %vm124, %v3331, 0
    %v3339 = vsel %vm261, %v3334, 0
    %3341 = vmatprep.subr.bf16.mxu0 0
    %3342 = vmatpush1.bf16.msra.mxu0 %v3339
    %3343 = vmatprep.subr.bf16.mxu0 0
    %3344 = vmatpush1.bf16.msra.mxu0 0
    %3345 = vmatprep.subr.bf16.mxu0 0
    %3346 = vmatpush1.bf16.msra.mxu0 0
    %3347 = vmatprep.subr.bf16.mxu0 0
    %3348 = vmatpush1.bf16.msra.mxu0 0
    %3349 = vmatprep.subr.bf16.mxu0 0
    %3350 = vmatpush1.bf16.msra.mxu0 0
    %3351 = vmatprep.subr.bf16.mxu0 0
    %3352 = vmatpush1.bf16.msra.mxu0 0
    %3353 = vmatprep.subr.bf16.mxu0 0
    %3354 = vmatpush1.bf16.msra.mxu0 0
    %3355 = vmatprep.subr.bf16.mxu0 0
    %3356 = vmatpush1.bf16.msra.mxu0 0
    %3357 = vmatprep.subr.bf16.mxu0 0
    %3358 = vmatpush1.bf16.msra.mxu0 0
    %3359 = vmatprep.subr.bf16.mxu0 0
    %3360 = vmatpush1.bf16.msra.mxu0 0
    %3361 = vmatprep.subr.bf16.mxu0 0
    %3362 = vmatpush1.bf16.msra.mxu0 0
    %3363 = vmatprep.subr.bf16.mxu0 0
    %3364 = vmatpush1.bf16.msra.mxu0 0
    %3365 = vmatprep.subr.bf16.mxu0 0
    %3366 = vmatpush1.bf16.msra.mxu0 0
    %3367 = vmatprep.subr.bf16.mxu0 0
    %3368 = vmatpush1.bf16.msra.mxu0 0
    %3369 = vmatprep.subr.bf16.mxu0 0
    %3370 = vmatpush1.bf16.msra.mxu0 0
    %3371 = vmatprep.subr.bf16.mxu0 0
    %3372 = vmatpush1.bf16.msra.mxu0 0
    %3373 = vmatprep.mubr.bf16.mxu0 0
    %3374 = vmatmul.mubr.bf16.gmra.mrb[0].mxu0 %v3336
    %v3375 = vpop.f32.mrb[0].mxu0
    %v3376 = vadd.f32 0.0, %v3375
    %v3377 = vpop.f32.mrb[0].mxu0
    %v3378 = vpop.f32.mrb[0].mxu0
    %v3379 = vpop.f32.mrb[0].mxu0
    %3380 = vdwg.mxu0
    %3381 = vrot.lane.b32.xlu0 %v2762, 48
    %v3382 = vpop.permute.xlu0 %3381
    %v3384 = vsel %vm124, %v3332, 0
    %v3387 = vsel %vm261, %v3382, 0
    %3389 = vmatprep.subr.bf16.mxu0 0
    %3390 = vmatpush1.bf16.msra.mxu0 %v3387
    %3391 = vmatprep.subr.bf16.mxu0 0
    %3392 = vmatpush1.bf16.msra.mxu0 0
    %3393 = vmatprep.subr.bf16.mxu0 0
    %3394 = vmatpush1.bf16.msra.mxu0 0
    %3395 = vmatprep.subr.bf16.mxu0 0
    %3396 = vmatpush1.bf16.msra.mxu0 0
    %3397 = vmatprep.subr.bf16.mxu0 0
    %3398 = vmatpush1.bf16.msra.mxu0 0
    %3399 = vmatprep.subr.bf16.mxu0 0
    %3400 = vmatpush1.bf16.msra.mxu0 0
    %3401 = vmatprep.subr.bf16.mxu0 0
    %3402 = vmatpush1.bf16.msra.mxu0 0
    %3403 = vmatprep.subr.bf16.mxu0 0
    %3404 = vmatpush1.bf16.msra.mxu0 0
    %3405 = vmatprep.subr.bf16.mxu0 0
    %3406 = vmatpush1.bf16.msra.mxu0 0
    %3407 = vmatprep.subr.bf16.mxu0 0
    %3408 = vmatpush1.bf16.msra.mxu0 0
    %3409 = vmatprep.subr.bf16.mxu0 0
    %3410 = vmatpush1.bf16.msra.mxu0 0
    %3411 = vmatprep.subr.bf16.mxu0 0
    %3412 = vmatpush1.bf16.msra.mxu0 0
    %3413 = vmatprep.subr.bf16.mxu0 0
    %3414 = vmatpush1.bf16.msra.mxu0 0
    %3415 = vmatprep.subr.bf16.mxu0 0
    %3416 = vmatpush1.bf16.msra.mxu0 0
    %3417 = vmatprep.subr.bf16.mxu0 0
    %3418 = vmatpush1.bf16.msra.mxu0 0
    %3419 = vmatprep.subr.bf16.mxu0 0
    %3420 = vmatpush1.bf16.msra.mxu0 0
    %3421 = vmatprep.mubr.bf16.mxu0 0
    %3422 = vmatmul.mubr.bf16.gmra.mrb[0].mxu0 %v3384
    %v3423 = vpop.f32.mrb[0].mxu0
    %v3424 = vadd.f32 0.0, %v3423
    %v3425 = vpop.f32.mrb[0].mxu0
    %v3426 = vpop.f32.mrb[0].mxu0
    %v3427 = vpop.f32.mrb[0].mxu0
    %3428 = vdwg.mxu0
    %v3429 = vrcp.pop %v3327
    %v3430 = vrcp.pop %v3330
    %v3431 = vmul.f32 %v3376, %v3429
    %v3432 = vmul.f32 %v3424, %v3430
    %3433 = vrot.lane.b32.xlu0 %v2761, 104
    %v3434 = vpop.permute.xlu0 %3433
    %3435 = vrot.lane.b32.xlu0 %v2761, 72
    %v3436 = vpop.permute.xlu0 %3435
    %v3438 = vsel %vm124, %v3434, 0
    %v3441 = vsel %vm124, %v3436, 0
    %3443 = vmatprep.subr.bf16.mxu0 0
    %3444 = vmatpush1.bf16.xpose.msra.mxu0 %v3441
    %3445 = vmatprep.subr.bf16.mxu0 0
    %3446 = vmatpush1.bf16.xpose.msra.mxu0 0
    %3447 = vmatprep.subr.bf16.mxu0 0
    %3448 = vmatpush1.bf16.xpose.msra.mxu0 0
    %3449 = vmatprep.subr.bf16.mxu0 0
    %3450 = vmatpush1.bf16.xpose.msra.mxu0 0
    %3451 = vmatprep.subr.bf16.mxu0 0
    %3452 = vmatpush1.bf16.xpose.msra.mxu0 0
    %3453 = vmatprep.subr.bf16.mxu0 0
    %3454 = vmatpush1.bf16.xpose.msra.mxu0 0
    %3455 = vmatprep.subr.bf16.mxu0 0
    %3456 = vmatpush1.bf16.xpose.msra.mxu0 0
    %3457 = vmatprep.subr.bf16.mxu0 0
    %3458 = vmatpush1.bf16.xpose.msra.mxu0 0
    %3459 = vmatprep.subr.bf16.mxu0 0
    %3460 = vmatpush1.bf16.xpose.msra.mxu0 0
    %3461 = vmatprep.subr.bf16.mxu0 0
    %3462 = vmatpush1.bf16.xpose.msra.mxu0 0
    %3463 = vmatprep.subr.bf16.mxu0 0
    %3464 = vmatpush1.bf16.xpose.msra.mxu0 0
    %3465 = vmatprep.subr.bf16.mxu0 0
    %3466 = vmatpush1.bf16.xpose.msra.mxu0 0
    %3467 = vmatprep.subr.bf16.mxu0 0
    %3468 = vmatpush1.bf16.xpose.msra.mxu0 0
    %3469 = vmatprep.subr.bf16.mxu0 0
    %3470 = vmatpush1.bf16.xpose.msra.mxu0 0
    %3471 = vmatprep.subr.bf16.mxu0 0
    %3472 = vmatpush1.bf16.xpose.msra.mxu0 0
    %3473 = vmatprep.subr.bf16.mxu0 0
    %3474 = vmatpush1.bf16.xpose.msra.mxu0 0
    %3475 = vmatprep.mubr.bf16.mxu0 0
    %3476 = vmatmul.mubr.bf16.gmra.mrb[0].mxu0 %v3438
    %v3477 = vpop.f32.mrb[0].mxu0
    %v3478 = vadd.f32 0.0, %v3477
    %v3479 = vpop.f32.mrb[0].mxu0
    %v3480 = vpop.f32.mrb[0].mxu0
    %v3481 = vpop.f32.mrb[0].mxu0
    %3482 = vdwg.mxu0
    %3483 = vrot.lane.b32.xlu0 %v2762, 104
    %v3484 = vpop.permute.xlu0 %3483
    %3485 = vrot.lane.b32.xlu0 %v2762, 72
    %v3486 = vpop.permute.xlu0 %3485
    %v3488 = vsel %vm124, %v3484, 0
    %v3491 = vsel %vm124, %v3486, 0
    %3493 = vmatprep.subr.bf16.mxu0 0
    %3494 = vmatpush1.bf16.xpose.msra.mxu0 %v3491
    %3495 = vmatprep.subr.bf16.mxu0 0
    %3496 = vmatpush1.bf16.xpose.msra.mxu0 0
    %3497 = vmatprep.subr.bf16.mxu0 0
    %3498 = vmatpush1.bf16.xpose.msra.mxu0 0
    %3499 = vmatprep.subr.bf16.mxu0 0
    %3500 = vmatpush1.bf16.xpose.msra.mxu0 0
    %3501 = vmatprep.subr.bf16.mxu0 0
    %3502 = vmatpush1.bf16.xpose.msra.mxu0 0
    %3503 = vmatprep.subr.bf16.mxu0 0
    %3504 = vmatpush1.bf16.xpose.msra.mxu0 0
    %3505 = vmatprep.subr.bf16.mxu0 0
    %3506 = vmatpush1.bf16.xpose.msra.mxu0 0
    %3507 = vmatprep.subr.bf16.mxu0 0
    %3508 = vmatpush1.bf16.xpose.msra.mxu0 0
    %3509 = vmatprep.subr.bf16.mxu0 0
    %3510 = vmatpush1.bf16.xpose.msra.mxu0 0
    %3511 = vmatprep.subr.bf16.mxu0 0
    %3512 = vmatpush1.bf16.xpose.msra.mxu0 0
    %3513 = vmatprep.subr.bf16.mxu0 0
    %3514 = vmatpush1.bf16.xpose.msra.mxu0 0
    %3515 = vmatprep.subr.bf16.mxu0 0
    %3516 = vmatpush1.bf16.xpose.msra.mxu0 0
    %3517 = vmatprep.subr.bf16.mxu0 0
    %3518 = vmatpush1.bf16.xpose.msra.mxu0 0
    %3519 = vmatprep.subr.bf16.mxu0 0
    %3520 = vmatpush1.bf16.xpose.msra.mxu0 0
    %3521 = vmatprep.subr.bf16.mxu0 0
    %3522 = vmatpush1.bf16.xpose.msra.mxu0 0
    %3523 = vmatprep.subr.bf16.mxu0 0
    %3524 = vmatpush1.bf16.xpose.msra.mxu0 0
    %3525 = vmatprep.mubr.bf16.mxu0 0
    %3526 = vmatmul.mubr.bf16.gmra.mrb[0].mxu0 %v3488
    %v3527 = vpop.f32.mrb[0].mxu0
    %v3528 = vadd.f32 0.0, %v3527
    %v3529 = vpop.f32.mrb[0].mxu0
    %v3530 = vpop.f32.mrb[0].mxu0
    %v3531 = vpop.f32.mrb[0].mxu0
    %3532 = vdwg.mxu0
    %v3533 = vmul.f32 %v3478, 0.35355338
    %v3534 = vmul.f32 %v3528, 0.35355338
    %v3535 = vadd.f32 %v3533, %v46
    %v3536 = vadd.f32 %v3534, %v46
    %v3537 = vsel %vm124, %v3535, -inf
    %3538 = vmax.xlane.f32.xlu0 %v3537
    %v3539 = vpop.xlane.xlu0 %3538
    %v3540 = vsel %vm124, %v3536, -inf
    %3541 = vmax.xlane.f32.xlu0 %v3540
    %v3542 = vpop.xlane.xlu0 %3541
    %v3543 = vsub.f32 %v3535, %v3539
    %v3544 = vsub.f32 %v3536, %v3542
    %v3545 = vmul.f32 %v3543, 1.442695
    %v3546 = vpow.pop %v3545
    %v3547 = vmul.f32 %v3544, 1.442695
    %v3548 = vpow.pop %v3547
    %v3549 = vsel %vm124, %v3546, 0.0
    %3550 = vadd.xlane.f32.xlu0 %v3549
    %v3551 = vpop.xlane.xlu0 %3550
    %v3552 = vsel %vm124, %v3548, 0.0
    %3553 = vadd.xlane.f32.xlu0 %v3552
    %v3554 = vpop.xlane.xlu0 %3553
    %v3555 = vpack.c.bf16 %v3546, %v3546
    %v3556 = vpack.c.bf16 %v3548, %v3548
    %3557 = vrot.lane.b32.xlu0 %v2761, 40
    %v3558 = vpop.permute.xlu0 %3557
    %v3560 = vsel %vm124, %v3555, 0
    %v3563 = vsel %vm261, %v3558, 0
    %3565 = vmatprep.subr.bf16.mxu0 0
    %3566 = vmatpush1.bf16.msra.mxu0 %v3563
    %3567 = vmatprep.subr.bf16.mxu0 0
    %3568 = vmatpush1.bf16.msra.mxu0 0
    %3569 = vmatprep.subr.bf16.mxu0 0
    %3570 = vmatpush1.bf16.msra.mxu0 0
    %3571 = vmatprep.subr.bf16.mxu0 0
    %3572 = vmatpush1.bf16.msra.mxu0 0
    %3573 = vmatprep.subr.bf16.mxu0 0
    %3574 = vmatpush1.bf16.msra.mxu0 0
    %3575 = vmatprep.subr.bf16.mxu0 0
    %3576 = vmatpush1.bf16.msra.mxu0 0
    %3577 = vmatprep.subr.bf16.mxu0 0
    %3578 = vmatpush1.bf16.msra.mxu0 0
    %3579 = vmatprep.subr.bf16.mxu0 0
    %3580 = vmatpush1.bf16.msra.mxu0 0
    %3581 = vmatprep.subr.bf16.mxu0 0
    %3582 = vmatpush1.bf16.msra.mxu0 0
    %3583 = vmatprep.subr.bf16.mxu0 0
    %3584 = vmatpush1.bf16.msra.mxu0 0
    %3585 = vmatprep.subr.bf16.mxu0 0
    %3586 = vmatpush1.bf16.msra.mxu0 0
    %3587 = vmatprep.subr.bf16.mxu0 0
    %3588 = vmatpush1.bf16.msra.mxu0 0
    %3589 = vmatprep.subr.bf16.mxu0 0
    %3590 = vmatpush1.bf16.msra.mxu0 0
    %3591 = vmatprep.subr.bf16.mxu0 0
    %3592 = vmatpush1.bf16.msra.mxu0 0
    %3593 = vmatprep.subr.bf16.mxu0 0
    %3594 = vmatpush1.bf16.msra.mxu0 0
    %3595 = vmatprep.subr.bf16.mxu0 0
    %3596 = vmatpush1.bf16.msra.mxu0 0
    %3597 = vmatprep.mubr.bf16.mxu0 0
    %3598 = vmatmul.mubr.bf16.gmra.mrb[0].mxu0 %v3560
    %v3599 = vpop.f32.mrb[0].mxu0
    %v3600 = vadd.f32 0.0, %v3599
    %v3601 = vpop.f32.mrb[0].mxu0
    %v3602 = vpop.f32.mrb[0].mxu0
    %v3603 = vpop.f32.mrb[0].mxu0
    %3604 = vdwg.mxu0
    %3605 = vrot.lane.b32.xlu0 %v2762, 40
    %v3606 = vpop.permute.xlu0 %3605
    %v3608 = vsel %vm124, %v3556, 0
    %v3611 = vsel %vm261, %v3606, 0
    %3613 = vmatprep.subr.bf16.mxu0 0
    %3614 = vmatpush1.bf16.msra.mxu0 %v3611
    %3615 = vmatprep.subr.bf16.mxu0 0
    %3616 = vmatpush1.bf16.msra.mxu0 0
    %3617 = vmatprep.subr.bf16.mxu0 0
    %3618 = vmatpush1.bf16.msra.mxu0 0
    %3619 = vmatprep.subr.bf16.mxu0 0
    %3620 = vmatpush1.bf16.msra.mxu0 0
    %3621 = vmatprep.subr.bf16.mxu0 0
    %3622 = vmatpush1.bf16.msra.mxu0 0
    %3623 = vmatprep.subr.bf16.mxu0 0
    %3624 = vmatpush1.bf16.msra.mxu0 0
    %3625 = vmatprep.subr.bf16.mxu0 0
    %3626 = vmatpush1.bf16.msra.mxu0 0
    %3627 = vmatprep.subr.bf16.mxu0 0
    %3628 = vmatpush1.bf16.msra.mxu0 0
    %3629 = vmatprep.subr.bf16.mxu0 0
    %3630 = vmatpush1.bf16.msra.mxu0 0
    %3631 = vmatprep.subr.bf16.mxu0 0
    %3632 = vmatpush1.bf16.msra.mxu0 0
    %3633 = vmatprep.subr.bf16.mxu0 0
    %3634 = vmatpush1.bf16.msra.mxu0 0
    %3635 = vmatprep.subr.bf16.mxu0 0
    %3636 = vmatpush1.bf16.msra.mxu0 0
    %3637 = vmatprep.subr.bf16.mxu0 0
    %3638 = vmatpush1.bf16.msra.mxu0 0
    %3639 = vmatprep.subr.bf16.mxu0 0
    %3640 = vmatpush1.bf16.msra.mxu0 0
    %3641 = vmatprep.subr.bf16.mxu0 0
    %3642 = vmatpush1.bf16.msra.mxu0 0
    %3643 = vmatprep.subr.bf16.mxu0 0
    %3644 = vmatpush1.bf16.msra.mxu0 0
    %3645 = vmatprep.mubr.bf16.mxu0 0
    %3646 = vmatmul.mubr.bf16.gmra.mrb[0].mxu0 %v3608
    %v3647 = vpop.f32.mrb[0].mxu0
    %v3648 = vadd.f32 0.0, %v3647
    %v3649 = vpop.f32.mrb[0].mxu0
    %v3650 = vpop.f32.mrb[0].mxu0
    %v3651 = vpop.f32.mrb[0].mxu0
    %3652 = vdwg.mxu0
    %v3653 = vrcp.pop %v3551
    %v3654 = vrcp.pop %v3554
    %v3655 = vmul.f32 %v3600, %v3653
    %v3656 = vmul.f32 %v3648, %v3654
    %3659 = vrot.lane.b32.xlu0 %v3207, 8
    %v3660 = vpop.permute.xlu0 %3659
    %3661 = vrot.lane.b32.xlu0 %v3208, 8
    %v3662 = vpop.permute.xlu0 %3661
    %3667 = vrot.lane.b32.xlu0 %v3431, 16
    %v3668 = vpop.permute.xlu0 %3667
    %3669 = vrot.lane.b32.xlu0 %v3432, 16
    %v3670 = vpop.permute.xlu0 %3669
    %3675 = vrot.lane.b32.xlu0 %v3655, 24
    %v3676 = vpop.permute.xlu0 %3675
    %3677 = vrot.lane.b32.xlu0 %v3656, 24
    %v3678 = vpop.permute.xlu0 %3677
    %v3681 = vsel %vm124, %v2983, %v3660
    %v3682 = vsel %vm124, %v2984, %v3662
    %v3683 = vsel %vm1055, %v3681, %v3668
    %v3684 = vsel %vm1055, %v3682, %v3670
    %v3685 = vsel %vm1058, %v3683, %v3676
    %v3686 = vsel %vm1058, %v3684, %v3678
    %v3687 = vpack.c.bf16 %v3686, %v3685
    %v3688 = vlaneseq
    %v3689 = vshrl.u32 %v3688, 7
    %v3690 = vsub.s32 0, %v3689
    %v3691 = vrot.slane %v2699, %v3690
    %v3696 = vunpack.c.l.b16 %v2694
    %v3697 = vunpack.c.l.b16 %v2695
    %v3698 = vunpack.c.l.b16 %v2696
    %v3699 = vunpack.c.l.b16 %v2697
    %v3700 = vpack.c.b16 %v3697, %v3696
    %v3701 = vpack.c.b16 %v3699, %v3698
    %v3705 = vsel %vm74, %v3687, 0
    %3707 = vmatprep.subr.bf16.mxu0 0
    %3708 = vmatpush1.bf16.msra.mxu0 %v3700
    %3709 = vmatprep.subr.bf16.mxu0 0
    %3710 = vmatpush1.bf16.msra.mxu0 %v3701
    %3711 = vmatprep.subr.bf16.mxu0 0
    %3712 = vmatpush1.bf16.msra.mxu0 0
    %3713 = vmatprep.subr.bf16.mxu0 0
    %3714 = vmatpush1.bf16.msra.mxu0 0
    %3715 = vmatprep.subr.bf16.mxu0 0
    %3716 = vmatpush1.bf16.msra.mxu0 0
    %3717 = vmatprep.subr.bf16.mxu0 0
    %3718 = vmatpush1.bf16.msra.mxu0 0
    %3719 = vmatprep.subr.bf16.mxu0 0
    %3720 = vmatpush1.bf16.msra.mxu0 0
    %3721 = vmatprep.subr.bf16.mxu0 0
    %3722 = vmatpush1.bf16.msra.mxu0 0
    %3723 = vmatprep.subr.bf16.mxu0 0
    %3724 = vmatpush1.bf16.msra.mxu0 0
    %3725 = vmatprep.subr.bf16.mxu0 0
    %3726 = vmatpush1.bf16.msra.mxu0 0
    %3727 = vmatprep.subr.bf16.mxu0 0
    %3728 = vmatpush1.bf16.msra.mxu0 0
    %3729 = vmatprep.subr.bf16.mxu0 0
    %3730 = vmatpush1.bf16.msra.mxu0 0
    %3731 = vmatprep.subr.bf16.mxu0 0
    %3732 = vmatpush1.bf16.msra.mxu0 0
    %3733 = vmatprep.subr.bf16.mxu0 0
    %3734 = vmatpush1.bf16.msra.mxu0 0
    %3735 = vmatprep.subr.bf16.mxu0 0
    %3736 = vmatpush1.bf16.msra.mxu0 0
    %3737 = vmatprep.subr.bf16.mxu0 0
    %3738 = vmatpush1.bf16.msra.mxu0 0
    %3739 = vmatprep.mubr.bf16.mxu0 0
    %3740 = vmatmul.mubr.bf16.gmra.mrb[0].mxu0 %v3705
    %v3741 = vpop.f32.mrb[0].mxu0
    %v3742 = vadd.f32 %v3691, %v3741
    %v3743 = vpop.f32.mrb[0].mxu0
    %v3744 = vpop.f32.mrb[0].mxu0
    %v3745 = vadd.f32 %v3691, %v3744
    %v3746 = vpop.f32.mrb[0].mxu0
    %3747 = vdwg.mxu0
    %v3748 = vadd.f32 %v37, %v3742
    %v3749 = vadd.f32 %v38, %v3745
    %v3750 = vld [vmem:[%s4 + $0x16] sm:$0x1]
    %v3751 = vld [vmem:[%s4 + $0x17] sm:$0x1]
    %v3752 = vsel %vm74, %v3748, 0.0
    %3753 = vadd.xlane.f32.xlu0 %v3752
    %v3754 = vpop.xlane.xlu0 %3753
    %v3755 = vsel %vm74, %v3749, 0.0
    %3756 = vadd.xlane.f32.xlu0 %v3755
    %v3757 = vpop.xlane.xlu0 %3756
    %v3758 = vmul.f32 %v3754, %v1132
    %v3759 = vmul.f32 %v3757, %v1132
    %v3760 = vsub.f32 %v3748, %v3758
    %v3761 = vsub.f32 %v3749, %v3759
    %v3762 = vmul.f32 %v3760, %v3760
    %v3763 = vmul.f32 %v3761, %v3761
    %v3764 = vsel %vm74, %v3762, 0.0
    %3765 = vadd.xlane.f32.xlu0 %v3764
    %v3766 = vpop.xlane.xlu0 %3765
    %v3767 = vsel %vm74, %v3763, 0.0
    %3768 = vadd.xlane.f32.xlu0 %v3767
    %v3769 = vpop.xlane.xlu0 %3768
    %v3770 = vmul.f32 %v3766, %v1132
    %v3771 = vmul.f32 %v3769, %v1132
    %v3772 = vadd.f32 %v3770, 1e-05
    %v3773 = vadd.f32 %v3771, 1e-05
    %v3774 = vrsqrt.pop %v3772
    %v3775 = vrsqrt.pop %v3773
    %v3776 = vmul.f32 %v3760, %v3774
    %v3777 = vmul.f32 %v3761, %v3775
    %v3778 = vlaneseq
    %v3779 = vshrl.u32 %v3778, 7
    %v3780 = vsub.s32 0, %v3779
    %v3781 = vrot.slane %v3750, %v3780
    %v3782 = vmul.f32 %v3776, %v3781
    %v3783 = vmul.f32 %v3777, %v3781
    %v3784 = vlaneseq
    %v3785 = vshrl.u32 %v3784, 7
    %v3786 = vsub.s32 0, %v3785
    %v3787 = vrot.slane %v3751, %v3786
    %v3788 = vadd.f32 %v3782, %v3787
    %v3789 = vadd.f32 %v3783, %v3787
    %v3790 = vld [vmem:[#allocation2 + $0xc0] sm:$0xf]
    %v3791 = vld [vmem:[#allocation2 + $0xc4] sm:$0xf]
    %v3792 = vld [vmem:[#allocation2 + $0xc8] sm:$0xf]
    %v3793 = vld [vmem:[#allocation2 + $0xcc] sm:$0xf]
    %v3794 = vld [vmem:[#allocation2 + $0xd0] sm:$0xf]
    %v3795 = vld [vmem:[#allocation2 + $0xd4] sm:$0xf]
    %v3796 = vld [vmem:[#allocation2 + $0xd8] sm:$0xf]
    %v3797 = vld [vmem:[#allocation2 + $0xdc] sm:$0xf]
    %v3798 = vld [vmem:[%s4 + $0x12] sm:$0x1]
    %v3799 = vld [vmem:[%s4 + $0x13] sm:$0x1]
    %v3800 = vpack.c.bf16 %v3789, %v3788
    %v3801 = vlaneseq
    %v3802 = vshrl.u32 %v3801, 7
    %v3803 = vsub.s32 0, %v3802
    %v3804 = vrot.slane %v3798, %v3803
    %v3809 = vunpack.c.l.b16 %v3790
    %v3810 = vunpack.c.l.b16 %v3791
    %v3811 = vunpack.c.l.b16 %v3792
    %v3812 = vunpack.c.l.b16 %v3793
    %v3813 = vpack.c.b16 %v3810, %v3809
    %v3814 = vpack.c.b16 %v3812, %v3811
    %v3818 = vsel %vm74, %v3800, 0
    %3820 = vmatprep.subr.bf16.mxu0 0
    %3821 = vmatpush1.bf16.msra.mxu0 %v3813
    %3822 = vmatprep.subr.bf16.mxu0 0
    %3823 = vmatpush1.bf16.msra.mxu0 %v3814
    %3824 = vmatprep.subr.bf16.mxu0 0
    %3825 = vmatpush1.bf16.msra.mxu0 0
    %3826 = vmatprep.subr.bf16.mxu0 0
    %3827 = vmatpush1.bf16.msra.mxu0 0
    %3828 = vmatprep.subr.bf16.mxu0 0
    %3829 = vmatpush1.bf16.msra.mxu0 0
    %3830 = vmatprep.subr.bf16.mxu0 0
    %3831 = vmatpush1.bf16.msra.mxu0 0
    %3832 = vmatprep.subr.bf16.mxu0 0
    %3833 = vmatpush1.bf16.msra.mxu0 0
    %3834 = vmatprep.subr.bf16.mxu0 0
    %3835 = vmatpush1.bf16.msra.mxu0 0
    %3836 = vmatprep.subr.bf16.mxu0 0
    %3837 = vmatpush1.bf16.msra.mxu0 0
    %3838 = vmatprep.subr.bf16.mxu0 0
    %3839 = vmatpush1.bf16.msra.mxu0 0
    %3840 = vmatprep.subr.bf16.mxu0 0
    %3841 = vmatpush1.bf16.msra.mxu0 0
    %3842 = vmatprep.subr.bf16.mxu0 0
    %3843 = vmatpush1.bf16.msra.mxu0 0
    %3844 = vmatprep.subr.bf16.mxu0 0
    %3845 = vmatpush1.bf16.msra.mxu0 0
    %3846 = vmatprep.subr.bf16.mxu0 0
    %3847 = vmatpush1.bf16.msra.mxu0 0
    %3848 = vmatprep.subr.bf16.mxu0 0
    %3849 = vmatpush1.bf16.msra.mxu0 0
    %3850 = vmatprep.subr.bf16.mxu0 0
    %3851 = vmatpush1.bf16.msra.mxu0 0
    %3852 = vmatprep.mubr.bf16.mxu0 0
    %3853 = vmatmul.mubr.bf16.gmra.mrb[0].mxu0 %v3818
    %v3854 = vpop.f32.mrb[0].mxu0
    %v3855 = vadd.f32 %v3804, %v3854
    %v3856 = vpop.f32.mrb[0].mxu0
    %v3857 = vpop.f32.mrb[0].mxu0
    %v3858 = vadd.f32 %v3804, %v3857
    %v3859 = vpop.f32.mrb[0].mxu0
    %3860 = vdwg.mxu0
    %v3861 = vpack.c.bf16 %v2689, %v2688
    %3862 = vrot.lane.b32.xlu0 %v3813, 96
    %v3863 = vpop.permute.xlu0 %3862
    %3864 = vrot.lane.b32.xlu0 %v3814, 96
    %v3865 = vpop.permute.xlu0 %3864
    %3869 = vrot.lane.b32.xlu0 %v3804, 96
    %v3870 = vpop.permute.xlu0 %3869
    %v3873 = vsel %vm74, %v3861, 0
    %3875 = vmatprep.subr.bf16.mxu0 0
    %3876 = vmatpush1.bf16.msra.mxu0 %v3863
    %3877 = vmatprep.subr.bf16.mxu0 0
    %3878 = vmatpush1.bf16.msra.mxu0 %v3865
    %3879 = vmatprep.subr.bf16.mxu0 0
    %3880 = vmatpush1.bf16.msra.mxu0 0
    %3881 = vmatprep.subr.bf16.mxu0 0
    %3882 = vmatpush1.bf16.msra.mxu0 0
    %3883 = vmatprep.subr.bf16.mxu0 0
    %3884 = vmatpush1.bf16.msra.mxu0 0
    %3885 = vmatprep.subr.bf16.mxu0 0
    %3886 = vmatpush1.bf16.msra.mxu0 0
    %3887 = vmatprep.subr.bf16.mxu0 0
    %3888 = vmatpush1.bf16.msra.mxu0 0
    %3889 = vmatprep.subr.bf16.mxu0 0
    %3890 = vmatpush1.bf16.msra.mxu0 0
    %3891 = vmatprep.subr.bf16.mxu0 0
    %3892 = vmatpush1.bf16.msra.mxu0 0
    %3893 = vmatprep.subr.bf16.mxu0 0
    %3894 = vmatpush1.bf16.msra.mxu0 0
    %3895 = vmatprep.subr.bf16.mxu0 0
    %3896 = vmatpush1.bf16.msra.mxu0 0
    %3897 = vmatprep.subr.bf16.mxu0 0
    %3898 = vmatpush1.bf16.msra.mxu0 0
    %3899 = vmatprep.subr.bf16.mxu0 0
    %3900 = vmatpush1.bf16.msra.mxu0 0
    %3901 = vmatprep.subr.bf16.mxu0 0
    %3902 = vmatpush1.bf16.msra.mxu0 0
    %3903 = vmatprep.subr.bf16.mxu0 0
    %3904 = vmatpush1.bf16.msra.mxu0 0
    %3905 = vmatprep.subr.bf16.mxu0 0
    %3906 = vmatpush1.bf16.msra.mxu0 0
    %3907 = vmatprep.mubr.bf16.mxu0 0
    %3908 = vmatmul.mubr.bf16.gmra.mrb[0].mxu0 %v3873
    %v3909 = vpop.f32.mrb[0].mxu0
    %v3910 = vadd.f32 %v3870, %v3909
    %v3911 = vpop.f32.mrb[0].mxu0
    %v3912 = vpop.f32.mrb[0].mxu0
    %v3913 = vadd.f32 %v3870, %v3912
    %v3914 = vpop.f32.mrb[0].mxu0
    %3915 = vdwg.mxu0
    %v3916 = vpack.c.bf16 %v3855, %v3855
    %v3917 = vpack.c.bf16 %v3858, %v3858
    %v3918 = vpack.c.bf16 %v3910, %v3910
    %v3919 = vpack.c.bf16 %v3913, %v3913
    %v3921 = vsel %vm124, %v3916, 0
    %v3924 = vsel %vm124, %v3918, 0
    %3926 = vmatprep.subr.bf16.mxu0 0
    %3927 = vmatpush1.bf16.xpose.msra.mxu0 %v3924
    %3928 = vmatprep.subr.bf16.mxu0 0
    %3929 = vmatpush1.bf16.xpose.msra.mxu0 0
    %3930 = vmatprep.subr.bf16.mxu0 0
    %3931 = vmatpush1.bf16.xpose.msra.mxu0 0
    %3932 = vmatprep.subr.bf16.mxu0 0
    %3933 = vmatpush1.bf16.xpose.msra.mxu0 0
    %3934 = vmatprep.subr.bf16.mxu0 0
    %3935 = vmatpush1.bf16.xpose.msra.mxu0 0
    %3936 = vmatprep.subr.bf16.mxu0 0
    %3937 = vmatpush1.bf16.xpose.msra.mxu0 0
    %3938 = vmatprep.subr.bf16.mxu0 0
    %3939 = vmatpush1.bf16.xpose.msra.mxu0 0
    %3940 = vmatprep.subr.bf16.mxu0 0
    %3941 = vmatpush1.bf16.xpose.msra.mxu0 0
    %3942 = vmatprep.subr.bf16.mxu0 0
    %3943 = vmatpush1.bf16.xpose.msra.mxu0 0
    %3944 = vmatprep.subr.bf16.mxu0 0
    %3945 = vmatpush1.bf16.xpose.msra.mxu0 0
    %3946 = vmatprep.subr.bf16.mxu0 0
    %3947 = vmatpush1.bf16.xpose.msra.mxu0 0
    %3948 = vmatprep.subr.bf16.mxu0 0
    %3949 = vmatpush1.bf16.xpose.msra.mxu0 0
    %3950 = vmatprep.subr.bf16.mxu0 0
    %3951 = vmatpush1.bf16.xpose.msra.mxu0 0
    %3952 = vmatprep.subr.bf16.mxu0 0
    %3953 = vmatpush1.bf16.xpose.msra.mxu0 0
    %3954 = vmatprep.subr.bf16.mxu0 0
    %3955 = vmatpush1.bf16.xpose.msra.mxu0 0
    %3956 = vmatprep.subr.bf16.mxu0 0
    %3957 = vmatpush1.bf16.xpose.msra.mxu0 0
    %3958 = vmatprep.mubr.bf16.mxu0 0
    %3959 = vmatmul.mubr.bf16.gmra.mrb[0].mxu0 %v3921
    %v3960 = vpop.f32.mrb[0].mxu0
    %v3961 = vadd.f32 0.0, %v3960
    %v3962 = vpop.f32.mrb[0].mxu0
    %v3963 = vpop.f32.mrb[0].mxu0
    %v3964 = vpop.f32.mrb[0].mxu0
    %3965 = vdwg.mxu0
    %v3967 = vsel %vm124, %v3917, 0
    %v3970 = vsel %vm124, %v3919, 0
    %3972 = vmatprep.subr.bf16.mxu0 0
    %3973 = vmatpush1.bf16.xpose.msra.mxu0 %v3970
    %3974 = vmatprep.subr.bf16.mxu0 0
    %3975 = vmatpush1.bf16.xpose.msra.mxu0 0
    %3976 = vmatprep.subr.bf16.mxu0 0
    %3977 = vmatpush1.bf16.xpose.msra.mxu0 0
    %3978 = vmatprep.subr.bf16.mxu0 0
    %3979 = vmatpush1.bf16.xpose.msra.mxu0 0
    %3980 = vmatprep.subr.bf16.mxu0 0
    %3981 = vmatpush1.bf16.xpose.msra.mxu0 0
    %3982 = vmatprep.subr.bf16.mxu0 0
    %3983 = vmatpush1.bf16.xpose.msra.mxu0 0
    %3984 = vmatprep.subr.bf16.mxu0 0
    %3985 = vmatpush1.bf16.xpose.msra.mxu0 0
    %3986 = vmatprep.subr.bf16.mxu0 0
    %3987 = vmatpush1.bf16.xpose.msra.mxu0 0
    %3988 = vmatprep.subr.bf16.mxu0 0
    %3989 = vmatpush1.bf16.xpose.msra.mxu0 0
    %3990 = vmatprep.subr.bf16.mxu0 0
    %3991 = vmatpush1.bf16.xpose.msra.mxu0 0
    %3992 = vmatprep.subr.bf16.mxu0 0
    %3993 = vmatpush1.bf16.xpose.msra.mxu0 0
    %3994 = vmatprep.subr.bf16.mxu0 0
    %3995 = vmatpush1.bf16.xpose.msra.mxu0 0
    %3996 = vmatprep.subr.bf16.mxu0 0
    %3997 = vmatpush1.bf16.xpose.msra.mxu0 0
    %3998 = vmatprep.subr.bf16.mxu0 0
    %3999 = vmatpush1.bf16.xpose.msra.mxu0 0
    %4000 = vmatprep.subr.bf16.mxu0 0
    %4001 = vmatpush1.bf16.xpose.msra.mxu0 0
    %4002 = vmatprep.subr.bf16.mxu0 0
    %4003 = vmatpush1.bf16.xpose.msra.mxu0 0
    %4004 = vmatprep.mubr.bf16.mxu0 0
    %4005 = vmatmul.mubr.bf16.gmra.mrb[0].mxu0 %v3967
    %v4006 = vpop.f32.mrb[0].mxu0
    %v4007 = vadd.f32 0.0, %v4006
    %v4008 = vpop.f32.mrb[0].mxu0
    %v4009 = vpop.f32.mrb[0].mxu0
    %v4010 = vpop.f32.mrb[0].mxu0
    %4011 = vdwg.mxu0
    %v4012 = vmul.f32 %v3961, 0.35355338
    %v4013 = vmul.f32 %v4007, 0.35355338
    %v4014 = vsel %vm124, %v4012, -inf
    %4015 = vmax.xlane.f32.xlu0 %v4014
    %v4016 = vpop.xlane.xlu0 %4015
    %v4017 = vsel %vm124, %v4013, -inf
    %4018 = vmax.xlane.f32.xlu0 %v4017
    %v4019 = vpop.xlane.xlu0 %4018
    %v4020 = vsub.f32 %v4012, %v4016
    %v4021 = vsub.f32 %v4013, %v4019
    %v4022 = vmul.f32 %v4020, 1.442695
    %v4023 = vpow.pop %v4022
    %v4024 = vmul.f32 %v4021, 1.442695
    %v4025 = vpow.pop %v4024
    %v4026 = vsel %vm124, %v4023, 0.0
    %4027 = vadd.xlane.f32.xlu0 %v4026
    %v4028 = vpop.xlane.xlu0 %4027
    %v4029 = vsel %vm124, %v4025, 0.0
    %4030 = vadd.xlane.f32.xlu0 %v4029
    %v4031 = vpop.xlane.xlu0 %4030
    %v4032 = vpack.c.bf16 %v4023, %v4023
    %v4033 = vpack.c.bf16 %v4025, %v4025
    %4035 = vrot.lane.b32.xlu0 %v3918, 96
    %v4036 = vpop.permute.xlu0 %4035
    %v4038 = vsel %vm124, %v4032, 0
    %v4041 = vsel %vm261, %v4036, 0
    %4043 = vmatprep.subr.bf16.mxu0 0
    %4044 = vmatpush1.bf16.msra.mxu0 %v4041
    %4045 = vmatprep.subr.bf16.mxu0 0
    %4046 = vmatpush1.bf16.msra.mxu0 0
    %4047 = vmatprep.subr.bf16.mxu0 0
    %4048 = vmatpush1.bf16.msra.mxu0 0
    %4049 = vmatprep.subr.bf16.mxu0 0
    %4050 = vmatpush1.bf16.msra.mxu0 0
    %4051 = vmatprep.subr.bf16.mxu0 0
    %4052 = vmatpush1.bf16.msra.mxu0 0
    %4053 = vmatprep.subr.bf16.mxu0 0
    %4054 = vmatpush1.bf16.msra.mxu0 0
    %4055 = vmatprep.subr.bf16.mxu0 0
    %4056 = vmatpush1.bf16.msra.mxu0 0
    %4057 = vmatprep.subr.bf16.mxu0 0
    %4058 = vmatpush1.bf16.msra.mxu0 0
    %4059 = vmatprep.subr.bf16.mxu0 0
    %4060 = vmatpush1.bf16.msra.mxu0 0
    %4061 = vmatprep.subr.bf16.mxu0 0
    %4062 = vmatpush1.bf16.msra.mxu0 0
    %4063 = vmatprep.subr.bf16.mxu0 0
    %4064 = vmatpush1.bf16.msra.mxu0 0
    %4065 = vmatprep.subr.bf16.mxu0 0
    %4066 = vmatpush1.bf16.msra.mxu0 0
    %4067 = vmatprep.subr.bf16.mxu0 0
    %4068 = vmatpush1.bf16.msra.mxu0 0
    %4069 = vmatprep.subr.bf16.mxu0 0
    %4070 = vmatpush1.bf16.msra.mxu0 0
    %4071 = vmatprep.subr.bf16.mxu0 0
    %4072 = vmatpush1.bf16.msra.mxu0 0
    %4073 = vmatprep.subr.bf16.mxu0 0
    %4074 = vmatpush1.bf16.msra.mxu0 0
    %4075 = vmatprep.mubr.bf16.mxu0 0
    %4076 = vmatmul.mubr.bf16.gmra.mrb[0].mxu0 %v4038
    %v4077 = vpop.f32.mrb[0].mxu0
    %v4078 = vadd.f32 0.0, %v4077
    %v4079 = vpop.f32.mrb[0].mxu0
    %v4080 = vpop.f32.mrb[0].mxu0
    %v4081 = vpop.f32.mrb[0].mxu0
    %4082 = vdwg.mxu0
    %4084 = vrot.lane.b32.xlu0 %v3919, 96
    %v4085 = vpop.permute.xlu0 %4084
    %v4087 = vsel %vm124, %v4033, 0
    %v4090 = vsel %vm261, %v4085, 0
    %4092 = vmatprep.subr.bf16.mxu0 0
    %4093 = vmatpush1.bf16.msra.mxu0 %v4090
    %4094 = vmatprep.subr.bf16.mxu0 0
    %4095 = vmatpush1.bf16.msra.mxu0 0
    %4096 = vmatprep.subr.bf16.mxu0 0
    %4097 = vmatpush1.bf16.msra.mxu0 0
    %4098 = vmatprep.subr.bf16.mxu0 0
    %4099 = vmatpush1.bf16.msra.mxu0 0
    %4100 = vmatprep.subr.bf16.mxu0 0
    %4101 = vmatpush1.bf16.msra.mxu0 0
    %4102 = vmatprep.subr.bf16.mxu0 0
    %4103 = vmatpush1.bf16.msra.mxu0 0
    %4104 = vmatprep.subr.bf16.mxu0 0
    %4105 = vmatpush1.bf16.msra.mxu0 0
    %4106 = vmatprep.subr.bf16.mxu0 0
    %4107 = vmatpush1.bf16.msra.mxu0 0
    %4108 = vmatprep.subr.bf16.mxu0 0
    %4109 = vmatpush1.bf16.msra.mxu0 0
    %4110 = vmatprep.subr.bf16.mxu0 0
    %4111 = vmatpush1.bf16.msra.mxu0 0
    %4112 = vmatprep.subr.bf16.mxu0 0
    %4113 = vmatpush1.bf16.msra.mxu0 0
    %4114 = vmatprep.subr.bf16.mxu0 0
    %4115 = vmatpush1.bf16.msra.mxu0 0
    %4116 = vmatprep.subr.bf16.mxu0 0
    %4117 = vmatpush1.bf16.msra.mxu0 0
    %4118 = vmatprep.subr.bf16.mxu0 0
    %4119 = vmatpush1.bf16.msra.mxu0 0
    %4120 = vmatprep.subr.bf16.mxu0 0
    %4121 = vmatpush1.bf16.msra.mxu0 0
    %4122 = vmatprep.subr.bf16.mxu0 0
    %4123 = vmatpush1.bf16.msra.mxu0 0
    %4124 = vmatprep.mubr.bf16.mxu0 0
    %4125 = vmatmul.mubr.bf16.gmra.mrb[0].mxu0 %v4087
    %v4126 = vpop.f32.mrb[0].mxu0
    %v4127 = vadd.f32 0.0, %v4126
    %v4128 = vpop.f32.mrb[0].mxu0
    %v4129 = vpop.f32.mrb[0].mxu0
    %v4130 = vpop.f32.mrb[0].mxu0
    %4131 = vdwg.mxu0
    %v4132 = vrcp.pop %v4028
    %v4133 = vrcp.pop %v4031
    %v4134 = vmul.f32 %v4078, %v4132
    %v4135 = vmul.f32 %v4127, %v4133
    %4137 = vrot.lane.b32.xlu0 %v3916, 120
    %v4138 = vpop.permute.xlu0 %4137
    %4139 = vrot.lane.b32.xlu0 %v3918, 120
    %v4140 = vpop.permute.xlu0 %4139
    %v4142 = vsel %vm124, %v4138, 0
    %v4145 = vsel %vm124, %v4140, 0
    %4147 = vmatprep.subr.bf16.mxu0 0
    %4148 = vmatpush1.bf16.xpose.msra.mxu0 %v4145
    %4149 = vmatprep.subr.bf16.mxu0 0
    %4150 = vmatpush1.bf16.xpose.msra.mxu0 0
    %4151 = vmatprep.subr.bf16.mxu0 0
    %4152 = vmatpush1.bf16.xpose.msra.mxu0 0
    %4153 = vmatprep.subr.bf16.mxu0 0
    %4154 = vmatpush1.bf16.xpose.msra.mxu0 0
    %4155 = vmatprep.subr.bf16.mxu0 0
    %4156 = vmatpush1.bf16.xpose.msra.mxu0 0
    %4157 = vmatprep.subr.bf16.mxu0 0
    %4158 = vmatpush1.bf16.xpose.msra.mxu0 0
    %4159 = vmatprep.subr.bf16.mxu0 0
    %4160 = vmatpush1.bf16.xpose.msra.mxu0 0
    %4161 = vmatprep.subr.bf16.mxu0 0
    %4162 = vmatpush1.bf16.xpose.msra.mxu0 0
    %4163 = vmatprep.subr.bf16.mxu0 0
    %4164 = vmatpush1.bf16.xpose.msra.mxu0 0
    %4165 = vmatprep.subr.bf16.mxu0 0
    %4166 = vmatpush1.bf16.xpose.msra.mxu0 0
    %4167 = vmatprep.subr.bf16.mxu0 0
    %4168 = vmatpush1.bf16.xpose.msra.mxu0 0
    %4169 = vmatprep.subr.bf16.mxu0 0
    %4170 = vmatpush1.bf16.xpose.msra.mxu0 0
    %4171 = vmatprep.subr.bf16.mxu0 0
    %4172 = vmatpush1.bf16.xpose.msra.mxu0 0
    %4173 = vmatprep.subr.bf16.mxu0 0
    %4174 = vmatpush1.bf16.xpose.msra.mxu0 0
    %4175 = vmatprep.subr.bf16.mxu0 0
    %4176 = vmatpush1.bf16.xpose.msra.mxu0 0
    %4177 = vmatprep.subr.bf16.mxu0 0
    %4178 = vmatpush1.bf16.xpose.msra.mxu0 0
    %4179 = vmatprep.mubr.bf16.mxu0 0
    %4180 = vmatmul.mubr.bf16.gmra.mrb[0].mxu0 %v4142
    %v4181 = vpop.f32.mrb[0].mxu0
    %v4182 = vadd.f32 0.0, %v4181
    %v4183 = vpop.f32.mrb[0].mxu0
    %v4184 = vpop.f32.mrb[0].mxu0
    %v4185 = vpop.f32.mrb[0].mxu0
    %4186 = vdwg.mxu0
    %4188 = vrot.lane.b32.xlu0 %v3917, 120
    %v4189 = vpop.permute.xlu0 %4188
    %4190 = vrot.lane.b32.xlu0 %v3919, 120
    %v4191 = vpop.permute.xlu0 %4190
    %v4193 = vsel %vm124, %v4189, 0
    %v4196 = vsel %vm124, %v4191, 0
    %4198 = vmatprep.subr.bf16.mxu0 0
    %4199 = vmatpush1.bf16.xpose.msra.mxu0 %v4196
    %4200 = vmatprep.subr.bf16.mxu0 0
    %4201 = vmatpush1.bf16.xpose.msra.mxu0 0
    %4202 = vmatprep.subr.bf16.mxu0 0
    %4203 = vmatpush1.bf16.xpose.msra.mxu0 0
    %4204 = vmatprep.subr.bf16.mxu0 0
    %4205 = vmatpush1.bf16.xpose.msra.mxu0 0
    %4206 = vmatprep.subr.bf16.mxu0 0
    %4207 = vmatpush1.bf16.xpose.msra.mxu0 0
    %4208 = vmatprep.subr.bf16.mxu0 0
    %4209 = vmatpush1.bf16.xpose.msra.mxu0 0
    %4210 = vmatprep.subr.bf16.mxu0 0
    %4211 = vmatpush1.bf16.xpose.msra.mxu0 0
    %4212 = vmatprep.subr.bf16.mxu0 0
    %4213 = vmatpush1.bf16.xpose.msra.mxu0 0
    %4214 = vmatprep.subr.bf16.mxu0 0
    %4215 = vmatpush1.bf16.xpose.msra.mxu0 0
    %4216 = vmatprep.subr.bf16.mxu0 0
    %4217 = vmatpush1.bf16.xpose.msra.mxu0 0
    %4218 = vmatprep.subr.bf16.mxu0 0
    %4219 = vmatpush1.bf16.xpose.msra.mxu0 0
    %4220 = vmatprep.subr.bf16.mxu0 0
    %4221 = vmatpush1.bf16.xpose.msra.mxu0 0
    %4222 = vmatprep.subr.bf16.mxu0 0
    %4223 = vmatpush1.bf16.xpose.msra.mxu0 0
    %4224 = vmatprep.subr.bf16.mxu0 0
    %4225 = vmatpush1.bf16.xpose.msra.mxu0 0
    %4226 = vmatprep.subr.bf16.mxu0 0
    %4227 = vmatpush1.bf16.xpose.msra.mxu0 0
    %4228 = vmatprep.subr.bf16.mxu0 0
    %4229 = vmatpush1.bf16.xpose.msra.mxu0 0
    %4230 = vmatprep.mubr.bf16.mxu0 0
    %4231 = vmatmul.mubr.bf16.gmra.mrb[0].mxu0 %v4193
    %v4232 = vpop.f32.mrb[0].mxu0
    %v4233 = vadd.f32 0.0, %v4232
    %v4234 = vpop.f32.mrb[0].mxu0
    %v4235 = vpop.f32.mrb[0].mxu0
    %v4236 = vpop.f32.mrb[0].mxu0
    %4237 = vdwg.mxu0
    %v4238 = vmul.f32 %v4182, 0.35355338
    %v4239 = vmul.f32 %v4233, 0.35355338
    %v4240 = vsel %vm124, %v4238, -inf
    %4241 = vmax.xlane.f32.xlu0 %v4240
    %v4242 = vpop.xlane.xlu0 %4241
    %v4243 = vsel %vm124, %v4239, -inf
    %4244 = vmax.xlane.f32.xlu0 %v4243
    %v4245 = vpop.xlane.xlu0 %4244
    %v4246 = vsub.f32 %v4238, %v4242
    %v4247 = vsub.f32 %v4239, %v4245
    %v4248 = vmul.f32 %v4246, 1.442695
    %v4249 = vpow.pop %v4248
    %v4250 = vmul.f32 %v4247, 1.442695
    %v4251 = vpow.pop %v4250
    %v4252 = vsel %vm124, %v4249, 0.0
    %4253 = vadd.xlane.f32.xlu0 %v4252
    %v4254 = vpop.xlane.xlu0 %4253
    %v4255 = vsel %vm124, %v4251, 0.0
    %4256 = vadd.xlane.f32.xlu0 %v4255
    %v4257 = vpop.xlane.xlu0 %4256
    %v4258 = vpack.c.bf16 %v4249, %v4249
    %v4259 = vpack.c.bf16 %v4251, %v4251
    %4260 = vrot.lane.b32.xlu0 %v3918, 88
    %v4261 = vpop.permute.xlu0 %4260
    %v4263 = vsel %vm124, %v4258, 0
    %v4266 = vsel %vm261, %v4261, 0
    %4268 = vmatprep.subr.bf16.mxu0 0
    %4269 = vmatpush1.bf16.msra.mxu0 %v4266
    %4270 = vmatprep.subr.bf16.mxu0 0
    %4271 = vmatpush1.bf16.msra.mxu0 0
    %4272 = vmatprep.subr.bf16.mxu0 0
    %4273 = vmatpush1.bf16.msra.mxu0 0
    %4274 = vmatprep.subr.bf16.mxu0 0
    %4275 = vmatpush1.bf16.msra.mxu0 0
    %4276 = vmatprep.subr.bf16.mxu0 0
    %4277 = vmatpush1.bf16.msra.mxu0 0
    %4278 = vmatprep.subr.bf16.mxu0 0
    %4279 = vmatpush1.bf16.msra.mxu0 0
    %4280 = vmatprep.subr.bf16.mxu0 0
    %4281 = vmatpush1.bf16.msra.mxu0 0
    %4282 = vmatprep.subr.bf16.mxu0 0
    %4283 = vmatpush1.bf16.msra.mxu0 0
    %4284 = vmatprep.subr.bf16.mxu0 0
    %4285 = vmatpush1.bf16.msra.mxu0 0
    %4286 = vmatprep.subr.bf16.mxu0 0
    %4287 = vmatpush1.bf16.msra.mxu0 0
    %4288 = vmatprep.subr.bf16.mxu0 0
    %4289 = vmatpush1.bf16.msra.mxu0 0
    %4290 = vmatprep.subr.bf16.mxu0 0
    %4291 = vmatpush1.bf16.msra.mxu0 0
    %4292 = vmatprep.subr.bf16.mxu0 0
    %4293 = vmatpush1.bf16.msra.mxu0 0
    %4294 = vmatprep.subr.bf16.mxu0 0
    %4295 = vmatpush1.bf16.msra.mxu0 0
    %4296 = vmatprep.subr.bf16.mxu0 0
    %4297 = vmatpush1.bf16.msra.mxu0 0
    %4298 = vmatprep.subr.bf16.mxu0 0
    %4299 = vmatpush1.bf16.msra.mxu0 0
    %4300 = vmatprep.mubr.bf16.mxu0 0
    %4301 = vmatmul.mubr.bf16.gmra.mrb[0].mxu0 %v4263
    %v4302 = vpop.f32.mrb[0].mxu0
    %v4303 = vadd.f32 0.0, %v4302
    %v4304 = vpop.f32.mrb[0].mxu0
    %v4305 = vpop.f32.mrb[0].mxu0
    %v4306 = vpop.f32.mrb[0].mxu0
    %4307 = vdwg.mxu0
    %4308 = vrot.lane.b32.xlu0 %v3919, 88
    %v4309 = vpop.permute.xlu0 %4308
    %v4311 = vsel %vm124, %v4259, 0
    %v4314 = vsel %vm261, %v4309, 0
    %4316 = vmatprep.subr.bf16.mxu0 0
    %4317 = vmatpush1.bf16.msra.mxu0 %v4314
    %4318 = vmatprep.subr.bf16.mxu0 0
    %4319 = vmatpush1.bf16.msra.mxu0 0
    %4320 = vmatprep.subr.bf16.mxu0 0
    %4321 = vmatpush1.bf16.msra.mxu0 0
    %4322 = vmatprep.subr.bf16.mxu0 0
    %4323 = vmatpush1.bf16.msra.mxu0 0
    %4324 = vmatprep.subr.bf16.mxu0 0
    %4325 = vmatpush1.bf16.msra.mxu0 0
    %4326 = vmatprep.subr.bf16.mxu0 0
    %4327 = vmatpush1.bf16.msra.mxu0 0
    %4328 = vmatprep.subr.bf16.mxu0 0
    %4329 = vmatpush1.bf16.msra.mxu0 0
    %4330 = vmatprep.subr.bf16.mxu0 0
    %4331 = vmatpush1.bf16.msra.mxu0 0
    %4332 = vmatprep.subr.bf16.mxu0 0
    %4333 = vmatpush1.bf16.msra.mxu0 0
    %4334 = vmatprep.subr.bf16.mxu0 0
    %4335 = vmatpush1.bf16.msra.mxu0 0
    %4336 = vmatprep.subr.bf16.mxu0 0
    %4337 = vmatpush1.bf16.msra.mxu0 0
    %4338 = vmatprep.subr.bf16.mxu0 0
    %4339 = vmatpush1.bf16.msra.mxu0 0
    %4340 = vmatprep.subr.bf16.mxu0 0
    %4341 = vmatpush1.bf16.msra.mxu0 0
    %4342 = vmatprep.subr.bf16.mxu0 0
    %4343 = vmatpush1.bf16.msra.mxu0 0
    %4344 = vmatprep.subr.bf16.mxu0 0
    %4345 = vmatpush1.bf16.msra.mxu0 0
    %4346 = vmatprep.subr.bf16.mxu0 0
    %4347 = vmatpush1.bf16.msra.mxu0 0
    %4348 = vmatprep.mubr.bf16.mxu0 0
    %4349 = vmatmul.mubr.bf16.gmra.mrb[0].mxu0 %v4311
    %v4350 = vpop.f32.mrb[0].mxu0
    %v4351 = vadd.f32 0.0, %v4350
    %v4352 = vpop.f32.mrb[0].mxu0
    %v4353 = vpop.f32.mrb[0].mxu0
    %v4354 = vpop.f32.mrb[0].mxu0
    %4355 = vdwg.mxu0
    %v4356 = vrcp.pop %v4254
    %v4357 = vrcp.pop %v4257
    %v4358 = vmul.f32 %v4303, %v4356
    %v4359 = vmul.f32 %v4351, %v4357
    %4360 = vrot.lane.b32.xlu0 %v3916, 112
    %v4361 = vpop.permute.xlu0 %4360
    %4362 = vrot.lane.b32.xlu0 %v3918, 112
    %v4363 = vpop.permute.xlu0 %4362
    %v4365 = vsel %vm124, %v4361, 0
    %v4368 = vsel %vm124, %v4363, 0
    %4370 = vmatprep.subr.bf16.mxu0 0
    %4371 = vmatpush1.bf16.xpose.msra.mxu0 %v4368
    %4372 = vmatprep.subr.bf16.mxu0 0
    %4373 = vmatpush1.bf16.xpose.msra.mxu0 0
    %4374 = vmatprep.subr.bf16.mxu0 0
    %4375 = vmatpush1.bf16.xpose.msra.mxu0 0
    %4376 = vmatprep.subr.bf16.mxu0 0
    %4377 = vmatpush1.bf16.xpose.msra.mxu0 0
    %4378 = vmatprep.subr.bf16.mxu0 0
    %4379 = vmatpush1.bf16.xpose.msra.mxu0 0
    %4380 = vmatprep.subr.bf16.mxu0 0
    %4381 = vmatpush1.bf16.xpose.msra.mxu0 0
    %4382 = vmatprep.subr.bf16.mxu0 0
    %4383 = vmatpush1.bf16.xpose.msra.mxu0 0
    %4384 = vmatprep.subr.bf16.mxu0 0
    %4385 = vmatpush1.bf16.xpose.msra.mxu0 0
    %4386 = vmatprep.subr.bf16.mxu0 0
    %4387 = vmatpush1.bf16.xpose.msra.mxu0 0
    %4388 = vmatprep.subr.bf16.mxu0 0
    %4389 = vmatpush1.bf16.xpose.msra.mxu0 0
    %4390 = vmatprep.subr.bf16.mxu0 0
    %4391 = vmatpush1.bf16.xpose.msra.mxu0 0
    %4392 = vmatprep.subr.bf16.mxu0 0
    %4393 = vmatpush1.bf16.xpose.msra.mxu0 0
    %4394 = vmatprep.subr.bf16.mxu0 0
    %4395 = vmatpush1.bf16.xpose.msra.mxu0 0
    %4396 = vmatprep.subr.bf16.mxu0 0
    %4397 = vmatpush1.bf16.xpose.msra.mxu0 0
    %4398 = vmatprep.subr.bf16.mxu0 0
    %4399 = vmatpush1.bf16.xpose.msra.mxu0 0
    %4400 = vmatprep.subr.bf16.mxu0 0
    %4401 = vmatpush1.bf16.xpose.msra.mxu0 0
    %4402 = vmatprep.mubr.bf16.mxu0 0
    %4403 = vmatmul.mubr.bf16.gmra.mrb[0].mxu0 %v4365
    %v4404 = vpop.f32.mrb[0].mxu0
    %v4405 = vadd.f32 0.0, %v4404
    %v4406 = vpop.f32.mrb[0].mxu0
    %v4407 = vpop.f32.mrb[0].mxu0
    %v4408 = vpop.f32.mrb[0].mxu0
    %4409 = vdwg.mxu0
    %4410 = vrot.lane.b32.xlu0 %v3917, 112
    %v4411 = vpop.permute.xlu0 %4410
    %4412 = vrot.lane.b32.xlu0 %v3919, 112
    %v4413 = vpop.permute.xlu0 %4412
    %v4415 = vsel %vm124, %v4411, 0
    %v4418 = vsel %vm124, %v4413, 0
    %4420 = vmatprep.subr.bf16.mxu0 0
    %4421 = vmatpush1.bf16.xpose.msra.mxu0 %v4418
    %4422 = vmatprep.subr.bf16.mxu0 0
    %4423 = vmatpush1.bf16.xpose.msra.mxu0 0
    %4424 = vmatprep.subr.bf16.mxu0 0
    %4425 = vmatpush1.bf16.xpose.msra.mxu0 0
    %4426 = vmatprep.subr.bf16.mxu0 0
    %4427 = vmatpush1.bf16.xpose.msra.mxu0 0
    %4428 = vmatprep.subr.bf16.mxu0 0
    %4429 = vmatpush1.bf16.xpose.msra.mxu0 0
    %4430 = vmatprep.subr.bf16.mxu0 0
    %4431 = vmatpush1.bf16.xpose.msra.mxu0 0
    %4432 = vmatprep.subr.bf16.mxu0 0
    %4433 = vmatpush1.bf16.xpose.msra.mxu0 0
    %4434 = vmatprep.subr.bf16.mxu0 0
    %4435 = vmatpush1.bf16.xpose.msra.mxu0 0
    %4436 = vmatprep.subr.bf16.mxu0 0
    %4437 = vmatpush1.bf16.xpose.msra.mxu0 0
    %4438 = vmatprep.subr.bf16.mxu0 0
    %4439 = vmatpush1.bf16.xpose.msra.mxu0 0
    %4440 = vmatprep.subr.bf16.mxu0 0
    %4441 = vmatpush1.bf16.xpose.msra.mxu0 0
    %4442 = vmatprep.subr.bf16.mxu0 0
    %4443 = vmatpush1.bf16.xpose.msra.mxu0 0
    %4444 = vmatprep.subr.bf16.mxu0 0
    %4445 = vmatpush1.bf16.xpose.msra.mxu0 0
    %4446 = vmatprep.subr.bf16.mxu0 0
    %4447 = vmatpush1.bf16.xpose.msra.mxu0 0
    %4448 = vmatprep.subr.bf16.mxu0 0
    %4449 = vmatpush1.bf16.xpose.msra.mxu0 0
    %4450 = vmatprep.subr.bf16.mxu0 0
    %4451 = vmatpush1.bf16.xpose.msra.mxu0 0
    %4452 = vmatprep.mubr.bf16.mxu0 0
    %4453 = vmatmul.mubr.bf16.gmra.mrb[0].mxu0 %v4415
    %v4454 = vpop.f32.mrb[0].mxu0
    %v4455 = vadd.f32 0.0, %v4454
    %v4456 = vpop.f32.mrb[0].mxu0
    %v4457 = vpop.f32.mrb[0].mxu0
    %v4458 = vpop.f32.mrb[0].mxu0
    %4459 = vdwg.mxu0
    %v4460 = vmul.f32 %v4405, 0.35355338
    %v4461 = vmul.f32 %v4455, 0.35355338
    %v4462 = vsel %vm124, %v4460, -inf
    %4463 = vmax.xlane.f32.xlu0 %v4462
    %v4464 = vpop.xlane.xlu0 %4463
    %v4465 = vsel %vm124, %v4461, -inf
    %4466 = vmax.xlane.f32.xlu0 %v4465
    %v4467 = vpop.xlane.xlu0 %4466
    %v4468 = vsub.f32 %v4460, %v4464
    %v4469 = vsub.f32 %v4461, %v4467
    %v4470 = vmul.f32 %v4468, 1.442695
    %v4471 = vpow.pop %v4470
    %v4472 = vmul.f32 %v4469, 1.442695
    %v4473 = vpow.pop %v4472
    %v4474 = vsel %vm124, %v4471, 0.0
    %4475 = vadd.xlane.f32.xlu0 %v4474
    %v4476 = vpop.xlane.xlu0 %4475
    %v4477 = vsel %vm124, %v4473, 0.0
    %4478 = vadd.xlane.f32.xlu0 %v4477
    %v4479 = vpop.xlane.xlu0 %4478
    %v4480 = vpack.c.bf16 %v4471, %v4471
    %v4481 = vpack.c.bf16 %v4473, %v4473
    %4482 = vrot.lane.b32.xlu0 %v3918, 80
    %v4483 = vpop.permute.xlu0 %4482
    %v4485 = vsel %vm124, %v4480, 0
    %v4488 = vsel %vm261, %v4483, 0
    %4490 = vmatprep.subr.bf16.mxu0 0
    %4491 = vmatpush1.bf16.msra.mxu0 %v4488
    %4492 = vmatprep.subr.bf16.mxu0 0
    %4493 = vmatpush1.bf16.msra.mxu0 0
    %4494 = vmatprep.subr.bf16.mxu0 0
    %4495 = vmatpush1.bf16.msra.mxu0 0
    %4496 = vmatprep.subr.bf16.mxu0 0
    %4497 = vmatpush1.bf16.msra.mxu0 0
    %4498 = vmatprep.subr.bf16.mxu0 0
    %4499 = vmatpush1.bf16.msra.mxu0 0
    %4500 = vmatprep.subr.bf16.mxu0 0
    %4501 = vmatpush1.bf16.msra.mxu0 0
    %4502 = vmatprep.subr.bf16.mxu0 0
    %4503 = vmatpush1.bf16.msra.mxu0 0
    %4504 = vmatprep.subr.bf16.mxu0 0
    %4505 = vmatpush1.bf16.msra.mxu0 0
    %4506 = vmatprep.subr.bf16.mxu0 0
    %4507 = vmatpush1.bf16.msra.mxu0 0
    %4508 = vmatprep.subr.bf16.mxu0 0
    %4509 = vmatpush1.bf16.msra.mxu0 0
    %4510 = vmatprep.subr.bf16.mxu0 0
    %4511 = vmatpush1.bf16.msra.mxu0 0
    %4512 = vmatprep.subr.bf16.mxu0 0
    %4513 = vmatpush1.bf16.msra.mxu0 0
    %4514 = vmatprep.subr.bf16.mxu0 0
    %4515 = vmatpush1.bf16.msra.mxu0 0
    %4516 = vmatprep.subr.bf16.mxu0 0
    %4517 = vmatpush1.bf16.msra.mxu0 0
    %4518 = vmatprep.subr.bf16.mxu0 0
    %4519 = vmatpush1.bf16.msra.mxu0 0
    %4520 = vmatprep.subr.bf16.mxu0 0
    %4521 = vmatpush1.bf16.msra.mxu0 0
    %4522 = vmatprep.mubr.bf16.mxu0 0
    %4523 = vmatmul.mubr.bf16.gmra.mrb[0].mxu0 %v4485
    %v4524 = vpop.f32.mrb[0].mxu0
    %v4525 = vadd.f32 0.0, %v4524
    %v4526 = vpop.f32.mrb[0].mxu0
    %v4527 = vpop.f32.mrb[0].mxu0
    %v4528 = vpop.f32.mrb[0].mxu0
    %4529 = vdwg.mxu0
    %4530 = vrot.lane.b32.xlu0 %v3919, 80
    %v4531 = vpop.permute.xlu0 %4530
    %v4533 = vsel %vm124, %v4481, 0
    %v4536 = vsel %vm261, %v4531, 0
    %4538 = vmatprep.subr.bf16.mxu0 0
    %4539 = vmatpush1.bf16.msra.mxu0 %v4536
    %4540 = vmatprep.subr.bf16.mxu0 0
    %4541 = vmatpush1.bf16.msra.mxu0 0
    %4542 = vmatprep.subr.bf16.mxu0 0
    %4543 = vmatpush1.bf16.msra.mxu0 0
    %4544 = vmatprep.subr.bf16.mxu0 0
    %4545 = vmatpush1.bf16.msra.mxu0 0
    %4546 = vmatprep.subr.bf16.mxu0 0
    %4547 = vmatpush1.bf16.msra.mxu0 0
    %4548 = vmatprep.subr.bf16.mxu0 0
    %4549 = vmatpush1.bf16.msra.mxu0 0
    %4550 = vmatprep.subr.bf16.mxu0 0
    %4551 = vmatpush1.bf16.msra.mxu0 0
    %4552 = vmatprep.subr.bf16.mxu0 0
    %4553 = vmatpush1.bf16.msra.mxu0 0
    %4554 = vmatprep.subr.bf16.mxu0 0
    %4555 = vmatpush1.bf16.msra.mxu0 0
    %4556 = vmatprep.subr.bf16.mxu0 0
    %4557 = vmatpush1.bf16.msra.mxu0 0
    %4558 = vmatprep.subr.bf16.mxu0 0
    %4559 = vmatpush1.bf16.msra.mxu0 0
    %4560 = vmatprep.subr.bf16.mxu0 0
    %4561 = vmatpush1.bf16.msra.mxu0 0
    %4562 = vmatprep.subr.bf16.mxu0 0
    %4563 = vmatpush1.bf16.msra.mxu0 0
    %4564 = vmatprep.subr.bf16.mxu0 0
    %4565 = vmatpush1.bf16.msra.mxu0 0
    %4566 = vmatprep.subr.bf16.mxu0 0
    %4567 = vmatpush1.bf16.msra.mxu0 0
    %4568 = vmatprep.subr.bf16.mxu0 0
    %4569 = vmatpush1.bf16.msra.mxu0 0
    %4570 = vmatprep.mubr.bf16.mxu0 0
    %4571 = vmatmul.mubr.bf16.gmra.mrb[0].mxu0 %v4533
    %v4572 = vpop.f32.mrb[0].mxu0
    %v4573 = vadd.f32 0.0, %v4572
    %v4574 = vpop.f32.mrb[0].mxu0
    %v4575 = vpop.f32.mrb[0].mxu0
    %v4576 = vpop.f32.mrb[0].mxu0
    %4577 = vdwg.mxu0
    %v4578 = vrcp.pop %v4476
    %v4579 = vrcp.pop %v4479
    %v4580 = vmul.f32 %v4525, %v4578
    %v4581 = vmul.f32 %v4573, %v4579
    %4582 = vrot.lane.b32.xlu0 %v3916, 104
    %v4583 = vpop.permute.xlu0 %4582
    %4584 = vrot.lane.b32.xlu0 %v3918, 104
    %v4585 = vpop.permute.xlu0 %4584
    %v4587 = vsel %vm124, %v4583, 0
    %v4590 = vsel %vm124, %v4585, 0
    %4592 = vmatprep.subr.bf16.mxu0 0
    %4593 = vmatpush1.bf16.xpose.msra.mxu0 %v4590
    %4594 = vmatprep.subr.bf16.mxu0 0
    %4595 = vmatpush1.bf16.xpose.msra.mxu0 0
    %4596 = vmatprep.subr.bf16.mxu0 0
    %4597 = vmatpush1.bf16.xpose.msra.mxu0 0
    %4598 = vmatprep.subr.bf16.mxu0 0
    %4599 = vmatpush1.bf16.xpose.msra.mxu0 0
    %4600 = vmatprep.subr.bf16.mxu0 0
    %4601 = vmatpush1.bf16.xpose.msra.mxu0 0
    %4602 = vmatprep.subr.bf16.mxu0 0
    %4603 = vmatpush1.bf16.xpose.msra.mxu0 0
    %4604 = vmatprep.subr.bf16.mxu0 0
    %4605 = vmatpush1.bf16.xpose.msra.mxu0 0
    %4606 = vmatprep.subr.bf16.mxu0 0
    %4607 = vmatpush1.bf16.xpose.msra.mxu0 0
    %4608 = vmatprep.subr.bf16.mxu0 0
    %4609 = vmatpush1.bf16.xpose.msra.mxu0 0
    %4610 = vmatprep.subr.bf16.mxu0 0
    %4611 = vmatpush1.bf16.xpose.msra.mxu0 0
    %4612 = vmatprep.subr.bf16.mxu0 0
    %4613 = vmatpush1.bf16.xpose.msra.mxu0 0
    %4614 = vmatprep.subr.bf16.mxu0 0
    %4615 = vmatpush1.bf16.xpose.msra.mxu0 0
    %4616 = vmatprep.subr.bf16.mxu0 0
    %4617 = vmatpush1.bf16.xpose.msra.mxu0 0
    %4618 = vmatprep.subr.bf16.mxu0 0
    %4619 = vmatpush1.bf16.xpose.msra.mxu0 0
    %4620 = vmatprep.subr.bf16.mxu0 0
    %4621 = vmatpush1.bf16.xpose.msra.mxu0 0
    %4622 = vmatprep.subr.bf16.mxu0 0
    %4623 = vmatpush1.bf16.xpose.msra.mxu0 0
    %4624 = vmatprep.mubr.bf16.mxu0 0
    %4625 = vmatmul.mubr.bf16.gmra.mrb[0].mxu0 %v4587
    %v4626 = vpop.f32.mrb[0].mxu0
    %v4627 = vadd.f32 0.0, %v4626
    %v4628 = vpop.f32.mrb[0].mxu0
    %v4629 = vpop.f32.mrb[0].mxu0
    %v4630 = vpop.f32.mrb[0].mxu0
    %4631 = vdwg.mxu0
    %4632 = vrot.lane.b32.xlu0 %v3917, 104
    %v4633 = vpop.permute.xlu0 %4632
    %4634 = vrot.lane.b32.xlu0 %v3919, 104
    %v4635 = vpop.permute.xlu0 %4634
    %v4637 = vsel %vm124, %v4633, 0
    %v4640 = vsel %vm124, %v4635, 0
    %4642 = vmatprep.subr.bf16.mxu0 0
    %4643 = vmatpush1.bf16.xpose.msra.mxu0 %v4640
    %4644 = vmatprep.subr.bf16.mxu0 0
    %4645 = vmatpush1.bf16.xpose.msra.mxu0 0
    %4646 = vmatprep.subr.bf16.mxu0 0
    %4647 = vmatpush1.bf16.xpose.msra.mxu0 0
    %4648 = vmatprep.subr.bf16.mxu0 0
    %4649 = vmatpush1.bf16.xpose.msra.mxu0 0
    %4650 = vmatprep.subr.bf16.mxu0 0
    %4651 = vmatpush1.bf16.xpose.msra.mxu0 0
    %4652 = vmatprep.subr.bf16.mxu0 0
    %4653 = vmatpush1.bf16.xpose.msra.mxu0 0
    %4654 = vmatprep.subr.bf16.mxu0 0
    %4655 = vmatpush1.bf16.xpose.msra.mxu0 0
    %4656 = vmatprep.subr.bf16.mxu0 0
    %4657 = vmatpush1.bf16.xpose.msra.mxu0 0
    %4658 = vmatprep.subr.bf16.mxu0 0
    %4659 = vmatpush1.bf16.xpose.msra.mxu0 0
    %4660 = vmatprep.subr.bf16.mxu0 0
    %4661 = vmatpush1.bf16.xpose.msra.mxu0 0
    %4662 = vmatprep.subr.bf16.mxu0 0
    %4663 = vmatpush1.bf16.xpose.msra.mxu0 0
    %4664 = vmatprep.subr.bf16.mxu0 0
    %4665 = vmatpush1.bf16.xpose.msra.mxu0 0
    %4666 = vmatprep.subr.bf16.mxu0 0
    %4667 = vmatpush1.bf16.xpose.msra.mxu0 0
    %4668 = vmatprep.subr.bf16.mxu0 0
    %4669 = vmatpush1.bf16.xpose.msra.mxu0 0
    %4670 = vmatprep.subr.bf16.mxu0 0
    %4671 = vmatpush1.bf16.xpose.msra.mxu0 0
    %4672 = vmatprep.subr.bf16.mxu0 0
    %4673 = vmatpush1.bf16.xpose.msra.mxu0 0
    %4674 = vmatprep.mubr.bf16.mxu0 0
    %4675 = vmatmul.mubr.bf16.gmra.mrb[0].mxu0 %v4637
    %v4676 = vpop.f32.mrb[0].mxu0
    %v4677 = vadd.f32 0.0, %v4676
    %v4678 = vpop.f32.mrb[0].mxu0
    %v4679 = vpop.f32.mrb[0].mxu0
    %v4680 = vpop.f32.mrb[0].mxu0
    %4681 = vdwg.mxu0
    %v4682 = vmul.f32 %v4627, 0.35355338
    %v4683 = vmul.f32 %v4677, 0.35355338
    %v4684 = vsel %vm124, %v4682, -inf
    %4685 = vmax.xlane.f32.xlu0 %v4684
    %v4686 = vpop.xlane.xlu0 %4685
    %v4687 = vsel %vm124, %v4683, -inf
    %4688 = vmax.xlane.f32.xlu0 %v4687
    %v4689 = vpop.xlane.xlu0 %4688
    %v4690 = vsub.f32 %v4682, %v4686
    %v4691 = vsub.f32 %v4683, %v4689
    %v4692 = vmul.f32 %v4690, 1.442695
    %v4693 = vpow.pop %v4692
    %v4694 = vmul.f32 %v4691, 1.442695
    %v4695 = vpow.pop %v4694
    %v4696 = vsel %vm124, %v4693, 0.0
    %4697 = vadd.xlane.f32.xlu0 %v4696
    %v4698 = vpop.xlane.xlu0 %4697
    %v4699 = vsel %vm124, %v4695, 0.0
    %4700 = vadd.xlane.f32.xlu0 %v4699
    %v4701 = vpop.xlane.xlu0 %4700
    %v4702 = vpack.c.bf16 %v4693, %v4693
    %v4703 = vpack.c.bf16 %v4695, %v4695
    %4704 = vrot.lane.b32.xlu0 %v3918, 72
    %v4705 = vpop.permute.xlu0 %4704
    %v4707 = vsel %vm124, %v4702, 0
    %v4710 = vsel %vm261, %v4705, 0
    %4712 = vmatprep.subr.bf16.mxu0 0
    %4713 = vmatpush1.bf16.msra.mxu0 %v4710
    %4714 = vmatprep.subr.bf16.mxu0 0
    %4715 = vmatpush1.bf16.msra.mxu0 0
    %4716 = vmatprep.subr.bf16.mxu0 0
    %4717 = vmatpush1.bf16.msra.mxu0 0
    %4718 = vmatprep.subr.bf16.mxu0 0
    %4719 = vmatpush1.bf16.msra.mxu0 0
    %4720 = vmatprep.subr.bf16.mxu0 0
    %4721 = vmatpush1.bf16.msra.mxu0 0
    %4722 = vmatprep.subr.bf16.mxu0 0
    %4723 = vmatpush1.bf16.msra.mxu0 0
    %4724 = vmatprep.subr.bf16.mxu0 0
    %4725 = vmatpush1.bf16.msra.mxu0 0
    %4726 = vmatprep.subr.bf16.mxu0 0
    %4727 = vmatpush1.bf16.msra.mxu0 0
    %4728 = vmatprep.subr.bf16.mxu0 0
    %4729 = vmatpush1.bf16.msra.mxu0 0
    %4730 = vmatprep.subr.bf16.mxu0 0
    %4731 = vmatpush1.bf16.msra.mxu0 0
    %4732 = vmatprep.subr.bf16.mxu0 0
    %4733 = vmatpush1.bf16.msra.mxu0 0
    %4734 = vmatprep.subr.bf16.mxu0 0
    %4735 = vmatpush1.bf16.msra.mxu0 0
    %4736 = vmatprep.subr.bf16.mxu0 0
    %4737 = vmatpush1.bf16.msra.mxu0 0
    %4738 = vmatprep.subr.bf16.mxu0 0
    %4739 = vmatpush1.bf16.msra.mxu0 0
    %4740 = vmatprep.subr.bf16.mxu0 0
    %4741 = vmatpush1.bf16.msra.mxu0 0
    %4742 = vmatprep.subr.bf16.mxu0 0
    %4743 = vmatpush1.bf16.msra.mxu0 0
    %4744 = vmatprep.mubr.bf16.mxu0 0
    %4745 = vmatmul.mubr.bf16.gmra.mrb[0].mxu0 %v4707
    %v4746 = vpop.f32.mrb[0].mxu0
    %v4747 = vadd.f32 0.0, %v4746
    %v4748 = vpop.f32.mrb[0].mxu0
    %v4749 = vpop.f32.mrb[0].mxu0
    %v4750 = vpop.f32.mrb[0].mxu0
    %4751 = vdwg.mxu0
    %4752 = vrot.lane.b32.xlu0 %v3919, 72
    %v4753 = vpop.permute.xlu0 %4752
    %v4755 = vsel %vm124, %v4703, 0
    %v4758 = vsel %vm261, %v4753, 0
    %4760 = vmatprep.subr.bf16.mxu0 0
    %4761 = vmatpush1.bf16.msra.mxu0 %v4758
    %4762 = vmatprep.subr.bf16.mxu0 0
    %4763 = vmatpush1.bf16.msra.mxu0 0
    %4764 = vmatprep.subr.bf16.mxu0 0
    %4765 = vmatpush1.bf16.msra.mxu0 0
    %4766 = vmatprep.subr.bf16.mxu0 0
    %4767 = vmatpush1.bf16.msra.mxu0 0
    %4768 = vmatprep.subr.bf16.mxu0 0
    %4769 = vmatpush1.bf16.msra.mxu0 0
    %4770 = vmatprep.subr.bf16.mxu0 0
    %4771 = vmatpush1.bf16.msra.mxu0 0
    %4772 = vmatprep.subr.bf16.mxu0 0
    %4773 = vmatpush1.bf16.msra.mxu0 0
    %4774 = vmatprep.subr.bf16.mxu0 0
    %4775 = vmatpush1.bf16.msra.mxu0 0
    %4776 = vmatprep.subr.bf16.mxu0 0
    %4777 = vmatpush1.bf16.msra.mxu0 0
    %4778 = vmatprep.subr.bf16.mxu0 0
    %4779 = vmatpush1.bf16.msra.mxu0 0
    %4780 = vmatprep.subr.bf16.mxu0 0
    %4781 = vmatpush1.bf16.msra.mxu0 0
    %4782 = vmatprep.subr.bf16.mxu0 0
    %4783 = vmatpush1.bf16.msra.mxu0 0
    %4784 = vmatprep.subr.bf16.mxu0 0
    %4785 = vmatpush1.bf16.msra.mxu0 0
    %4786 = vmatprep.subr.bf16.mxu0 0
    %4787 = vmatpush1.bf16.msra.mxu0 0
    %4788 = vmatprep.subr.bf16.mxu0 0
    %4789 = vmatpush1.bf16.msra.mxu0 0
    %4790 = vmatprep.subr.bf16.mxu0 0
    %4791 = vmatpush1.bf16.msra.mxu0 0
    %4792 = vmatprep.mubr.bf16.mxu0 0
    %4793 = vmatmul.mubr.bf16.gmra.mrb[0].mxu0 %v4755
    %v4794 = vpop.f32.mrb[0].mxu0
    %v4795 = vadd.f32 0.0, %v4794
    %v4796 = vpop.f32.mrb[0].mxu0
    %v4797 = vpop.f32.mrb[0].mxu0
    %v4798 = vpop.f32.mrb[0].mxu0
    %4799 = vdwg.mxu0
    %v4800 = vrcp.pop %v4698
    %v4801 = vrcp.pop %v4701
    %v4802 = vmul.f32 %v4747, %v4800
    %v4803 = vmul.f32 %v4795, %v4801
    %4806 = vrot.lane.b32.xlu0 %v4358, 8
    %v4807 = vpop.permute.xlu0 %4806
    %4808 = vrot.lane.b32.xlu0 %v4359, 8
    %v4809 = vpop.permute.xlu0 %4808
    %4814 = vrot.lane.b32.xlu0 %v4580, 16
    %v4815 = vpop.permute.xlu0 %4814
    %4816 = vrot.lane.b32.xlu0 %v4581, 16
    %v4817 = vpop.permute.xlu0 %4816
    %4822 = vrot.lane.b32.xlu0 %v4802, 24
    %v4823 = vpop.permute.xlu0 %4822
    %4824 = vrot.lane.b32.xlu0 %v4803, 24
    %v4825 = vpop.permute.xlu0 %4824
    %v4828 = vsel %vm124, %v4134, %v4807
    %v4829 = vsel %vm124, %v4135, %v4809
    %v4830 = vsel %vm1055, %v4828, %v4815
    %v4831 = vsel %vm1055, %v4829, %v4817
    %v4832 = vsel %vm1058, %v4830, %v4823
    %v4833 = vsel %vm1058, %v4831, %v4825
    %v4834 = vpack.c.bf16 %v4833, %v4832
    %v4835 = vlaneseq
    %v4836 = vshrl.u32 %v4835, 7
    %v4837 = vsub.s32 0, %v4836
    %v4838 = vrot.slane %v3799, %v4837
    %v4843 = vunpack.c.l.b16 %v3794
    %v4844 = vunpack.c.l.b16 %v3795
    %v4845 = vunpack.c.l.b16 %v3796
    %v4846 = vunpack.c.l.b16 %v3797
    %v4847 = vpack.c.b16 %v4844, %v4843
    %v4848 = vpack.c.b16 %v4846, %v4845
    %v4852 = vsel %vm74, %v4834, 0
    %4854 = vmatprep.subr.bf16.mxu0 0
    %4855 = vmatpush1.bf16.msra.mxu0 %v4847
    %4856 = vmatprep.subr.bf16.mxu0 0
    %4857 = vmatpush1.bf16.msra.mxu0 %v4848
    %4858 = vmatprep.subr.bf16.mxu0 0
    %4859 = vmatpush1.bf16.msra.mxu0 0
    %4860 = vmatprep.subr.bf16.mxu0 0
    %4861 = vmatpush1.bf16.msra.mxu0 0
    %4862 = vmatprep.subr.bf16.mxu0 0
    %4863 = vmatpush1.bf16.msra.mxu0 0
    %4864 = vmatprep.subr.bf16.mxu0 0
    %4865 = vmatpush1.bf16.msra.mxu0 0
    %4866 = vmatprep.subr.bf16.mxu0 0
    %4867 = vmatpush1.bf16.msra.mxu0 0
    %4868 = vmatprep.subr.bf16.mxu0 0
    %4869 = vmatpush1.bf16.msra.mxu0 0
    %4870 = vmatprep.subr.bf16.mxu0 0
    %4871 = vmatpush1.bf16.msra.mxu0 0
    %4872 = vmatprep.subr.bf16.mxu0 0
    %4873 = vmatpush1.bf16.msra.mxu0 0
    %4874 = vmatprep.subr.bf16.mxu0 0
    %4875 = vmatpush1.bf16.msra.mxu0 0
    %4876 = vmatprep.subr.bf16.mxu0 0
    %4877 = vmatpush1.bf16.msra.mxu0 0
    %4878 = vmatprep.subr.bf16.mxu0 0
    %4879 = vmatpush1.bf16.msra.mxu0 0
    %4880 = vmatprep.subr.bf16.mxu0 0
    %4881 = vmatpush1.bf16.msra.mxu0 0
    %4882 = vmatprep.subr.bf16.mxu0 0
    %4883 = vmatpush1.bf16.msra.mxu0 0
    %4884 = vmatprep.subr.bf16.mxu0 0
    %4885 = vmatpush1.bf16.msra.mxu0 0
    %4886 = vmatprep.mubr.bf16.mxu0 0
    %4887 = vmatmul.mubr.bf16.gmra.mrb[0].mxu0 %v4852
    %v4888 = vpop.f32.mrb[0].mxu0
    %v4889 = vadd.f32 %v4838, %v4888
    %v4890 = vpop.f32.mrb[0].mxu0
    %v4891 = vpop.f32.mrb[0].mxu0
    %v4892 = vadd.f32 %v4838, %v4891
    %v4893 = vpop.f32.mrb[0].mxu0
    %4894 = vdwg.mxu0
    %v4895 = vadd.f32 %v3788, %v4889
    %v4896 = vadd.f32 %v3789, %v4892
    %v4897 = vld [vmem:[%s4 + $0x18] sm:$0x1]
    %v4898 = vld [vmem:[%s4 + $0x19] sm:$0x1]
    %v4899 = vsel %vm74, %v4895, 0.0
    %4900 = vadd.xlane.f32.xlu0 %v4899
    %v4901 = vpop.xlane.xlu0 %4900
    %v4902 = vsel %vm74, %v4896, 0.0
    %4903 = vadd.xlane.f32.xlu0 %v4902
    %v4904 = vpop.xlane.xlu0 %4903
    %v4905 = vmul.f32 %v4901, %v1132
    %v4906 = vmul.f32 %v4904, %v1132
    %v4907 = vsub.f32 %v4895, %v4905
    %v4908 = vsub.f32 %v4896, %v4906
    %v4909 = vmul.f32 %v4907, %v4907
    %v4910 = vmul.f32 %v4908, %v4908
    %v4911 = vsel %vm74, %v4909, 0.0
    %4912 = vadd.xlane.f32.xlu0 %v4911
    %v4913 = vpop.xlane.xlu0 %4912
    %v4914 = vsel %vm74, %v4910, 0.0
    %4915 = vadd.xlane.f32.xlu0 %v4914
    %v4916 = vpop.xlane.xlu0 %4915
    %v4917 = vmul.f32 %v4913, %v1132
    %v4918 = vmul.f32 %v4916, %v1132
    %v4919 = vadd.f32 %v4917, 1e-05
    %v4920 = vadd.f32 %v4918, 1e-05
    %v4921 = vrsqrt.pop %v4919
    %v4922 = vrsqrt.pop %v4920
    %v4923 = vmul.f32 %v4907, %v4921
    %v4924 = vmul.f32 %v4908, %v4922
    %v4925 = vlaneseq
    %v4926 = vshrl.u32 %v4925, 7
    %v4927 = vsub.s32 0, %v4926
    %v4928 = vrot.slane %v4897, %v4927
    %v4929 = vmul.f32 %v4923, %v4928
    %v4930 = vmul.f32 %v4924, %v4928
    %v4931 = vlaneseq
    %v4932 = vshrl.u32 %v4931, 7
    %v4933 = vsub.s32 0, %v4932
    %v4934 = vrot.slane %v4898, %v4933
    %v4935 = vadd.f32 %v4929, %v4934
    %v4936 = vadd.f32 %v4930, %v4934
    %v4937 = vld [vmem:[#allocation2 + $0xe0] sm:$0xf]
    %v4938 = vld [vmem:[#allocation2 + $0xe4] sm:$0xf]
    %v4939 = vld [vmem:[#allocation2 + $0xe8] sm:$0xf]
    %v4940 = vld [vmem:[#allocation2 + $0xec] sm:$0xf]
    %v4941 = vpack.c.bf16 %v4936, %v4935
    %v4942 = vld [vmem:[%s4 + $0x14] sm:$0x1]
    %v4943 = vlaneseq
    %v4944 = vshrl.u32 %v4943, 7
    %v4945 = vsub.s32 0, %v4944
    %v4946 = vrot.slane %v4942, %v4945
    %v4951 = vunpack.c.l.b16 %v4937
    %v4952 = vunpack.c.l.b16 %v4938
    %v4953 = vunpack.c.l.b16 %v4939
    %v4954 = vunpack.c.l.b16 %v4940
    %v4955 = vpack.c.b16 %v4952, %v4951
    %v4956 = vpack.c.b16 %v4954, %v4953
    %v4960 = vsel %vm74, %v4941, 0
    %4962 = vmatprep.subr.bf16.mxu0 0
    %4963 = vmatpush1.bf16.msra.mxu0 %v4955
    %4964 = vmatprep.subr.bf16.mxu0 0
    %4965 = vmatpush1.bf16.msra.mxu0 %v4956
    %4966 = vmatprep.subr.bf16.mxu0 0
    %4967 = vmatpush1.bf16.msra.mxu0 0
    %4968 = vmatprep.subr.bf16.mxu0 0
    %4969 = vmatpush1.bf16.msra.mxu0 0
    %4970 = vmatprep.subr.bf16.mxu0 0
    %4971 = vmatpush1.bf16.msra.mxu0 0
    %4972 = vmatprep.subr.bf16.mxu0 0
    %4973 = vmatpush1.bf16.msra.mxu0 0
    %4974 = vmatprep.subr.bf16.mxu0 0
    %4975 = vmatpush1.bf16.msra.mxu0 0
    %4976 = vmatprep.subr.bf16.mxu0 0
    %4977 = vmatpush1.bf16.msra.mxu0 0
    %4978 = vmatprep.subr.bf16.mxu0 0
    %4979 = vmatpush1.bf16.msra.mxu0 0
    %4980 = vmatprep.subr.bf16.mxu0 0
    %4981 = vmatpush1.bf16.msra.mxu0 0
    %4982 = vmatprep.subr.bf16.mxu0 0
    %4983 = vmatpush1.bf16.msra.mxu0 0
    %4984 = vmatprep.subr.bf16.mxu0 0
    %4985 = vmatpush1.bf16.msra.mxu0 0
    %4986 = vmatprep.subr.bf16.mxu0 0
    %4987 = vmatpush1.bf16.msra.mxu0 0
    %4988 = vmatprep.subr.bf16.mxu0 0
    %4989 = vmatpush1.bf16.msra.mxu0 0
    %4990 = vmatprep.subr.bf16.mxu0 0
    %4991 = vmatpush1.bf16.msra.mxu0 0
    %4992 = vmatprep.subr.bf16.mxu0 0
    %4993 = vmatpush1.bf16.msra.mxu0 0
    %4994 = vmatprep.mubr.bf16.mxu0 0
    %4995 = vmatmul.mubr.bf16.gmra.mrb[0].mxu0 %v4960
    %v4996 = vpop.f32.mrb[0].mxu0
    %v4997 = vadd.f32 %v4946, %v4996
    %v4998 = vpop.f32.mrb[0].mxu0
    %v4999 = vpop.f32.mrb[0].mxu0
    %v5000 = vadd.f32 %v4946, %v4999
    %v5001 = vpop.f32.mrb[0].mxu0
    %5002 = vdwg.mxu0
    %v5003 = vmax.f32 %v4997, 0.0
    %v5004 = vmax.f32 %v5000, 0.0
    %v5005 = vld [vmem:[#allocation2 + $0xf0] sm:$0xf]
    %v5006 = vld [vmem:[#allocation2 + $0xf4] sm:$0xf]
    %v5007 = vld [vmem:[#allocation2 + $0xf8] sm:$0xf]
    %v5008 = vld [vmem:[#allocation2 + $0xfc] sm:$0xf]
    %v5009 = vld [vmem:[#allocation2 + $0x100] sm:$0xf]
    %v5010 = vld [vmem:[#allocation2 + $0x104] sm:$0xf]
    %v5011 = vld [vmem:[#allocation2 + $0x108] sm:$0xf]
    %v5012 = vld [vmem:[#allocation2 + $0x10c] sm:$0xf]
    %v5013 = vpack.c.bf16 %v5004, %v5003
    %v5014 = vld [vmem:[%s4 + $0x15] sm:$0x1]
    %v5015 = vlaneseq
    %v5016 = vshrl.u32 %v5015, 7
    %v5017 = vsub.s32 0, %v5016
    %v5018 = vrot.slane %v5014, %v5017
    %v5027 = vunpack.c.l.b16 %v5005
    %v5028 = vunpack.c.l.b16 %v5006
    %v5029 = vunpack.c.l.b16 %v5007
    %v5030 = vunpack.c.l.b16 %v5008
    %v5031 = vunpack.c.l.b16 %v5009
    %v5032 = vunpack.c.l.b16 %v5010
    %v5033 = vunpack.c.l.b16 %v5011
    %v5034 = vunpack.c.l.b16 %v5012
    %v5035 = vpack.c.b16 %v5028, %v5027
    %v5036 = vpack.c.b16 %v5030, %v5029
    %v5037 = vpack.c.b16 %v5032, %v5031
    %v5038 = vpack.c.b16 %v5034, %v5033
    %v5044 = vsel %vm1271, %v5013, 0
    %5046 = vmatprep.subr.bf16.mxu0 0
    %5047 = vmatpush1.bf16.msra.mxu0 %v5035
    %5048 = vmatprep.subr.bf16.mxu0 0
    %5049 = vmatpush1.bf16.msra.mxu0 %v5036
    %5050 = vmatprep.subr.bf16.mxu0 0
    %5051 = vmatpush1.bf16.msra.mxu0 %v5037
    %5052 = vmatprep.subr.bf16.mxu0 0
    %5053 = vmatpush1.bf16.msra.mxu0 %v5038
    %5054 = vmatprep.subr.bf16.mxu0 0
    %5055 = vmatpush1.bf16.msra.mxu0 0
    %5056 = vmatprep.subr.bf16.mxu0 0
    %5057 = vmatpush1.bf16.msra.mxu0 0
    %5058 = vmatprep.subr.bf16.mxu0 0
    %5059 = vmatpush1.bf16.msra.mxu0 0
    %5060 = vmatprep.subr.bf16.mxu0 0
    %5061 = vmatpush1.bf16.msra.mxu0 0
    %5062 = vmatprep.subr.bf16.mxu0 0
    %5063 = vmatpush1.bf16.msra.mxu0 0
    %5064 = vmatprep.subr.bf16.mxu0 0
    %5065 = vmatpush1.bf16.msra.mxu0 0
    %5066 = vmatprep.subr.bf16.mxu0 0
    %5067 = vmatpush1.bf16.msra.mxu0 0
    %5068 = vmatprep.subr.bf16.mxu0 0
    %5069 = vmatpush1.bf16.msra.mxu0 0
    %5070 = vmatprep.subr.bf16.mxu0 0
    %5071 = vmatpush1.bf16.msra.mxu0 0
    %5072 = vmatprep.subr.bf16.mxu0 0
    %5073 = vmatpush1.bf16.msra.mxu0 0
    %5074 = vmatprep.subr.bf16.mxu0 0
    %5075 = vmatpush1.bf16.msra.mxu0 0
    %5076 = vmatprep.subr.bf16.mxu0 0
    %5077 = vmatpush1.bf16.msra.mxu0 0
    %5078 = vmatprep.mubr.bf16.mxu0 0
    %5079 = vmatmul.mubr.bf16.gmra.mrb[0].mxu0 %v5044
    %v5080 = vpop.f32.mrb[0].mxu0
    %v5081 = vadd.f32 %v5018, %v5080
    %v5082 = vpop.f32.mrb[0].mxu0
    %v5083 = vpop.f32.mrb[0].mxu0
    %v5084 = vadd.f32 %v5018, %v5083
    %v5085 = vpop.f32.mrb[0].mxu0
    %5086 = vdwg.mxu0
    %v5087 = vadd.f32 %v4935, %v5081
    %v5088 = vadd.f32 %v4936, %v5084
    %v5089 = vld [vmem:[%s4 + $0x1a] sm:$0x1]
    %v5090 = vld [vmem:[%s4 + $0x1b] sm:$0x1]
    %v5091 = vsel %vm74, %v5087, 0.0
    %5092 = vadd.xlane.f32.xlu0 %v5091
    %v5093 = vpop.xlane.xlu0 %5092
    %v5094 = vsel %vm74, %v5088, 0.0
    %5095 = vadd.xlane.f32.xlu0 %v5094
    %v5096 = vpop.xlane.xlu0 %5095
    %v5097 = vmul.f32 %v5093, %v1132
    %v5098 = vmul.f32 %v5096, %v1132
    %v5099 = vsub.f32 %v5087, %v5097
    %v5100 = vsub.f32 %v5088, %v5098
    %v5101 = vmul.f32 %v5099, %v5099
    %v5102 = vmul.f32 %v5100, %v5100
    %v5103 = vsel %vm74, %v5101, 0.0
    %5104 = vadd.xlane.f32.xlu0 %v5103
    %v5105 = vpop.xlane.xlu0 %5104
    %v5106 = vsel %vm74, %v5102, 0.0
    %5107 = vadd.xlane.f32.xlu0 %v5106
    %v5108 = vpop.xlane.xlu0 %5107
    %v5109 = vmul.f32 %v5105, %v1132
    %v5110 = vmul.f32 %v5108, %v1132
    %v5111 = vadd.f32 %v5109, 1e-05
    %v5112 = vadd.f32 %v5110, 1e-05
    %v5113 = vrsqrt.pop %v5111
    %v5114 = vrsqrt.pop %v5112
    %v5115 = vmul.f32 %v5099, %v5113
    %v5116 = vmul.f32 %v5100, %v5114
    %v5117 = vlaneseq
    %v5118 = vshrl.u32 %v5117, 7
    %v5119 = vsub.s32 0, %v5118
    %v5120 = vrot.slane %v5089, %v5119
    %v5121 = vmul.f32 %v5115, %v5120
    %v5122 = vmul.f32 %v5116, %v5120
    %v5123 = vlaneseq
    %v5124 = vshrl.u32 %v5123, 7
    %v5125 = vsub.s32 0, %v5124
    %v5126 = vrot.slane %v5090, %v5125
    %v5127 = vadd.f32 %v5121, %v5126
    %v5128 = vadd.f32 %v5122, %v5126
    %v5129 = vld [vmem:[#allocation2 + $0x110] sm:$0xf]
    %v5130 = vld [vmem:[#allocation2 + $0x114] sm:$0xf]
    %v5131 = vld [vmem:[#allocation2 + $0x118] sm:$0xf]
    %v5132 = vld [vmem:[#allocation2 + $0x11c] sm:$0xf]
    %v5133 = vld [vmem:[#allocation2 + $0x120] sm:$0xf]
    %v5134 = vld [vmem:[#allocation2 + $0x124] sm:$0xf]
    %v5135 = vld [vmem:[#allocation2 + $0x128] sm:$0xf]
    %v5136 = vld [vmem:[#allocation2 + $0x12c] sm:$0xf]
    %v5137 = vld [vmem:[%s4 + $0x1c] sm:$0x1]
    %v5138 = vld [vmem:[%s4 + $0x1d] sm:$0x1]
    %v5139 = vpack.c.bf16 %v5128, %v5127
    %v5140 = vlaneseq
    %v5141 = vshrl.u32 %v5140, 7
    %v5142 = vsub.s32 0, %v5141
    %v5143 = vrot.slane %v5137, %v5142
    %v5148 = vunpack.c.l.b16 %v5129
    %v5149 = vunpack.c.l.b16 %v5130
    %v5150 = vunpack.c.l.b16 %v5131
    %v5151 = vunpack.c.l.b16 %v5132
    %v5152 = vpack.c.b16 %v5149, %v5148
    %v5153 = vpack.c.b16 %v5151, %v5150
    %v5157 = vsel %vm74, %v5139, 0
    %5159 = vmatprep.subr.bf16.mxu0 0
    %5160 = vmatpush1.bf16.msra.mxu0 %v5152
    %5161 = vmatprep.subr.bf16.mxu0 0
    %5162 = vmatpush1.bf16.msra.mxu0 %v5153
    %5163 = vmatprep.subr.bf16.mxu0 0
    %5164 = vmatpush1.bf16.msra.mxu0 0
    %5165 = vmatprep.subr.bf16.mxu0 0
    %5166 = vmatpush1.bf16.msra.mxu0 0
    %5167 = vmatprep.subr.bf16.mxu0 0
    %5168 = vmatpush1.bf16.msra.mxu0 0
    %5169 = vmatprep.subr.bf16.mxu0 0
    %5170 = vmatpush1.bf16.msra.mxu0 0
    %5171 = vmatprep.subr.bf16.mxu0 0
    %5172 = vmatpush1.bf16.msra.mxu0 0
    %5173 = vmatprep.subr.bf16.mxu0 0
    %5174 = vmatpush1.bf16.msra.mxu0 0
    %5175 = vmatprep.subr.bf16.mxu0 0
    %5176 = vmatpush1.bf16.msra.mxu0 0
    %5177 = vmatprep.subr.bf16.mxu0 0
    %5178 = vmatpush1.bf16.msra.mxu0 0
    %5179 = vmatprep.subr.bf16.mxu0 0
    %5180 = vmatpush1.bf16.msra.mxu0 0
    %5181 = vmatprep.subr.bf16.mxu0 0
    %5182 = vmatpush1.bf16.msra.mxu0 0
    %5183 = vmatprep.subr.bf16.mxu0 0
    %5184 = vmatpush1.bf16.msra.mxu0 0
    %5185 = vmatprep.subr.bf16.mxu0 0
    %5186 = vmatpush1.bf16.msra.mxu0 0
    %5187 = vmatprep.subr.bf16.mxu0 0
    %5188 = vmatpush1.bf16.msra.mxu0 0
    %5189 = vmatprep.subr.bf16.mxu0 0
    %5190 = vmatpush1.bf16.msra.mxu0 0
    %5191 = vmatprep.mubr.bf16.mxu0 0
    %5192 = vmatmul.mubr.bf16.gmra.mrb[0].mxu0 %v5157
    %v5193 = vpop.f32.mrb[0].mxu0
    %v5194 = vadd.f32 %v5143, %v5193
    %v5195 = vpop.f32.mrb[0].mxu0
    %v5196 = vpop.f32.mrb[0].mxu0
    %v5197 = vadd.f32 %v5143, %v5196
    %v5198 = vpop.f32.mrb[0].mxu0
    %5199 = vdwg.mxu0
    %v5200 = vpack.c.bf16 %v5194, %v5194
    %v5201 = vpack.c.bf16 %v5197, %v5197
    %5203 = vrot.lane.b32.xlu0 %v5200, 96
    %v5204 = vpop.permute.xlu0 %5203
    %v5206 = vsel %vm124, %v5200, 0
    %v5209 = vsel %vm124, %v5204, 0
    %5211 = vmatprep.subr.bf16.mxu0 0
    %5212 = vmatpush1.bf16.xpose.msra.mxu0 %v5209
    %5213 = vmatprep.subr.bf16.mxu0 0
    %5214 = vmatpush1.bf16.xpose.msra.mxu0 0
    %5215 = vmatprep.subr.bf16.mxu0 0
    %5216 = vmatpush1.bf16.xpose.msra.mxu0 0
    %5217 = vmatprep.subr.bf16.mxu0 0
    %5218 = vmatpush1.bf16.xpose.msra.mxu0 0
    %5219 = vmatprep.subr.bf16.mxu0 0
    %5220 = vmatpush1.bf16.xpose.msra.mxu0 0
    %5221 = vmatprep.subr.bf16.mxu0 0
    %5222 = vmatpush1.bf16.xpose.msra.mxu0 0
    %5223 = vmatprep.subr.bf16.mxu0 0
    %5224 = vmatpush1.bf16.xpose.msra.mxu0 0
    %5225 = vmatprep.subr.bf16.mxu0 0
    %5226 = vmatpush1.bf16.xpose.msra.mxu0 0
    %5227 = vmatprep.subr.bf16.mxu0 0
    %5228 = vmatpush1.bf16.xpose.msra.mxu0 0
    %5229 = vmatprep.subr.bf16.mxu0 0
    %5230 = vmatpush1.bf16.xpose.msra.mxu0 0
    %5231 = vmatprep.subr.bf16.mxu0 0
    %5232 = vmatpush1.bf16.xpose.msra.mxu0 0
    %5233 = vmatprep.subr.bf16.mxu0 0
    %5234 = vmatpush1.bf16.xpose.msra.mxu0 0
    %5235 = vmatprep.subr.bf16.mxu0 0
    %5236 = vmatpush1.bf16.xpose.msra.mxu0 0
    %5237 = vmatprep.subr.bf16.mxu0 0
    %5238 = vmatpush1.bf16.xpose.msra.mxu0 0
    %5239 = vmatprep.subr.bf16.mxu0 0
    %5240 = vmatpush1.bf16.xpose.msra.mxu0 0
    %5241 = vmatprep.subr.bf16.mxu0 0
    %5242 = vmatpush1.bf16.xpose.msra.mxu0 0
    %5243 = vmatprep.mubr.bf16.mxu0 0
    %5244 = vmatmul.mubr.bf16.gmra.mrb[0].mxu0 %v5206
    %v5245 = vpop.f32.mrb[0].mxu0
    %v5246 = vadd.f32 0.0, %v5245
    %v5247 = vpop.f32.mrb[0].mxu0
    %v5248 = vpop.f32.mrb[0].mxu0
    %v5249 = vpop.f32.mrb[0].mxu0
    %5250 = vdwg.mxu0
    %5252 = vrot.lane.b32.xlu0 %v5201, 96
    %v5253 = vpop.permute.xlu0 %5252
    %v5255 = vsel %vm124, %v5201, 0
    %v5258 = vsel %vm124, %v5253, 0
    %5260 = vmatprep.subr.bf16.mxu0 0
    %5261 = vmatpush1.bf16.xpose.msra.mxu0 %v5258
    %5262 = vmatprep.subr.bf16.mxu0 0
    %5263 = vmatpush1.bf16.xpose.msra.mxu0 0
    %5264 = vmatprep.subr.bf16.mxu0 0
    %5265 = vmatpush1.bf16.xpose.msra.mxu0 0
    %5266 = vmatprep.subr.bf16.mxu0 0
    %5267 = vmatpush1.bf16.xpose.msra.mxu0 0
    %5268 = vmatprep.subr.bf16.mxu0 0
    %5269 = vmatpush1.bf16.xpose.msra.mxu0 0
    %5270 = vmatprep.subr.bf16.mxu0 0
    %5271 = vmatpush1.bf16.xpose.msra.mxu0 0
    %5272 = vmatprep.subr.bf16.mxu0 0
    %5273 = vmatpush1.bf16.xpose.msra.mxu0 0
    %5274 = vmatprep.subr.bf16.mxu0 0
    %5275 = vmatpush1.bf16.xpose.msra.mxu0 0
    %5276 = vmatprep.subr.bf16.mxu0 0
    %5277 = vmatpush1.bf16.xpose.msra.mxu0 0
    %5278 = vmatprep.subr.bf16.mxu0 0
    %5279 = vmatpush1.bf16.xpose.msra.mxu0 0
    %5280 = vmatprep.subr.bf16.mxu0 0
    %5281 = vmatpush1.bf16.xpose.msra.mxu0 0
    %5282 = vmatprep.subr.bf16.mxu0 0
    %5283 = vmatpush1.bf16.xpose.msra.mxu0 0
    %5284 = vmatprep.subr.bf16.mxu0 0
    %5285 = vmatpush1.bf16.xpose.msra.mxu0 0
    %5286 = vmatprep.subr.bf16.mxu0 0
    %5287 = vmatpush1.bf16.xpose.msra.mxu0 0
    %5288 = vmatprep.subr.bf16.mxu0 0
    %5289 = vmatpush1.bf16.xpose.msra.mxu0 0
    %5290 = vmatprep.subr.bf16.mxu0 0
    %5291 = vmatpush1.bf16.xpose.msra.mxu0 0
    %5292 = vmatprep.mubr.bf16.mxu0 0
    %5293 = vmatmul.mubr.bf16.gmra.mrb[0].mxu0 %v5255
    %v5294 = vpop.f32.mrb[0].mxu0
    %v5295 = vadd.f32 0.0, %v5294
    %v5296 = vpop.f32.mrb[0].mxu0
    %v5297 = vpop.f32.mrb[0].mxu0
    %v5298 = vpop.f32.mrb[0].mxu0
    %5299 = vdwg.mxu0
    %v5300 = vmul.f32 %v5246, 0.35355338
    %v5301 = vmul.f32 %v5295, 0.35355338
    %v5302 = vadd.f32 %v5300, %v46
    %v5303 = vadd.f32 %v5301, %v46
    %v5304 = vsel %vm124, %v5302, -inf
    %5305 = vmax.xlane.f32.xlu0 %v5304
    %v5306 = vpop.xlane.xlu0 %5305
    %v5307 = vsel %vm124, %v5303, -inf
    %5308 = vmax.xlane.f32.xlu0 %v5307
    %v5309 = vpop.xlane.xlu0 %5308
    %v5310 = vsub.f32 %v5302, %v5306
    %v5311 = vsub.f32 %v5303, %v5309
    %v5312 = vmul.f32 %v5310, 1.442695
    %v5313 = vpow.pop %v5312
    %v5314 = vmul.f32 %v5311, 1.442695
    %v5315 = vpow.pop %v5314
    %v5316 = vsel %vm124, %v5313, 0.0
    %5317 = vadd.xlane.f32.xlu0 %v5316
    %v5318 = vpop.xlane.xlu0 %5317
    %v5319 = vsel %vm124, %v5315, 0.0
    %5320 = vadd.xlane.f32.xlu0 %v5319
    %v5321 = vpop.xlane.xlu0 %5320
    %v5322 = vpack.c.bf16 %v5313, %v5313
    %v5323 = vpack.c.bf16 %v5315, %v5315
    %5324 = vrot.lane.b32.xlu0 %v5200, 64
    %v5325 = vpop.permute.xlu0 %5324
    %v5327 = vsel %vm124, %v5322, 0
    %v5330 = vsel %vm261, %v5325, 0
    %5332 = vmatprep.subr.bf16.mxu0 0
    %5333 = vmatpush1.bf16.msra.mxu0 %v5330
    %5334 = vmatprep.subr.bf16.mxu0 0
    %5335 = vmatpush1.bf16.msra.mxu0 0
    %5336 = vmatprep.subr.bf16.mxu0 0
    %5337 = vmatpush1.bf16.msra.mxu0 0
    %5338 = vmatprep.subr.bf16.mxu0 0
    %5339 = vmatpush1.bf16.msra.mxu0 0
    %5340 = vmatprep.subr.bf16.mxu0 0
    %5341 = vmatpush1.bf16.msra.mxu0 0
    %5342 = vmatprep.subr.bf16.mxu0 0
    %5343 = vmatpush1.bf16.msra.mxu0 0
    %5344 = vmatprep.subr.bf16.mxu0 0
    %5345 = vmatpush1.bf16.msra.mxu0 0
    %5346 = vmatprep.subr.bf16.mxu0 0
    %5347 = vmatpush1.bf16.msra.mxu0 0
    %5348 = vmatprep.subr.bf16.mxu0 0
    %5349 = vmatpush1.bf16.msra.mxu0 0
    %5350 = vmatprep.subr.bf16.mxu0 0
    %5351 = vmatpush1.bf16.msra.mxu0 0
    %5352 = vmatprep.subr.bf16.mxu0 0
    %5353 = vmatpush1.bf16.msra.mxu0 0
    %5354 = vmatprep.subr.bf16.mxu0 0
    %5355 = vmatpush1.bf16.msra.mxu0 0
    %5356 = vmatprep.subr.bf16.mxu0 0
    %5357 = vmatpush1.bf16.msra.mxu0 0
    %5358 = vmatprep.subr.bf16.mxu0 0
    %5359 = vmatpush1.bf16.msra.mxu0 0
    %5360 = vmatprep.subr.bf16.mxu0 0
    %5361 = vmatpush1.bf16.msra.mxu0 0
    %5362 = vmatprep.subr.bf16.mxu0 0
    %5363 = vmatpush1.bf16.msra.mxu0 0
    %5364 = vmatprep.mubr.bf16.mxu0 0
    %5365 = vmatmul.mubr.bf16.gmra.mrb[0].mxu0 %v5327
    %v5366 = vpop.f32.mrb[0].mxu0
    %v5367 = vadd.f32 0.0, %v5366
    %v5368 = vpop.f32.mrb[0].mxu0
    %v5369 = vpop.f32.mrb[0].mxu0
    %v5370 = vpop.f32.mrb[0].mxu0
    %5371 = vdwg.mxu0
    %5372 = vrot.lane.b32.xlu0 %v5201, 64
    %v5373 = vpop.permute.xlu0 %5372
    %v5375 = vsel %vm124, %v5323, 0
    %v5378 = vsel %vm261, %v5373, 0
    %5380 = vmatprep.subr.bf16.mxu0 0
    %5381 = vmatpush1.bf16.msra.mxu0 %v5378
    %5382 = vmatprep.subr.bf16.mxu0 0
    %5383 = vmatpush1.bf16.msra.mxu0 0
    %5384 = vmatprep.subr.bf16.mxu0 0
    %5385 = vmatpush1.bf16.msra.mxu0 0
    %5386 = vmatprep.subr.bf16.mxu0 0
    %5387 = vmatpush1.bf16.msra.mxu0 0
    %5388 = vmatprep.subr.bf16.mxu0 0
    %5389 = vmatpush1.bf16.msra.mxu0 0
    %5390 = vmatprep.subr.bf16.mxu0 0
    %5391 = vmatpush1.bf16.msra.mxu0 0
    %5392 = vmatprep.subr.bf16.mxu0 0
    %5393 = vmatpush1.bf16.msra.mxu0 0
    %5394 = vmatprep.subr.bf16.mxu0 0
    %5395 = vmatpush1.bf16.msra.mxu0 0
    %5396 = vmatprep.subr.bf16.mxu0 0
    %5397 = vmatpush1.bf16.msra.mxu0 0
    %5398 = vmatprep.subr.bf16.mxu0 0
    %5399 = vmatpush1.bf16.msra.mxu0 0
    %5400 = vmatprep.subr.bf16.mxu0 0
    %5401 = vmatpush1.bf16.msra.mxu0 0
    %5402 = vmatprep.subr.bf16.mxu0 0
    %5403 = vmatpush1.bf16.msra.mxu0 0
    %5404 = vmatprep.subr.bf16.mxu0 0
    %5405 = vmatpush1.bf16.msra.mxu0 0
    %5406 = vmatprep.subr.bf16.mxu0 0
    %5407 = vmatpush1.bf16.msra.mxu0 0
    %5408 = vmatprep.subr.bf16.mxu0 0
    %5409 = vmatpush1.bf16.msra.mxu0 0
    %5410 = vmatprep.subr.bf16.mxu0 0
    %5411 = vmatpush1.bf16.msra.mxu0 0
    %5412 = vmatprep.mubr.bf16.mxu0 0
    %5413 = vmatmul.mubr.bf16.gmra.mrb[0].mxu0 %v5375
    %v5414 = vpop.f32.mrb[0].mxu0
    %v5415 = vadd.f32 0.0, %v5414
    %v5416 = vpop.f32.mrb[0].mxu0
    %v5417 = vpop.f32.mrb[0].mxu0
    %v5418 = vpop.f32.mrb[0].mxu0
    %5419 = vdwg.mxu0
    %v5420 = vrcp.pop %v5318
    %v5421 = vrcp.pop %v5321
    %v5422 = vmul.f32 %v5367, %v5420
    %v5423 = vmul.f32 %v5415, %v5421
    %5424 = vrot.lane.b32.xlu0 %v5200, 120
    %v5425 = vpop.permute.xlu0 %5424
    %5426 = vrot.lane.b32.xlu0 %v5200, 88
    %v5427 = vpop.permute.xlu0 %5426
    %v5429 = vsel %vm124, %v5425, 0
    %v5432 = vsel %vm124, %v5427, 0
    %5434 = vmatprep.subr.bf16.mxu0 0
    %5435 = vmatpush1.bf16.xpose.msra.mxu0 %v5432
    %5436 = vmatprep.subr.bf16.mxu0 0
    %5437 = vmatpush1.bf16.xpose.msra.mxu0 0
    %5438 = vmatprep.subr.bf16.mxu0 0
    %5439 = vmatpush1.bf16.xpose.msra.mxu0 0
    %5440 = vmatprep.subr.bf16.mxu0 0
    %5441 = vmatpush1.bf16.xpose.msra.mxu0 0
    %5442 = vmatprep.subr.bf16.mxu0 0
    %5443 = vmatpush1.bf16.xpose.msra.mxu0 0
    %5444 = vmatprep.subr.bf16.mxu0 0
    %5445 = vmatpush1.bf16.xpose.msra.mxu0 0
    %5446 = vmatprep.subr.bf16.mxu0 0
    %5447 = vmatpush1.bf16.xpose.msra.mxu0 0
    %5448 = vmatprep.subr.bf16.mxu0 0
    %5449 = vmatpush1.bf16.xpose.msra.mxu0 0
    %5450 = vmatprep.subr.bf16.mxu0 0
    %5451 = vmatpush1.bf16.xpose.msra.mxu0 0
    %5452 = vmatprep.subr.bf16.mxu0 0
    %5453 = vmatpush1.bf16.xpose.msra.mxu0 0
    %5454 = vmatprep.subr.bf16.mxu0 0
    %5455 = vmatpush1.bf16.xpose.msra.mxu0 0
    %5456 = vmatprep.subr.bf16.mxu0 0
    %5457 = vmatpush1.bf16.xpose.msra.mxu0 0
    %5458 = vmatprep.subr.bf16.mxu0 0
    %5459 = vmatpush1.bf16.xpose.msra.mxu0 0
    %5460 = vmatprep.subr.bf16.mxu0 0
    %5461 = vmatpush1.bf16.xpose.msra.mxu0 0
    %5462 = vmatprep.subr.bf16.mxu0 0
    %5463 = vmatpush1.bf16.xpose.msra.mxu0 0
    %5464 = vmatprep.subr.bf16.mxu0 0
    %5465 = vmatpush1.bf16.xpose.msra.mxu0 0
    %5466 = vmatprep.mubr.bf16.mxu0 0
    %5467 = vmatmul.mubr.bf16.gmra.mrb[0].mxu0 %v5429
    %v5468 = vpop.f32.mrb[0].mxu0
    %v5469 = vadd.f32 0.0, %v5468
    %v5470 = vpop.f32.mrb[0].mxu0
    %v5471 = vpop.f32.mrb[0].mxu0
    %v5472 = vpop.f32.mrb[0].mxu0
    %5473 = vdwg.mxu0
    %5474 = vrot.lane.b32.xlu0 %v5201, 120
    %v5475 = vpop.permute.xlu0 %5474
    %5476 = vrot.lane.b32.xlu0 %v5201, 88
    %v5477 = vpop.permute.xlu0 %5476
    %v5479 = vsel %vm124, %v5475, 0
    %v5482 = vsel %vm124, %v5477, 0
    %5484 = vmatprep.subr.bf16.mxu0 0
    %5485 = vmatpush1.bf16.xpose.msra.mxu0 %v5482
    %5486 = vmatprep.subr.bf16.mxu0 0
    %5487 = vmatpush1.bf16.xpose.msra.mxu0 0
    %5488 = vmatprep.subr.bf16.mxu0 0
    %5489 = vmatpush1.bf16.xpose.msra.mxu0 0
    %5490 = vmatprep.subr.bf16.mxu0 0
    %5491 = vmatpush1.bf16.xpose.msra.mxu0 0
    %5492 = vmatprep.subr.bf16.mxu0 0
    %5493 = vmatpush1.bf16.xpose.msra.mxu0 0
    %5494 = vmatprep.subr.bf16.mxu0 0
    %5495 = vmatpush1.bf16.xpose.msra.mxu0 0
    %5496 = vmatprep.subr.bf16.mxu0 0
    %5497 = vmatpush1.bf16.xpose.msra.mxu0 0
    %5498 = vmatprep.subr.bf16.mxu0 0
    %5499 = vmatpush1.bf16.xpose.msra.mxu0 0
    %5500 = vmatprep.subr.bf16.mxu0 0
    %5501 = vmatpush1.bf16.xpose.msra.mxu0 0
    %5502 = vmatprep.subr.bf16.mxu0 0
    %5503 = vmatpush1.bf16.xpose.msra.mxu0 0
    %5504 = vmatprep.subr.bf16.mxu0 0
    %5505 = vmatpush1.bf16.xpose.msra.mxu0 0
    %5506 = vmatprep.subr.bf16.mxu0 0
    %5507 = vmatpush1.bf16.xpose.msra.mxu0 0
    %5508 = vmatprep.subr.bf16.mxu0 0
    %5509 = vmatpush1.bf16.xpose.msra.mxu0 0
    %5510 = vmatprep.subr.bf16.mxu0 0
    %5511 = vmatpush1.bf16.xpose.msra.mxu0 0
    %5512 = vmatprep.subr.bf16.mxu0 0
    %5513 = vmatpush1.bf16.xpose.msra.mxu0 0
    %5514 = vmatprep.subr.bf16.mxu0 0
    %5515 = vmatpush1.bf16.xpose.msra.mxu0 0
    %5516 = vmatprep.mubr.bf16.mxu0 0
    %5517 = vmatmul.mubr.bf16.gmra.mrb[0].mxu0 %v5479
    %v5518 = vpop.f32.mrb[0].mxu0
    %v5519 = vadd.f32 0.0, %v5518
    %v5520 = vpop.f32.mrb[0].mxu0
    %v5521 = vpop.f32.mrb[0].mxu0
    %v5522 = vpop.f32.mrb[0].mxu0
    %5523 = vdwg.mxu0
    %v5524 = vmul.f32 %v5469, 0.35355338
    %v5525 = vmul.f32 %v5519, 0.35355338
    %v5526 = vadd.f32 %v5524, %v46
    %v5527 = vadd.f32 %v5525, %v46
    %v5528 = vsel %vm124, %v5526, -inf
    %5529 = vmax.xlane.f32.xlu0 %v5528
    %v5530 = vpop.xlane.xlu0 %5529
    %v5531 = vsel %vm124, %v5527, -inf
    %5532 = vmax.xlane.f32.xlu0 %v5531
    %v5533 = vpop.xlane.xlu0 %5532
    %v5534 = vsub.f32 %v5526, %v5530
    %v5535 = vsub.f32 %v5527, %v5533
    %v5536 = vmul.f32 %v5534, 1.442695
    %v5537 = vpow.pop %v5536
    %v5538 = vmul.f32 %v5535, 1.442695
    %v5539 = vpow.pop %v5538
    %v5540 = vsel %vm124, %v5537, 0.0
    %5541 = vadd.xlane.f32.xlu0 %v5540
    %v5542 = vpop.xlane.xlu0 %5541
    %v5543 = vsel %vm124, %v5539, 0.0
    %5544 = vadd.xlane.f32.xlu0 %v5543
    %v5545 = vpop.xlane.xlu0 %5544
    %v5546 = vpack.c.bf16 %v5537, %v5537
    %v5547 = vpack.c.bf16 %v5539, %v5539
    %5548 = vrot.lane.b32.xlu0 %v5200, 56
    %v5549 = vpop.permute.xlu0 %5548
    %v5551 = vsel %vm124, %v5546, 0
    %v5554 = vsel %vm261, %v5549, 0
    %5556 = vmatprep.subr.bf16.mxu0 0
    %5557 = vmatpush1.bf16.msra.mxu0 %v5554
    %5558 = vmatprep.subr.bf16.mxu0 0
    %5559 = vmatpush1.bf16.msra.mxu0 0
    %5560 = vmatprep.subr.bf16.mxu0 0
    %5561 = vmatpush1.bf16.msra.mxu0 0
    %5562 = vmatprep.subr.bf16.mxu0 0
    %5563 = vmatpush1.bf16.msra.mxu0 0
    %5564 = vmatprep.subr.bf16.mxu0 0
    %5565 = vmatpush1.bf16.msra.mxu0 0
    %5566 = vmatprep.subr.bf16.mxu0 0
    %5567 = vmatpush1.bf16.msra.mxu0 0
    %5568 = vmatprep.subr.bf16.mxu0 0
    %5569 = vmatpush1.bf16.msra.mxu0 0
    %5570 = vmatprep.subr.bf16.mxu0 0
    %5571 = vmatpush1.bf16.msra.mxu0 0
    %5572 = vmatprep.subr.bf16.mxu0 0
    %5573 = vmatpush1.bf16.msra.mxu0 0
    %5574 = vmatprep.subr.bf16.mxu0 0
    %5575 = vmatpush1.bf16.msra.mxu0 0
    %5576 = vmatprep.subr.bf16.mxu0 0
    %5577 = vmatpush1.bf16.msra.mxu0 0
    %5578 = vmatprep.subr.bf16.mxu0 0
    %5579 = vmatpush1.bf16.msra.mxu0 0
    %5580 = vmatprep.subr.bf16.mxu0 0
    %5581 = vmatpush1.bf16.msra.mxu0 0
    %5582 = vmatprep.subr.bf16.mxu0 0
    %5583 = vmatpush1.bf16.msra.mxu0 0
    %5584 = vmatprep.subr.bf16.mxu0 0
    %5585 = vmatpush1.bf16.msra.mxu0 0
    %5586 = vmatprep.subr.bf16.mxu0 0
    %5587 = vmatpush1.bf16.msra.mxu0 0
    %5588 = vmatprep.mubr.bf16.mxu0 0
    %5589 = vmatmul.mubr.bf16.gmra.mrb[0].mxu0 %v5551
    %v5590 = vpop.f32.mrb[0].mxu0
    %v5591 = vadd.f32 0.0, %v5590
    %v5592 = vpop.f32.mrb[0].mxu0
    %v5593 = vpop.f32.mrb[0].mxu0
    %v5594 = vpop.f32.mrb[0].mxu0
    %5595 = vdwg.mxu0
    %5596 = vrot.lane.b32.xlu0 %v5201, 56
    %v5597 = vpop.permute.xlu0 %5596
    %v5599 = vsel %vm124, %v5547, 0
    %v5602 = vsel %vm261, %v5597, 0
    %5604 = vmatprep.subr.bf16.mxu0 0
    %5605 = vmatpush1.bf16.msra.mxu0 %v5602
    %5606 = vmatprep.subr.bf16.mxu0 0
    %5607 = vmatpush1.bf16.msra.mxu0 0
    %5608 = vmatprep.subr.bf16.mxu0 0
    %5609 = vmatpush1.bf16.msra.mxu0 0
    %5610 = vmatprep.subr.bf16.mxu0 0
    %5611 = vmatpush1.bf16.msra.mxu0 0
    %5612 = vmatprep.subr.bf16.mxu0 0
    %5613 = vmatpush1.bf16.msra.mxu0 0
    %5614 = vmatprep.subr.bf16.mxu0 0
    %5615 = vmatpush1.bf16.msra.mxu0 0
    %5616 = vmatprep.subr.bf16.mxu0 0
    %5617 = vmatpush1.bf16.msra.mxu0 0
    %5618 = vmatprep.subr.bf16.mxu0 0
    %5619 = vmatpush1.bf16.msra.mxu0 0
    %5620 = vmatprep.subr.bf16.mxu0 0
    %5621 = vmatpush1.bf16.msra.mxu0 0
    %5622 = vmatprep.subr.bf16.mxu0 0
    %5623 = vmatpush1.bf16.msra.mxu0 0
    %5624 = vmatprep.subr.bf16.mxu0 0
    %5625 = vmatpush1.bf16.msra.mxu0 0
    %5626 = vmatprep.subr.bf16.mxu0 0
    %5627 = vmatpush1.bf16.msra.mxu0 0
    %5628 = vmatprep.subr.bf16.mxu0 0
    %5629 = vmatpush1.bf16.msra.mxu0 0
    %5630 = vmatprep.subr.bf16.mxu0 0
    %5631 = vmatpush1.bf16.msra.mxu0 0
    %5632 = vmatprep.subr.bf16.mxu0 0
    %5633 = vmatpush1.bf16.msra.mxu0 0
    %5634 = vmatprep.subr.bf16.mxu0 0
    %5635 = vmatpush1.bf16.msra.mxu0 0
    %5636 = vmatprep.mubr.bf16.mxu0 0
    %5637 = vmatmul.mubr.bf16.gmra.mrb[0].mxu0 %v5599
    %v5638 = vpop.f32.mrb[0].mxu0
    %v5639 = vadd.f32 0.0, %v5638
    %v5640 = vpop.f32.mrb[0].mxu0
    %v5641 = vpop.f32.mrb[0].mxu0
    %v5642 = vpop.f32.mrb[0].mxu0
    %5643 = vdwg.mxu0
    %v5644 = vrcp.pop %v5542
    %v5645 = vrcp.pop %v5545
    %v5646 = vmul.f32 %v5591, %v5644
    %v5647 = vmul.f32 %v5639, %v5645
    %5648 = vrot.lane.b32.xlu0 %v5200, 112
    %v5649 = vpop.permute.xlu0 %5648
    %5650 = vrot.lane.b32.xlu0 %v5200, 80
    %v5651 = vpop.permute.xlu0 %5650
    %v5653 = vsel %vm124, %v5649, 0
    %v5656 = vsel %vm124, %v5651, 0
    %5658 = vmatprep.subr.bf16.mxu0 0
    %5659 = vmatpush1.bf16.xpose.msra.mxu0 %v5656
    %5660 = vmatprep.subr.bf16.mxu0 0
    %5661 = vmatpush1.bf16.xpose.msra.mxu0 0
    %5662 = vmatprep.subr.bf16.mxu0 0
    %5663 = vmatpush1.bf16.xpose.msra.mxu0 0
    %5664 = vmatprep.subr.bf16.mxu0 0
    %5665 = vmatpush1.bf16.xpose.msra.mxu0 0
    %5666 = vmatprep.subr.bf16.mxu0 0
    %5667 = vmatpush1.bf16.xpose.msra.mxu0 0
    %5668 = vmatprep.subr.bf16.mxu0 0
    %5669 = vmatpush1.bf16.xpose.msra.mxu0 0
    %5670 = vmatprep.subr.bf16.mxu0 0
    %5671 = vmatpush1.bf16.xpose.msra.mxu0 0
    %5672 = vmatprep.subr.bf16.mxu0 0
    %5673 = vmatpush1.bf16.xpose.msra.mxu0 0
    %5674 = vmatprep.subr.bf16.mxu0 0
    %5675 = vmatpush1.bf16.xpose.msra.mxu0 0
    %5676 = vmatprep.subr.bf16.mxu0 0
    %5677 = vmatpush1.bf16.xpose.msra.mxu0 0
    %5678 = vmatprep.subr.bf16.mxu0 0
    %5679 = vmatpush1.bf16.xpose.msra.mxu0 0
    %5680 = vmatprep.subr.bf16.mxu0 0
    %5681 = vmatpush1.bf16.xpose.msra.mxu0 0
    %5682 = vmatprep.subr.bf16.mxu0 0
    %5683 = vmatpush1.bf16.xpose.msra.mxu0 0
    %5684 = vmatprep.subr.bf16.mxu0 0
    %5685 = vmatpush1.bf16.xpose.msra.mxu0 0
    %5686 = vmatprep.subr.bf16.mxu0 0
    %5687 = vmatpush1.bf16.xpose.msra.mxu0 0
    %5688 = vmatprep.subr.bf16.mxu0 0
    %5689 = vmatpush1.bf16.xpose.msra.mxu0 0
    %5690 = vmatprep.mubr.bf16.mxu0 0
    %5691 = vmatmul.mubr.bf16.gmra.mrb[0].mxu0 %v5653
    %v5692 = vpop.f32.mrb[0].mxu0
    %v5693 = vadd.f32 0.0, %v5692
    %v5694 = vpop.f32.mrb[0].mxu0
    %v5695 = vpop.f32.mrb[0].mxu0
    %v5696 = vpop.f32.mrb[0].mxu0
    %5697 = vdwg.mxu0
    %5698 = vrot.lane.b32.xlu0 %v5201, 112
    %v5699 = vpop.permute.xlu0 %5698
    %5700 = vrot.lane.b32.xlu0 %v5201, 80
    %v5701 = vpop.permute.xlu0 %5700
    %v5703 = vsel %vm124, %v5699, 0
    %v5706 = vsel %vm124, %v5701, 0
    %5708 = vmatprep.subr.bf16.mxu0 0
    %5709 = vmatpush1.bf16.xpose.msra.mxu0 %v5706
    %5710 = vmatprep.subr.bf16.mxu0 0
    %5711 = vmatpush1.bf16.xpose.msra.mxu0 0
    %5712 = vmatprep.subr.bf16.mxu0 0
    %5713 = vmatpush1.bf16.xpose.msra.mxu0 0
    %5714 = vmatprep.subr.bf16.mxu0 0
    %5715 = vmatpush1.bf16.xpose.msra.mxu0 0
    %5716 = vmatprep.subr.bf16.mxu0 0
    %5717 = vmatpush1.bf16.xpose.msra.mxu0 0
    %5718 = vmatprep.subr.bf16.mxu0 0
    %5719 = vmatpush1.bf16.xpose.msra.mxu0 0
    %5720 = vmatprep.subr.bf16.mxu0 0
    %5721 = vmatpush1.bf16.xpose.msra.mxu0 0
    %5722 = vmatprep.subr.bf16.mxu0 0
    %5723 = vmatpush1.bf16.xpose.msra.mxu0 0
    %5724 = vmatprep.subr.bf16.mxu0 0
    %5725 = vmatpush1.bf16.xpose.msra.mxu0 0
    %5726 = vmatprep.subr.bf16.mxu0 0
    %5727 = vmatpush1.bf16.xpose.msra.mxu0 0
    %5728 = vmatprep.subr.bf16.mxu0 0
    %5729 = vmatpush1.bf16.xpose.msra.mxu0 0
    %5730 = vmatprep.subr.bf16.mxu0 0
    %5731 = vmatpush1.bf16.xpose.msra.mxu0 0
    %5732 = vmatprep.subr.bf16.mxu0 0
    %5733 = vmatpush1.bf16.xpose.msra.mxu0 0
    %5734 = vmatprep.subr.bf16.mxu0 0
    %5735 = vmatpush1.bf16.xpose.msra.mxu0 0
    %5736 = vmatprep.subr.bf16.mxu0 0
    %5737 = vmatpush1.bf16.xpose.msra.mxu0 0
    %5738 = vmatprep.subr.bf16.mxu0 0
    %5739 = vmatpush1.bf16.xpose.msra.mxu0 0
    %5740 = vmatprep.mubr.bf16.mxu0 0
    %5741 = vmatmul.mubr.bf16.gmra.mrb[0].mxu0 %v5703
    %v5742 = vpop.f32.mrb[0].mxu0
    %v5743 = vadd.f32 0.0, %v5742
    %v5744 = vpop.f32.mrb[0].mxu0
    %v5745 = vpop.f32.mrb[0].mxu0
    %v5746 = vpop.f32.mrb[0].mxu0
    %5747 = vdwg.mxu0
    %v5748 = vmul.f32 %v5693, 0.35355338
    %v5749 = vmul.f32 %v5743, 0.35355338
    %v5750 = vadd.f32 %v5748, %v46
    %v5751 = vadd.f32 %v5749, %v46
    %v5752 = vsel %vm124, %v5750, -inf
    %5753 = vmax.xlane.f32.xlu0 %v5752
    %v5754 = vpop.xlane.xlu0 %5753
    %v5755 = vsel %vm124, %v5751, -inf
    %5756 = vmax.xlane.f32.xlu0 %v5755
    %v5757 = vpop.xlane.xlu0 %5756
    %v5758 = vsub.f32 %v5750, %v5754
    %v5759 = vsub.f32 %v5751, %v5757
    %v5760 = vmul.f32 %v5758, 1.442695
    %v5761 = vpow.pop %v5760
    %v5762 = vmul.f32 %v5759, 1.442695
    %v5763 = vpow.pop %v5762
    %v5764 = vsel %vm124, %v5761, 0.0
    %5765 = vadd.xlane.f32.xlu0 %v5764
    %v5766 = vpop.xlane.xlu0 %5765
    %v5767 = vsel %vm124, %v5763, 0.0
    %5768 = vadd.xlane.f32.xlu0 %v5767
    %v5769 = vpop.xlane.xlu0 %5768
    %v5770 = vpack.c.bf16 %v5761, %v5761
    %v5771 = vpack.c.bf16 %v5763, %v5763
    %5772 = vrot.lane.b32.xlu0 %v5200, 48
    %v5773 = vpop.permute.xlu0 %5772
    %v5775 = vsel %vm124, %v5770, 0
    %v5778 = vsel %vm261, %v5773, 0
    %5780 = vmatprep.subr.bf16.mxu0 0
    %5781 = vmatpush1.bf16.msra.mxu0 %v5778
    %5782 = vmatprep.subr.bf16.mxu0 0
    %5783 = vmatpush1.bf16.msra.mxu0 0
    %5784 = vmatprep.subr.bf16.mxu0 0
    %5785 = vmatpush1.bf16.msra.mxu0 0
    %5786 = vmatprep.subr.bf16.mxu0 0
    %5787 = vmatpush1.bf16.msra.mxu0 0
    %5788 = vmatprep.subr.bf16.mxu0 0
    %5789 = vmatpush1.bf16.msra.mxu0 0
    %5790 = vmatprep.subr.bf16.mxu0 0
    %5791 = vmatpush1.bf16.msra.mxu0 0
    %5792 = vmatprep.subr.bf16.mxu0 0
    %5793 = vmatpush1.bf16.msra.mxu0 0
    %5794 = vmatprep.subr.bf16.mxu0 0
    %5795 = vmatpush1.bf16.msra.mxu0 0
    %5796 = vmatprep.subr.bf16.mxu0 0
    %5797 = vmatpush1.bf16.msra.mxu0 0
    %5798 = vmatprep.subr.bf16.mxu0 0
    %5799 = vmatpush1.bf16.msra.mxu0 0
    %5800 = vmatprep.subr.bf16.mxu0 0
    %5801 = vmatpush1.bf16.msra.mxu0 0
    %5802 = vmatprep.subr.bf16.mxu0 0
    %5803 = vmatpush1.bf16.msra.mxu0 0
    %5804 = vmatprep.subr.bf16.mxu0 0
    %5805 = vmatpush1.bf16.msra.mxu0 0
    %5806 = vmatprep.subr.bf16.mxu0 0
    %5807 = vmatpush1.bf16.msra.mxu0 0
    %5808 = vmatprep.subr.bf16.mxu0 0
    %5809 = vmatpush1.bf16.msra.mxu0 0
    %5810 = vmatprep.subr.bf16.mxu0 0
    %5811 = vmatpush1.bf16.msra.mxu0 0
    %5812 = vmatprep.mubr.bf16.mxu0 0
    %5813 = vmatmul.mubr.bf16.gmra.mrb[0].mxu0 %v5775
    %v5814 = vpop.f32.mrb[0].mxu0
    %v5815 = vadd.f32 0.0, %v5814
    %v5816 = vpop.f32.mrb[0].mxu0
    %v5817 = vpop.f32.mrb[0].mxu0
    %v5818 = vpop.f32.mrb[0].mxu0
    %5819 = vdwg.mxu0
    %5820 = vrot.lane.b32.xlu0 %v5201, 48
    %v5821 = vpop.permute.xlu0 %5820
    %v5823 = vsel %vm124, %v5771, 0
    %v5826 = vsel %vm261, %v5821, 0
    %5828 = vmatprep.subr.bf16.mxu0 0
    %5829 = vmatpush1.bf16.msra.mxu0 %v5826
    %5830 = vmatprep.subr.bf16.mxu0 0
    %5831 = vmatpush1.bf16.msra.mxu0 0
    %5832 = vmatprep.subr.bf16.mxu0 0
    %5833 = vmatpush1.bf16.msra.mxu0 0
    %5834 = vmatprep.subr.bf16.mxu0 0
    %5835 = vmatpush1.bf16.msra.mxu0 0
    %5836 = vmatprep.subr.bf16.mxu0 0
    %5837 = vmatpush1.bf16.msra.mxu0 0
    %5838 = vmatprep.subr.bf16.mxu0 0
    %5839 = vmatpush1.bf16.msra.mxu0 0
    %5840 = vmatprep.subr.bf16.mxu0 0
    %5841 = vmatpush1.bf16.msra.mxu0 0
    %5842 = vmatprep.subr.bf16.mxu0 0
    %5843 = vmatpush1.bf16.msra.mxu0 0
    %5844 = vmatprep.subr.bf16.mxu0 0
    %5845 = vmatpush1.bf16.msra.mxu0 0
    %5846 = vmatprep.subr.bf16.mxu0 0
    %5847 = vmatpush1.bf16.msra.mxu0 0
    %5848 = vmatprep.subr.bf16.mxu0 0
    %5849 = vmatpush1.bf16.msra.mxu0 0
    %5850 = vmatprep.subr.bf16.mxu0 0
    %5851 = vmatpush1.bf16.msra.mxu0 0
    %5852 = vmatprep.subr.bf16.mxu0 0
    %5853 = vmatpush1.bf16.msra.mxu0 0
    %5854 = vmatprep.subr.bf16.mxu0 0
    %5855 = vmatpush1.bf16.msra.mxu0 0
    %5856 = vmatprep.subr.bf16.mxu0 0
    %5857 = vmatpush1.bf16.msra.mxu0 0
    %5858 = vmatprep.subr.bf16.mxu0 0
    %5859 = vmatpush1.bf16.msra.mxu0 0
    %5860 = vmatprep.mubr.bf16.mxu0 0
    %5861 = vmatmul.mubr.bf16.gmra.mrb[0].mxu0 %v5823
    %v5862 = vpop.f32.mrb[0].mxu0
    %v5863 = vadd.f32 0.0, %v5862
    %v5864 = vpop.f32.mrb[0].mxu0
    %v5865 = vpop.f32.mrb[0].mxu0
    %v5866 = vpop.f32.mrb[0].mxu0
    %5867 = vdwg.mxu0
    %v5868 = vrcp.pop %v5766
    %v5869 = vrcp.pop %v5769
    %v5870 = vmul.f32 %v5815, %v5868
    %v5871 = vmul.f32 %v5863, %v5869
    %5872 = vrot.lane.b32.xlu0 %v5200, 104
    %v5873 = vpop.permute.xlu0 %5872
    %5874 = vrot.lane.b32.xlu0 %v5200, 72
    %v5875 = vpop.permute.xlu0 %5874
    %v5877 = vsel %vm124, %v5873, 0
    %v5880 = vsel %vm124, %v5875, 0
    %5882 = vmatprep.subr.bf16.mxu0 0
    %5883 = vmatpush1.bf16.xpose.msra.mxu0 %v5880
    %5884 = vmatprep.subr.bf16.mxu0 0
    %5885 = vmatpush1.bf16.xpose.msra.mxu0 0
    %5886 = vmatprep.subr.bf16.mxu0 0
    %5887 = vmatpush1.bf16.xpose.msra.mxu0 0
    %5888 = vmatprep.subr.bf16.mxu0 0
    %5889 = vmatpush1.bf16.xpose.msra.mxu0 0
    %5890 = vmatprep.subr.bf16.mxu0 0
    %5891 = vmatpush1.bf16.xpose.msra.mxu0 0
    %5892 = vmatprep.subr.bf16.mxu0 0
    %5893 = vmatpush1.bf16.xpose.msra.mxu0 0
    %5894 = vmatprep.subr.bf16.mxu0 0
    %5895 = vmatpush1.bf16.xpose.msra.mxu0 0
    %5896 = vmatprep.subr.bf16.mxu0 0
    %5897 = vmatpush1.bf16.xpose.msra.mxu0 0
    %5898 = vmatprep.subr.bf16.mxu0 0
    %5899 = vmatpush1.bf16.xpose.msra.mxu0 0
    %5900 = vmatprep.subr.bf16.mxu0 0
    %5901 = vmatpush1.bf16.xpose.msra.mxu0 0
    %5902 = vmatprep.subr.bf16.mxu0 0
    %5903 = vmatpush1.bf16.xpose.msra.mxu0 0
    %5904 = vmatprep.subr.bf16.mxu0 0
    %5905 = vmatpush1.bf16.xpose.msra.mxu0 0
    %5906 = vmatprep.subr.bf16.mxu0 0
    %5907 = vmatpush1.bf16.xpose.msra.mxu0 0
    %5908 = vmatprep.subr.bf16.mxu0 0
    %5909 = vmatpush1.bf16.xpose.msra.mxu0 0
    %5910 = vmatprep.subr.bf16.mxu0 0
    %5911 = vmatpush1.bf16.xpose.msra.mxu0 0
    %5912 = vmatprep.subr.bf16.mxu0 0
    %5913 = vmatpush1.bf16.xpose.msra.mxu0 0
    %5914 = vmatprep.mubr.bf16.mxu0 0
    %5915 = vmatmul.mubr.bf16.gmra.mrb[0].mxu0 %v5877
    %v5916 = vpop.f32.mrb[0].mxu0
    %v5917 = vadd.f32 0.0, %v5916
    %v5918 = vpop.f32.mrb[0].mxu0
    %v5919 = vpop.f32.mrb[0].mxu0
    %v5920 = vpop.f32.mrb[0].mxu0
    %5921 = vdwg.mxu0
    %5922 = vrot.lane.b32.xlu0 %v5201, 104
    %v5923 = vpop.permute.xlu0 %5922
    %5924 = vrot.lane.b32.xlu0 %v5201, 72
    %v5925 = vpop.permute.xlu0 %5924
    %v5927 = vsel %vm124, %v5923, 0
    %v5930 = vsel %vm124, %v5925, 0
    %5932 = vmatprep.subr.bf16.mxu0 0
    %5933 = vmatpush1.bf16.xpose.msra.mxu0 %v5930
    %5934 = vmatprep.subr.bf16.mxu0 0
    %5935 = vmatpush1.bf16.xpose.msra.mxu0 0
    %5936 = vmatprep.subr.bf16.mxu0 0
    %5937 = vmatpush1.bf16.xpose.msra.mxu0 0
    %5938 = vmatprep.subr.bf16.mxu0 0
    %5939 = vmatpush1.bf16.xpose.msra.mxu0 0
    %5940 = vmatprep.subr.bf16.mxu0 0
    %5941 = vmatpush1.bf16.xpose.msra.mxu0 0
    %5942 = vmatprep.subr.bf16.mxu0 0
    %5943 = vmatpush1.bf16.xpose.msra.mxu0 0
    %5944 = vmatprep.subr.bf16.mxu0 0
    %5945 = vmatpush1.bf16.xpose.msra.mxu0 0
    %5946 = vmatprep.subr.bf16.mxu0 0
    %5947 = vmatpush1.bf16.xpose.msra.mxu0 0
    %5948 = vmatprep.subr.bf16.mxu0 0
    %5949 = vmatpush1.bf16.xpose.msra.mxu0 0
    %5950 = vmatprep.subr.bf16.mxu0 0
    %5951 = vmatpush1.bf16.xpose.msra.mxu0 0
    %5952 = vmatprep.subr.bf16.mxu0 0
    %5953 = vmatpush1.bf16.xpose.msra.mxu0 0
    %5954 = vmatprep.subr.bf16.mxu0 0
    %5955 = vmatpush1.bf16.xpose.msra.mxu0 0
    %5956 = vmatprep.subr.bf16.mxu0 0
    %5957 = vmatpush1.bf16.xpose.msra.mxu0 0
    %5958 = vmatprep.subr.bf16.mxu0 0
    %5959 = vmatpush1.bf16.xpose.msra.mxu0 0
    %5960 = vmatprep.subr.bf16.mxu0 0
    %5961 = vmatpush1.bf16.xpose.msra.mxu0 0
    %5962 = vmatprep.subr.bf16.mxu0 0
    %5963 = vmatpush1.bf16.xpose.msra.mxu0 0
    %5964 = vmatprep.mubr.bf16.mxu0 0
    %5965 = vmatmul.mubr.bf16.gmra.mrb[0].mxu0 %v5927
    %v5966 = vpop.f32.mrb[0].mxu0
    %v5967 = vadd.f32 0.0, %v5966
    %v5968 = vpop.f32.mrb[0].mxu0
    %v5969 = vpop.f32.mrb[0].mxu0
    %v5970 = vpop.f32.mrb[0].mxu0
    %5971 = vdwg.mxu0
    %v5972 = vmul.f32 %v5917, 0.35355338
    %v5973 = vmul.f32 %v5967, 0.35355338
    %v5974 = vadd.f32 %v5972, %v46
    %v5975 = vadd.f32 %v5973, %v46
    %v5976 = vsel %vm124, %v5974, -inf
    %5977 = vmax.xlane.f32.xlu0 %v5976
    %v5978 = vpop.xlane.xlu0 %5977
    %v5979 = vsel %vm124, %v5975, -inf
    %5980 = vmax.xlane.f32.xlu0 %v5979
    %v5981 = vpop.xlane.xlu0 %5980
    %v5982 = vsub.f32 %v5974, %v5978
    %v5983 = vsub.f32 %v5975, %v5981
    %v5984 = vmul.f32 %v5982, 1.442695
    %v5985 = vpow.pop %v5984
    %v5986 = vmul.f32 %v5983, 1.442695
    %v5987 = vpow.pop %v5986
    %v5988 = vsel %vm124, %v5985, 0.0
    %5989 = vadd.xlane.f32.xlu0 %v5988
    %v5990 = vpop.xlane.xlu0 %5989
    %v5991 = vsel %vm124, %v5987, 0.0
    %5992 = vadd.xlane.f32.xlu0 %v5991
    %v5993 = vpop.xlane.xlu0 %5992
    %v5994 = vpack.c.bf16 %v5985, %v5985
    %v5995 = vpack.c.bf16 %v5987, %v5987
    %5996 = vrot.lane.b32.xlu0 %v5200, 40
    %v5997 = vpop.permute.xlu0 %5996
    %v5999 = vsel %vm124, %v5994, 0
    %v6002 = vsel %vm261, %v5997, 0
    %6004 = vmatprep.subr.bf16.mxu0 0
    %6005 = vmatpush1.bf16.msra.mxu0 %v6002
    %6006 = vmatprep.subr.bf16.mxu0 0
    %6007 = vmatpush1.bf16.msra.mxu0 0
    %6008 = vmatprep.subr.bf16.mxu0 0
    %6009 = vmatpush1.bf16.msra.mxu0 0
    %6010 = vmatprep.subr.bf16.mxu0 0
    %6011 = vmatpush1.bf16.msra.mxu0 0
    %6012 = vmatprep.subr.bf16.mxu0 0
    %6013 = vmatpush1.bf16.msra.mxu0 0
    %6014 = vmatprep.subr.bf16.mxu0 0
    %6015 = vmatpush1.bf16.msra.mxu0 0
    %6016 = vmatprep.subr.bf16.mxu0 0
    %6017 = vmatpush1.bf16.msra.mxu0 0
    %6018 = vmatprep.subr.bf16.mxu0 0
    %6019 = vmatpush1.bf16.msra.mxu0 0
    %6020 = vmatprep.subr.bf16.mxu0 0
    %6021 = vmatpush1.bf16.msra.mxu0 0
    %6022 = vmatprep.subr.bf16.mxu0 0
    %6023 = vmatpush1.bf16.msra.mxu0 0
    %6024 = vmatprep.subr.bf16.mxu0 0
    %6025 = vmatpush1.bf16.msra.mxu0 0
    %6026 = vmatprep.subr.bf16.mxu0 0
    %6027 = vmatpush1.bf16.msra.mxu0 0
    %6028 = vmatprep.subr.bf16.mxu0 0
    %6029 = vmatpush1.bf16.msra.mxu0 0
    %6030 = vmatprep.subr.bf16.mxu0 0
    %6031 = vmatpush1.bf16.msra.mxu0 0
    %6032 = vmatprep.subr.bf16.mxu0 0
    %6033 = vmatpush1.bf16.msra.mxu0 0
    %6034 = vmatprep.subr.bf16.mxu0 0
    %6035 = vmatpush1.bf16.msra.mxu0 0
    %6036 = vmatprep.mubr.bf16.mxu0 0
    %6037 = vmatmul.mubr.bf16.gmra.mrb[0].mxu0 %v5999
    %v6038 = vpop.f32.mrb[0].mxu0
    %v6039 = vadd.f32 0.0, %v6038
    %v6040 = vpop.f32.mrb[0].mxu0
    %v6041 = vpop.f32.mrb[0].mxu0
    %v6042 = vpop.f32.mrb[0].mxu0
    %6043 = vdwg.mxu0
    %6044 = vrot.lane.b32.xlu0 %v5201, 40
    %v6045 = vpop.permute.xlu0 %6044
    %v6047 = vsel %vm124, %v5995, 0
    %v6050 = vsel %vm261, %v6045, 0
    %6052 = vmatprep.subr.bf16.mxu0 0
    %6053 = vmatpush1.bf16.msra.mxu0 %v6050
    %6054 = vmatprep.subr.bf16.mxu0 0
    %6055 = vmatpush1.bf16.msra.mxu0 0
    %6056 = vmatprep.subr.bf16.mxu0 0
    %6057 = vmatpush1.bf16.msra.mxu0 0
    %6058 = vmatprep.subr.bf16.mxu0 0
    %6059 = vmatpush1.bf16.msra.mxu0 0
    %6060 = vmatprep.subr.bf16.mxu0 0
    %6061 = vmatpush1.bf16.msra.mxu0 0
    %6062 = vmatprep.subr.bf16.mxu0 0
    %6063 = vmatpush1.bf16.msra.mxu0 0
    %6064 = vmatprep.subr.bf16.mxu0 0
    %6065 = vmatpush1.bf16.msra.mxu0 0
    %6066 = vmatprep.subr.bf16.mxu0 0
    %6067 = vmatpush1.bf16.msra.mxu0 0
    %6068 = vmatprep.subr.bf16.mxu0 0
    %6069 = vmatpush1.bf16.msra.mxu0 0
    %6070 = vmatprep.subr.bf16.mxu0 0
    %6071 = vmatpush1.bf16.msra.mxu0 0
    %6072 = vmatprep.subr.bf16.mxu0 0
    %6073 = vmatpush1.bf16.msra.mxu0 0
    %6074 = vmatprep.subr.bf16.mxu0 0
    %6075 = vmatpush1.bf16.msra.mxu0 0
    %6076 = vmatprep.subr.bf16.mxu0 0
    %6077 = vmatpush1.bf16.msra.mxu0 0
    %6078 = vmatprep.subr.bf16.mxu0 0
    %6079 = vmatpush1.bf16.msra.mxu0 0
    %6080 = vmatprep.subr.bf16.mxu0 0
    %6081 = vmatpush1.bf16.msra.mxu0 0
    %6082 = vmatprep.subr.bf16.mxu0 0
    %6083 = vmatpush1.bf16.msra.mxu0 0
    %6084 = vmatprep.mubr.bf16.mxu0 0
    %6085 = vmatmul.mubr.bf16.gmra.mrb[0].mxu0 %v6047
    %v6086 = vpop.f32.mrb[0].mxu0
    %v6087 = vadd.f32 0.0, %v6086
    %v6088 = vpop.f32.mrb[0].mxu0
    %v6089 = vpop.f32.mrb[0].mxu0
    %v6090 = vpop.f32.mrb[0].mxu0
    %6091 = vdwg.mxu0
    %v6092 = vrcp.pop %v5990
    %v6093 = vrcp.pop %v5993
    %v6094 = vmul.f32 %v6039, %v6092
    %v6095 = vmul.f32 %v6087, %v6093
    %6098 = vrot.lane.b32.xlu0 %v5646, 8
    %v6099 = vpop.permute.xlu0 %6098
    %6100 = vrot.lane.b32.xlu0 %v5647, 8
    %v6101 = vpop.permute.xlu0 %6100
    %6106 = vrot.lane.b32.xlu0 %v5870, 16
    %v6107 = vpop.permute.xlu0 %6106
    %6108 = vrot.lane.b32.xlu0 %v5871, 16
    %v6109 = vpop.permute.xlu0 %6108
    %6114 = vrot.lane.b32.xlu0 %v6094, 24
    %v6115 = vpop.permute.xlu0 %6114
    %6116 = vrot.lane.b32.xlu0 %v6095, 24
    %v6117 = vpop.permute.xlu0 %6116
    %v6120 = vsel %vm124, %v5422, %v6099
    %v6121 = vsel %vm124, %v5423, %v6101
    %v6122 = vsel %vm1055, %v6120, %v6107
    %v6123 = vsel %vm1055, %v6121, %v6109
    %v6124 = vsel %vm1058, %v6122, %v6115
    %v6125 = vsel %vm1058, %v6123, %v6117
    %v6126 = vpack.c.bf16 %v6125, %v6124
    %v6127 = vlaneseq
    %v6128 = vshrl.u32 %v6127, 7
    %v6129 = vsub.s32 0, %v6128
    %v6130 = vrot.slane %v5138, %v6129
    %v6135 = vunpack.c.l.b16 %v5133
    %v6136 = vunpack.c.l.b16 %v5134
    %v6137 = vunpack.c.l.b16 %v5135
    %v6138 = vunpack.c.l.b16 %v5136
    %v6139 = vpack.c.b16 %v6136, %v6135
    %v6140 = vpack.c.b16 %v6138, %v6137
    %v6144 = vsel %vm74, %v6126, 0
    %6146 = vmatprep.subr.bf16.mxu0 0
    %6147 = vmatpush1.bf16.msra.mxu0 %v6139
    %6148 = vmatprep.subr.bf16.mxu0 0
    %6149 = vmatpush1.bf16.msra.mxu0 %v6140
    %6150 = vmatprep.subr.bf16.mxu0 0
    %6151 = vmatpush1.bf16.msra.mxu0 0
    %6152 = vmatprep.subr.bf16.mxu0 0
    %6153 = vmatpush1.bf16.msra.mxu0 0
    %6154 = vmatprep.subr.bf16.mxu0 0
    %6155 = vmatpush1.bf16.msra.mxu0 0
    %6156 = vmatprep.subr.bf16.mxu0 0
    %6157 = vmatpush1.bf16.msra.mxu0 0
    %6158 = vmatprep.subr.bf16.mxu0 0
    %6159 = vmatpush1.bf16.msra.mxu0 0
    %6160 = vmatprep.subr.bf16.mxu0 0
    %6161 = vmatpush1.bf16.msra.mxu0 0
    %6162 = vmatprep.subr.bf16.mxu0 0
    %6163 = vmatpush1.bf16.msra.mxu0 0
    %6164 = vmatprep.subr.bf16.mxu0 0
    %6165 = vmatpush1.bf16.msra.mxu0 0
    %6166 = vmatprep.subr.bf16.mxu0 0
    %6167 = vmatpush1.bf16.msra.mxu0 0
    %6168 = vmatprep.subr.bf16.mxu0 0
    %6169 = vmatpush1.bf16.msra.mxu0 0
    %6170 = vmatprep.subr.bf16.mxu0 0
    %6171 = vmatpush1.bf16.msra.mxu0 0
    %6172 = vmatprep.subr.bf16.mxu0 0
    %6173 = vmatpush1.bf16.msra.mxu0 0
    %6174 = vmatprep.subr.bf16.mxu0 0
    %6175 = vmatpush1.bf16.msra.mxu0 0
    %6176 = vmatprep.subr.bf16.mxu0 0
    %6177 = vmatpush1.bf16.msra.mxu0 0
    %6178 = vmatprep.mubr.bf16.mxu0 0
    %6179 = vmatmul.mubr.bf16.gmra.mrb[0].mxu0 %v6144
    %v6180 = vpop.f32.mrb[0].mxu0
    %v6181 = vadd.f32 %v6130, %v6180
    %v6182 = vpop.f32.mrb[0].mxu0
    %v6183 = vpop.f32.mrb[0].mxu0
    %v6184 = vadd.f32 %v6130, %v6183
    %v6185 = vpop.f32.mrb[0].mxu0
    %6186 = vdwg.mxu0
    %v6187 = vadd.f32 %v5127, %v6181
    %v6188 = vadd.f32 %v5128, %v6184
    %v6189 = vld [vmem:[%s4 + $0x22] sm:$0x1]
    %v6190 = vld [vmem:[%s4 + $0x23] sm:$0x1]
    %v6191 = vsel %vm74, %v6187, 0.0
    %6192 = vadd.xlane.f32.xlu0 %v6191
    %v6193 = vpop.xlane.xlu0 %6192
    %v6194 = vsel %vm74, %v6188, 0.0
    %6195 = vadd.xlane.f32.xlu0 %v6194
    %v6196 = vpop.xlane.xlu0 %6195
    %v6197 = vmul.f32 %v6193, %v1132
    %v6198 = vmul.f32 %v6196, %v1132
    %v6199 = vsub.f32 %v6187, %v6197
    %v6200 = vsub.f32 %v6188, %v6198
    %v6201 = vmul.f32 %v6199, %v6199
    %v6202 = vmul.f32 %v6200, %v6200
    %v6203 = vsel %vm74, %v6201, 0.0
    %6204 = vadd.xlane.f32.xlu0 %v6203
    %v6205 = vpop.xlane.xlu0 %6204
    %v6206 = vsel %vm74, %v6202, 0.0
    %6207 = vadd.xlane.f32.xlu0 %v6206
    %v6208 = vpop.xlane.xlu0 %6207
    %v6209 = vmul.f32 %v6205, %v1132
    %v6210 = vmul.f32 %v6208, %v1132
    %v6211 = vadd.f32 %v6209, 1e-05
    %v6212 = vadd.f32 %v6210, 1e-05
    %v6213 = vrsqrt.pop %v6211
    %v6214 = vrsqrt.pop %v6212
    %v6215 = vmul.f32 %v6199, %v6213
    %v6216 = vmul.f32 %v6200, %v6214
    %v6217 = vlaneseq
    %v6218 = vshrl.u32 %v6217, 7
    %v6219 = vsub.s32 0, %v6218
    %v6220 = vrot.slane %v6189, %v6219
    %v6221 = vmul.f32 %v6215, %v6220
    %v6222 = vmul.f32 %v6216, %v6220
    %v6223 = vlaneseq
    %v6224 = vshrl.u32 %v6223, 7
    %v6225 = vsub.s32 0, %v6224
    %v6226 = vrot.slane %v6190, %v6225
    %v6227 = vadd.f32 %v6221, %v6226
    %v6228 = vadd.f32 %v6222, %v6226
    %v6229 = vld [vmem:[#allocation2 + $0x130] sm:$0xf]
    %v6230 = vld [vmem:[#allocation2 + $0x134] sm:$0xf]
    %v6231 = vld [vmem:[#allocation2 + $0x138] sm:$0xf]
    %v6232 = vld [vmem:[#allocation2 + $0x13c] sm:$0xf]
    %v6233 = vld [vmem:[#allocation2 + $0x140] sm:$0xf]
    %v6234 = vld [vmem:[#allocation2 + $0x144] sm:$0xf]
    %v6235 = vld [vmem:[#allocation2 + $0x148] sm:$0xf]
    %v6236 = vld [vmem:[#allocation2 + $0x14c] sm:$0xf]
    %v6237 = vld [vmem:[%s4 + $0x1e] sm:$0x1]
    %v6238 = vld [vmem:[%s4 + $0x1f] sm:$0x1]
    %v6239 = vpack.c.bf16 %v6228, %v6227
    %v6240 = vlaneseq
    %v6241 = vshrl.u32 %v6240, 7
    %v6242 = vsub.s32 0, %v6241
    %v6243 = vrot.slane %v6237, %v6242
    %v6248 = vunpack.c.l.b16 %v6229
    %v6249 = vunpack.c.l.b16 %v6230
    %v6250 = vunpack.c.l.b16 %v6231
    %v6251 = vunpack.c.l.b16 %v6232
    %v6252 = vpack.c.b16 %v6249, %v6248
    %v6253 = vpack.c.b16 %v6251, %v6250
    %v6257 = vsel %vm74, %v6239, 0
    %6259 = vmatprep.subr.bf16.mxu0 0
    %6260 = vmatpush1.bf16.msra.mxu0 %v6252
    %6261 = vmatprep.subr.bf16.mxu0 0
    %6262 = vmatpush1.bf16.msra.mxu0 %v6253
    %6263 = vmatprep.subr.bf16.mxu0 0
    %6264 = vmatpush1.bf16.msra.mxu0 0
    %6265 = vmatprep.subr.bf16.mxu0 0
    %6266 = vmatpush1.bf16.msra.mxu0 0
    %6267 = vmatprep.subr.bf16.mxu0 0
    %6268 = vmatpush1.bf16.msra.mxu0 0
    %6269 = vmatprep.subr.bf16.mxu0 0
    %6270 = vmatpush1.bf16.msra.mxu0 0
    %6271 = vmatprep.subr.bf16.mxu0 0
    %6272 = vmatpush1.bf16.msra.mxu0 0
    %6273 = vmatprep.subr.bf16.mxu0 0
    %6274 = vmatpush1.bf16.msra.mxu0 0
    %6275 = vmatprep.subr.bf16.mxu0 0
    %6276 = vmatpush1.bf16.msra.mxu0 0
    %6277 = vmatprep.subr.bf16.mxu0 0
    %6278 = vmatpush1.bf16.msra.mxu0 0
    %6279 = vmatprep.subr.bf16.mxu0 0
    %6280 = vmatpush1.bf16.msra.mxu0 0
    %6281 = vmatprep.subr.bf16.mxu0 0
    %6282 = vmatpush1.bf16.msra.mxu0 0
    %6283 = vmatprep.subr.bf16.mxu0 0
    %6284 = vmatpush1.bf16.msra.mxu0 0
    %6285 = vmatprep.subr.bf16.mxu0 0
    %6286 = vmatpush1.bf16.msra.mxu0 0
    %6287 = vmatprep.subr.bf16.mxu0 0
    %6288 = vmatpush1.bf16.msra.mxu0 0
    %6289 = vmatprep.subr.bf16.mxu0 0
    %6290 = vmatpush1.bf16.msra.mxu0 0
    %6291 = vmatprep.mubr.bf16.mxu0 0
    %6292 = vmatmul.mubr.bf16.gmra.mrb[0].mxu0 %v6257
    %v6293 = vpop.f32.mrb[0].mxu0
    %v6294 = vadd.f32 %v6243, %v6293
    %v6295 = vpop.f32.mrb[0].mxu0
    %v6296 = vpop.f32.mrb[0].mxu0
    %v6297 = vadd.f32 %v6243, %v6296
    %v6298 = vpop.f32.mrb[0].mxu0
    %6299 = vdwg.mxu0
    %6300 = vrot.lane.b32.xlu0 %v6252, 96
    %v6301 = vpop.permute.xlu0 %6300
    %6302 = vrot.lane.b32.xlu0 %v6253, 96
    %v6303 = vpop.permute.xlu0 %6302
    %6307 = vrot.lane.b32.xlu0 %v6243, 96
    %v6308 = vpop.permute.xlu0 %6307
    %6310 = vmatprep.subr.bf16.mxu0 0
    %6311 = vmatpush1.bf16.msra.mxu0 %v6301
    %6312 = vmatprep.subr.bf16.mxu0 0
    %6313 = vmatpush1.bf16.msra.mxu0 %v6303
    %6314 = vmatprep.subr.bf16.mxu0 0
    %6315 = vmatpush1.bf16.msra.mxu0 0
    %6316 = vmatprep.subr.bf16.mxu0 0
    %6317 = vmatpush1.bf16.msra.mxu0 0
    %6318 = vmatprep.subr.bf16.mxu0 0
    %6319 = vmatpush1.bf16.msra.mxu0 0
    %6320 = vmatprep.subr.bf16.mxu0 0
    %6321 = vmatpush1.bf16.msra.mxu0 0
    %6322 = vmatprep.subr.bf16.mxu0 0
    %6323 = vmatpush1.bf16.msra.mxu0 0
    %6324 = vmatprep.subr.bf16.mxu0 0
    %6325 = vmatpush1.bf16.msra.mxu0 0
    %6326 = vmatprep.subr.bf16.mxu0 0
    %6327 = vmatpush1.bf16.msra.mxu0 0
    %6328 = vmatprep.subr.bf16.mxu0 0
    %6329 = vmatpush1.bf16.msra.mxu0 0
    %6330 = vmatprep.subr.bf16.mxu0 0
    %6331 = vmatpush1.bf16.msra.mxu0 0
    %6332 = vmatprep.subr.bf16.mxu0 0
    %6333 = vmatpush1.bf16.msra.mxu0 0
    %6334 = vmatprep.subr.bf16.mxu0 0
    %6335 = vmatpush1.bf16.msra.mxu0 0
    %6336 = vmatprep.subr.bf16.mxu0 0
    %6337 = vmatpush1.bf16.msra.mxu0 0
    %6338 = vmatprep.subr.bf16.mxu0 0
    %6339 = vmatpush1.bf16.msra.mxu0 0
    %6340 = vmatprep.subr.bf16.mxu0 0
    %6341 = vmatpush1.bf16.msra.mxu0 0
    %6342 = vmatprep.mubr.bf16.mxu0 0
    %6343 = vmatmul.mubr.bf16.gmra.mrb[0].mxu0 %v3873
    %v6344 = vpop.f32.mrb[0].mxu0
    %v6345 = vadd.f32 %v6308, %v6344
    %v6346 = vpop.f32.mrb[0].mxu0
    %v6347 = vpop.f32.mrb[0].mxu0
    %v6348 = vadd.f32 %v6308, %v6347
    %v6349 = vpop.f32.mrb[0].mxu0
    %6350 = vdwg.mxu0
    %v6351 = vpack.c.bf16 %v6294, %v6294
    %v6352 = vpack.c.bf16 %v6297, %v6297
    %v6353 = vpack.c.bf16 %v6345, %v6345
    %v6354 = vpack.c.bf16 %v6348, %v6348
    %v6356 = vsel %vm124, %v6351, 0
    %v6359 = vsel %vm124, %v6353, 0
    %6361 = vmatprep.subr.bf16.mxu0 0
    %6362 = vmatpush1.bf16.xpose.msra.mxu0 %v6359
    %6363 = vmatprep.subr.bf16.mxu0 0
    %6364 = vmatpush1.bf16.xpose.msra.mxu0 0
    %6365 = vmatprep.subr.bf16.mxu0 0
    %6366 = vmatpush1.bf16.xpose.msra.mxu0 0
    %6367 = vmatprep.subr.bf16.mxu0 0
    %6368 = vmatpush1.bf16.xpose.msra.mxu0 0
    %6369 = vmatprep.subr.bf16.mxu0 0
    %6370 = vmatpush1.bf16.xpose.msra.mxu0 0
    %6371 = vmatprep.subr.bf16.mxu0 0
    %6372 = vmatpush1.bf16.xpose.msra.mxu0 0
    %6373 = vmatprep.subr.bf16.mxu0 0
    %6374 = vmatpush1.bf16.xpose.msra.mxu0 0
    %6375 = vmatprep.subr.bf16.mxu0 0
    %6376 = vmatpush1.bf16.xpose.msra.mxu0 0
    %6377 = vmatprep.subr.bf16.mxu0 0
    %6378 = vmatpush1.bf16.xpose.msra.mxu0 0
    %6379 = vmatprep.subr.bf16.mxu0 0
    %6380 = vmatpush1.bf16.xpose.msra.mxu0 0
    %6381 = vmatprep.subr.bf16.mxu0 0
    %6382 = vmatpush1.bf16.xpose.msra.mxu0 0
    %6383 = vmatprep.subr.bf16.mxu0 0
    %6384 = vmatpush1.bf16.xpose.msra.mxu0 0
    %6385 = vmatprep.subr.bf16.mxu0 0
    %6386 = vmatpush1.bf16.xpose.msra.mxu0 0
    %6387 = vmatprep.subr.bf16.mxu0 0
    %6388 = vmatpush1.bf16.xpose.msra.mxu0 0
    %6389 = vmatprep.subr.bf16.mxu0 0
    %6390 = vmatpush1.bf16.xpose.msra.mxu0 0
    %6391 = vmatprep.subr.bf16.mxu0 0
    %6392 = vmatpush1.bf16.xpose.msra.mxu0 0
    %6393 = vmatprep.mubr.bf16.mxu0 0
    %6394 = vmatmul.mubr.bf16.gmra.mrb[0].mxu0 %v6356
    %v6395 = vpop.f32.mrb[0].mxu0
    %v6396 = vadd.f32 0.0, %v6395
    %v6397 = vpop.f32.mrb[0].mxu0
    %v6398 = vpop.f32.mrb[0].mxu0
    %v6399 = vpop.f32.mrb[0].mxu0
    %6400 = vdwg.mxu0
    %v6402 = vsel %vm124, %v6352, 0
    %v6405 = vsel %vm124, %v6354, 0
    %6407 = vmatprep.subr.bf16.mxu0 0
    %6408 = vmatpush1.bf16.xpose.msra.mxu0 %v6405
    %6409 = vmatprep.subr.bf16.mxu0 0
    %6410 = vmatpush1.bf16.xpose.msra.mxu0 0
    %6411 = vmatprep.subr.bf16.mxu0 0
    %6412 = vmatpush1.bf16.xpose.msra.mxu0 0
    %6413 = vmatprep.subr.bf16.mxu0 0
    %6414 = vmatpush1.bf16.xpose.msra.mxu0 0
    %6415 = vmatprep.subr.bf16.mxu0 0
    %6416 = vmatpush1.bf16.xpose.msra.mxu0 0
    %6417 = vmatprep.subr.bf16.mxu0 0
    %6418 = vmatpush1.bf16.xpose.msra.mxu0 0
    %6419 = vmatprep.subr.bf16.mxu0 0
    %6420 = vmatpush1.bf16.xpose.msra.mxu0 0
    %6421 = vmatprep.subr.bf16.mxu0 0
    %6422 = vmatpush1.bf16.xpose.msra.mxu0 0
    %6423 = vmatprep.subr.bf16.mxu0 0
    %6424 = vmatpush1.bf16.xpose.msra.mxu0 0
    %6425 = vmatprep.subr.bf16.mxu0 0
    %6426 = vmatpush1.bf16.xpose.msra.mxu0 0
    %6427 = vmatprep.subr.bf16.mxu0 0
    %6428 = vmatpush1.bf16.xpose.msra.mxu0 0
    %6429 = vmatprep.subr.bf16.mxu0 0
    %6430 = vmatpush1.bf16.xpose.msra.mxu0 0
    %6431 = vmatprep.subr.bf16.mxu0 0
    %6432 = vmatpush1.bf16.xpose.msra.mxu0 0
    %6433 = vmatprep.subr.bf16.mxu0 0
    %6434 = vmatpush1.bf16.xpose.msra.mxu0 0
    %6435 = vmatprep.subr.bf16.mxu0 0
    %6436 = vmatpush1.bf16.xpose.msra.mxu0 0
    %6437 = vmatprep.subr.bf16.mxu0 0
    %6438 = vmatpush1.bf16.xpose.msra.mxu0 0
    %6439 = vmatprep.mubr.bf16.mxu0 0
    %6440 = vmatmul.mubr.bf16.gmra.mrb[0].mxu0 %v6402
    %v6441 = vpop.f32.mrb[0].mxu0
    %v6442 = vadd.f32 0.0, %v6441
    %v6443 = vpop.f32.mrb[0].mxu0
    %v6444 = vpop.f32.mrb[0].mxu0
    %v6445 = vpop.f32.mrb[0].mxu0
    %6446 = vdwg.mxu0
    %v6447 = vmul.f32 %v6396, 0.35355338
    %v6448 = vmul.f32 %v6442, 0.35355338
    %v6449 = vsel %vm124, %v6447, -inf
    %6450 = vmax.xlane.f32.xlu0 %v6449
    %v6451 = vpop.xlane.xlu0 %6450
    %v6452 = vsel %vm124, %v6448, -inf
    %6453 = vmax.xlane.f32.xlu0 %v6452
    %v6454 = vpop.xlane.xlu0 %6453
    %v6455 = vsub.f32 %v6447, %v6451
    %v6456 = vsub.f32 %v6448, %v6454
    %v6457 = vmul.f32 %v6455, 1.442695
    %v6458 = vpow.pop %v6457
    %v6459 = vmul.f32 %v6456, 1.442695
    %v6460 = vpow.pop %v6459
    %v6461 = vsel %vm124, %v6458, 0.0
    %6462 = vadd.xlane.f32.xlu0 %v6461
    %v6463 = vpop.xlane.xlu0 %6462
    %v6464 = vsel %vm124, %v6460, 0.0
    %6465 = vadd.xlane.f32.xlu0 %v6464
    %v6466 = vpop.xlane.xlu0 %6465
    %v6467 = vpack.c.bf16 %v6458, %v6458
    %v6468 = vpack.c.bf16 %v6460, %v6460
    %6470 = vrot.lane.b32.xlu0 %v6353, 96
    %v6471 = vpop.permute.xlu0 %6470
    %v6473 = vsel %vm124, %v6467, 0
    %v6476 = vsel %vm261, %v6471, 0
    %6478 = vmatprep.subr.bf16.mxu0 0
    %6479 = vmatpush1.bf16.msra.mxu0 %v6476
    %6480 = vmatprep.subr.bf16.mxu0 0
    %6481 = vmatpush1.bf16.msra.mxu0 0
    %6482 = vmatprep.subr.bf16.mxu0 0
    %6483 = vmatpush1.bf16.msra.mxu0 0
    %6484 = vmatprep.subr.bf16.mxu0 0
    %6485 = vmatpush1.bf16.msra.mxu0 0
    %6486 = vmatprep.subr.bf16.mxu0 0
    %6487 = vmatpush1.bf16.msra.mxu0 0
    %6488 = vmatprep.subr.bf16.mxu0 0
    %6489 = vmatpush1.bf16.msra.mxu0 0
    %6490 = vmatprep.subr.bf16.mxu0 0
    %6491 = vmatpush1.bf16.msra.mxu0 0
    %6492 = vmatprep.subr.bf16.mxu0 0
    %6493 = vmatpush1.bf16.msra.mxu0 0
    %6494 = vmatprep.subr.bf16.mxu0 0
    %6495 = vmatpush1.bf16.msra.mxu0 0
    %6496 = vmatprep.subr.bf16.mxu0 0
    %6497 = vmatpush1.bf16.msra.mxu0 0
    %6498 = vmatprep.subr.bf16.mxu0 0
    %6499 = vmatpush1.bf16.msra.mxu0 0
    %6500 = vmatprep.subr.bf16.mxu0 0
    %6501 = vmatpush1.bf16.msra.mxu0 0
    %6502 = vmatprep.subr.bf16.mxu0 0
    %6503 = vmatpush1.bf16.msra.mxu0 0
    %6504 = vmatprep.subr.bf16.mxu0 0
    %6505 = vmatpush1.bf16.msra.mxu0 0
    %6506 = vmatprep.subr.bf16.mxu0 0
    %6507 = vmatpush1.bf16.msra.mxu0 0
    %6508 = vmatprep.subr.bf16.mxu0 0
    %6509 = vmatpush1.bf16.msra.mxu0 0
    %6510 = vmatprep.mubr.bf16.mxu0 0
    %6511 = vmatmul.mubr.bf16.gmra.mrb[0].mxu0 %v6473
    %v6512 = vpop.f32.mrb[0].mxu0
    %v6513 = vadd.f32 0.0, %v6512
    %v6514 = vpop.f32.mrb[0].mxu0
    %v6515 = vpop.f32.mrb[0].mxu0
    %v6516 = vpop.f32.mrb[0].mxu0
    %6517 = vdwg.mxu0
    %6519 = vrot.lane.b32.xlu0 %v6354, 96
    %v6520 = vpop.permute.xlu0 %6519
    %v6522 = vsel %vm124, %v6468, 0
    %v6525 = vsel %vm261, %v6520, 0
    %6527 = vmatprep.subr.bf16.mxu0 0
    %6528 = vmatpush1.bf16.msra.mxu0 %v6525
    %6529 = vmatprep.subr.bf16.mxu0 0
    %6530 = vmatpush1.bf16.msra.mxu0 0
    %6531 = vmatprep.subr.bf16.mxu0 0
    %6532 = vmatpush1.bf16.msra.mxu0 0
    %6533 = vmatprep.subr.bf16.mxu0 0
    %6534 = vmatpush1.bf16.msra.mxu0 0
    %6535 = vmatprep.subr.bf16.mxu0 0
    %6536 = vmatpush1.bf16.msra.mxu0 0
    %6537 = vmatprep.subr.bf16.mxu0 0
    %6538 = vmatpush1.bf16.msra.mxu0 0
    %6539 = vmatprep.subr.bf16.mxu0 0
    %6540 = vmatpush1.bf16.msra.mxu0 0
    %6541 = vmatprep.subr.bf16.mxu0 0
    %6542 = vmatpush1.bf16.msra.mxu0 0
    %6543 = vmatprep.subr.bf16.mxu0 0
    %6544 = vmatpush1.bf16.msra.mxu0 0
    %6545 = vmatprep.subr.bf16.mxu0 0
    %6546 = vmatpush1.bf16.msra.mxu0 0
    %6547 = vmatprep.subr.bf16.mxu0 0
    %6548 = vmatpush1.bf16.msra.mxu0 0
    %6549 = vmatprep.subr.bf16.mxu0 0
    %6550 = vmatpush1.bf16.msra.mxu0 0
    %6551 = vmatprep.subr.bf16.mxu0 0
    %6552 = vmatpush1.bf16.msra.mxu0 0
    %6553 = vmatprep.subr.bf16.mxu0 0
    %6554 = vmatpush1.bf16.msra.mxu0 0
    %6555 = vmatprep.subr.bf16.mxu0 0
    %6556 = vmatpush1.bf16.msra.mxu0 0
    %6557 = vmatprep.subr.bf16.mxu0 0
    %6558 = vmatpush1.bf16.msra.mxu0 0
    %6559 = vmatprep.mubr.bf16.mxu0 0
    %6560 = vmatmul.mubr.bf16.gmra.mrb[0].mxu0 %v6522
    %v6561 = vpop.f32.mrb[0].mxu0
    %v6562 = vadd.f32 0.0, %v6561
    %v6563 = vpop.f32.mrb[0].mxu0
    %v6564 = vpop.f32.mrb[0].mxu0
    %v6565 = vpop.f32.mrb[0].mxu0
    %6566 = vdwg.mxu0
    %v6567 = vrcp.pop %v6463
    %v6568 = vrcp.pop %v6466
    %v6569 = vmul.f32 %v6513, %v6567
    %v6570 = vmul.f32 %v6562, %v6568
    %6572 = vrot.lane.b32.xlu0 %v6351, 120
    %v6573 = vpop.permute.xlu0 %6572
    %6574 = vrot.lane.b32.xlu0 %v6353, 120
    %v6575 = vpop.permute.xlu0 %6574
    %v6577 = vsel %vm124, %v6573, 0
    %v6580 = vsel %vm124, %v6575, 0
    %6582 = vmatprep.subr.bf16.mxu0 0
    %6583 = vmatpush1.bf16.xpose.msra.mxu0 %v6580
    %6584 = vmatprep.subr.bf16.mxu0 0
    %6585 = vmatpush1.bf16.xpose.msra.mxu0 0
    %6586 = vmatprep.subr.bf16.mxu0 0
    %6587 = vmatpush1.bf16.xpose.msra.mxu0 0
    %6588 = vmatprep.subr.bf16.mxu0 0
    %6589 = vmatpush1.bf16.xpose.msra.mxu0 0
    %6590 = vmatprep.subr.bf16.mxu0 0
    %6591 = vmatpush1.bf16.xpose.msra.mxu0 0
    %6592 = vmatprep.subr.bf16.mxu0 0
    %6593 = vmatpush1.bf16.xpose.msra.mxu0 0
    %6594 = vmatprep.subr.bf16.mxu0 0
    %6595 = vmatpush1.bf16.xpose.msra.mxu0 0
    %6596 = vmatprep.subr.bf16.mxu0 0
    %6597 = vmatpush1.bf16.xpose.msra.mxu0 0
    %6598 = vmatprep.subr.bf16.mxu0 0
    %6599 = vmatpush1.bf16.xpose.msra.mxu0 0
    %6600 = vmatprep.subr.bf16.mxu0 0
    %6601 = vmatpush1.bf16.xpose.msra.mxu0 0
    %6602 = vmatprep.subr.bf16.mxu0 0
    %6603 = vmatpush1.bf16.xpose.msra.mxu0 0
    %6604 = vmatprep.subr.bf16.mxu0 0
    %6605 = vmatpush1.bf16.xpose.msra.mxu0 0
    %6606 = vmatprep.subr.bf16.mxu0 0
    %6607 = vmatpush1.bf16.xpose.msra.mxu0 0
    %6608 = vmatprep.subr.bf16.mxu0 0
    %6609 = vmatpush1.bf16.xpose.msra.mxu0 0
    %6610 = vmatprep.subr.bf16.mxu0 0
    %6611 = vmatpush1.bf16.xpose.msra.mxu0 0
    %6612 = vmatprep.subr.bf16.mxu0 0
    %6613 = vmatpush1.bf16.xpose.msra.mxu0 0
    %6614 = vmatprep.mubr.bf16.mxu0 0
    %6615 = vmatmul.mubr.bf16.gmra.mrb[0].mxu0 %v6577
    %v6616 = vpop.f32.mrb[0].mxu0
    %v6617 = vadd.f32 0.0, %v6616
    %v6618 = vpop.f32.mrb[0].mxu0
    %v6619 = vpop.f32.mrb[0].mxu0
    %v6620 = vpop.f32.mrb[0].mxu0
    %6621 = vdwg.mxu0
    %6623 = vrot.lane.b32.xlu0 %v6352, 120
    %v6624 = vpop.permute.xlu0 %6623
    %6625 = vrot.lane.b32.xlu0 %v6354, 120
    %v6626 = vpop.permute.xlu0 %6625
    %v6628 = vsel %vm124, %v6624, 0
    %v6631 = vsel %vm124, %v6626, 0
    %6633 = vmatprep.subr.bf16.mxu0 0
    %6634 = vmatpush1.bf16.xpose.msra.mxu0 %v6631
    %6635 = vmatprep.subr.bf16.mxu0 0
    %6636 = vmatpush1.bf16.xpose.msra.mxu0 0
    %6637 = vmatprep.subr.bf16.mxu0 0
    %6638 = vmatpush1.bf16.xpose.msra.mxu0 0
    %6639 = vmatprep.subr.bf16.mxu0 0
    %6640 = vmatpush1.bf16.xpose.msra.mxu0 0
    %6641 = vmatprep.subr.bf16.mxu0 0
    %6642 = vmatpush1.bf16.xpose.msra.mxu0 0
    %6643 = vmatprep.subr.bf16.mxu0 0
    %6644 = vmatpush1.bf16.xpose.msra.mxu0 0
    %6645 = vmatprep.subr.bf16.mxu0 0
    %6646 = vmatpush1.bf16.xpose.msra.mxu0 0
    %6647 = vmatprep.subr.bf16.mxu0 0
    %6648 = vmatpush1.bf16.xpose.msra.mxu0 0
    %6649 = vmatprep.subr.bf16.mxu0 0
    %6650 = vmatpush1.bf16.xpose.msra.mxu0 0
    %6651 = vmatprep.subr.bf16.mxu0 0
    %6652 = vmatpush1.bf16.xpose.msra.mxu0 0
    %6653 = vmatprep.subr.bf16.mxu0 0
    %6654 = vmatpush1.bf16.xpose.msra.mxu0 0
    %6655 = vmatprep.subr.bf16.mxu0 0
    %6656 = vmatpush1.bf16.xpose.msra.mxu0 0
    %6657 = vmatprep.subr.bf16.mxu0 0
    %6658 = vmatpush1.bf16.xpose.msra.mxu0 0
    %6659 = vmatprep.subr.bf16.mxu0 0
    %6660 = vmatpush1.bf16.xpose.msra.mxu0 0
    %6661 = vmatprep.subr.bf16.mxu0 0
    %6662 = vmatpush1.bf16.xpose.msra.mxu0 0
    %6663 = vmatprep.subr.bf16.mxu0 0
    %6664 = vmatpush1.bf16.xpose.msra.mxu0 0
    %6665 = vmatprep.mubr.bf16.mxu0 0
    %6666 = vmatmul.mubr.bf16.gmra.mrb[0].mxu0 %v6628
    %v6667 = vpop.f32.mrb[0].mxu0
    %v6668 = vadd.f32 0.0, %v6667
    %v6669 = vpop.f32.mrb[0].mxu0
    %v6670 = vpop.f32.mrb[0].mxu0
    %v6671 = vpop.f32.mrb[0].mxu0
    %6672 = vdwg.mxu0
    %v6673 = vmul.f32 %v6617, 0.35355338
    %v6674 = vmul.f32 %v6668, 0.35355338
    %v6675 = vsel %vm124, %v6673, -inf
    %6676 = vmax.xlane.f32.xlu0 %v6675
    %v6677 = vpop.xlane.xlu0 %6676
    %v6678 = vsel %vm124, %v6674, -inf
    %6679 = vmax.xlane.f32.xlu0 %v6678
    %v6680 = vpop.xlane.xlu0 %6679
    %v6681 = vsub.f32 %v6673, %v6677
    %v6682 = vsub.f32 %v6674, %v6680
    %v6683 = vmul.f32 %v6681, 1.442695
    %v6684 = vpow.pop %v6683
    %v6685 = vmul.f32 %v6682, 1.442695
    %v6686 = vpow.pop %v6685
    %v6687 = vsel %vm124, %v6684, 0.0
    %6688 = vadd.xlane.f32.xlu0 %v6687
    %v6689 = vpop.xlane.xlu0 %6688
    %v6690 = vsel %vm124, %v6686, 0.0
    %6691 = vadd.xlane.f32.xlu0 %v6690
    %v6692 = vpop.xlane.xlu0 %6691
    %v6693 = vpack.c.bf16 %v6684, %v6684
    %v6694 = vpack.c.bf16 %v6686, %v6686
    %6695 = vrot.lane.b32.xlu0 %v6353, 88
    %v6696 = vpop.permute.xlu0 %6695
    %v6698 = vsel %vm124, %v6693, 0
    %v6701 = vsel %vm261, %v6696, 0
    %6703 = vmatprep.subr.bf16.mxu0 0
    %6704 = vmatpush1.bf16.msra.mxu0 %v6701
    %6705 = vmatprep.subr.bf16.mxu0 0
    %6706 = vmatpush1.bf16.msra.mxu0 0
    %6707 = vmatprep.subr.bf16.mxu0 0
    %6708 = vmatpush1.bf16.msra.mxu0 0
    %6709 = vmatprep.subr.bf16.mxu0 0
    %6710 = vmatpush1.bf16.msra.mxu0 0
    %6711 = vmatprep.subr.bf16.mxu0 0
    %6712 = vmatpush1.bf16.msra.mxu0 0
    %6713 = vmatprep.subr.bf16.mxu0 0
    %6714 = vmatpush1.bf16.msra.mxu0 0
    %6715 = vmatprep.subr.bf16.mxu0 0
    %6716 = vmatpush1.bf16.msra.mxu0 0
    %6717 = vmatprep.subr.bf16.mxu0 0
    %6718 = vmatpush1.bf16.msra.mxu0 0
    %6719 = vmatprep.subr.bf16.mxu0 0
    %6720 = vmatpush1.bf16.msra.mxu0 0
    %6721 = vmatprep.subr.bf16.mxu0 0
    %6722 = vmatpush1.bf16.msra.mxu0 0
    %6723 = vmatprep.subr.bf16.mxu0 0
    %6724 = vmatpush1.bf16.msra.mxu0 0
    %6725 = vmatprep.subr.bf16.mxu0 0
    %6726 = vmatpush1.bf16.msra.mxu0 0
    %6727 = vmatprep.subr.bf16.mxu0 0
    %6728 = vmatpush1.bf16.msra.mxu0 0
    %6729 = vmatprep.subr.bf16.mxu0 0
    %6730 = vmatpush1.bf16.msra.mxu0 0
    %6731 = vmatprep.subr.bf16.mxu0 0
    %6732 = vmatpush1.bf16.msra.mxu0 0
    %6733 = vmatprep.subr.bf16.mxu0 0
    %6734 = vmatpush1.bf16.msra.mxu0 0
    %6735 = vmatprep.mubr.bf16.mxu0 0
    %6736 = vmatmul.mubr.bf16.gmra.mrb[0].mxu0 %v6698
    %v6737 = vpop.f32.mrb[0].mxu0
    %v6738 = vadd.f32 0.0, %v6737
    %v6739 = vpop.f32.mrb[0].mxu0
    %v6740 = vpop.f32.mrb[0].mxu0
    %v6741 = vpop.f32.mrb[0].mxu0
    %6742 = vdwg.mxu0
    %6743 = vrot.lane.b32.xlu0 %v6354, 88
    %v6744 = vpop.permute.xlu0 %6743
    %v6746 = vsel %vm124, %v6694, 0
    %v6749 = vsel %vm261, %v6744, 0
    %6751 = vmatprep.subr.bf16.mxu0 0
    %6752 = vmatpush1.bf16.msra.mxu0 %v6749
    %6753 = vmatprep.subr.bf16.mxu0 0
    %6754 = vmatpush1.bf16.msra.mxu0 0
    %6755 = vmatprep.subr.bf16.mxu0 0
    %6756 = vmatpush1.bf16.msra.mxu0 0
    %6757 = vmatprep.subr.bf16.mxu0 0
    %6758 = vmatpush1.bf16.msra.mxu0 0
    %6759 = vmatprep.subr.bf16.mxu0 0
    %6760 = vmatpush1.bf16.msra.mxu0 0
    %6761 = vmatprep.subr.bf16.mxu0 0
    %6762 = vmatpush1.bf16.msra.mxu0 0
    %6763 = vmatprep.subr.bf16.mxu0 0
    %6764 = vmatpush1.bf16.msra.mxu0 0
    %6765 = vmatprep.subr.bf16.mxu0 0
    %6766 = vmatpush1.bf16.msra.mxu0 0
    %6767 = vmatprep.subr.bf16.mxu0 0
    %6768 = vmatpush1.bf16.msra.mxu0 0
    %6769 = vmatprep.subr.bf16.mxu0 0
    %6770 = vmatpush1.bf16.msra.mxu0 0
    %6771 = vmatprep.subr.bf16.mxu0 0
    %6772 = vmatpush1.bf16.msra.mxu0 0
    %6773 = vmatprep.subr.bf16.mxu0 0
    %6774 = vmatpush1.bf16.msra.mxu0 0
    %6775 = vmatprep.subr.bf16.mxu0 0
    %6776 = vmatpush1.bf16.msra.mxu0 0
    %6777 = vmatprep.subr.bf16.mxu0 0
    %6778 = vmatpush1.bf16.msra.mxu0 0
    %6779 = vmatprep.subr.bf16.mxu0 0
    %6780 = vmatpush1.bf16.msra.mxu0 0
    %6781 = vmatprep.subr.bf16.mxu0 0
    %6782 = vmatpush1.bf16.msra.mxu0 0
    %6783 = vmatprep.mubr.bf16.mxu0 0
    %6784 = vmatmul.mubr.bf16.gmra.mrb[0].mxu0 %v6746
    %v6785 = vpop.f32.mrb[0].mxu0
    %v6786 = vadd.f32 0.0, %v6785
    %v6787 = vpop.f32.mrb[0].mxu0
    %v6788 = vpop.f32.mrb[0].mxu0
    %v6789 = vpop.f32.mrb[0].mxu0
    %6790 = vdwg.mxu0
    %v6791 = vrcp.pop %v6689
    %v6792 = vrcp.pop %v6692
    %v6793 = vmul.f32 %v6738, %v6791
    %v6794 = vmul.f32 %v6786, %v6792
    %6795 = vrot.lane.b32.xlu0 %v6351, 112
    %v6796 = vpop.permute.xlu0 %6795
    %6797 = vrot.lane.b32.xlu0 %v6353, 112
    %v6798 = vpop.permute.xlu0 %6797
    %v6800 = vsel %vm124, %v6796, 0
    %v6803 = vsel %vm124, %v6798, 0
    %6805 = vmatprep.subr.bf16.mxu0 0
    %6806 = vmatpush1.bf16.xpose.msra.mxu0 %v6803
    %6807 = vmatprep.subr.bf16.mxu0 0
    %6808 = vmatpush1.bf16.xpose.msra.mxu0 0
    %6809 = vmatprep.subr.bf16.mxu0 0
    %6810 = vmatpush1.bf16.xpose.msra.mxu0 0
    %6811 = vmatprep.subr.bf16.mxu0 0
    %6812 = vmatpush1.bf16.xpose.msra.mxu0 0
    %6813 = vmatprep.subr.bf16.mxu0 0
    %6814 = vmatpush1.bf16.xpose.msra.mxu0 0
    %6815 = vmatprep.subr.bf16.mxu0 0
    %6816 = vmatpush1.bf16.xpose.msra.mxu0 0
    %6817 = vmatprep.subr.bf16.mxu0 0
    %6818 = vmatpush1.bf16.xpose.msra.mxu0 0
    %6819 = vmatprep.subr.bf16.mxu0 0
    %6820 = vmatpush1.bf16.xpose.msra.mxu0 0
    %6821 = vmatprep.subr.bf16.mxu0 0
    %6822 = vmatpush1.bf16.xpose.msra.mxu0 0
    %6823 = vmatprep.subr.bf16.mxu0 0
    %6824 = vmatpush1.bf16.xpose.msra.mxu0 0
    %6825 = vmatprep.subr.bf16.mxu0 0
    %6826 = vmatpush1.bf16.xpose.msra.mxu0 0
    %6827 = vmatprep.subr.bf16.mxu0 0
    %6828 = vmatpush1.bf16.xpose.msra.mxu0 0
    %6829 = vmatprep.subr.bf16.mxu0 0
    %6830 = vmatpush1.bf16.xpose.msra.mxu0 0
    %6831 = vmatprep.subr.bf16.mxu0 0
    %6832 = vmatpush1.bf16.xpose.msra.mxu0 0
    %6833 = vmatprep.subr.bf16.mxu0 0
    %6834 = vmatpush1.bf16.xpose.msra.mxu0 0
    %6835 = vmatprep.subr.bf16.mxu0 0
    %6836 = vmatpush1.bf16.xpose.msra.mxu0 0
    %6837 = vmatprep.mubr.bf16.mxu0 0
    %6838 = vmatmul.mubr.bf16.gmra.mrb[0].mxu0 %v6800
    %v6839 = vpop.f32.mrb[0].mxu0
    %v6840 = vadd.f32 0.0, %v6839
    %v6841 = vpop.f32.mrb[0].mxu0
    %v6842 = vpop.f32.mrb[0].mxu0
    %v6843 = vpop.f32.mrb[0].mxu0
    %6844 = vdwg.mxu0
    %6845 = vrot.lane.b32.xlu0 %v6352, 112
    %v6846 = vpop.permute.xlu0 %6845
    %6847 = vrot.lane.b32.xlu0 %v6354, 112
    %v6848 = vpop.permute.xlu0 %6847
    %v6850 = vsel %vm124, %v6846, 0
    %v6853 = vsel %vm124, %v6848, 0
    %6855 = vmatprep.subr.bf16.mxu0 0
    %6856 = vmatpush1.bf16.xpose.msra.mxu0 %v6853
    %6857 = vmatprep.subr.bf16.mxu0 0
    %6858 = vmatpush1.bf16.xpose.msra.mxu0 0
    %6859 = vmatprep.subr.bf16.mxu0 0
    %6860 = vmatpush1.bf16.xpose.msra.mxu0 0
    %6861 = vmatprep.subr.bf16.mxu0 0
    %6862 = vmatpush1.bf16.xpose.msra.mxu0 0
    %6863 = vmatprep.subr.bf16.mxu0 0
    %6864 = vmatpush1.bf16.xpose.msra.mxu0 0
    %6865 = vmatprep.subr.bf16.mxu0 0
    %6866 = vmatpush1.bf16.xpose.msra.mxu0 0
    %6867 = vmatprep.subr.bf16.mxu0 0
    %6868 = vmatpush1.bf16.xpose.msra.mxu0 0
    %6869 = vmatprep.subr.bf16.mxu0 0
    %6870 = vmatpush1.bf16.xpose.msra.mxu0 0
    %6871 = vmatprep.subr.bf16.mxu0 0
    %6872 = vmatpush1.bf16.xpose.msra.mxu0 0
    %6873 = vmatprep.subr.bf16.mxu0 0
    %6874 = vmatpush1.bf16.xpose.msra.mxu0 0
    %6875 = vmatprep.subr.bf16.mxu0 0
    %6876 = vmatpush1.bf16.xpose.msra.mxu0 0
    %6877 = vmatprep.subr.bf16.mxu0 0
    %6878 = vmatpush1.bf16.xpose.msra.mxu0 0
    %6879 = vmatprep.subr.bf16.mxu0 0
    %6880 = vmatpush1.bf16.xpose.msra.mxu0 0
    %6881 = vmatprep.subr.bf16.mxu0 0
    %6882 = vmatpush1.bf16.xpose.msra.mxu0 0
    %6883 = vmatprep.subr.bf16.mxu0 0
    %6884 = vmatpush1.bf16.xpose.msra.mxu0 0
    %6885 = vmatprep.subr.bf16.mxu0 0
    %6886 = vmatpush1.bf16.xpose.msra.mxu0 0
    %6887 = vmatprep.mubr.bf16.mxu0 0
    %6888 = vmatmul.mubr.bf16.gmra.mrb[0].mxu0 %v6850
    %v6889 = vpop.f32.mrb[0].mxu0
    %v6890 = vadd.f32 0.0, %v6889
    %v6891 = vpop.f32.mrb[0].mxu0
    %v6892 = vpop.f32.mrb[0].mxu0
    %v6893 = vpop.f32.mrb[0].mxu0
    %6894 = vdwg.mxu0
    %v6895 = vmul.f32 %v6840, 0.35355338
    %v6896 = vmul.f32 %v6890, 0.35355338
    %v6897 = vsel %vm124, %v6895, -inf
    %6898 = vmax.xlane.f32.xlu0 %v6897
    %v6899 = vpop.xlane.xlu0 %6898
    %v6900 = vsel %vm124, %v6896, -inf
    %6901 = vmax.xlane.f32.xlu0 %v6900
    %v6902 = vpop.xlane.xlu0 %6901
    %v6903 = vsub.f32 %v6895, %v6899
    %v6904 = vsub.f32 %v6896, %v6902
    %v6905 = vmul.f32 %v6903, 1.442695
    %v6906 = vpow.pop %v6905
    %v6907 = vmul.f32 %v6904, 1.442695
    %v6908 = vpow.pop %v6907
    %v6909 = vsel %vm124, %v6906, 0.0
    %6910 = vadd.xlane.f32.xlu0 %v6909
    %v6911 = vpop.xlane.xlu0 %6910
    %v6912 = vsel %vm124, %v6908, 0.0
    %6913 = vadd.xlane.f32.xlu0 %v6912
    %v6914 = vpop.xlane.xlu0 %6913
    %v6915 = vpack.c.bf16 %v6906, %v6906
    %v6916 = vpack.c.bf16 %v6908, %v6908
    %6917 = vrot.lane.b32.xlu0 %v6353, 80
    %v6918 = vpop.permute.xlu0 %6917
    %v6920 = vsel %vm124, %v6915, 0
    %v6923 = vsel %vm261, %v6918, 0
    %6925 = vmatprep.subr.bf16.mxu0 0
    %6926 = vmatpush1.bf16.msra.mxu0 %v6923
    %6927 = vmatprep.subr.bf16.mxu0 0
    %6928 = vmatpush1.bf16.msra.mxu0 0
    %6929 = vmatprep.subr.bf16.mxu0 0
    %6930 = vmatpush1.bf16.msra.mxu0 0
    %6931 = vmatprep.subr.bf16.mxu0 0
    %6932 = vmatpush1.bf16.msra.mxu0 0
    %6933 = vmatprep.subr.bf16.mxu0 0
    %6934 = vmatpush1.bf16.msra.mxu0 0
    %6935 = vmatprep.subr.bf16.mxu0 0
    %6936 = vmatpush1.bf16.msra.mxu0 0
    %6937 = vmatprep.subr.bf16.mxu0 0
    %6938 = vmatpush1.bf16.msra.mxu0 0
    %6939 = vmatprep.subr.bf16.mxu0 0
    %6940 = vmatpush1.bf16.msra.mxu0 0
    %6941 = vmatprep.subr.bf16.mxu0 0
    %6942 = vmatpush1.bf16.msra.mxu0 0
    %6943 = vmatprep.subr.bf16.mxu0 0
    %6944 = vmatpush1.bf16.msra.mxu0 0
    %6945 = vmatprep.subr.bf16.mxu0 0
    %6946 = vmatpush1.bf16.msra.mxu0 0
    %6947 = vmatprep.subr.bf16.mxu0 0
    %6948 = vmatpush1.bf16.msra.mxu0 0
    %6949 = vmatprep.subr.bf16.mxu0 0
    %6950 = vmatpush1.bf16.msra.mxu0 0
    %6951 = vmatprep.subr.bf16.mxu0 0
    %6952 = vmatpush1.bf16.msra.mxu0 0
    %6953 = vmatprep.subr.bf16.mxu0 0
    %6954 = vmatpush1.bf16.msra.mxu0 0
    %6955 = vmatprep.subr.bf16.mxu0 0
    %6956 = vmatpush1.bf16.msra.mxu0 0
    %6957 = vmatprep.mubr.bf16.mxu0 0
    %6958 = vmatmul.mubr.bf16.gmra.mrb[0].mxu0 %v6920
    %v6959 = vpop.f32.mrb[0].mxu0
    %v6960 = vadd.f32 0.0, %v6959
    %v6961 = vpop.f32.mrb[0].mxu0
    %v6962 = vpop.f32.mrb[0].mxu0
    %v6963 = vpop.f32.mrb[0].mxu0
    %6964 = vdwg.mxu0
    %6965 = vrot.lane.b32.xlu0 %v6354, 80
    %v6966 = vpop.permute.xlu0 %6965
    %v6968 = vsel %vm124, %v6916, 0
    %v6971 = vsel %vm261, %v6966, 0
    %6973 = vmatprep.subr.bf16.mxu0 0
    %6974 = vmatpush1.bf16.msra.mxu0 %v6971
    %6975 = vmatprep.subr.bf16.mxu0 0
    %6976 = vmatpush1.bf16.msra.mxu0 0
    %6977 = vmatprep.subr.bf16.mxu0 0
    %6978 = vmatpush1.bf16.msra.mxu0 0
    %6979 = vmatprep.subr.bf16.mxu0 0
    %6980 = vmatpush1.bf16.msra.mxu0 0
    %6981 = vmatprep.subr.bf16.mxu0 0
    %6982 = vmatpush1.bf16.msra.mxu0 0
    %6983 = vmatprep.subr.bf16.mxu0 0
    %6984 = vmatpush1.bf16.msra.mxu0 0
    %6985 = vmatprep.subr.bf16.mxu0 0
    %6986 = vmatpush1.bf16.msra.mxu0 0
    %6987 = vmatprep.subr.bf16.mxu0 0
    %6988 = vmatpush1.bf16.msra.mxu0 0
    %6989 = vmatprep.subr.bf16.mxu0 0
    %6990 = vmatpush1.bf16.msra.mxu0 0
    %6991 = vmatprep.subr.bf16.mxu0 0
    %6992 = vmatpush1.bf16.msra.mxu0 0
    %6993 = vmatprep.subr.bf16.mxu0 0
    %6994 = vmatpush1.bf16.msra.mxu0 0
    %6995 = vmatprep.subr.bf16.mxu0 0
    %6996 = vmatpush1.bf16.msra.mxu0 0
    %6997 = vmatprep.subr.bf16.mxu0 0
    %6998 = vmatpush1.bf16.msra.mxu0 0
    %6999 = vmatprep.subr.bf16.mxu0 0
    %7000 = vmatpush1.bf16.msra.mxu0 0
    %7001 = vmatprep.subr.bf16.mxu0 0
    %7002 = vmatpush1.bf16.msra.mxu0 0
    %7003 = vmatprep.subr.bf16.mxu0 0
    %7004 = vmatpush1.bf16.msra.mxu0 0
    %7005 = vmatprep.mubr.bf16.mxu0 0
    %7006 = vmatmul.mubr.bf16.gmra.mrb[0].mxu0 %v6968
    %v7007 = vpop.f32.mrb[0].mxu0
    %v7008 = vadd.f32 0.0, %v7007
    %v7009 = vpop.f32.mrb[0].mxu0
    %v7010 = vpop.f32.mrb[0].mxu0
    %v7011 = vpop.f32.mrb[0].mxu0
    %7012 = vdwg.mxu0
    %v7013 = vrcp.pop %v6911
    %v7014 = vrcp.pop %v6914
    %v7015 = vmul.f32 %v6960, %v7013
    %v7016 = vmul.f32 %v7008, %v7014
    %7017 = vrot.lane.b32.xlu0 %v6351, 104
    %v7018 = vpop.permute.xlu0 %7017
    %7019 = vrot.lane.b32.xlu0 %v6353, 104
    %v7020 = vpop.permute.xlu0 %7019
    %v7022 = vsel %vm124, %v7018, 0
    %v7025 = vsel %vm124, %v7020, 0
    %7027 = vmatprep.subr.bf16.mxu0 0
    %7028 = vmatpush1.bf16.xpose.msra.mxu0 %v7025
    %7029 = vmatprep.subr.bf16.mxu0 0
    %7030 = vmatpush1.bf16.xpose.msra.mxu0 0
    %7031 = vmatprep.subr.bf16.mxu0 0
    %7032 = vmatpush1.bf16.xpose.msra.mxu0 0
    %7033 = vmatprep.subr.bf16.mxu0 0
    %7034 = vmatpush1.bf16.xpose.msra.mxu0 0
    %7035 = vmatprep.subr.bf16.mxu0 0
    %7036 = vmatpush1.bf16.xpose.msra.mxu0 0
    %7037 = vmatprep.subr.bf16.mxu0 0
    %7038 = vmatpush1.bf16.xpose.msra.mxu0 0
    %7039 = vmatprep.subr.bf16.mxu0 0
    %7040 = vmatpush1.bf16.xpose.msra.mxu0 0
    %7041 = vmatprep.subr.bf16.mxu0 0
    %7042 = vmatpush1.bf16.xpose.msra.mxu0 0
    %7043 = vmatprep.subr.bf16.mxu0 0
    %7044 = vmatpush1.bf16.xpose.msra.mxu0 0
    %7045 = vmatprep.subr.bf16.mxu0 0
    %7046 = vmatpush1.bf16.xpose.msra.mxu0 0
    %7047 = vmatprep.subr.bf16.mxu0 0
    %7048 = vmatpush1.bf16.xpose.msra.mxu0 0
    %7049 = vmatprep.subr.bf16.mxu0 0
    %7050 = vmatpush1.bf16.xpose.msra.mxu0 0
    %7051 = vmatprep.subr.bf16.mxu0 0
    %7052 = vmatpush1.bf16.xpose.msra.mxu0 0
    %7053 = vmatprep.subr.bf16.mxu0 0
    %7054 = vmatpush1.bf16.xpose.msra.mxu0 0
    %7055 = vmatprep.subr.bf16.mxu0 0
    %7056 = vmatpush1.bf16.xpose.msra.mxu0 0
    %7057 = vmatprep.subr.bf16.mxu0 0
    %7058 = vmatpush1.bf16.xpose.msra.mxu0 0
    %7059 = vmatprep.mubr.bf16.mxu0 0
    %7060 = vmatmul.mubr.bf16.gmra.mrb[0].mxu0 %v7022
    %v7061 = vpop.f32.mrb[0].mxu0
    %v7062 = vadd.f32 0.0, %v7061
    %v7063 = vpop.f32.mrb[0].mxu0
    %v7064 = vpop.f32.mrb[0].mxu0
    %v7065 = vpop.f32.mrb[0].mxu0
    %7066 = vdwg.mxu0
    %7067 = vrot.lane.b32.xlu0 %v6352, 104
    %v7068 = vpop.permute.xlu0 %7067
    %7069 = vrot.lane.b32.xlu0 %v6354, 104
    %v7070 = vpop.permute.xlu0 %7069
    %v7072 = vsel %vm124, %v7068, 0
    %v7075 = vsel %vm124, %v7070, 0
    %7077 = vmatprep.subr.bf16.mxu0 0
    %7078 = vmatpush1.bf16.xpose.msra.mxu0 %v7075
    %7079 = vmatprep.subr.bf16.mxu0 0
    %7080 = vmatpush1.bf16.xpose.msra.mxu0 0
    %7081 = vmatprep.subr.bf16.mxu0 0
    %7082 = vmatpush1.bf16.xpose.msra.mxu0 0
    %7083 = vmatprep.subr.bf16.mxu0 0
    %7084 = vmatpush1.bf16.xpose.msra.mxu0 0
    %7085 = vmatprep.subr.bf16.mxu0 0
    %7086 = vmatpush1.bf16.xpose.msra.mxu0 0
    %7087 = vmatprep.subr.bf16.mxu0 0
    %7088 = vmatpush1.bf16.xpose.msra.mxu0 0
    %7089 = vmatprep.subr.bf16.mxu0 0
    %7090 = vmatpush1.bf16.xpose.msra.mxu0 0
    %7091 = vmatprep.subr.bf16.mxu0 0
    %7092 = vmatpush1.bf16.xpose.msra.mxu0 0
    %7093 = vmatprep.subr.bf16.mxu0 0
    %7094 = vmatpush1.bf16.xpose.msra.mxu0 0
    %7095 = vmatprep.subr.bf16.mxu0 0
    %7096 = vmatpush1.bf16.xpose.msra.mxu0 0
    %7097 = vmatprep.subr.bf16.mxu0 0
    %7098 = vmatpush1.bf16.xpose.msra.mxu0 0
    %7099 = vmatprep.subr.bf16.mxu0 0
    %7100 = vmatpush1.bf16.xpose.msra.mxu0 0
    %7101 = vmatprep.subr.bf16.mxu0 0
    %7102 = vmatpush1.bf16.xpose.msra.mxu0 0
    %7103 = vmatprep.subr.bf16.mxu0 0
    %7104 = vmatpush1.bf16.xpose.msra.mxu0 0
    %7105 = vmatprep.subr.bf16.mxu0 0
    %7106 = vmatpush1.bf16.xpose.msra.mxu0 0
    %7107 = vmatprep.subr.bf16.mxu0 0
    %7108 = vmatpush1.bf16.xpose.msra.mxu0 0
    %7109 = vmatprep.mubr.bf16.mxu0 0
    %7110 = vmatmul.mubr.bf16.gmra.mrb[0].mxu0 %v7072
    %v7111 = vpop.f32.mrb[0].mxu0
    %v7112 = vadd.f32 0.0, %v7111
    %v7113 = vpop.f32.mrb[0].mxu0
    %v7114 = vpop.f32.mrb[0].mxu0
    %v7115 = vpop.f32.mrb[0].mxu0
    %7116 = vdwg.mxu0
    %v7117 = vmul.f32 %v7062, 0.35355338
    %v7118 = vmul.f32 %v7112, 0.35355338
    %v7119 = vsel %vm124, %v7117, -inf
    %7120 = vmax.xlane.f32.xlu0 %v7119
    %v7121 = vpop.xlane.xlu0 %7120
    %v7122 = vsel %vm124, %v7118, -inf
    %7123 = vmax.xlane.f32.xlu0 %v7122
    %v7124 = vpop.xlane.xlu0 %7123
    %v7125 = vsub.f32 %v7117, %v7121
    %v7126 = vsub.f32 %v7118, %v7124
    %v7127 = vmul.f32 %v7125, 1.442695
    %v7128 = vpow.pop %v7127
    %v7129 = vmul.f32 %v7126, 1.442695
    %v7130 = vpow.pop %v7129
    %v7131 = vsel %vm124, %v7128, 0.0
    %7132 = vadd.xlane.f32.xlu0 %v7131
    %v7133 = vpop.xlane.xlu0 %7132
    %v7134 = vsel %vm124, %v7130, 0.0
    %7135 = vadd.xlane.f32.xlu0 %v7134
    %v7136 = vpop.xlane.xlu0 %7135
    %v7137 = vpack.c.bf16 %v7128, %v7128
    %v7138 = vpack.c.bf16 %v7130, %v7130
    %7139 = vrot.lane.b32.xlu0 %v6353, 72
    %v7140 = vpop.permute.xlu0 %7139
    %v7142 = vsel %vm124, %v7137, 0
    %v7145 = vsel %vm261, %v7140, 0
    %7147 = vmatprep.subr.bf16.mxu0 0
    %7148 = vmatpush1.bf16.msra.mxu0 %v7145
    %7149 = vmatprep.subr.bf16.mxu0 0
    %7150 = vmatpush1.bf16.msra.mxu0 0
    %7151 = vmatprep.subr.bf16.mxu0 0
    %7152 = vmatpush1.bf16.msra.mxu0 0
    %7153 = vmatprep.subr.bf16.mxu0 0
    %7154 = vmatpush1.bf16.msra.mxu0 0
    %7155 = vmatprep.subr.bf16.mxu0 0
    %7156 = vmatpush1.bf16.msra.mxu0 0
    %7157 = vmatprep.subr.bf16.mxu0 0
    %7158 = vmatpush1.bf16.msra.mxu0 0
    %7159 = vmatprep.subr.bf16.mxu0 0
    %7160 = vmatpush1.bf16.msra.mxu0 0
    %7161 = vmatprep.subr.bf16.mxu0 0
    %7162 = vmatpush1.bf16.msra.mxu0 0
    %7163 = vmatprep.subr.bf16.mxu0 0
    %7164 = vmatpush1.bf16.msra.mxu0 0
    %7165 = vmatprep.subr.bf16.mxu0 0
    %7166 = vmatpush1.bf16.msra.mxu0 0
    %7167 = vmatprep.subr.bf16.mxu0 0
    %7168 = vmatpush1.bf16.msra.mxu0 0
    %7169 = vmatprep.subr.bf16.mxu0 0
    %7170 = vmatpush1.bf16.msra.mxu0 0
    %7171 = vmatprep.subr.bf16.mxu0 0
    %7172 = vmatpush1.bf16.msra.mxu0 0
    %7173 = vmatprep.subr.bf16.mxu0 0
    %7174 = vmatpush1.bf16.msra.mxu0 0
    %7175 = vmatprep.subr.bf16.mxu0 0
    %7176 = vmatpush1.bf16.msra.mxu0 0
    %7177 = vmatprep.subr.bf16.mxu0 0
    %7178 = vmatpush1.bf16.msra.mxu0 0
    %7179 = vmatprep.mubr.bf16.mxu0 0
    %7180 = vmatmul.mubr.bf16.gmra.mrb[0].mxu0 %v7142
    %v7181 = vpop.f32.mrb[0].mxu0
    %v7182 = vadd.f32 0.0, %v7181
    %v7183 = vpop.f32.mrb[0].mxu0
    %v7184 = vpop.f32.mrb[0].mxu0
    %v7185 = vpop.f32.mrb[0].mxu0
    %7186 = vdwg.mxu0
    %7187 = vrot.lane.b32.xlu0 %v6354, 72
    %v7188 = vpop.permute.xlu0 %7187
    %v7190 = vsel %vm124, %v7138, 0
    %v7193 = vsel %vm261, %v7188, 0
    %7195 = vmatprep.subr.bf16.mxu0 0
    %7196 = vmatpush1.bf16.msra.mxu0 %v7193
    %7197 = vmatprep.subr.bf16.mxu0 0
    %7198 = vmatpush1.bf16.msra.mxu0 0
    %7199 = vmatprep.subr.bf16.mxu0 0
    %7200 = vmatpush1.bf16.msra.mxu0 0
    %7201 = vmatprep.subr.bf16.mxu0 0
    %7202 = vmatpush1.bf16.msra.mxu0 0
    %7203 = vmatprep.subr.bf16.mxu0 0
    %7204 = vmatpush1.bf16.msra.mxu0 0
    %7205 = vmatprep.subr.bf16.mxu0 0
    %7206 = vmatpush1.bf16.msra.mxu0 0
    %7207 = vmatprep.subr.bf16.mxu0 0
    %7208 = vmatpush1.bf16.msra.mxu0 0
    %7209 = vmatprep.subr.bf16.mxu0 0
    %7210 = vmatpush1.bf16.msra.mxu0 0
    %7211 = vmatprep.subr.bf16.mxu0 0
    %7212 = vmatpush1.bf16.msra.mxu0 0
    %7213 = vmatprep.subr.bf16.mxu0 0
    %7214 = vmatpush1.bf16.msra.mxu0 0
    %7215 = vmatprep.subr.bf16.mxu0 0
    %7216 = vmatpush1.bf16.msra.mxu0 0
    %7217 = vmatprep.subr.bf16.mxu0 0
    %7218 = vmatpush1.bf16.msra.mxu0 0
    %7219 = vmatprep.subr.bf16.mxu0 0
    %7220 = vmatpush1.bf16.msra.mxu0 0
    %7221 = vmatprep.subr.bf16.mxu0 0
    %7222 = vmatpush1.bf16.msra.mxu0 0
    %7223 = vmatprep.subr.bf16.mxu0 0
    %7224 = vmatpush1.bf16.msra.mxu0 0
    %7225 = vmatprep.subr.bf16.mxu0 0
    %7226 = vmatpush1.bf16.msra.mxu0 0
    %7227 = vmatprep.mubr.bf16.mxu0 0
    %7228 = vmatmul.mubr.bf16.gmra.mrb[0].mxu0 %v7190
    %v7229 = vpop.f32.mrb[0].mxu0
    %v7230 = vadd.f32 0.0, %v7229
    %v7231 = vpop.f32.mrb[0].mxu0
    %v7232 = vpop.f32.mrb[0].mxu0
    %v7233 = vpop.f32.mrb[0].mxu0
    %7234 = vdwg.mxu0
    %v7235 = vrcp.pop %v7133
    %v7236 = vrcp.pop %v7136
    %v7237 = vmul.f32 %v7182, %v7235
    %v7238 = vmul.f32 %v7230, %v7236
    %7241 = vrot.lane.b32.xlu0 %v6793, 8
    %v7242 = vpop.permute.xlu0 %7241
    %7243 = vrot.lane.b32.xlu0 %v6794, 8
    %v7244 = vpop.permute.xlu0 %7243
    %7249 = vrot.lane.b32.xlu0 %v7015, 16
    %v7250 = vpop.permute.xlu0 %7249
    %7251 = vrot.lane.b32.xlu0 %v7016, 16
    %v7252 = vpop.permute.xlu0 %7251
    %7257 = vrot.lane.b32.xlu0 %v7237, 24
    %v7258 = vpop.permute.xlu0 %7257
    %7259 = vrot.lane.b32.xlu0 %v7238, 24
    %v7260 = vpop.permute.xlu0 %7259
    %v7263 = vsel %vm124, %v6569, %v7242
    %v7264 = vsel %vm124, %v6570, %v7244
    %v7265 = vsel %vm1055, %v7263, %v7250
    %v7266 = vsel %vm1055, %v7264, %v7252
    %v7267 = vsel %vm1058, %v7265, %v7258
    %v7268 = vsel %vm1058, %v7266, %v7260
    %v7269 = vpack.c.bf16 %v7268, %v7267
    %v7270 = vlaneseq
    %v7271 = vshrl.u32 %v7270, 7
    %v7272 = vsub.s32 0, %v7271
    %v7273 = vrot.slane %v6238, %v7272
    %v7278 = vunpack.c.l.b16 %v6233
    %v7279 = vunpack.c.l.b16 %v6234
    %v7280 = vunpack.c.l.b16 %v6235
    %v7281 = vunpack.c.l.b16 %v6236
    %v7282 = vpack.c.b16 %v7279, %v7278
    %v7283 = vpack.c.b16 %v7281, %v7280
    %v7287 = vsel %vm74, %v7269, 0
    %7289 = vmatprep.subr.bf16.mxu0 0
    %7290 = vmatpush1.bf16.msra.mxu0 %v7282
    %7291 = vmatprep.subr.bf16.mxu0 0
    %7292 = vmatpush1.bf16.msra.mxu0 %v7283
    %7293 = vmatprep.subr.bf16.mxu0 0
    %7294 = vmatpush1.bf16.msra.mxu0 0
    %7295 = vmatprep.subr.bf16.mxu0 0
    %7296 = vmatpush1.bf16.msra.mxu0 0
    %7297 = vmatprep.subr.bf16.mxu0 0
    %7298 = vmatpush1.bf16.msra.mxu0 0
    %7299 = vmatprep.subr.bf16.mxu0 0
    %7300 = vmatpush1.bf16.msra.mxu0 0
    %7301 = vmatprep.subr.bf16.mxu0 0
    %7302 = vmatpush1.bf16.msra.mxu0 0
    %7303 = vmatprep.subr.bf16.mxu0 0
    %7304 = vmatpush1.bf16.msra.mxu0 0
    %7305 = vmatprep.subr.bf16.mxu0 0
    %7306 = vmatpush1.bf16.msra.mxu0 0
    %7307 = vmatprep.subr.bf16.mxu0 0
    %7308 = vmatpush1.bf16.msra.mxu0 0
    %7309 = vmatprep.subr.bf16.mxu0 0
    %7310 = vmatpush1.bf16.msra.mxu0 0
    %7311 = vmatprep.subr.bf16.mxu0 0
    %7312 = vmatpush1.bf16.msra.mxu0 0
    %7313 = vmatprep.subr.bf16.mxu0 0
    %7314 = vmatpush1.bf16.msra.mxu0 0
    %7315 = vmatprep.subr.bf16.mxu0 0
    %7316 = vmatpush1.bf16.msra.mxu0 0
    %7317 = vmatprep.subr.bf16.mxu0 0
    %7318 = vmatpush1.bf16.msra.mxu0 0
    %7319 = vmatprep.subr.bf16.mxu0 0
    %7320 = vmatpush1.bf16.msra.mxu0 0
    %7321 = vmatprep.mubr.bf16.mxu0 0
    %7322 = vmatmul.mubr.bf16.gmra.mrb[0].mxu0 %v7287
    %v7323 = vpop.f32.mrb[0].mxu0
    %v7324 = vadd.f32 %v7273, %v7323
    %v7325 = vpop.f32.mrb[0].mxu0
    %v7326 = vpop.f32.mrb[0].mxu0
    %v7327 = vadd.f32 %v7273, %v7326
    %v7328 = vpop.f32.mrb[0].mxu0
    %7329 = vdwg.mxu0
    %v7330 = vadd.f32 %v6227, %v7324
    %v7331 = vadd.f32 %v6228, %v7327
    %v7332 = vld [vmem:[%s4 + $0x24] sm:$0x1]
    %v7333 = vld [vmem:[%s4 + $0x25] sm:$0x1]
    %v7334 = vsel %vm74, %v7330, 0.0
    %7335 = vadd.xlane.f32.xlu0 %v7334
    %v7336 = vpop.xlane.xlu0 %7335
    %v7337 = vsel %vm74, %v7331, 0.0
    %7338 = vadd.xlane.f32.xlu0 %v7337
    %v7339 = vpop.xlane.xlu0 %7338
    %v7340 = vmul.f32 %v7336, %v1132
    %v7341 = vmul.f32 %v7339, %v1132
    %v7342 = vsub.f32 %v7330, %v7340
    %v7343 = vsub.f32 %v7331, %v7341
    %v7344 = vmul.f32 %v7342, %v7342
    %v7345 = vmul.f32 %v7343, %v7343
    %v7346 = vsel %vm74, %v7344, 0.0
    %7347 = vadd.xlane.f32.xlu0 %v7346
    %v7348 = vpop.xlane.xlu0 %7347
    %v7349 = vsel %vm74, %v7345, 0.0
    %7350 = vadd.xlane.f32.xlu0 %v7349
    %v7351 = vpop.xlane.xlu0 %7350
    %v7352 = vmul.f32 %v7348, %v1132
    %v7353 = vmul.f32 %v7351, %v1132
    %v7354 = vadd.f32 %v7352, 1e-05
    %v7355 = vadd.f32 %v7353, 1e-05
    %v7356 = vrsqrt.pop %v7354
    %v7357 = vrsqrt.pop %v7355
    %v7358 = vmul.f32 %v7342, %v7356
    %v7359 = vmul.f32 %v7343, %v7357
    %v7360 = vlaneseq
    %v7361 = vshrl.u32 %v7360, 7
    %v7362 = vsub.s32 0, %v7361
    %v7363 = vrot.slane %v7332, %v7362
    %v7364 = vmul.f32 %v7358, %v7363
    %v7365 = vmul.f32 %v7359, %v7363
    %v7366 = vlaneseq
    %v7367 = vshrl.u32 %v7366, 7
    %v7368 = vsub.s32 0, %v7367
    %v7369 = vrot.slane %v7333, %v7368
    %v7370 = vadd.f32 %v7364, %v7369
    %v7371 = vadd.f32 %v7365, %v7369
    %v7372 = vld [vmem:[#allocation2 + $0x150] sm:$0xf]
    %v7373 = vld [vmem:[#allocation2 + $0x154] sm:$0xf]
    %v7374 = vld [vmem:[#allocation2 + $0x158] sm:$0xf]
    %v7375 = vld [vmem:[#allocation2 + $0x15c] sm:$0xf]
    %v7376 = vpack.c.bf16 %v7371, %v7370
    %v7377 = vld [vmem:[%s4 + $0x20] sm:$0x1]
    %v7378 = vlaneseq
    %v7379 = vshrl.u32 %v7378, 7
    %v7380 = vsub.s32 0, %v7379
    %v7381 = vrot.slane %v7377, %v7380
    %v7386 = vunpack.c.l.b16 %v7372
    %v7387 = vunpack.c.l.b16 %v7373
    %v7388 = vunpack.c.l.b16 %v7374
    %v7389 = vunpack.c.l.b16 %v7375
    %v7390 = vpack.c.b16 %v7387, %v7386
    %v7391 = vpack.c.b16 %v7389, %v7388
    %v7395 = vsel %vm74, %v7376, 0
    %7397 = vmatprep.subr.bf16.mxu0 0
    %7398 = vmatpush1.bf16.msra.mxu0 %v7390
    %7399 = vmatprep.subr.bf16.mxu0 0
    %7400 = vmatpush1.bf16.msra.mxu0 %v7391
    %7401 = vmatprep.subr.bf16.mxu0 0
    %7402 = vmatpush1.bf16.msra.mxu0 0
    %7403 = vmatprep.subr.bf16.mxu0 0
    %7404 = vmatpush1.bf16.msra.mxu0 0
    %7405 = vmatprep.subr.bf16.mxu0 0
    %7406 = vmatpush1.bf16.msra.mxu0 0
    %7407 = vmatprep.subr.bf16.mxu0 0
    %7408 = vmatpush1.bf16.msra.mxu0 0
    %7409 = vmatprep.subr.bf16.mxu0 0
    %7410 = vmatpush1.bf16.msra.mxu0 0
    %7411 = vmatprep.subr.bf16.mxu0 0
    %7412 = vmatpush1.bf16.msra.mxu0 0
    %7413 = vmatprep.subr.bf16.mxu0 0
    %7414 = vmatpush1.bf16.msra.mxu0 0
    %7415 = vmatprep.subr.bf16.mxu0 0
    %7416 = vmatpush1.bf16.msra.mxu0 0
    %7417 = vmatprep.subr.bf16.mxu0 0
    %7418 = vmatpush1.bf16.msra.mxu0 0
    %7419 = vmatprep.subr.bf16.mxu0 0
    %7420 = vmatpush1.bf16.msra.mxu0 0
    %7421 = vmatprep.subr.bf16.mxu0 0
    %7422 = vmatpush1.bf16.msra.mxu0 0
    %7423 = vmatprep.subr.bf16.mxu0 0
    %7424 = vmatpush1.bf16.msra.mxu0 0
    %7425 = vmatprep.subr.bf16.mxu0 0
    %7426 = vmatpush1.bf16.msra.mxu0 0
    %7427 = vmatprep.subr.bf16.mxu0 0
    %7428 = vmatpush1.bf16.msra.mxu0 0
    %7429 = vmatprep.mubr.bf16.mxu0 0
    %7430 = vmatmul.mubr.bf16.gmra.mrb[0].mxu0 %v7395
    %v7431 = vpop.f32.mrb[0].mxu0
    %v7432 = vadd.f32 %v7381, %v7431
    %v7433 = vpop.f32.mrb[0].mxu0
    %v7434 = vpop.f32.mrb[0].mxu0
    %v7435 = vadd.f32 %v7381, %v7434
    %v7436 = vpop.f32.mrb[0].mxu0
    %7437 = vdwg.mxu0
    %v7438 = vmax.f32 %v7432, 0.0
    %v7439 = vmax.f32 %v7435, 0.0
    %v7440 = vld [vmem:[#allocation2 + $0x160] sm:$0xf]
    %v7441 = vld [vmem:[#allocation2 + $0x164] sm:$0xf]
    %v7442 = vld [vmem:[#allocation2 + $0x168] sm:$0xf]
    %v7443 = vld [vmem:[#allocation2 + $0x16c] sm:$0xf]
    %v7444 = vld [vmem:[#allocation2 + $0x170] sm:$0xf]
    %v7445 = vld [vmem:[#allocation2 + $0x174] sm:$0xf]
    %v7446 = vld [vmem:[#allocation2 + $0x178] sm:$0xf]
    %v7447 = vld [vmem:[#allocation2 + $0x17c] sm:$0xf]
    %v7448 = vpack.c.bf16 %v7439, %v7438
    %v7449 = vld [vmem:[%s4 + $0x21] sm:$0x1]
    %v7450 = vlaneseq
    %v7451 = vshrl.u32 %v7450, 7
    %v7452 = vsub.s32 0, %v7451
    %v7453 = vrot.slane %v7449, %v7452
    %v7462 = vunpack.c.l.b16 %v7440
    %v7463 = vunpack.c.l.b16 %v7441
    %v7464 = vunpack.c.l.b16 %v7442
    %v7465 = vunpack.c.l.b16 %v7443
    %v7466 = vunpack.c.l.b16 %v7444
    %v7467 = vunpack.c.l.b16 %v7445
    %v7468 = vunpack.c.l.b16 %v7446
    %v7469 = vunpack.c.l.b16 %v7447
    %v7470 = vpack.c.b16 %v7463, %v7462
    %v7471 = vpack.c.b16 %v7465, %v7464
    %v7472 = vpack.c.b16 %v7467, %v7466
    %v7473 = vpack.c.b16 %v7469, %v7468
    %v7479 = vsel %vm1271, %v7448, 0
    %7481 = vmatprep.subr.bf16.mxu0 0
    %7482 = vmatpush1.bf16.msra.mxu0 %v7470
    %7483 = vmatprep.subr.bf16.mxu0 0
    %7484 = vmatpush1.bf16.msra.mxu0 %v7471
    %7485 = vmatprep.subr.bf16.mxu0 0
    %7486 = vmatpush1.bf16.msra.mxu0 %v7472
    %7487 = vmatprep.subr.bf16.mxu0 0
    %7488 = vmatpush1.bf16.msra.mxu0 %v7473
    %7489 = vmatprep.subr.bf16.mxu0 0
    %7490 = vmatpush1.bf16.msra.mxu0 0
    %7491 = vmatprep.subr.bf16.mxu0 0
    %7492 = vmatpush1.bf16.msra.mxu0 0
    %7493 = vmatprep.subr.bf16.mxu0 0
    %7494 = vmatpush1.bf16.msra.mxu0 0
    %7495 = vmatprep.subr.bf16.mxu0 0
    %7496 = vmatpush1.bf16.msra.mxu0 0
    %7497 = vmatprep.subr.bf16.mxu0 0
    %7498 = vmatpush1.bf16.msra.mxu0 0
    %7499 = vmatprep.subr.bf16.mxu0 0
    %7500 = vmatpush1.bf16.msra.mxu0 0
    %7501 = vmatprep.subr.bf16.mxu0 0
    %7502 = vmatpush1.bf16.msra.mxu0 0
    %7503 = vmatprep.subr.bf16.mxu0 0
    %7504 = vmatpush1.bf16.msra.mxu0 0
    %7505 = vmatprep.subr.bf16.mxu0 0
    %7506 = vmatpush1.bf16.msra.mxu0 0
    %7507 = vmatprep.subr.bf16.mxu0 0
    %7508 = vmatpush1.bf16.msra.mxu0 0
    %7509 = vmatprep.subr.bf16.mxu0 0
    %7510 = vmatpush1.bf16.msra.mxu0 0
    %7511 = vmatprep.subr.bf16.mxu0 0
    %7512 = vmatpush1.bf16.msra.mxu0 0
    %7513 = vmatprep.mubr.bf16.mxu0 0
    %7514 = vmatmul.mubr.bf16.gmra.mrb[0].mxu0 %v7479
    %v7515 = vpop.f32.mrb[0].mxu0
    %v7516 = vadd.f32 %v7453, %v7515
    %v7517 = vpop.f32.mrb[0].mxu0
    %v7518 = vpop.f32.mrb[0].mxu0
    %v7519 = vadd.f32 %v7453, %v7518
    %v7520 = vpop.f32.mrb[0].mxu0
    %7521 = vdwg.mxu0
    %v7522 = vadd.f32 %v7370, %v7516
    %v7523 = vadd.f32 %v7371, %v7519
    %v7524 = vld [vmem:[%s4 + $0x26] sm:$0x1]
    %v7525 = vld [vmem:[%s4 + $0x27] sm:$0x1]
    %v7526 = vsel %vm74, %v7522, 0.0
    %7527 = vadd.xlane.f32.xlu0 %v7526
    %v7528 = vpop.xlane.xlu0 %7527
    %v7529 = vsel %vm74, %v7523, 0.0
    %7530 = vadd.xlane.f32.xlu0 %v7529
    %v7531 = vpop.xlane.xlu0 %7530
    %v7532 = vmul.f32 %v7528, %v1132
    %v7533 = vmul.f32 %v7531, %v1132
    %v7534 = vsub.f32 %v7522, %v7532
    %v7535 = vsub.f32 %v7523, %v7533
    %v7536 = vmul.f32 %v7534, %v7534
    %v7537 = vmul.f32 %v7535, %v7535
    %v7538 = vsel %vm74, %v7536, 0.0
    %7539 = vadd.xlane.f32.xlu0 %v7538
    %v7540 = vpop.xlane.xlu0 %7539
    %v7541 = vsel %vm74, %v7537, 0.0
    %7542 = vadd.xlane.f32.xlu0 %v7541
    %v7543 = vpop.xlane.xlu0 %7542
    %v7544 = vmul.f32 %v7540, %v1132
    %v7545 = vmul.f32 %v7543, %v1132
    %v7546 = vadd.f32 %v7544, 1e-05
    %v7547 = vadd.f32 %v7545, 1e-05
    %v7548 = vrsqrt.pop %v7546
    %v7549 = vrsqrt.pop %v7547
    %v7550 = vmul.f32 %v7534, %v7548
    %v7551 = vmul.f32 %v7535, %v7549
    %v7552 = vlaneseq
    %v7553 = vshrl.u32 %v7552, 7
    %v7554 = vsub.s32 0, %v7553
    %v7555 = vrot.slane %v7524, %v7554
    %v7556 = vmul.f32 %v7550, %v7555
    %v7557 = vmul.f32 %v7551, %v7555
    %v7558 = vlaneseq
    %v7559 = vshrl.u32 %v7558, 7
    %v7560 = vsub.s32 0, %v7559
    %v7561 = vrot.slane %v7525, %v7560
    %v7562 = vadd.f32 %v7556, %v7561
    %v7563 = vadd.f32 %v7557, %v7561
    %v7564 = vld [vmem:[%s4 + $0x2a] sm:$0x1]
    %v7565 = vld [vmem:[%s4 + $0x2b] sm:$0x1]
    %v7566 = vsel %vm74, %v7562, 0.0
    %7567 = vadd.xlane.f32.xlu0 %v7566
    %v7568 = vpop.xlane.xlu0 %7567
    %v7569 = vsel %vm74, %v7563, 0.0
    %7570 = vadd.xlane.f32.xlu0 %v7569
    %v7571 = vpop.xlane.xlu0 %7570
    %v7572 = vmul.f32 %v7568, %v1132
    %v7573 = vmul.f32 %v7571, %v1132
    %v7574 = vsub.f32 %v7562, %v7572
    %v7575 = vsub.f32 %v7563, %v7573
    %v7576 = vmul.f32 %v7574, %v7574
    %v7577 = vmul.f32 %v7575, %v7575
    %v7578 = vsel %vm74, %v7576, 0.0
    %7579 = vadd.xlane.f32.xlu0 %v7578
    %v7580 = vpop.xlane.xlu0 %7579
    %v7581 = vsel %vm74, %v7577, 0.0
    %7582 = vadd.xlane.f32.xlu0 %v7581
    %v7583 = vpop.xlane.xlu0 %7582
    %v7584 = vmul.f32 %v7580, %v1132
    %v7585 = vmul.f32 %v7583, %v1132
    %v7586 = vadd.f32 %v7584, 1e-05
    %v7587 = vadd.f32 %v7585, 1e-05
    %v7588 = vrsqrt.pop %v7586
    %v7589 = vrsqrt.pop %v7587
    %v7590 = vmul.f32 %v7574, %v7588
    %v7591 = vmul.f32 %v7575, %v7589
    %v7592 = vlaneseq
    %v7593 = vshrl.u32 %v7592, 7
    %v7594 = vsub.s32 0, %v7593
    %v7595 = vrot.slane %v7564, %v7594
    %v7596 = vmul.f32 %v7590, %v7595
    %v7597 = vmul.f32 %v7591, %v7595
    %v7598 = vlaneseq
    %v7599 = vshrl.u32 %v7598, 7
    %v7600 = vsub.s32 0, %v7599
    %v7601 = vrot.slane %v7565, %v7600
    %v7602 = vadd.f32 %v7596, %v7601
    %v7603 = vadd.f32 %v7597, %v7601
    %v7604 = vld [vmem:[#allocation2 + $0x180] sm:$0xf]
    %v7605 = vld [vmem:[#allocation2 + $0x184] sm:$0xf]
    %v7606 = vld [vmem:[#allocation2 + $0x188] sm:$0xf]
    %v7607 = vld [vmem:[#allocation2 + $0x18c] sm:$0xf]
    %v7608 = vpack.c.bf16 %v7603, %v7602
    %v7609 = vld [vmem:[%s4 + $0x2c] sm:$0x1]
    %v7610 = vlaneseq
    %v7611 = vshrl.u32 %v7610, 7
    %v7612 = vsub.s32 0, %v7611
    %v7613 = vrot.slane %v7609, %v7612
    %v7618 = vunpack.c.l.b16 %v7604
    %v7619 = vunpack.c.l.b16 %v7605
    %v7620 = vunpack.c.l.b16 %v7606
    %v7621 = vunpack.c.l.b16 %v7607
    %v7622 = vpack.c.b16 %v7619, %v7618
    %v7623 = vpack.c.b16 %v7621, %v7620
    %v7627 = vsel %vm74, %v7608, 0
    %7629 = vmatprep.subr.bf16.mxu0 0
    %7630 = vmatpush1.bf16.msra.mxu0 %v7622
    %7631 = vmatprep.subr.bf16.mxu0 0
    %7632 = vmatpush1.bf16.msra.mxu0 %v7623
    %7633 = vmatprep.subr.bf16.mxu0 0
    %7634 = vmatpush1.bf16.msra.mxu0 0
    %7635 = vmatprep.subr.bf16.mxu0 0
    %7636 = vmatpush1.bf16.msra.mxu0 0
    %7637 = vmatprep.subr.bf16.mxu0 0
    %7638 = vmatpush1.bf16.msra.mxu0 0
    %7639 = vmatprep.subr.bf16.mxu0 0
    %7640 = vmatpush1.bf16.msra.mxu0 0
    %7641 = vmatprep.subr.bf16.mxu0 0
    %7642 = vmatpush1.bf16.msra.mxu0 0
    %7643 = vmatprep.subr.bf16.mxu0 0
    %7644 = vmatpush1.bf16.msra.mxu0 0
    %7645 = vmatprep.subr.bf16.mxu0 0
    %7646 = vmatpush1.bf16.msra.mxu0 0
    %7647 = vmatprep.subr.bf16.mxu0 0
    %7648 = vmatpush1.bf16.msra.mxu0 0
    %7649 = vmatprep.subr.bf16.mxu0 0
    %7650 = vmatpush1.bf16.msra.mxu0 0
    %7651 = vmatprep.subr.bf16.mxu0 0
    %7652 = vmatpush1.bf16.msra.mxu0 0
    %7653 = vmatprep.subr.bf16.mxu0 0
    %7654 = vmatpush1.bf16.msra.mxu0 0
    %7655 = vmatprep.subr.bf16.mxu0 0
    %7656 = vmatpush1.bf16.msra.mxu0 0
    %7657 = vmatprep.subr.bf16.mxu0 0
    %7658 = vmatpush1.bf16.msra.mxu0 0
    %7659 = vmatprep.subr.bf16.mxu0 0
    %7660 = vmatpush1.bf16.msra.mxu0 0
    %7661 = vmatprep.mubr.bf16.mxu0 0
    %7662 = vmatmul.mubr.bf16.gmra.mrb[0].mxu0 %v7627
    %v7663 = vpop.f32.mrb[0].mxu0
    %v7664 = vadd.f32 %v7613, %v7663
    %v7665 = vpop.f32.mrb[0].mxu0
    %v7666 = vpop.f32.mrb[0].mxu0
    %v7667 = vadd.f32 %v7613, %v7666
    %v7668 = vpop.f32.mrb[0].mxu0
    %7669 = vdwg.mxu0
    %7670 = vmax.xlane.f32.xlu0 %v7664
    %v7671 = vpop.xlane.xlu0 %7670
    %7672 = vmax.xlane.f32.xlu0 %v7667
    %v7673 = vpop.xlane.xlu0 %7672
    %v7674 = vsub.f32 %v7664, %v7671
    %v7675 = vsub.f32 %v7667, %v7673
    %v7676 = vmul.f32 %v7674, 1.442695
    %v7677 = vpow.pop %v7676
    %v7678 = vmul.f32 %v7675, 1.442695
    %v7679 = vpow.pop %v7678
    %7680 = vadd.xlane.f32.xlu0 %v7677
    %v7681 = vpop.xlane.xlu0 %7680
    %7682 = vadd.xlane.f32.xlu0 %v7679
    %v7683 = vpop.xlane.xlu0 %7682
    %v7684 = vlog2.pop %v7681
    %v7685 = vmul.f32 %v7684, 0.6931472
    %v7686 = vlog2.pop %v7683
    %v7687 = vmul.f32 %v7686, 0.6931472
    %v7688 = vsub.f32 %v7674, %v7685
    %v7689 = vsub.f32 %v7675, %v7687
    %7690 = vst [vmem:[%s5] sm:$0xff] %v7688
    %7691 = vst [vmem:[%s5 + $0x8] sm:$0xff] %v7689
    // Predicated region
    $region26: #{model_forward.1} parent=1 // pred_check
      _
    $region27: #{model_forward.1} parent=1 // pred_check_branch
      %7693 = sbr.rel (0) target = $region29
    $region28: #{model_forward.1} parent=1 // pred_region
      _
    $region29: #{model_forward.1} parent=1 // pred_fallthru
      _
    // Predicated region
    $region30: #{model_forward.1} parent=1 // pred_check
      _
    $region31: #{model_forward.1} parent=1 // pred_check_branch
      %7695 = sbr.rel (0) target = $region33
    $region32: #{model_forward.1} parent=1 // pred_region
      _
    $region33: #{model_forward.1} parent=1 // pred_fallthru
      _
    %7696 = vsyncpa [#allocation3], 1

</llo_original>
